<compile_context>
chip_gen: v7x
topology: tpu7x:2x2x1
jax: 0.10.0
libtpu: 0.0.40
codegen_flags: <defaults>
</compile_context>

<pallas_src>
import jax
import jax.numpy as jnp
from jax import lax
from jax.experimental import pallas as pl
from jax.experimental.pallas import tpu as pltpu


# ---------------- static module config ----------------
IN_CHANNELS = 1
NUM_CLASSES = 2
DEPTH = 2
WF = 3
IMG = 16                                     # input spatial size (H = W)

# channel plan for the 2*DEPTH VALID 3x3 convs (UNetConvBlock x DEPTH):
CONV_CHANNELS = [(IN_CHANNELS, 2 ** WF), (2 ** WF, 2 ** WF),
                 (2 ** WF, 2 ** (WF + 1)), (2 ** (WF + 1), 2 ** (WF + 1))]
FC_IN = CONV_CHANNELS[-1][1]                 # 16


# ------------------- in-kernel building blocks (VMEM only) -------------------

def _conv3x3_relu_vmem(p_ref, load_rows, w_ref, b_ref, out_ref, h_in, w_in, cin):
    """VALID 3x3 conv + bias + ReLU, entirely in VMEM.

    The input activation is a compact row-major (h_in*w_in, cin) slab read via
    `load_rows(lo, hi) -> (hi - lo, cin)`.  Patches are gathered into the
    reused VMEM scratch `p_ref` (in-kernel im2col: zero HBM traffic), with
    column order (kh, kw, cin) to match w.reshape(9*cin, cout).  The output is
    written compact to `out_ref` of shape ((h_in-2)*(w_in-2), cout).
    """
    h_out, w_out = h_in - 2, w_in - 2
    m, k = h_out * w_out, 9 * cin
    # --- patch gather: pure VMEM slice copies -------------------------------
    for h in range(h_out):
        for kh in range(3):
            base = (h + kh) * w_in
            for kw in range(3):
                t = kh * 3 + kw
                p_ref[h * w_out:(h + 1) * w_out, t * cin:(t + 1) * cin] = (
                    load_rows(base + kw, base + kw + w_out))
    # --- contraction ---------------------------------------------------------
    if k <= 16:
        # cin == 1 (first conv): tiny contraction -> 9-tap VPU multiply-add;
        # a (m,9)x(9,8) matmul would waste an MXU pass + result-FIFO pop.
        acc = b_ref[...] + p_ref[0:m, 0:1] * w_ref[0:1, :]
        for t in range(1, k):
            acc = acc + p_ref[0:m, t:t + 1] * w_ref[t:t + 1, :]
    else:
        acc = jnp.dot(p_ref[0:m, 0:k], w_ref[...],
                      preferred_element_type=jnp.float32) + b_ref[...]
    out_ref[...] = jnp.maximum(acc, 0.0)


def _maxpool2x2_vmem(in_ref, out_ref, h_in, w_in):
    """MaxPool2d(kernel=2, stride=2) on a compact (h_in*w_in, C) VMEM slab.

    Floor semantics (trailing odd row/col dropped) match nn.MaxPool2d(2); for
    this config h_in, w_in are even anyway.
    """
    h_out, w_out = h_in // 2, w_in // 2
    for i in range(h_out):
        for j in range(w_out):
            top = in_ref[(2 * i) * w_in + 2 * j:(2 * i) * w_in + 2 * j + 2, :]
            bot = in_ref[(2 * i + 1) * w_in + 2 * j:
                         (2 * i + 1) * w_in + 2 * j + 2, :]
            out_ref[i * w_out + j:i * w_out + j + 1, :] = jnp.max(
                jnp.maximum(top, bot), axis=0, keepdims=True)


# ------------------------------- fused Encoder -------------------------------

def _build_encoder_forward(img_hw, conv_channels, num_classes):
    H = W = img_hw
    cins = [c[0] for c in conv_channels]
    couts = [c[1] for c in conv_channels]

    # static spatial plan (VALID 3x3 shrinks by 2; pool halves with floor)
    s0 = (H, W)                              # conv0 in        (16,16)
    s1 = (s0[0] - 2, s0[1] - 2)              # conv0 out       (14,14)
    s2 = (s1[0] - 2, s1[1] - 2)              # conv1 out       (12,12)
    sp = (s2[0] // 2, s2[1] // 2)            # pool out        ( 6, 6)
    s3 = (sp[0] - 2, sp[1] - 2)              # conv2 out       ( 4, 4)
    s4 = (s3[0] - 2, s3[1] - 2)              # conv3 out       ( 2, 2)
    assert min(s4) >= 1, "input too small for this Encoder config"

    def encoder_kernel(x_ref, w0_r, b0_r, w1_r, b1_r, w2_r, b2_r, w3_r, b3_r,
                       fcw_r, fcb_r, o_ref,
                       p_ref, a0_r, a1_r, ap_r, a2_r, a3_r):
        # ---- UNetConvBlock 0: (conv3x3 -> ReLU) x 2, intermediates in VMEM --
        _conv3x3_relu_vmem(p_ref, lambda lo, hi: x_ref[0, lo:hi, :],
                           w0_r, b0_r, a0_r, s0[0], s0[1], cins[0])
        _conv3x3_relu_vmem(p_ref, lambda lo, hi: a0_r[lo:hi, :],
                           w1_r, b1_r, a1_r, s1[0], s1[1], cins[1])
        # ---- MaxPool2d(2), fused in the same kernel --------------------------
        _maxpool2x2_vmem(a1_r, ap_r, s2[0], s2[1])
        # ---- UNetConvBlock 1 -------------------------------------------------
        _conv3x3_relu_vmem(p_ref, lambda lo, hi: ap_r[lo:hi, :],
                           w2_r, b2_r, a2_r, sp[0], sp[1], cins[2])
        _conv3x3_relu_vmem(p_ref, lambda lo, hi: a2_r[lo:hi, :],
                           w3_r, b3_r, a3_r, s3[0], s3[1], cins[3])
        # ---- AdaptiveAvgPool2d(1) + flatten + Linear (fused, 2-D slab) -------
        pooled = jnp.sum(a3_r[...], axis=0, keepdims=True) * (
            1.0 / float(s4[0] * s4[1]))                             # (1, C)
        y = jnp.dot(pooled, fcw_r[...],
                    preferred_element_type=jnp.float32) + fcb_r[...]
        o_ref[0] = y.astype(o_ref.dtype)

    m_max = max(s1[0] * s1[1], s2[0] * s2[1], s3[0] * s3[1], s4[0] * s4[1])
    k_max = 9 * max(cins)
    scratch_shapes = [
        pltpu.VMEM((m_max, k_max), jnp.float32),                 # shared im2col patches
        pltpu.VMEM((s1[0] * s1[1], couts[0]), jnp.float32),      # conv0 output
        pltpu.VMEM((s2[0] * s2[1], couts[1]), jnp.float32),      # conv1 output
        pltpu.VMEM((sp[0] * sp[1], couts[1]), jnp.float32),      # pooled activation
        pltpu.VMEM((s3[0] * s3[1], couts[2]), jnp.float32),      # conv2 output
        pltpu.VMEM((s4[0] * s4[1], couts[3]), jnp.float32),      # conv3 output
    ]

    def forward(params, x_nchw):
        B = x_nchw.shape[0]
        # NCHW -> compact (B, H*W, Cin): a tiny one-time layout op on the raw
        # input (NOT an im2col -- patch assembly happens inside the kernel).
        x2d = jnp.transpose(x_nchw, (0, 2, 3, 1)).reshape(B, H * W, cins[0])

        operands = [x2d]
        in_specs = [pl.BlockSpec((1, H * W, cins[0]), lambda b: (b, 0, 0))]

        def _full(a):   # small parameter: whole array resident in VMEM,
            return pl.BlockSpec(a.shape, lambda b: (0,) * a.ndim)  # reused per step

        for i in range(len(conv_channels)):
            w2d = params[f"conv{i}_w"].reshape(9 * cins[i], couts[i])
            brow = params[f"conv{i}_b"].reshape(1, couts[i])
            operands += [w2d, brow]
            in_specs += [_full(w2d), _full(brow)]
        fcw = params["fc_w"]
        fcb = params["fc_b"].reshape(1, num_classes)
        operands += [fcw, fcb]
        in_specs += [_full(fcw), _full(fcb)]

        out = pl.pallas_call(
            encoder_kernel,
            out_shape=jax.ShapeDtypeStruct((B, 1, num_classes), jnp.float32),
            grid_spec=pltpu.PrefetchScalarGridSpec(
                num_scalar_prefetch=0,
                grid=(B,),                                  # one image per step
                in_specs=in_specs,
                out_specs=pl.BlockSpec((1, 1, num_classes), lambda b: (b, 0, 0)),
                scratch_shapes=scratch_shapes),
            compiler_params=pltpu.CompilerParams(
                dimension_semantics=("parallel",)),         # megacore on v7x
        )(*operands)
        return out.reshape(B, num_classes)

    return forward


encoder_forward = jax.jit(_build_encoder_forward(IMG, CONV_CHANNELS, NUM_CLASSES))


# ------------------------------ parameters ----------------------------------

def init_params(key):
    params = {}
    keys = jax.random.split(key, len(CONV_CHANNELS) + 1)
    for i, (cin, cout) in enumerate(CONV_CHANNELS):
        kw_, kb_ = jax.random.split(keys[i])
        bound = (9 * cin) ** -0.5
        params[f"conv{i}_w"] = jax.random.uniform(
            kw_, (3, 3, cin, cout), jnp.float32, -bound, bound)
        params[f"conv{i}_b"] = jax.random.uniform(
            kb_, (cout,), jnp.float32, -bound, bound)
    kw_, kb_ = jax.random.split(keys[-1])
    bound = FC_IN ** -0.5
    params["fc_w"] = jax.random.uniform(
        kw_, (FC_IN, NUM_CLASSES), jnp.float32, -bound, bound)
    params["fc_b"] = jax.random.uniform(
        kb_, (NUM_CLASSES,), jnp.float32, -bound, bound)
    return params


# --------------------------- pure-JAX reference -----------------------------

def encoder_reference(params, x_nchw):
    x = jnp.transpose(x_nchw, (0, 2, 3, 1))

    def conv(x, w, b):
        y = lax.conv_general_dilated(
            x, w, window_strides=(1, 1), padding="VALID",
            dimension_numbers=("NHWC", "HWIO", "NHWC"),
            precision=lax.Precision.HIGHEST)
        return jnp.maximum(y + b.reshape(1, 1, 1, -1), 0.0)

    x = conv(x, params["conv0_w"], params["conv0_b"])
    x = conv(x, params["conv1_w"], params["conv1_b"])
    x = lax.reduce_window(x, -jnp.inf, lax.max,
                          (1, 2, 2, 1), (1, 2, 2, 1), "VALID")
    x = conv(x, params["conv2_w"], params["conv2_b"])
    x = conv(x, params["conv3_w"], params["conv3_b"])
    pooled = jnp.mean(x, axis=(1, 2))
    return jnp.dot(pooled, params["fc_w"],
                   precision=lax.Precision.HIGHEST) + params["fc_b"]


if __name__ == "__main__":
    key = jax.random.PRNGKey(0)
    pkey, xkey = jax.random.split(key)
    params = init_params(pkey)
    x = jax.random.normal(xkey, (2, IN_CHANNELS, IMG, IMG), dtype=jnp.float32)

    out = jax.block_until_ready(encoder_forward(params, x))
    assert out.shape == (2, NUM_CLASSES), out.shape

    ref = encoder_reference(params, x)
    if not jnp.allclose(out, ref, atol=1e-4, rtol=1e-4):
        raise AssertionError("Pallas Encoder output mismatch vs JAX reference")
    print("KERNEL_OK")
</pallas_src>

<mosaic_0001>
module attributes {stable_mosaic.version = 11 : i64} {
  func.func @encoder_kernel(%arg0: i32, %arg1: memref<1x256x1xf32, #tpu.memory_space<vmem>>, %arg2: memref<9x8xf32, #tpu.memory_space<vmem>>, %arg3: memref<1x8xf32, #tpu.memory_space<vmem>>, %arg4: memref<72x8xf32, #tpu.memory_space<vmem>>, %arg5: memref<1x8xf32, #tpu.memory_space<vmem>>, %arg6: memref<72x16xf32, #tpu.memory_space<vmem>>, %arg7: memref<1x16xf32, #tpu.memory_space<vmem>>, %arg8: memref<144x16xf32, #tpu.memory_space<vmem>>, %arg9: memref<1x16xf32, #tpu.memory_space<vmem>>, %arg10: memref<16x2xf32, #tpu.memory_space<vmem>>, %arg11: memref<1x2xf32, #tpu.memory_space<vmem>>, %arg12: memref<1x1x2xf32, #tpu.memory_space<vmem>>, %arg13: memref<196x144xf32, #tpu.memory_space<vmem>>, %arg14: memref<196x8xf32, #tpu.memory_space<vmem>>, %arg15: memref<144x8xf32, #tpu.memory_space<vmem>>, %arg16: memref<36x8xf32, #tpu.memory_space<vmem>>, %arg17: memref<16x16xf32, #tpu.memory_space<vmem>>, %arg18: memref<4x16xf32, #tpu.memory_space<vmem>>) attributes {dimension_semantics = [#tpu.dimension_semantics<parallel>], iteration_bounds = array<i64: 2>, scalar_prefetch = 0 : i64, scratch_operands = 6 : i64, tpu.core_type = #tpu.core_type<tc>, window_params = [{transform_indices = @transform_0, window_bounds = array<i64: 1, 256, 1>}, {pipeline_mode = #tpu.pipeline_mode<synchronous>, transform_indices = @transform_1, window_bounds = array<i64: 9, 8>}, {pipeline_mode = #tpu.pipeline_mode<synchronous>, transform_indices = @transform_2, window_bounds = array<i64: 1, 8>}, {pipeline_mode = #tpu.pipeline_mode<synchronous>, transform_indices = @transform_3, window_bounds = array<i64: 72, 8>}, {pipeline_mode = #tpu.pipeline_mode<synchronous>, transform_indices = @transform_4, window_bounds = array<i64: 1, 8>}, {pipeline_mode = #tpu.pipeline_mode<synchronous>, transform_indices = @transform_5, window_bounds = array<i64: 72, 16>}, {pipeline_mode = #tpu.pipeline_mode<synchronous>, transform_indices = @transform_6, window_bounds = array<i64: 1, 16>}, {pipeline_mode = #tpu.pipeline_mode<synchronous>, transform_indices = @transform_7, window_bounds = array<i64: 144, 16>}, {pipeline_mode = #tpu.pipeline_mode<synchronous>, transform_indices = @transform_8, window_bounds = array<i64: 1, 16>}, {pipeline_mode = #tpu.pipeline_mode<synchronous>, transform_indices = @transform_9, window_bounds = array<i64: 16, 2>}, {pipeline_mode = #tpu.pipeline_mode<synchronous>, transform_indices = @transform_10, window_bounds = array<i64: 1, 2>}, {transform_indices = @transform_11, window_bounds = array<i64: 1, 1, 2>}]} {
    %c0 = arith.constant 0 : index
    %c0_0 = arith.constant 0 : index
    %c0_1 = arith.constant 0 : index
    %0 = vector.load %arg1[%c0, %c0_0, %c0_1] : memref<1x256x1xf32, #tpu.memory_space<vmem>>, vector<1x14x1xf32>
    %1 = vector.shape_cast %0 : vector<1x14x1xf32> to vector<14x1xf32>
    %c0_2 = arith.constant 0 : index
    %c0_3 = arith.constant 0 : index
    %2 = vector.load %arg13[%c0_2, %c0_3] : memref<196x144xf32, #tpu.memory_space<vmem>>, vector<14x1xf32>
    tpu.vector_store %arg13[%c0_2, %c0_3], %1 {strides = array<i32>} : memref<196x144xf32, #tpu.memory_space<vmem>>, vector<14x1xf32>,
    %c0_4 = arith.constant 0 : index
    %c1 = arith.constant 1 : index
    %c0_5 = arith.constant 0 : index
    %3 = vector.load %arg1[%c0_4, %c1, %c0_5] : memref<1x256x1xf32, #tpu.memory_space<vmem>>, vector<1x14x1xf32>
    %4 = vector.shape_cast %3 : vector<1x14x1xf32> to vector<14x1xf32>
    %c0_6 = arith.constant 0 : index
    %c1_7 = arith.constant 1 : index
    %5 = vector.load %arg13[%c0_6, %c1_7] : memref<196x144xf32, #tpu.memory_space<vmem>>, vector<14x1xf32>
    tpu.vector_store %arg13[%c0_6, %c1_7], %4 {strides = array<i32>} : memref<196x144xf32, #tpu.memory_space<vmem>>, vector<14x1xf32>,
    %c0_8 = arith.constant 0 : index
    %c2 = arith.constant 2 : index
    %c0_9 = arith.constant 0 : index
    %6 = vector.load %arg1[%c0_8, %c2, %c0_9] : memref<1x256x1xf32, #tpu.memory_space<vmem>>, vector<1x14x1xf32>
    %7 = vector.shape_cast %6 : vector<1x14x1xf32> to vector<14x1xf32>
    %c0_10 = arith.constant 0 : index
    %c2_11 = arith.constant 2 : index
    %8 = vector.load %arg13[%c0_10, %c2_11] : memref<196x144xf32, #tpu.memory_space<vmem>>, vector<14x1xf32>
    tpu.vector_store %arg13[%c0_10, %c2_11], %7 {strides = array<i32>} : memref<196x144xf32, #tpu.memory_space<vmem>>, vector<14x1xf32>,
    %c0_12 = arith.constant 0 : index
    %c16 = arith.constant 16 : index
    %c0_13 = arith.constant 0 : index
    %9 = vector.load %arg1[%c0_12, %c16, %c0_13] : memref<1x256x1xf32, #tpu.memory_space<vmem>>, vector<1x14x1xf32>
    %10 = vector.shape_cast %9 : vector<1x14x1xf32> to vector<14x1xf32>
    %c0_14 = arith.constant 0 : index
    %c3 = arith.constant 3 : index
    %11 = vector.load %arg13[%c0_14, %c3] : memref<196x144xf32, #tpu.memory_space<vmem>>, vector<14x1xf32>
    tpu.vector_store %arg13[%c0_14, %c3], %10 {strides = array<i32>} : memref<196x144xf32, #tpu.memory_space<vmem>>, vector<14x1xf32>,
    %c0_15 = arith.constant 0 : index
    %c17 = arith.constant 17 : index
    %c0_16 = arith.constant 0 : index
    %12 = vector.load %arg1[%c0_15, %c17, %c0_16] : memref<1x256x1xf32, #tpu.memory_space<vmem>>, vector<1x14x1xf32>
    %13 = vector.shape_cast %12 : vector<1x14x1xf32> to vector<14x1xf32>
    %c0_17 = arith.constant 0 : index
    %c4 = arith.constant 4 : index
    %14 = vector.load %arg13[%c0_17, %c4] : memref<196x144xf32, #tpu.memory_space<vmem>>, vector<14x1xf32>
    tpu.vector_store %arg13[%c0_17, %c4], %13 {strides = array<i32>} : memref<196x144xf32, #tpu.memory_space<vmem>>, vector<14x1xf32>,
    %c0_18 = arith.constant 0 : index
    %c18 = arith.constant 18 : index
    %c0_19 = arith.constant 0 : index
    %15 = vector.load %arg1[%c0_18, %c18, %c0_19] : memref<1x256x1xf32, #tpu.memory_space<vmem>>, vector<1x14x1xf32>
    %16 = vector.shape_cast %15 : vector<1x14x1xf32> to vector<14x1xf32>
    %c0_20 = arith.constant 0 : index
    %c5 = arith.constant 5 : index
    %17 = vector.load %arg13[%c0_20, %c5] : memref<196x144xf32, #tpu.memory_space<vmem>>, vector<14x1xf32>
    tpu.vector_store %arg13[%c0_20, %c5], %16 {strides = array<i32>} : memref<196x144xf32, #tpu.memory_space<vmem>>, vector<14x1xf32>,
    %c0_21 = arith.constant 0 : index
    %c32 = arith.constant 32 : index
    %c0_22 = arith.constant 0 : index
    %18 = vector.load %arg1[%c0_21, %c32, %c0_22] : memref<1x256x1xf32, #tpu.memory_space<vmem>>, vector<1x14x1xf32>
    %19 = vector.shape_cast %18 : vector<1x14x1xf32> to vector<14x1xf32>
    %c0_23 = arith.constant 0 : index
    %c6 = arith.constant 6 : index
    %20 = vector.load %arg13[%c0_23, %c6] : memref<196x144xf32, #tpu.memory_space<vmem>>, vector<14x1xf32>
    tpu.vector_store %arg13[%c0_23, %c6], %19 {strides = array<i32>} : memref<196x144xf32, #tpu.memory_space<vmem>>, vector<14x1xf32>,
    %c0_24 = arith.constant 0 : index
    %c33 = arith.constant 33 : index
    %c0_25 = arith.constant 0 : index
    %21 = vector.load %arg1[%c0_24, %c33, %c0_25] : memref<1x256x1xf32, #tpu.memory_space<vmem>>, vector<1x14x1xf32>
    %22 = vector.shape_cast %21 : vector<1x14x1xf32> to vector<14x1xf32>
    %c0_26 = arith.constant 0 : index
    %c7 = arith.constant 7 : index
    %23 = vector.load %arg13[%c0_26, %c7] : memref<196x144xf32, #tpu.memory_space<vmem>>, vector<14x1xf32>
    tpu.vector_store %arg13[%c0_26, %c7], %22 {strides = array<i32>} : memref<196x144xf32, #tpu.memory_space<vmem>>, vector<14x1xf32>,
    %c0_27 = arith.constant 0 : index
    %c34 = arith.constant 34 : index
    %c0_28 = arith.constant 0 : index
    %24 = vector.load %arg1[%c0_27, %c34, %c0_28] : memref<1x256x1xf32, #tpu.memory_space<vmem>>, vector<1x14x1xf32>
    %25 = vector.shape_cast %24 : vector<1x14x1xf32> to vector<14x1xf32>
    %c0_29 = arith.constant 0 : index
    %c8 = arith.constant 8 : index
    %26 = vector.load %arg13[%c0_29, %c8] : memref<196x144xf32, #tpu.memory_space<vmem>>, vector<14x1xf32>
    tpu.vector_store %arg13[%c0_29, %c8], %25 {strides = array<i32>} : memref<196x144xf32, #tpu.memory_space<vmem>>, vector<14x1xf32>,
    %c0_30 = arith.constant 0 : index
    %c16_31 = arith.constant 16 : index
    %c0_32 = arith.constant 0 : index
    %27 = vector.load %arg1[%c0_30, %c16_31, %c0_32] : memref<1x256x1xf32, #tpu.memory_space<vmem>>, vector<1x14x1xf32>
    %28 = vector.shape_cast %27 : vector<1x14x1xf32> to vector<14x1xf32>
    %c14 = arith.constant 14 : index
    %c0_33 = arith.constant 0 : index
    %29 = vector.load %arg13[%c14, %c0_33] : memref<196x144xf32, #tpu.memory_space<vmem>>, vector<14x1xf32>
    tpu.vector_store %arg13[%c14, %c0_33], %28 {strides = array<i32>} : memref<196x144xf32, #tpu.memory_space<vmem>>, vector<14x1xf32>,
    %c0_34 = arith.constant 0 : index
    %c17_35 = arith.constant 17 : index
    %c0_36 = arith.constant 0 : index
    %30 = vector.load %arg1[%c0_34, %c17_35, %c0_36] : memref<1x256x1xf32, #tpu.memory_space<vmem>>, vector<1x14x1xf32>
    %31 = vector.shape_cast %30 : vector<1x14x1xf32> to vector<14x1xf32>
    %c14_37 = arith.constant 14 : index
    %c1_38 = arith.constant 1 : index
    %32 = vector.load %arg13[%c14_37, %c1_38] : memref<196x144xf32, #tpu.memory_space<vmem>>, vector<14x1xf32>
    tpu.vector_store %arg13[%c14_37, %c1_38], %31 {strides = array<i32>} : memref<196x144xf32, #tpu.memory_space<vmem>>, vector<14x1xf32>,
    %c0_39 = arith.constant 0 : index
    %c18_40 = arith.constant 18 : index
    %c0_41 = arith.constant 0 : index
    %33 = vector.load %arg1[%c0_39, %c18_40, %c0_41] : memref<1x256x1xf32, #tpu.memory_space<vmem>>, vector<1x14x1xf32>
    %34 = vector.shape_cast %33 : vector<1x14x1xf32> to vector<14x1xf32>
    %c14_42 = arith.constant 14 : index
    %c2_43 = arith.constant 2 : index
    %35 = vector.load %arg13[%c14_42, %c2_43] : memref<196x144xf32, #tpu.memory_space<vmem>>, vector<14x1xf32>
    tpu.vector_store %arg13[%c14_42, %c2_43], %34 {strides = array<i32>} : memref<196x144xf32, #tpu.memory_space<vmem>>, vector<14x1xf32>,
    %c0_44 = arith.constant 0 : index
    %c32_45 = arith.constant 32 : index
    %c0_46 = arith.constant 0 : index
    %36 = vector.load %arg1[%c0_44, %c32_45, %c0_46] : memref<1x256x1xf32, #tpu.memory_space<vmem>>, vector<1x14x1xf32>
    %37 = vector.shape_cast %36 : vector<1x14x1xf32> to vector<14x1xf32>
    %c14_47 = arith.constant 14 : index
    %c3_48 = arith.constant 3 : index
    %38 = vector.load %arg13[%c14_47, %c3_48] : memref<196x144xf32, #tpu.memory_space<vmem>>, vector<14x1xf32>
    tpu.vector_store %arg13[%c14_47, %c3_48], %37 {strides = array<i32>} : memref<196x144xf32, #tpu.memory_space<vmem>>, vector<14x1xf32>,
    %c0_49 = arith.constant 0 : index
    %c33_50 = arith.constant 33 : index
    %c0_51 = arith.constant 0 : index
    %39 = vector.load %arg1[%c0_49, %c33_50, %c0_51] : memref<1x256x1xf32, #tpu.memory_space<vmem>>, vector<1x14x1xf32>
    %40 = vector.shape_cast %39 : vector<1x14x1xf32> to vector<14x1xf32>
    %c14_52 = arith.constant 14 : index
    %c4_53 = arith.constant 4 : index
    %41 = vector.load %arg13[%c14_52, %c4_53] : memref<196x144xf32, #tpu.memory_space<vmem>>, vector<14x1xf32>
    tpu.vector_store %arg13[%c14_52, %c4_53], %40 {strides = array<i32>} : memref<196x144xf32, #tpu.memory_space<vmem>>, vector<14x1xf32>,
    %c0_54 = arith.constant 0 : index
    %c34_55 = arith.constant 34 : index
    %c0_56 = arith.constant 0 : index
    %42 = vector.load %arg1[%c0_54, %c34_55, %c0_56] : memref<1x256x1xf32, #tpu.memory_space<vmem>>, vector<1x14x1xf32>
    %43 = vector.shape_cast %42 : vector<1x14x1xf32> to vector<14x1xf32>
    %c14_57 = arith.constant 14 : index
    %c5_58 = arith.constant 5 : index
    %44 = vector.load %arg13[%c14_57, %c5_58] : memref<196x144xf32, #tpu.memory_space<vmem>>, vector<14x1xf32>
    tpu.vector_store %arg13[%c14_57, %c5_58], %43 {strides = array<i32>} : memref<196x144xf32, #tpu.memory_space<vmem>>, vector<14x1xf32>,
    %c0_59 = arith.constant 0 : index
    %c48 = arith.constant 48 : index
    %c0_60 = arith.constant 0 : index
    %45 = vector.load %arg1[%c0_59, %c48, %c0_60] : memref<1x256x1xf32, #tpu.memory_space<vmem>>, vector<1x14x1xf32>
    %46 = vector.shape_cast %45 : vector<1x14x1xf32> to vector<14x1xf32>
    %c14_61 = arith.constant 14 : index
    %c6_62 = arith.constant 6 : index
    %47 = vector.load %arg13[%c14_61, %c6_62] : memref<196x144xf32, #tpu.memory_space<vmem>>, vector<14x1xf32>
    tpu.vector_store %arg13[%c14_61, %c6_62], %46 {strides = array<i32>} : memref<196x144xf32, #tpu.memory_space<vmem>>, vector<14x1xf32>,
    %c0_63 = arith.constant 0 : index
    %c49 = arith.constant 49 : index
    %c0_64 = arith.constant 0 : index
    %48 = vector.load %arg1[%c0_63, %c49, %c0_64] : memref<1x256x1xf32, #tpu.memory_space<vmem>>, vector<1x14x1xf32>
    %49 = vector.shape_cast %48 : vector<1x14x1xf32> to vector<14x1xf32>
    %c14_65 = arith.constant 14 : index
    %c7_66 = arith.constant 7 : index
    %50 = vector.load %arg13[%c14_65, %c7_66] : memref<196x144xf32, #tpu.memory_space<vmem>>, vector<14x1xf32>
    tpu.vector_store %arg13[%c14_65, %c7_66], %49 {strides = array<i32>} : memref<196x144xf32, #tpu.memory_space<vmem>>, vector<14x1xf32>,
    %c0_67 = arith.constant 0 : index
    %c50 = arith.constant 50 : index
    %c0_68 = arith.constant 0 : index
    %51 = vector.load %arg1[%c0_67, %c50, %c0_68] : memref<1x256x1xf32, #tpu.memory_space<vmem>>, vector<1x14x1xf32>
    %52 = vector.shape_cast %51 : vector<1x14x1xf32> to vector<14x1xf32>
    %c14_69 = arith.constant 14 : index
    %c8_70 = arith.constant 8 : index
    %53 = vector.load %arg13[%c14_69, %c8_70] : memref<196x144xf32, #tpu.memory_space<vmem>>, vector<14x1xf32>
    tpu.vector_store %arg13[%c14_69, %c8_70], %52 {strides = array<i32>} : memref<196x144xf32, #tpu.memory_space<vmem>>, vector<14x1xf32>,
    %c0_71 = arith.constant 0 : index
    %c32_72 = arith.constant 32 : index
    %c0_73 = arith.constant 0 : index
    %54 = vector.load %arg1[%c0_71, %c32_72, %c0_73] : memref<1x256x1xf32, #tpu.memory_space<vmem>>, vector<1x14x1xf32>
    %55 = vector.shape_cast %54 : vector<1x14x1xf32> to vector<14x1xf32>
    %c28 = arith.constant 28 : index
    %c0_74 = arith.constant 0 : index
    %56 = vector.load %arg13[%c28, %c0_74] : memref<196x144xf32, #tpu.memory_space<vmem>>, vector<14x1xf32>
    tpu.vector_store %arg13[%c28, %c0_74], %55 {strides = array<i32>} : memref<196x144xf32, #tpu.memory_space<vmem>>, vector<14x1xf32>,
    %c0_75 = arith.constant 0 : index
    %c33_76 = arith.constant 33 : index
    %c0_77 = arith.constant 0 : index
    %57 = vector.load %arg1[%c0_75, %c33_76, %c0_77] : memref<1x256x1xf32, #tpu.memory_space<vmem>>, vector<1x14x1xf32>
    %58 = vector.shape_cast %57 : vector<1x14x1xf32> to vector<14x1xf32>
    %c28_78 = arith.constant 28 : index
    %c1_79 = arith.constant 1 : index
    %59 = vector.load %arg13[%c28_78, %c1_79] : memref<196x144xf32, #tpu.memory_space<vmem>>, vector<14x1xf32>
    tpu.vector_store %arg13[%c28_78, %c1_79], %58 {strides = array<i32>} : memref<196x144xf32, #tpu.memory_space<vmem>>, vector<14x1xf32>,
    %c0_80 = arith.constant 0 : index
    %c34_81 = arith.constant 34 : index
    %c0_82 = arith.constant 0 : index
    %60 = vector.load %arg1[%c0_80, %c34_81, %c0_82] : memref<1x256x1xf32, #tpu.memory_space<vmem>>, vector<1x14x1xf32>
    %61 = vector.shape_cast %60 : vector<1x14x1xf32> to vector<14x1xf32>
    %c28_83 = arith.constant 28 : index
    %c2_84 = arith.constant 2 : index
    %62 = vector.load %arg13[%c28_83, %c2_84] : memref<196x144xf32, #tpu.memory_space<vmem>>, vector<14x1xf32>
    tpu.vector_store %arg13[%c28_83, %c2_84], %61 {strides = array<i32>} : memref<196x144xf32, #tpu.memory_space<vmem>>, vector<14x1xf32>,
    %c0_85 = arith.constant 0 : index
    %c48_86 = arith.constant 48 : index
    %c0_87 = arith.constant 0 : index
    %63 = vector.load %arg1[%c0_85, %c48_86, %c0_87] : memref<1x256x1xf32, #tpu.memory_space<vmem>>, vector<1x14x1xf32>
    %64 = vector.shape_cast %63 : vector<1x14x1xf32> to vector<14x1xf32>
    %c28_88 = arith.constant 28 : index
    %c3_89 = arith.constant 3 : index
    %65 = vector.load %arg13[%c28_88, %c3_89] : memref<196x144xf32, #tpu.memory_space<vmem>>, vector<14x1xf32>
    tpu.vector_store %arg13[%c28_88, %c3_89], %64 {strides = array<i32>} : memref<196x144xf32, #tpu.memory_space<vmem>>, vector<14x1xf32>,
    %c0_90 = arith.constant 0 : index
    %c49_91 = arith.constant 49 : index
    %c0_92 = arith.constant 0 : index
    %66 = vector.load %arg1[%c0_90, %c49_91, %c0_92] : memref<1x256x1xf32, #tpu.memory_space<vmem>>, vector<1x14x1xf32>
    %67 = vector.shape_cast %66 : vector<1x14x1xf32> to vector<14x1xf32>
    %c28_93 = arith.constant 28 : index
    %c4_94 = arith.constant 4 : index
    %68 = vector.load %arg13[%c28_93, %c4_94] : memref<196x144xf32, #tpu.memory_space<vmem>>, vector<14x1xf32>
    tpu.vector_store %arg13[%c28_93, %c4_94], %67 {strides = array<i32>} : memref<196x144xf32, #tpu.memory_space<vmem>>, vector<14x1xf32>,
    %c0_95 = arith.constant 0 : index
    %c50_96 = arith.constant 50 : index
    %c0_97 = arith.constant 0 : index
    %69 = vector.load %arg1[%c0_95, %c50_96, %c0_97] : memref<1x256x1xf32, #tpu.memory_space<vmem>>, vector<1x14x1xf32>
    %70 = vector.shape_cast %69 : vector<1x14x1xf32> to vector<14x1xf32>
    %c28_98 = arith.constant 28 : index
    %c5_99 = arith.constant 5 : index
    %71 = vector.load %arg13[%c28_98, %c5_99] : memref<196x144xf32, #tpu.memory_space<vmem>>, vector<14x1xf32>
    tpu.vector_store %arg13[%c28_98, %c5_99], %70 {strides = array<i32>} : memref<196x144xf32, #tpu.memory_space<vmem>>, vector<14x1xf32>,
    %c0_100 = arith.constant 0 : index
    %c64 = arith.constant 64 : index
    %c0_101 = arith.constant 0 : index
    %72 = vector.load %arg1[%c0_100, %c64, %c0_101] : memref<1x256x1xf32, #tpu.memory_space<vmem>>, vector<1x14x1xf32>
    %73 = vector.shape_cast %72 : vector<1x14x1xf32> to vector<14x1xf32>
    %c28_102 = arith.constant 28 : index
    %c6_103 = arith.constant 6 : index
    %74 = vector.load %arg13[%c28_102, %c6_103] : memref<196x144xf32, #tpu.memory_space<vmem>>, vector<14x1xf32>
    tpu.vector_store %arg13[%c28_102, %c6_103], %73 {strides = array<i32>} : memref<196x144xf32, #tpu.memory_space<vmem>>, vector<14x1xf32>,
    %c0_104 = arith.constant 0 : index
    %c65 = arith.constant 65 : index
    %c0_105 = arith.constant 0 : index
    %75 = vector.load %arg1[%c0_104, %c65, %c0_105] : memref<1x256x1xf32, #tpu.memory_space<vmem>>, vector<1x14x1xf32>
    %76 = vector.shape_cast %75 : vector<1x14x1xf32> to vector<14x1xf32>
    %c28_106 = arith.constant 28 : index
    %c7_107 = arith.constant 7 : index
    %77 = vector.load %arg13[%c28_106, %c7_107] : memref<196x144xf32, #tpu.memory_space<vmem>>, vector<14x1xf32>
    tpu.vector_store %arg13[%c28_106, %c7_107], %76 {strides = array<i32>} : memref<196x144xf32, #tpu.memory_space<vmem>>, vector<14x1xf32>,
    %c0_108 = arith.constant 0 : index
    %c66 = arith.constant 66 : index
    %c0_109 = arith.constant 0 : index
    %78 = vector.load %arg1[%c0_108, %c66, %c0_109] : memref<1x256x1xf32, #tpu.memory_space<vmem>>, vector<1x14x1xf32>
    %79 = vector.shape_cast %78 : vector<1x14x1xf32> to vector<14x1xf32>
    %c28_110 = arith.constant 28 : index
    %c8_111 = arith.constant 8 : index
    %80 = vector.load %arg13[%c28_110, %c8_111] : memref<196x144xf32, #tpu.memory_space<vmem>>, vector<14x1xf32>
    tpu.vector_store %arg13[%c28_110, %c8_111], %79 {strides = array<i32>} : memref<196x144xf32, #tpu.memory_space<vmem>>, vector<14x1xf32>,
    %c0_112 = arith.constant 0 : index
    %c48_113 = arith.constant 48 : index
    %c0_114 = arith.constant 0 : index
    %81 = vector.load %arg1[%c0_112, %c48_113, %c0_114] : memref<1x256x1xf32, #tpu.memory_space<vmem>>, vector<1x14x1xf32>
    %82 = vector.shape_cast %81 : vector<1x14x1xf32> to vector<14x1xf32>
    %c42 = arith.constant 42 : index
    %c0_115 = arith.constant 0 : index
    %83 = vector.load %arg13[%c42, %c0_115] : memref<196x144xf32, #tpu.memory_space<vmem>>, vector<14x1xf32>
    tpu.vector_store %arg13[%c42, %c0_115], %82 {strides = array<i32>} : memref<196x144xf32, #tpu.memory_space<vmem>>, vector<14x1xf32>,
    %c0_116 = arith.constant 0 : index
    %c49_117 = arith.constant 49 : index
    %c0_118 = arith.constant 0 : index
    %84 = vector.load %arg1[%c0_116, %c49_117, %c0_118] : memref<1x256x1xf32, #tpu.memory_space<vmem>>, vector<1x14x1xf32>
    %85 = vector.shape_cast %84 : vector<1x14x1xf32> to vector<14x1xf32>
    %c42_119 = arith.constant 42 : index
    %c1_120 = arith.constant 1 : index
    %86 = vector.load %arg13[%c42_119, %c1_120] : memref<196x144xf32, #tpu.memory_space<vmem>>, vector<14x1xf32>
    tpu.vector_store %arg13[%c42_119, %c1_120], %85 {strides = array<i32>} : memref<196x144xf32, #tpu.memory_space<vmem>>, vector<14x1xf32>,
    %c0_121 = arith.constant 0 : index
    %c50_122 = arith.constant 50 : index
    %c0_123 = arith.constant 0 : index
    %87 = vector.load %arg1[%c0_121, %c50_122, %c0_123] : memref<1x256x1xf32, #tpu.memory_space<vmem>>, vector<1x14x1xf32>
    %88 = vector.shape_cast %87 : vector<1x14x1xf32> to vector<14x1xf32>
    %c42_124 = arith.constant 42 : index
    %c2_125 = arith.constant 2 : index
    %89 = vector.load %arg13[%c42_124, %c2_125] : memref<196x144xf32, #tpu.memory_space<vmem>>, vector<14x1xf32>
    tpu.vector_store %arg13[%c42_124, %c2_125], %88 {strides = array<i32>} : memref<196x144xf32, #tpu.memory_space<vmem>>, vector<14x1xf32>,
    %c0_126 = arith.constant 0 : index
    %c64_127 = arith.constant 64 : index
    %c0_128 = arith.constant 0 : index
    %90 = vector.load %arg1[%c0_126, %c64_127, %c0_128] : memref<1x256x1xf32, #tpu.memory_space<vmem>>, vector<1x14x1xf32>
    %91 = vector.shape_cast %90 : vector<1x14x1xf32> to vector<14x1xf32>
    %c42_129 = arith.constant 42 : index
    %c3_130 = arith.constant 3 : index
    %92 = vector.load %arg13[%c42_129, %c3_130] : memref<196x144xf32, #tpu.memory_space<vmem>>, vector<14x1xf32>
    tpu.vector_store %arg13[%c42_129, %c3_130], %91 {strides = array<i32>} : memref<196x144xf32, #tpu.memory_space<vmem>>, vector<14x1xf32>,
    %c0_131 = arith.constant 0 : index
    %c65_132 = arith.constant 65 : index
    %c0_133 = arith.constant 0 : index
    %93 = vector.load %arg1[%c0_131, %c65_132, %c0_133] : memref<1x256x1xf32, #tpu.memory_space<vmem>>, vector<1x14x1xf32>
    %94 = vector.shape_cast %93 : vector<1x14x1xf32> to vector<14x1xf32>
    %c42_134 = arith.constant 42 : index
    %c4_135 = arith.constant 4 : index
    %95 = vector.load %arg13[%c42_134, %c4_135] : memref<196x144xf32, #tpu.memory_space<vmem>>, vector<14x1xf32>
    tpu.vector_store %arg13[%c42_134, %c4_135], %94 {strides = array<i32>} : memref<196x144xf32, #tpu.memory_space<vmem>>, vector<14x1xf32>,
    %c0_136 = arith.constant 0 : index
    %c66_137 = arith.constant 66 : index
    %c0_138 = arith.constant 0 : index
    %96 = vector.load %arg1[%c0_136, %c66_137, %c0_138] : memref<1x256x1xf32, #tpu.memory_space<vmem>>, vector<1x14x1xf32>
    %97 = vector.shape_cast %96 : vector<1x14x1xf32> to vector<14x1xf32>
    %c42_139 = arith.constant 42 : index
    %c5_140 = arith.constant 5 : index
    %98 = vector.load %arg13[%c42_139, %c5_140] : memref<196x144xf32, #tpu.memory_space<vmem>>, vector<14x1xf32>
    tpu.vector_store %arg13[%c42_139, %c5_140], %97 {strides = array<i32>} : memref<196x144xf32, #tpu.memory_space<vmem>>, vector<14x1xf32>,
    %c0_141 = arith.constant 0 : index
    %c80 = arith.constant 80 : index
    %c0_142 = arith.constant 0 : index
    %99 = vector.load %arg1[%c0_141, %c80, %c0_142] : memref<1x256x1xf32, #tpu.memory_space<vmem>>, vector<1x14x1xf32>
    %100 = vector.shape_cast %99 : vector<1x14x1xf32> to vector<14x1xf32>
    %c42_143 = arith.constant 42 : index
    %c6_144 = arith.constant 6 : index
    %101 = vector.load %arg13[%c42_143, %c6_144] : memref<196x144xf32, #tpu.memory_space<vmem>>, vector<14x1xf32>
    tpu.vector_store %arg13[%c42_143, %c6_144], %100 {strides = array<i32>} : memref<196x144xf32, #tpu.memory_space<vmem>>, vector<14x1xf32>,
    %c0_145 = arith.constant 0 : index
    %c81 = arith.constant 81 : index
    %c0_146 = arith.constant 0 : index
    %102 = vector.load %arg1[%c0_145, %c81, %c0_146] : memref<1x256x1xf32, #tpu.memory_space<vmem>>, vector<1x14x1xf32>
    %103 = vector.shape_cast %102 : vector<1x14x1xf32> to vector<14x1xf32>
    %c42_147 = arith.constant 42 : index
    %c7_148 = arith.constant 7 : index
    %104 = vector.load %arg13[%c42_147, %c7_148] : memref<196x144xf32, #tpu.memory_space<vmem>>, vector<14x1xf32>
    tpu.vector_store %arg13[%c42_147, %c7_148], %103 {strides = array<i32>} : memref<196x144xf32, #tpu.memory_space<vmem>>, vector<14x1xf32>,
    %c0_149 = arith.constant 0 : index
    %c82 = arith.constant 82 : index
    %c0_150 = arith.constant 0 : index
    %105 = vector.load %arg1[%c0_149, %c82, %c0_150] : memref<1x256x1xf32, #tpu.memory_space<vmem>>, vector<1x14x1xf32>
    %106 = vector.shape_cast %105 : vector<1x14x1xf32> to vector<14x1xf32>
    %c42_151 = arith.constant 42 : index
    %c8_152 = arith.constant 8 : index
    %107 = vector.load %arg13[%c42_151, %c8_152] : memref<196x144xf32, #tpu.memory_space<vmem>>, vector<14x1xf32>
    tpu.vector_store %arg13[%c42_151, %c8_152], %106 {strides = array<i32>} : memref<196x144xf32, #tpu.memory_space<vmem>>, vector<14x1xf32>,
    %c0_153 = arith.constant 0 : index
    %c64_154 = arith.constant 64 : index
    %c0_155 = arith.constant 0 : index
    %108 = vector.load %arg1[%c0_153, %c64_154, %c0_155] : memref<1x256x1xf32, #tpu.memory_space<vmem>>, vector<1x14x1xf32>
    %109 = vector.shape_cast %108 : vector<1x14x1xf32> to vector<14x1xf32>
    %c56 = arith.constant 56 : index
    %c0_156 = arith.constant 0 : index
    %110 = vector.load %arg13[%c56, %c0_156] : memref<196x144xf32, #tpu.memory_space<vmem>>, vector<14x1xf32>
    tpu.vector_store %arg13[%c56, %c0_156], %109 {strides = array<i32>} : memref<196x144xf32, #tpu.memory_space<vmem>>, vector<14x1xf32>,
    %c0_157 = arith.constant 0 : index
    %c65_158 = arith.constant 65 : index
    %c0_159 = arith.constant 0 : index
    %111 = vector.load %arg1[%c0_157, %c65_158, %c0_159] : memref<1x256x1xf32, #tpu.memory_space<vmem>>, vector<1x14x1xf32>
    %112 = vector.shape_cast %111 : vector<1x14x1xf32> to vector<14x1xf32>
    %c56_160 = arith.constant 56 : index
    %c1_161 = arith.constant 1 : index
    %113 = vector.load %arg13[%c56_160, %c1_161] : memref<196x144xf32, #tpu.memory_space<vmem>>, vector<14x1xf32>
    tpu.vector_store %arg13[%c56_160, %c1_161], %112 {strides = array<i32>} : memref<196x144xf32, #tpu.memory_space<vmem>>, vector<14x1xf32>,
    %c0_162 = arith.constant 0 : index
    %c66_163 = arith.constant 66 : index
    %c0_164 = arith.constant 0 : index
    %114 = vector.load %arg1[%c0_162, %c66_163, %c0_164] : memref<1x256x1xf32, #tpu.memory_space<vmem>>, vector<1x14x1xf32>
    %115 = vector.shape_cast %114 : vector<1x14x1xf32> to vector<14x1xf32>
    %c56_165 = arith.constant 56 : index
    %c2_166 = arith.constant 2 : index
    %116 = vector.load %arg13[%c56_165, %c2_166] : memref<196x144xf32, #tpu.memory_space<vmem>>, vector<14x1xf32>
    tpu.vector_store %arg13[%c56_165, %c2_166], %115 {strides = array<i32>} : memref<196x144xf32, #tpu.memory_space<vmem>>, vector<14x1xf32>,
    %c0_167 = arith.constant 0 : index
    %c80_168 = arith.constant 80 : index
    %c0_169 = arith.constant 0 : index
    %117 = vector.load %arg1[%c0_167, %c80_168, %c0_169] : memref<1x256x1xf32, #tpu.memory_space<vmem>>, vector<1x14x1xf32>
    %118 = vector.shape_cast %117 : vector<1x14x1xf32> to vector<14x1xf32>
    %c56_170 = arith.constant 56 : index
    %c3_171 = arith.constant 3 : index
    %119 = vector.load %arg13[%c56_170, %c3_171] : memref<196x144xf32, #tpu.memory_space<vmem>>, vector<14x1xf32>
    tpu.vector_store %arg13[%c56_170, %c3_171], %118 {strides = array<i32>} : memref<196x144xf32, #tpu.memory_space<vmem>>, vector<14x1xf32>,
    %c0_172 = arith.constant 0 : index
    %c81_173 = arith.constant 81 : index
    %c0_174 = arith.constant 0 : index
    %120 = vector.load %arg1[%c0_172, %c81_173, %c0_174] : memref<1x256x1xf32, #tpu.memory_space<vmem>>, vector<1x14x1xf32>
    %121 = vector.shape_cast %120 : vector<1x14x1xf32> to vector<14x1xf32>
    %c56_175 = arith.constant 56 : index
    %c4_176 = arith.constant 4 : index
    %122 = vector.load %arg13[%c56_175, %c4_176] : memref<196x144xf32, #tpu.memory_space<vmem>>, vector<14x1xf32>
    tpu.vector_store %arg13[%c56_175, %c4_176], %121 {strides = array<i32>} : memref<196x144xf32, #tpu.memory_space<vmem>>, vector<14x1xf32>,
    %c0_177 = arith.constant 0 : index
    %c82_178 = arith.constant 82 : index
    %c0_179 = arith.constant 0 : index
    %123 = vector.load %arg1[%c0_177, %c82_178, %c0_179] : memref<1x256x1xf32, #tpu.memory_space<vmem>>, vector<1x14x1xf32>
    %124 = vector.shape_cast %123 : vector<1x14x1xf32> to vector<14x1xf32>
    %c56_180 = arith.constant 56 : index
    %c5_181 = arith.constant 5 : index
    %125 = vector.load %arg13[%c56_180, %c5_181] : memref<196x144xf32, #tpu.memory_space<vmem>>, vector<14x1xf32>
    tpu.vector_store %arg13[%c56_180, %c5_181], %124 {strides = array<i32>} : memref<196x144xf32, #tpu.memory_space<vmem>>, vector<14x1xf32>,
    %c0_182 = arith.constant 0 : index
    %c96 = arith.constant 96 : index
    %c0_183 = arith.constant 0 : index
    %126 = vector.load %arg1[%c0_182, %c96, %c0_183] : memref<1x256x1xf32, #tpu.memory_space<vmem>>, vector<1x14x1xf32>
    %127 = vector.shape_cast %126 : vector<1x14x1xf32> to vector<14x1xf32>
    %c56_184 = arith.constant 56 : index
    %c6_185 = arith.constant 6 : index
    %128 = vector.load %arg13[%c56_184, %c6_185] : memref<196x144xf32, #tpu.memory_space<vmem>>, vector<14x1xf32>
    tpu.vector_store %arg13[%c56_184, %c6_185], %127 {strides = array<i32>} : memref<196x144xf32, #tpu.memory_space<vmem>>, vector<14x1xf32>,
    %c0_186 = arith.constant 0 : index
    %c97 = arith.constant 97 : index
    %c0_187 = arith.constant 0 : index
    %129 = vector.load %arg1[%c0_186, %c97, %c0_187] : memref<1x256x1xf32, #tpu.memory_space<vmem>>, vector<1x14x1xf32>
    %130 = vector.shape_cast %129 : vector<1x14x1xf32> to vector<14x1xf32>
    %c56_188 = arith.constant 56 : index
    %c7_189 = arith.constant 7 : index
    %131 = vector.load %arg13[%c56_188, %c7_189] : memref<196x144xf32, #tpu.memory_space<vmem>>, vector<14x1xf32>
    tpu.vector_store %arg13[%c56_188, %c7_189], %130 {strides = array<i32>} : memref<196x144xf32, #tpu.memory_space<vmem>>, vector<14x1xf32>,
    %c0_190 = arith.constant 0 : index
    %c98 = arith.constant 98 : index
    %c0_191 = arith.constant 0 : index
    %132 = vector.load %arg1[%c0_190, %c98, %c0_191] : memref<1x256x1xf32, #tpu.memory_space<vmem>>, vector<1x14x1xf32>
    %133 = vector.shape_cast %132 : vector<1x14x1xf32> to vector<14x1xf32>
    %c56_192 = arith.constant 56 : index
    %c8_193 = arith.constant 8 : index
    %134 = vector.load %arg13[%c56_192, %c8_193] : memref<196x144xf32, #tpu.memory_space<vmem>>, vector<14x1xf32>
    tpu.vector_store %arg13[%c56_192, %c8_193], %133 {strides = array<i32>} : memref<196x144xf32, #tpu.memory_space<vmem>>, vector<14x1xf32>,
    %c0_194 = arith.constant 0 : index
    %c80_195 = arith.constant 80 : index
    %c0_196 = arith.constant 0 : index
    %135 = vector.load %arg1[%c0_194, %c80_195, %c0_196] : memref<1x256x1xf32, #tpu.memory_space<vmem>>, vector<1x14x1xf32>
    %136 = vector.shape_cast %135 : vector<1x14x1xf32> to vector<14x1xf32>
    %c70 = arith.constant 70 : index
    %c0_197 = arith.constant 0 : index
    %137 = vector.load %arg13[%c70, %c0_197] : memref<196x144xf32, #tpu.memory_space<vmem>>, vector<14x1xf32>
    tpu.vector_store %arg13[%c70, %c0_197], %136 {strides = array<i32>} : memref<196x144xf32, #tpu.memory_space<vmem>>, vector<14x1xf32>,
    %c0_198 = arith.constant 0 : index
    %c81_199 = arith.constant 81 : index
    %c0_200 = arith.constant 0 : index
    %138 = vector.load %arg1[%c0_198, %c81_199, %c0_200] : memref<1x256x1xf32, #tpu.memory_space<vmem>>, vector<1x14x1xf32>
    %139 = vector.shape_cast %138 : vector<1x14x1xf32> to vector<14x1xf32>
    %c70_201 = arith.constant 70 : index
    %c1_202 = arith.constant 1 : index
    %140 = vector.load %arg13[%c70_201, %c1_202] : memref<196x144xf32, #tpu.memory_space<vmem>>, vector<14x1xf32>
    tpu.vector_store %arg13[%c70_201, %c1_202], %139 {strides = array<i32>} : memref<196x144xf32, #tpu.memory_space<vmem>>, vector<14x1xf32>,
    %c0_203 = arith.constant 0 : index
    %c82_204 = arith.constant 82 : index
    %c0_205 = arith.constant 0 : index
    %141 = vector.load %arg1[%c0_203, %c82_204, %c0_205] : memref<1x256x1xf32, #tpu.memory_space<vmem>>, vector<1x14x1xf32>
    %142 = vector.shape_cast %141 : vector<1x14x1xf32> to vector<14x1xf32>
    %c70_206 = arith.constant 70 : index
    %c2_207 = arith.constant 2 : index
    %143 = vector.load %arg13[%c70_206, %c2_207] : memref<196x144xf32, #tpu.memory_space<vmem>>, vector<14x1xf32>
    tpu.vector_store %arg13[%c70_206, %c2_207], %142 {strides = array<i32>} : memref<196x144xf32, #tpu.memory_space<vmem>>, vector<14x1xf32>,
    %c0_208 = arith.constant 0 : index
    %c96_209 = arith.constant 96 : index
    %c0_210 = arith.constant 0 : index
    %144 = vector.load %arg1[%c0_208, %c96_209, %c0_210] : memref<1x256x1xf32, #tpu.memory_space<vmem>>, vector<1x14x1xf32>
    %145 = vector.shape_cast %144 : vector<1x14x1xf32> to vector<14x1xf32>
    %c70_211 = arith.constant 70 : index
    %c3_212 = arith.constant 3 : index
    %146 = vector.load %arg13[%c70_211, %c3_212] : memref<196x144xf32, #tpu.memory_space<vmem>>, vector<14x1xf32>
    tpu.vector_store %arg13[%c70_211, %c3_212], %145 {strides = array<i32>} : memref<196x144xf32, #tpu.memory_space<vmem>>, vector<14x1xf32>,
    %c0_213 = arith.constant 0 : index
    %c97_214 = arith.constant 97 : index
    %c0_215 = arith.constant 0 : index
    %147 = vector.load %arg1[%c0_213, %c97_214, %c0_215] : memref<1x256x1xf32, #tpu.memory_space<vmem>>, vector<1x14x1xf32>
    %148 = vector.shape_cast %147 : vector<1x14x1xf32> to vector<14x1xf32>
    %c70_216 = arith.constant 70 : index
    %c4_217 = arith.constant 4 : index
    %149 = vector.load %arg13[%c70_216, %c4_217] : memref<196x144xf32, #tpu.memory_space<vmem>>, vector<14x1xf32>
    tpu.vector_store %arg13[%c70_216, %c4_217], %148 {strides = array<i32>} : memref<196x144xf32, #tpu.memory_space<vmem>>, vector<14x1xf32>,
    %c0_218 = arith.constant 0 : index
    %c98_219 = arith.constant 98 : index
    %c0_220 = arith.constant 0 : index
    %150 = vector.load %arg1[%c0_218, %c98_219, %c0_220] : memref<1x256x1xf32, #tpu.memory_space<vmem>>, vector<1x14x1xf32>
    %151 = vector.shape_cast %150 : vector<1x14x1xf32> to vector<14x1xf32>
    %c70_221 = arith.constant 70 : index
    %c5_222 = arith.constant 5 : index
    %152 = vector.load %arg13[%c70_221, %c5_222] : memref<196x144xf32, #tpu.memory_space<vmem>>, vector<14x1xf32>
    tpu.vector_store %arg13[%c70_221, %c5_222], %151 {strides = array<i32>} : memref<196x144xf32, #tpu.memory_space<vmem>>, vector<14x1xf32>,
    %c0_223 = arith.constant 0 : index
    %c112 = arith.constant 112 : index
    %c0_224 = arith.constant 0 : index
    %153 = vector.load %arg1[%c0_223, %c112, %c0_224] : memref<1x256x1xf32, #tpu.memory_space<vmem>>, vector<1x14x1xf32>
    %154 = vector.shape_cast %153 : vector<1x14x1xf32> to vector<14x1xf32>
    %c70_225 = arith.constant 70 : index
    %c6_226 = arith.constant 6 : index
    %155 = vector.load %arg13[%c70_225, %c6_226] : memref<196x144xf32, #tpu.memory_space<vmem>>, vector<14x1xf32>
    tpu.vector_store %arg13[%c70_225, %c6_226], %154 {strides = array<i32>} : memref<196x144xf32, #tpu.memory_space<vmem>>, vector<14x1xf32>,
    %c0_227 = arith.constant 0 : index
    %c113 = arith.constant 113 : index
    %c0_228 = arith.constant 0 : index
    %156 = vector.load %arg1[%c0_227, %c113, %c0_228] : memref<1x256x1xf32, #tpu.memory_space<vmem>>, vector<1x14x1xf32>
    %157 = vector.shape_cast %156 : vector<1x14x1xf32> to vector<14x1xf32>
    %c70_229 = arith.constant 70 : index
    %c7_230 = arith.constant 7 : index
    %158 = vector.load %arg13[%c70_229, %c7_230] : memref<196x144xf32, #tpu.memory_space<vmem>>, vector<14x1xf32>
    tpu.vector_store %arg13[%c70_229, %c7_230], %157 {strides = array<i32>} : memref<196x144xf32, #tpu.memory_space<vmem>>, vector<14x1xf32>,
    %c0_231 = arith.constant 0 : index
    %c114 = arith.constant 114 : index
    %c0_232 = arith.constant 0 : index
    %159 = vector.load %arg1[%c0_231, %c114, %c0_232] : memref<1x256x1xf32, #tpu.memory_space<vmem>>, vector<1x14x1xf32>
    %160 = vector.shape_cast %159 : vector<1x14x1xf32> to vector<14x1xf32>
    %c70_233 = arith.constant 70 : index
    %c8_234 = arith.constant 8 : index
    %161 = vector.load %arg13[%c70_233, %c8_234] : memref<196x144xf32, #tpu.memory_space<vmem>>, vector<14x1xf32>
    tpu.vector_store %arg13[%c70_233, %c8_234], %160 {strides = array<i32>} : memref<196x144xf32, #tpu.memory_space<vmem>>, vector<14x1xf32>,
    %c0_235 = arith.constant 0 : index
    %c96_236 = arith.constant 96 : index
    %c0_237 = arith.constant 0 : index
    %162 = vector.load %arg1[%c0_235, %c96_236, %c0_237] : memref<1x256x1xf32, #tpu.memory_space<vmem>>, vector<1x14x1xf32>
    %163 = vector.shape_cast %162 : vector<1x14x1xf32> to vector<14x1xf32>
    %c84 = arith.constant 84 : index
    %c0_238 = arith.constant 0 : index
    %164 = vector.load %arg13[%c84, %c0_238] : memref<196x144xf32, #tpu.memory_space<vmem>>, vector<14x1xf32>
    tpu.vector_store %arg13[%c84, %c0_238], %163 {strides = array<i32>} : memref<196x144xf32, #tpu.memory_space<vmem>>, vector<14x1xf32>,
    %c0_239 = arith.constant 0 : index
    %c97_240 = arith.constant 97 : index
    %c0_241 = arith.constant 0 : index
    %165 = vector.load %arg1[%c0_239, %c97_240, %c0_241] : memref<1x256x1xf32, #tpu.memory_space<vmem>>, vector<1x14x1xf32>
    %166 = vector.shape_cast %165 : vector<1x14x1xf32> to vector<14x1xf32>
    %c84_242 = arith.constant 84 : index
    %c1_243 = arith.constant 1 : index
    %167 = vector.load %arg13[%c84_242, %c1_243] : memref<196x144xf32, #tpu.memory_space<vmem>>, vector<14x1xf32>
    tpu.vector_store %arg13[%c84_242, %c1_243], %166 {strides = array<i32>} : memref<196x144xf32, #tpu.memory_space<vmem>>, vector<14x1xf32>,
    %c0_244 = arith.constant 0 : index
    %c98_245 = arith.constant 98 : index
    %c0_246 = arith.constant 0 : index
    %168 = vector.load %arg1[%c0_244, %c98_245, %c0_246] : memref<1x256x1xf32, #tpu.memory_space<vmem>>, vector<1x14x1xf32>
    %169 = vector.shape_cast %168 : vector<1x14x1xf32> to vector<14x1xf32>
    %c84_247 = arith.constant 84 : index
    %c2_248 = arith.constant 2 : index
    %170 = vector.load %arg13[%c84_247, %c2_248] : memref<196x144xf32, #tpu.memory_space<vmem>>, vector<14x1xf32>
    tpu.vector_store %arg13[%c84_247, %c2_248], %169 {strides = array<i32>} : memref<196x144xf32, #tpu.memory_space<vmem>>, vector<14x1xf32>,
    %c0_249 = arith.constant 0 : index
    %c112_250 = arith.constant 112 : index
    %c0_251 = arith.constant 0 : index
    %171 = vector.load %arg1[%c0_249, %c112_250, %c0_251] : memref<1x256x1xf32, #tpu.memory_space<vmem>>, vector<1x14x1xf32>
    %172 = vector.shape_cast %171 : vector<1x14x1xf32> to vector<14x1xf32>
    %c84_252 = arith.constant 84 : index
    %c3_253 = arith.constant 3 : index
    %173 = vector.load %arg13[%c84_252, %c3_253] : memref<196x144xf32, #tpu.memory_space<vmem>>, vector<14x1xf32>
    tpu.vector_store %arg13[%c84_252, %c3_253], %172 {strides = array<i32>} : memref<196x144xf32, #tpu.memory_space<vmem>>, vector<14x1xf32>,
    %c0_254 = arith.constant 0 : index
    %c113_255 = arith.constant 113 : index
    %c0_256 = arith.constant 0 : index
    %174 = vector.load %arg1[%c0_254, %c113_255, %c0_256] : memref<1x256x1xf32, #tpu.memory_space<vmem>>, vector<1x14x1xf32>
    %175 = vector.shape_cast %174 : vector<1x14x1xf32> to vector<14x1xf32>
    %c84_257 = arith.constant 84 : index
    %c4_258 = arith.constant 4 : index
    %176 = vector.load %arg13[%c84_257, %c4_258] : memref<196x144xf32, #tpu.memory_space<vmem>>, vector<14x1xf32>
    tpu.vector_store %arg13[%c84_257, %c4_258], %175 {strides = array<i32>} : memref<196x144xf32, #tpu.memory_space<vmem>>, vector<14x1xf32>,
    %c0_259 = arith.constant 0 : index
    %c114_260 = arith.constant 114 : index
    %c0_261 = arith.constant 0 : index
    %177 = vector.load %arg1[%c0_259, %c114_260, %c0_261] : memref<1x256x1xf32, #tpu.memory_space<vmem>>, vector<1x14x1xf32>
    %178 = vector.shape_cast %177 : vector<1x14x1xf32> to vector<14x1xf32>
    %c84_262 = arith.constant 84 : index
    %c5_263 = arith.constant 5 : index
    %179 = vector.load %arg13[%c84_262, %c5_263] : memref<196x144xf32, #tpu.memory_space<vmem>>, vector<14x1xf32>
    tpu.vector_store %arg13[%c84_262, %c5_263], %178 {strides = array<i32>} : memref<196x144xf32, #tpu.memory_space<vmem>>, vector<14x1xf32>,
    %c0_264 = arith.constant 0 : index
    %c128 = arith.constant 128 : index
    %c0_265 = arith.constant 0 : index
    %180 = vector.load %arg1[%c0_264, %c128, %c0_265] : memref<1x256x1xf32, #tpu.memory_space<vmem>>, vector<1x14x1xf32>
    %181 = vector.shape_cast %180 : vector<1x14x1xf32> to vector<14x1xf32>
    %c84_266 = arith.constant 84 : index
    %c6_267 = arith.constant 6 : index
    %182 = vector.load %arg13[%c84_266, %c6_267] : memref<196x144xf32, #tpu.memory_space<vmem>>, vector<14x1xf32>
    tpu.vector_store %arg13[%c84_266, %c6_267], %181 {strides = array<i32>} : memref<196x144xf32, #tpu.memory_space<vmem>>, vector<14x1xf32>,
    %c0_268 = arith.constant 0 : index
    %c129 = arith.constant 129 : index
    %c0_269 = arith.constant 0 : index
    %183 = vector.load %arg1[%c0_268, %c129, %c0_269] : memref<1x256x1xf32, #tpu.memory_space<vmem>>, vector<1x14x1xf32>
    %184 = vector.shape_cast %183 : vector<1x14x1xf32> to vector<14x1xf32>
    %c84_270 = arith.constant 84 : index
    %c7_271 = arith.constant 7 : index
    %185 = vector.load %arg13[%c84_270, %c7_271] : memref<196x144xf32, #tpu.memory_space<vmem>>, vector<14x1xf32>
    tpu.vector_store %arg13[%c84_270, %c7_271], %184 {strides = array<i32>} : memref<196x144xf32, #tpu.memory_space<vmem>>, vector<14x1xf32>,
    %c0_272 = arith.constant 0 : index
    %c130 = arith.constant 130 : index
    %c0_273 = arith.constant 0 : index
    %186 = vector.load %arg1[%c0_272, %c130, %c0_273] : memref<1x256x1xf32, #tpu.memory_space<vmem>>, vector<1x14x1xf32>
    %187 = vector.shape_cast %186 : vector<1x14x1xf32> to vector<14x1xf32>
    %c84_274 = arith.constant 84 : index
    %c8_275 = arith.constant 8 : index
    %188 = vector.load %arg13[%c84_274, %c8_275] : memref<196x144xf32, #tpu.memory_space<vmem>>, vector<14x1xf32>
    tpu.vector_store %arg13[%c84_274, %c8_275], %187 {strides = array<i32>} : memref<196x144xf32, #tpu.memory_space<vmem>>, vector<14x1xf32>,
    %c0_276 = arith.constant 0 : index
    %c112_277 = arith.constant 112 : index
    %c0_278 = arith.constant 0 : index
    %189 = vector.load %arg1[%c0_276, %c112_277, %c0_278] : memref<1x256x1xf32, #tpu.memory_space<vmem>>, vector<1x14x1xf32>
    %190 = vector.shape_cast %189 : vector<1x14x1xf32> to vector<14x1xf32>
    %c98_279 = arith.constant 98 : index
    %c0_280 = arith.constant 0 : index
    %191 = vector.load %arg13[%c98_279, %c0_280] : memref<196x144xf32, #tpu.memory_space<vmem>>, vector<14x1xf32>
    tpu.vector_store %arg13[%c98_279, %c0_280], %190 {strides = array<i32>} : memref<196x144xf32, #tpu.memory_space<vmem>>, vector<14x1xf32>,
    %c0_281 = arith.constant 0 : index
    %c113_282 = arith.constant 113 : index
    %c0_283 = arith.constant 0 : index
    %192 = vector.load %arg1[%c0_281, %c113_282, %c0_283] : memref<1x256x1xf32, #tpu.memory_space<vmem>>, vector<1x14x1xf32>
    %193 = vector.shape_cast %192 : vector<1x14x1xf32> to vector<14x1xf32>
    %c98_284 = arith.constant 98 : index
    %c1_285 = arith.constant 1 : index
    %194 = vector.load %arg13[%c98_284, %c1_285] : memref<196x144xf32, #tpu.memory_space<vmem>>, vector<14x1xf32>
    tpu.vector_store %arg13[%c98_284, %c1_285], %193 {strides = array<i32>} : memref<196x144xf32, #tpu.memory_space<vmem>>, vector<14x1xf32>,
    %c0_286 = arith.constant 0 : index
    %c114_287 = arith.constant 114 : index
    %c0_288 = arith.constant 0 : index
    %195 = vector.load %arg1[%c0_286, %c114_287, %c0_288] : memref<1x256x1xf32, #tpu.memory_space<vmem>>, vector<1x14x1xf32>
    %196 = vector.shape_cast %195 : vector<1x14x1xf32> to vector<14x1xf32>
    %c98_289 = arith.constant 98 : index
    %c2_290 = arith.constant 2 : index
    %197 = vector.load %arg13[%c98_289, %c2_290] : memref<196x144xf32, #tpu.memory_space<vmem>>, vector<14x1xf32>
    tpu.vector_store %arg13[%c98_289, %c2_290], %196 {strides = array<i32>} : memref<196x144xf32, #tpu.memory_space<vmem>>, vector<14x1xf32>,
    %c0_291 = arith.constant 0 : index
    %c128_292 = arith.constant 128 : index
    %c0_293 = arith.constant 0 : index
    %198 = vector.load %arg1[%c0_291, %c128_292, %c0_293] : memref<1x256x1xf32, #tpu.memory_space<vmem>>, vector<1x14x1xf32>
    %199 = vector.shape_cast %198 : vector<1x14x1xf32> to vector<14x1xf32>
    %c98_294 = arith.constant 98 : index
    %c3_295 = arith.constant 3 : index
    %200 = vector.load %arg13[%c98_294, %c3_295] : memref<196x144xf32, #tpu.memory_space<vmem>>, vector<14x1xf32>
    tpu.vector_store %arg13[%c98_294, %c3_295], %199 {strides = array<i32>} : memref<196x144xf32, #tpu.memory_space<vmem>>, vector<14x1xf32>,
    %c0_296 = arith.constant 0 : index
    %c129_297 = arith.constant 129 : index
    %c0_298 = arith.constant 0 : index
    %201 = vector.load %arg1[%c0_296, %c129_297, %c0_298] : memref<1x256x1xf32, #tpu.memory_space<vmem>>, vector<1x14x1xf32>
    %202 = vector.shape_cast %201 : vector<1x14x1xf32> to vector<14x1xf32>
    %c98_299 = arith.constant 98 : index
    %c4_300 = arith.constant 4 : index
    %203 = vector.load %arg13[%c98_299, %c4_300] : memref<196x144xf32, #tpu.memory_space<vmem>>, vector<14x1xf32>
    tpu.vector_store %arg13[%c98_299, %c4_300], %202 {strides = array<i32>} : memref<196x144xf32, #tpu.memory_space<vmem>>, vector<14x1xf32>,
    %c0_301 = arith.constant 0 : index
    %c130_302 = arith.constant 130 : index
    %c0_303 = arith.constant 0 : index
    %204 = vector.load %arg1[%c0_301, %c130_302, %c0_303] : memref<1x256x1xf32, #tpu.memory_space<vmem>>, vector<1x14x1xf32>
    %205 = vector.shape_cast %204 : vector<1x14x1xf32> to vector<14x1xf32>
    %c98_304 = arith.constant 98 : index
    %c5_305 = arith.constant 5 : index
    %206 = vector.load %arg13[%c98_304, %c5_305] : memref<196x144xf32, #tpu.memory_space<vmem>>, vector<14x1xf32>
    tpu.vector_store %arg13[%c98_304, %c5_305], %205 {strides = array<i32>} : memref<196x144xf32, #tpu.memory_space<vmem>>, vector<14x1xf32>,
    %c0_306 = arith.constant 0 : index
    %c144 = arith.constant 144 : index
    %c0_307 = arith.constant 0 : index
    %207 = vector.load %arg1[%c0_306, %c144, %c0_307] : memref<1x256x1xf32, #tpu.memory_space<vmem>>, vector<1x14x1xf32>
    %208 = vector.shape_cast %207 : vector<1x14x1xf32> to vector<14x1xf32>
    %c98_308 = arith.constant 98 : index
    %c6_309 = arith.constant 6 : index
    %209 = vector.load %arg13[%c98_308, %c6_309] : memref<196x144xf32, #tpu.memory_space<vmem>>, vector<14x1xf32>
    tpu.vector_store %arg13[%c98_308, %c6_309], %208 {strides = array<i32>} : memref<196x144xf32, #tpu.memory_space<vmem>>, vector<14x1xf32>,
    %c0_310 = arith.constant 0 : index
    %c145 = arith.constant 145 : index
    %c0_311 = arith.constant 0 : index
    %210 = vector.load %arg1[%c0_310, %c145, %c0_311] : memref<1x256x1xf32, #tpu.memory_space<vmem>>, vector<1x14x1xf32>
    %211 = vector.shape_cast %210 : vector<1x14x1xf32> to vector<14x1xf32>
    %c98_312 = arith.constant 98 : index
    %c7_313 = arith.constant 7 : index
    %212 = vector.load %arg13[%c98_312, %c7_313] : memref<196x144xf32, #tpu.memory_space<vmem>>, vector<14x1xf32>
    tpu.vector_store %arg13[%c98_312, %c7_313], %211 {strides = array<i32>} : memref<196x144xf32, #tpu.memory_space<vmem>>, vector<14x1xf32>,
    %c0_314 = arith.constant 0 : index
    %c146 = arith.constant 146 : index
    %c0_315 = arith.constant 0 : index
    %213 = vector.load %arg1[%c0_314, %c146, %c0_315] : memref<1x256x1xf32, #tpu.memory_space<vmem>>, vector<1x14x1xf32>
    %214 = vector.shape_cast %213 : vector<1x14x1xf32> to vector<14x1xf32>
    %c98_316 = arith.constant 98 : index
    %c8_317 = arith.constant 8 : index
    %215 = vector.load %arg13[%c98_316, %c8_317] : memref<196x144xf32, #tpu.memory_space<vmem>>, vector<14x1xf32>
    tpu.vector_store %arg13[%c98_316, %c8_317], %214 {strides = array<i32>} : memref<196x144xf32, #tpu.memory_space<vmem>>, vector<14x1xf32>,
    %c0_318 = arith.constant 0 : index
    %c128_319 = arith.constant 128 : index
    %c0_320 = arith.constant 0 : index
    %216 = vector.load %arg1[%c0_318, %c128_319, %c0_320] : memref<1x256x1xf32, #tpu.memory_space<vmem>>, vector<1x14x1xf32>
    %217 = vector.shape_cast %216 : vector<1x14x1xf32> to vector<14x1xf32>
    %c112_321 = arith.constant 112 : index
    %c0_322 = arith.constant 0 : index
    %218 = vector.load %arg13[%c112_321, %c0_322] : memref<196x144xf32, #tpu.memory_space<vmem>>, vector<14x1xf32>
    tpu.vector_store %arg13[%c112_321, %c0_322], %217 {strides = array<i32>} : memref<196x144xf32, #tpu.memory_space<vmem>>, vector<14x1xf32>,
    %c0_323 = arith.constant 0 : index
    %c129_324 = arith.constant 129 : index
    %c0_325 = arith.constant 0 : index
    %219 = vector.load %arg1[%c0_323, %c129_324, %c0_325] : memref<1x256x1xf32, #tpu.memory_space<vmem>>, vector<1x14x1xf32>
    %220 = vector.shape_cast %219 : vector<1x14x1xf32> to vector<14x1xf32>
    %c112_326 = arith.constant 112 : index
    %c1_327 = arith.constant 1 : index
    %221 = vector.load %arg13[%c112_326, %c1_327] : memref<196x144xf32, #tpu.memory_space<vmem>>, vector<14x1xf32>
    tpu.vector_store %arg13[%c112_326, %c1_327], %220 {strides = array<i32>} : memref<196x144xf32, #tpu.memory_space<vmem>>, vector<14x1xf32>,
    %c0_328 = arith.constant 0 : index
    %c130_329 = arith.constant 130 : index
    %c0_330 = arith.constant 0 : index
    %222 = vector.load %arg1[%c0_328, %c130_329, %c0_330] : memref<1x256x1xf32, #tpu.memory_space<vmem>>, vector<1x14x1xf32>
    %223 = vector.shape_cast %222 : vector<1x14x1xf32> to vector<14x1xf32>
    %c112_331 = arith.constant 112 : index
    %c2_332 = arith.constant 2 : index
    %224 = vector.load %arg13[%c112_331, %c2_332] : memref<196x144xf32, #tpu.memory_space<vmem>>, vector<14x1xf32>
    tpu.vector_store %arg13[%c112_331, %c2_332], %223 {strides = array<i32>} : memref<196x144xf32, #tpu.memory_space<vmem>>, vector<14x1xf32>,
    %c0_333 = arith.constant 0 : index
    %c144_334 = arith.constant 144 : index
    %c0_335 = arith.constant 0 : index
    %225 = vector.load %arg1[%c0_333, %c144_334, %c0_335] : memref<1x256x1xf32, #tpu.memory_space<vmem>>, vector<1x14x1xf32>
    %226 = vector.shape_cast %225 : vector<1x14x1xf32> to vector<14x1xf32>
    %c112_336 = arith.constant 112 : index
    %c3_337 = arith.constant 3 : index
    %227 = vector.load %arg13[%c112_336, %c3_337] : memref<196x144xf32, #tpu.memory_space<vmem>>, vector<14x1xf32>
    tpu.vector_store %arg13[%c112_336, %c3_337], %226 {strides = array<i32>} : memref<196x144xf32, #tpu.memory_space<vmem>>, vector<14x1xf32>,
    %c0_338 = arith.constant 0 : index
    %c145_339 = arith.constant 145 : index
    %c0_340 = arith.constant 0 : index
    %228 = vector.load %arg1[%c0_338, %c145_339, %c0_340] : memref<1x256x1xf32, #tpu.memory_space<vmem>>, vector<1x14x1xf32>
    %229 = vector.shape_cast %228 : vector<1x14x1xf32> to vector<14x1xf32>
    %c112_341 = arith.constant 112 : index
    %c4_342 = arith.constant 4 : index
    %230 = vector.load %arg13[%c112_341, %c4_342] : memref<196x144xf32, #tpu.memory_space<vmem>>, vector<14x1xf32>
    tpu.vector_store %arg13[%c112_341, %c4_342], %229 {strides = array<i32>} : memref<196x144xf32, #tpu.memory_space<vmem>>, vector<14x1xf32>,
    %c0_343 = arith.constant 0 : index
    %c146_344 = arith.constant 146 : index
    %c0_345 = arith.constant 0 : index
    %231 = vector.load %arg1[%c0_343, %c146_344, %c0_345] : memref<1x256x1xf32, #tpu.memory_space<vmem>>, vector<1x14x1xf32>
    %232 = vector.shape_cast %231 : vector<1x14x1xf32> to vector<14x1xf32>
    %c112_346 = arith.constant 112 : index
    %c5_347 = arith.constant 5 : index
    %233 = vector.load %arg13[%c112_346, %c5_347] : memref<196x144xf32, #tpu.memory_space<vmem>>, vector<14x1xf32>
    tpu.vector_store %arg13[%c112_346, %c5_347], %232 {strides = array<i32>} : memref<196x144xf32, #tpu.memory_space<vmem>>, vector<14x1xf32>,
    %c0_348 = arith.constant 0 : index
    %c160 = arith.constant 160 : index
    %c0_349 = arith.constant 0 : index
    %234 = vector.load %arg1[%c0_348, %c160, %c0_349] : memref<1x256x1xf32, #tpu.memory_space<vmem>>, vector<1x14x1xf32>
    %235 = vector.shape_cast %234 : vector<1x14x1xf32> to vector<14x1xf32>
    %c112_350 = arith.constant 112 : index
    %c6_351 = arith.constant 6 : index
    %236 = vector.load %arg13[%c112_350, %c6_351] : memref<196x144xf32, #tpu.memory_space<vmem>>, vector<14x1xf32>
    tpu.vector_store %arg13[%c112_350, %c6_351], %235 {strides = array<i32>} : memref<196x144xf32, #tpu.memory_space<vmem>>, vector<14x1xf32>,
    %c0_352 = arith.constant 0 : index
    %c161 = arith.constant 161 : index
    %c0_353 = arith.constant 0 : index
    %237 = vector.load %arg1[%c0_352, %c161, %c0_353] : memref<1x256x1xf32, #tpu.memory_space<vmem>>, vector<1x14x1xf32>
    %238 = vector.shape_cast %237 : vector<1x14x1xf32> to vector<14x1xf32>
    %c112_354 = arith.constant 112 : index
    %c7_355 = arith.constant 7 : index
    %239 = vector.load %arg13[%c112_354, %c7_355] : memref<196x144xf32, #tpu.memory_space<vmem>>, vector<14x1xf32>
    tpu.vector_store %arg13[%c112_354, %c7_355], %238 {strides = array<i32>} : memref<196x144xf32, #tpu.memory_space<vmem>>, vector<14x1xf32>,
    %c0_356 = arith.constant 0 : index
    %c162 = arith.constant 162 : index
    %c0_357 = arith.constant 0 : index
    %240 = vector.load %arg1[%c0_356, %c162, %c0_357] : memref<1x256x1xf32, #tpu.memory_space<vmem>>, vector<1x14x1xf32>
    %241 = vector.shape_cast %240 : vector<1x14x1xf32> to vector<14x1xf32>
    %c112_358 = arith.constant 112 : index
    %c8_359 = arith.constant 8 : index
    %242 = vector.load %arg13[%c112_358, %c8_359] : memref<196x144xf32, #tpu.memory_space<vmem>>, vector<14x1xf32>
    tpu.vector_store %arg13[%c112_358, %c8_359], %241 {strides = array<i32>} : memref<196x144xf32, #tpu.memory_space<vmem>>, vector<14x1xf32>,
    %c0_360 = arith.constant 0 : index
    %c144_361 = arith.constant 144 : index
    %c0_362 = arith.constant 0 : index
    %243 = vector.load %arg1[%c0_360, %c144_361, %c0_362] : memref<1x256x1xf32, #tpu.memory_space<vmem>>, vector<1x14x1xf32>
    %244 = vector.shape_cast %243 : vector<1x14x1xf32> to vector<14x1xf32>
    %c126 = arith.constant 126 : index
    %c0_363 = arith.constant 0 : index
    %245 = vector.load %arg13[%c126, %c0_363] : memref<196x144xf32, #tpu.memory_space<vmem>>, vector<14x1xf32>
    tpu.vector_store %arg13[%c126, %c0_363], %244 {strides = array<i32>} : memref<196x144xf32, #tpu.memory_space<vmem>>, vector<14x1xf32>,
    %c0_364 = arith.constant 0 : index
    %c145_365 = arith.constant 145 : index
    %c0_366 = arith.constant 0 : index
    %246 = vector.load %arg1[%c0_364, %c145_365, %c0_366] : memref<1x256x1xf32, #tpu.memory_space<vmem>>, vector<1x14x1xf32>
    %247 = vector.shape_cast %246 : vector<1x14x1xf32> to vector<14x1xf32>
    %c126_367 = arith.constant 126 : index
    %c1_368 = arith.constant 1 : index
    %248 = vector.load %arg13[%c126_367, %c1_368] : memref<196x144xf32, #tpu.memory_space<vmem>>, vector<14x1xf32>
    tpu.vector_store %arg13[%c126_367, %c1_368], %247 {strides = array<i32>} : memref<196x144xf32, #tpu.memory_space<vmem>>, vector<14x1xf32>,
    %c0_369 = arith.constant 0 : index
    %c146_370 = arith.constant 146 : index
    %c0_371 = arith.constant 0 : index
    %249 = vector.load %arg1[%c0_369, %c146_370, %c0_371] : memref<1x256x1xf32, #tpu.memory_space<vmem>>, vector<1x14x1xf32>
    %250 = vector.shape_cast %249 : vector<1x14x1xf32> to vector<14x1xf32>
    %c126_372 = arith.constant 126 : index
    %c2_373 = arith.constant 2 : index
    %251 = vector.load %arg13[%c126_372, %c2_373] : memref<196x144xf32, #tpu.memory_space<vmem>>, vector<14x1xf32>
    tpu.vector_store %arg13[%c126_372, %c2_373], %250 {strides = array<i32>} : memref<196x144xf32, #tpu.memory_space<vmem>>, vector<14x1xf32>,
    %c0_374 = arith.constant 0 : index
    %c160_375 = arith.constant 160 : index
    %c0_376 = arith.constant 0 : index
    %252 = vector.load %arg1[%c0_374, %c160_375, %c0_376] : memref<1x256x1xf32, #tpu.memory_space<vmem>>, vector<1x14x1xf32>
    %253 = vector.shape_cast %252 : vector<1x14x1xf32> to vector<14x1xf32>
    %c126_377 = arith.constant 126 : index
    %c3_378 = arith.constant 3 : index
    %254 = vector.load %arg13[%c126_377, %c3_378] : memref<196x144xf32, #tpu.memory_space<vmem>>, vector<14x1xf32>
    tpu.vector_store %arg13[%c126_377, %c3_378], %253 {strides = array<i32>} : memref<196x144xf32, #tpu.memory_space<vmem>>, vector<14x1xf32>,
    %c0_379 = arith.constant 0 : index
    %c161_380 = arith.constant 161 : index
    %c0_381 = arith.constant 0 : index
    %255 = vector.load %arg1[%c0_379, %c161_380, %c0_381] : memref<1x256x1xf32, #tpu.memory_space<vmem>>, vector<1x14x1xf32>
    %256 = vector.shape_cast %255 : vector<1x14x1xf32> to vector<14x1xf32>
    %c126_382 = arith.constant 126 : index
    %c4_383 = arith.constant 4 : index
    %257 = vector.load %arg13[%c126_382, %c4_383] : memref<196x144xf32, #tpu.memory_space<vmem>>, vector<14x1xf32>
    tpu.vector_store %arg13[%c126_382, %c4_383], %256 {strides = array<i32>} : memref<196x144xf32, #tpu.memory_space<vmem>>, vector<14x1xf32>,
    %c0_384 = arith.constant 0 : index
    %c162_385 = arith.constant 162 : index
    %c0_386 = arith.constant 0 : index
    %258 = vector.load %arg1[%c0_384, %c162_385, %c0_386] : memref<1x256x1xf32, #tpu.memory_space<vmem>>, vector<1x14x1xf32>
    %259 = vector.shape_cast %258 : vector<1x14x1xf32> to vector<14x1xf32>
    %c126_387 = arith.constant 126 : index
    %c5_388 = arith.constant 5 : index
    %260 = vector.load %arg13[%c126_387, %c5_388] : memref<196x144xf32, #tpu.memory_space<vmem>>, vector<14x1xf32>
    tpu.vector_store %arg13[%c126_387, %c5_388], %259 {strides = array<i32>} : memref<196x144xf32, #tpu.memory_space<vmem>>, vector<14x1xf32>,
    %c0_389 = arith.constant 0 : index
    %c176 = arith.constant 176 : index
    %c0_390 = arith.constant 0 : index
    %261 = vector.load %arg1[%c0_389, %c176, %c0_390] : memref<1x256x1xf32, #tpu.memory_space<vmem>>, vector<1x14x1xf32>
    %262 = vector.shape_cast %261 : vector<1x14x1xf32> to vector<14x1xf32>
    %c126_391 = arith.constant 126 : index
    %c6_392 = arith.constant 6 : index
    %263 = vector.load %arg13[%c126_391, %c6_392] : memref<196x144xf32, #tpu.memory_space<vmem>>, vector<14x1xf32>
    tpu.vector_store %arg13[%c126_391, %c6_392], %262 {strides = array<i32>} : memref<196x144xf32, #tpu.memory_space<vmem>>, vector<14x1xf32>,
    %c0_393 = arith.constant 0 : index
    %c177 = arith.constant 177 : index
    %c0_394 = arith.constant 0 : index
    %264 = vector.load %arg1[%c0_393, %c177, %c0_394] : memref<1x256x1xf32, #tpu.memory_space<vmem>>, vector<1x14x1xf32>
    %265 = vector.shape_cast %264 : vector<1x14x1xf32> to vector<14x1xf32>
    %c126_395 = arith.constant 126 : index
    %c7_396 = arith.constant 7 : index
    %266 = vector.load %arg13[%c126_395, %c7_396] : memref<196x144xf32, #tpu.memory_space<vmem>>, vector<14x1xf32>
    tpu.vector_store %arg13[%c126_395, %c7_396], %265 {strides = array<i32>} : memref<196x144xf32, #tpu.memory_space<vmem>>, vector<14x1xf32>,
    %c0_397 = arith.constant 0 : index
    %c178 = arith.constant 178 : index
    %c0_398 = arith.constant 0 : index
    %267 = vector.load %arg1[%c0_397, %c178, %c0_398] : memref<1x256x1xf32, #tpu.memory_space<vmem>>, vector<1x14x1xf32>
    %268 = vector.shape_cast %267 : vector<1x14x1xf32> to vector<14x1xf32>
    %c126_399 = arith.constant 126 : index
    %c8_400 = arith.constant 8 : index
    %269 = vector.load %arg13[%c126_399, %c8_400] : memref<196x144xf32, #tpu.memory_space<vmem>>, vector<14x1xf32>
    tpu.vector_store %arg13[%c126_399, %c8_400], %268 {strides = array<i32>} : memref<196x144xf32, #tpu.memory_space<vmem>>, vector<14x1xf32>,
    %c0_401 = arith.constant 0 : index
    %c160_402 = arith.constant 160 : index
    %c0_403 = arith.constant 0 : index
    %270 = vector.load %arg1[%c0_401, %c160_402, %c0_403] : memref<1x256x1xf32, #tpu.memory_space<vmem>>, vector<1x14x1xf32>
    %271 = vector.shape_cast %270 : vector<1x14x1xf32> to vector<14x1xf32>
    %c140 = arith.constant 140 : index
    %c0_404 = arith.constant 0 : index
    %272 = vector.load %arg13[%c140, %c0_404] : memref<196x144xf32, #tpu.memory_space<vmem>>, vector<14x1xf32>
    tpu.vector_store %arg13[%c140, %c0_404], %271 {strides = array<i32>} : memref<196x144xf32, #tpu.memory_space<vmem>>, vector<14x1xf32>,
    %c0_405 = arith.constant 0 : index
    %c161_406 = arith.constant 161 : index
    %c0_407 = arith.constant 0 : index
    %273 = vector.load %arg1[%c0_405, %c161_406, %c0_407] : memref<1x256x1xf32, #tpu.memory_space<vmem>>, vector<1x14x1xf32>
    %274 = vector.shape_cast %273 : vector<1x14x1xf32> to vector<14x1xf32>
    %c140_408 = arith.constant 140 : index
    %c1_409 = arith.constant 1 : index
    %275 = vector.load %arg13[%c140_408, %c1_409] : memref<196x144xf32, #tpu.memory_space<vmem>>, vector<14x1xf32>
    tpu.vector_store %arg13[%c140_408, %c1_409], %274 {strides = array<i32>} : memref<196x144xf32, #tpu.memory_space<vmem>>, vector<14x1xf32>,
    %c0_410 = arith.constant 0 : index
    %c162_411 = arith.constant 162 : index
    %c0_412 = arith.constant 0 : index
    %276 = vector.load %arg1[%c0_410, %c162_411, %c0_412] : memref<1x256x1xf32, #tpu.memory_space<vmem>>, vector<1x14x1xf32>
    %277 = vector.shape_cast %276 : vector<1x14x1xf32> to vector<14x1xf32>
    %c140_413 = arith.constant 140 : index
    %c2_414 = arith.constant 2 : index
    %278 = vector.load %arg13[%c140_413, %c2_414] : memref<196x144xf32, #tpu.memory_space<vmem>>, vector<14x1xf32>
    tpu.vector_store %arg13[%c140_413, %c2_414], %277 {strides = array<i32>} : memref<196x144xf32, #tpu.memory_space<vmem>>, vector<14x1xf32>,
    %c0_415 = arith.constant 0 : index
    %c176_416 = arith.constant 176 : index
    %c0_417 = arith.constant 0 : index
    %279 = vector.load %arg1[%c0_415, %c176_416, %c0_417] : memref<1x256x1xf32, #tpu.memory_space<vmem>>, vector<1x14x1xf32>
    %280 = vector.shape_cast %279 : vector<1x14x1xf32> to vector<14x1xf32>
    %c140_418 = arith.constant 140 : index
    %c3_419 = arith.constant 3 : index
    %281 = vector.load %arg13[%c140_418, %c3_419] : memref<196x144xf32, #tpu.memory_space<vmem>>, vector<14x1xf32>
    tpu.vector_store %arg13[%c140_418, %c3_419], %280 {strides = array<i32>} : memref<196x144xf32, #tpu.memory_space<vmem>>, vector<14x1xf32>,
    %c0_420 = arith.constant 0 : index
    %c177_421 = arith.constant 177 : index
    %c0_422 = arith.constant 0 : index
    %282 = vector.load %arg1[%c0_420, %c177_421, %c0_422] : memref<1x256x1xf32, #tpu.memory_space<vmem>>, vector<1x14x1xf32>
    %283 = vector.shape_cast %282 : vector<1x14x1xf32> to vector<14x1xf32>
    %c140_423 = arith.constant 140 : index
    %c4_424 = arith.constant 4 : index
    %284 = vector.load %arg13[%c140_423, %c4_424] : memref<196x144xf32, #tpu.memory_space<vmem>>, vector<14x1xf32>
    tpu.vector_store %arg13[%c140_423, %c4_424], %283 {strides = array<i32>} : memref<196x144xf32, #tpu.memory_space<vmem>>, vector<14x1xf32>,
    %c0_425 = arith.constant 0 : index
    %c178_426 = arith.constant 178 : index
    %c0_427 = arith.constant 0 : index
    %285 = vector.load %arg1[%c0_425, %c178_426, %c0_427] : memref<1x256x1xf32, #tpu.memory_space<vmem>>, vector<1x14x1xf32>
    %286 = vector.shape_cast %285 : vector<1x14x1xf32> to vector<14x1xf32>
    %c140_428 = arith.constant 140 : index
    %c5_429 = arith.constant 5 : index
    %287 = vector.load %arg13[%c140_428, %c5_429] : memref<196x144xf32, #tpu.memory_space<vmem>>, vector<14x1xf32>
    tpu.vector_store %arg13[%c140_428, %c5_429], %286 {strides = array<i32>} : memref<196x144xf32, #tpu.memory_space<vmem>>, vector<14x1xf32>,
    %c0_430 = arith.constant 0 : index
    %c192 = arith.constant 192 : index
    %c0_431 = arith.constant 0 : index
    %288 = vector.load %arg1[%c0_430, %c192, %c0_431] : memref<1x256x1xf32, #tpu.memory_space<vmem>>, vector<1x14x1xf32>
    %289 = vector.shape_cast %288 : vector<1x14x1xf32> to vector<14x1xf32>
    %c140_432 = arith.constant 140 : index
    %c6_433 = arith.constant 6 : index
    %290 = vector.load %arg13[%c140_432, %c6_433] : memref<196x144xf32, #tpu.memory_space<vmem>>, vector<14x1xf32>
    tpu.vector_store %arg13[%c140_432, %c6_433], %289 {strides = array<i32>} : memref<196x144xf32, #tpu.memory_space<vmem>>, vector<14x1xf32>,
    %c0_434 = arith.constant 0 : index
    %c193 = arith.constant 193 : index
    %c0_435 = arith.constant 0 : index
    %291 = vector.load %arg1[%c0_434, %c193, %c0_435] : memref<1x256x1xf32, #tpu.memory_space<vmem>>, vector<1x14x1xf32>
    %292 = vector.shape_cast %291 : vector<1x14x1xf32> to vector<14x1xf32>
    %c140_436 = arith.constant 140 : index
    %c7_437 = arith.constant 7 : index
    %293 = vector.load %arg13[%c140_436, %c7_437] : memref<196x144xf32, #tpu.memory_space<vmem>>, vector<14x1xf32>
    tpu.vector_store %arg13[%c140_436, %c7_437], %292 {strides = array<i32>} : memref<196x144xf32, #tpu.memory_space<vmem>>, vector<14x1xf32>,
    %c0_438 = arith.constant 0 : index
    %c194 = arith.constant 194 : index
    %c0_439 = arith.constant 0 : index
    %294 = vector.load %arg1[%c0_438, %c194, %c0_439] : memref<1x256x1xf32, #tpu.memory_space<vmem>>, vector<1x14x1xf32>
    %295 = vector.shape_cast %294 : vector<1x14x1xf32> to vector<14x1xf32>
    %c140_440 = arith.constant 140 : index
    %c8_441 = arith.constant 8 : index
    %296 = vector.load %arg13[%c140_440, %c8_441] : memref<196x144xf32, #tpu.memory_space<vmem>>, vector<14x1xf32>
    tpu.vector_store %arg13[%c140_440, %c8_441], %295 {strides = array<i32>} : memref<196x144xf32, #tpu.memory_space<vmem>>, vector<14x1xf32>,
    %c0_442 = arith.constant 0 : index
    %c176_443 = arith.constant 176 : index
    %c0_444 = arith.constant 0 : index
    %297 = vector.load %arg1[%c0_442, %c176_443, %c0_444] : memref<1x256x1xf32, #tpu.memory_space<vmem>>, vector<1x14x1xf32>
    %298 = vector.shape_cast %297 : vector<1x14x1xf32> to vector<14x1xf32>
    %c154 = arith.constant 154 : index
    %c0_445 = arith.constant 0 : index
    %299 = vector.load %arg13[%c154, %c0_445] : memref<196x144xf32, #tpu.memory_space<vmem>>, vector<14x1xf32>
    tpu.vector_store %arg13[%c154, %c0_445], %298 {strides = array<i32>} : memref<196x144xf32, #tpu.memory_space<vmem>>, vector<14x1xf32>,
    %c0_446 = arith.constant 0 : index
    %c177_447 = arith.constant 177 : index
    %c0_448 = arith.constant 0 : index
    %300 = vector.load %arg1[%c0_446, %c177_447, %c0_448] : memref<1x256x1xf32, #tpu.memory_space<vmem>>, vector<1x14x1xf32>
    %301 = vector.shape_cast %300 : vector<1x14x1xf32> to vector<14x1xf32>
    %c154_449 = arith.constant 154 : index
    %c1_450 = arith.constant 1 : index
    %302 = vector.load %arg13[%c154_449, %c1_450] : memref<196x144xf32, #tpu.memory_space<vmem>>, vector<14x1xf32>
    tpu.vector_store %arg13[%c154_449, %c1_450], %301 {strides = array<i32>} : memref<196x144xf32, #tpu.memory_space<vmem>>, vector<14x1xf32>,
    %c0_451 = arith.constant 0 : index
    %c178_452 = arith.constant 178 : index
    %c0_453 = arith.constant 0 : index
    %303 = vector.load %arg1[%c0_451, %c178_452, %c0_453] : memref<1x256x1xf32, #tpu.memory_space<vmem>>, vector<1x14x1xf32>
    %304 = vector.shape_cast %303 : vector<1x14x1xf32> to vector<14x1xf32>
    %c154_454 = arith.constant 154 : index
    %c2_455 = arith.constant 2 : index
    %305 = vector.load %arg13[%c154_454, %c2_455] : memref<196x144xf32, #tpu.memory_space<vmem>>, vector<14x1xf32>
    tpu.vector_store %arg13[%c154_454, %c2_455], %304 {strides = array<i32>} : memref<196x144xf32, #tpu.memory_space<vmem>>, vector<14x1xf32>,
    %c0_456 = arith.constant 0 : index
    %c192_457 = arith.constant 192 : index
    %c0_458 = arith.constant 0 : index
    %306 = vector.load %arg1[%c0_456, %c192_457, %c0_458] : memref<1x256x1xf32, #tpu.memory_space<vmem>>, vector<1x14x1xf32>
    %307 = vector.shape_cast %306 : vector<1x14x1xf32> to vector<14x1xf32>
    %c154_459 = arith.constant 154 : index
    %c3_460 = arith.constant 3 : index
    %308 = vector.load %arg13[%c154_459, %c3_460] : memref<196x144xf32, #tpu.memory_space<vmem>>, vector<14x1xf32>
    tpu.vector_store %arg13[%c154_459, %c3_460], %307 {strides = array<i32>} : memref<196x144xf32, #tpu.memory_space<vmem>>, vector<14x1xf32>,
    %c0_461 = arith.constant 0 : index
    %c193_462 = arith.constant 193 : index
    %c0_463 = arith.constant 0 : index
    %309 = vector.load %arg1[%c0_461, %c193_462, %c0_463] : memref<1x256x1xf32, #tpu.memory_space<vmem>>, vector<1x14x1xf32>
    %310 = vector.shape_cast %309 : vector<1x14x1xf32> to vector<14x1xf32>
    %c154_464 = arith.constant 154 : index
    %c4_465 = arith.constant 4 : index
    %311 = vector.load %arg13[%c154_464, %c4_465] : memref<196x144xf32, #tpu.memory_space<vmem>>, vector<14x1xf32>
    tpu.vector_store %arg13[%c154_464, %c4_465], %310 {strides = array<i32>} : memref<196x144xf32, #tpu.memory_space<vmem>>, vector<14x1xf32>,
    %c0_466 = arith.constant 0 : index
    %c194_467 = arith.constant 194 : index
    %c0_468 = arith.constant 0 : index
    %312 = vector.load %arg1[%c0_466, %c194_467, %c0_468] : memref<1x256x1xf32, #tpu.memory_space<vmem>>, vector<1x14x1xf32>
    %313 = vector.shape_cast %312 : vector<1x14x1xf32> to vector<14x1xf32>
    %c154_469 = arith.constant 154 : index
    %c5_470 = arith.constant 5 : index
    %314 = vector.load %arg13[%c154_469, %c5_470] : memref<196x144xf32, #tpu.memory_space<vmem>>, vector<14x1xf32>
    tpu.vector_store %arg13[%c154_469, %c5_470], %313 {strides = array<i32>} : memref<196x144xf32, #tpu.memory_space<vmem>>, vector<14x1xf32>,
    %c0_471 = arith.constant 0 : index
    %c208 = arith.constant 208 : index
    %c0_472 = arith.constant 0 : index
    %315 = vector.load %arg1[%c0_471, %c208, %c0_472] : memref<1x256x1xf32, #tpu.memory_space<vmem>>, vector<1x14x1xf32>
    %316 = vector.shape_cast %315 : vector<1x14x1xf32> to vector<14x1xf32>
    %c154_473 = arith.constant 154 : index
    %c6_474 = arith.constant 6 : index
    %317 = vector.load %arg13[%c154_473, %c6_474] : memref<196x144xf32, #tpu.memory_space<vmem>>, vector<14x1xf32>
    tpu.vector_store %arg13[%c154_473, %c6_474], %316 {strides = array<i32>} : memref<196x144xf32, #tpu.memory_space<vmem>>, vector<14x1xf32>,
    %c0_475 = arith.constant 0 : index
    %c209 = arith.constant 209 : index
    %c0_476 = arith.constant 0 : index
    %318 = vector.load %arg1[%c0_475, %c209, %c0_476] : memref<1x256x1xf32, #tpu.memory_space<vmem>>, vector<1x14x1xf32>
    %319 = vector.shape_cast %318 : vector<1x14x1xf32> to vector<14x1xf32>
    %c154_477 = arith.constant 154 : index
    %c7_478 = arith.constant 7 : index
    %320 = vector.load %arg13[%c154_477, %c7_478] : memref<196x144xf32, #tpu.memory_space<vmem>>, vector<14x1xf32>
    tpu.vector_store %arg13[%c154_477, %c7_478], %319 {strides = array<i32>} : memref<196x144xf32, #tpu.memory_space<vmem>>, vector<14x1xf32>,
    %c0_479 = arith.constant 0 : index
    %c210 = arith.constant 210 : index
    %c0_480 = arith.constant 0 : index
    %321 = vector.load %arg1[%c0_479, %c210, %c0_480] : memref<1x256x1xf32, #tpu.memory_space<vmem>>, vector<1x14x1xf32>
    %322 = vector.shape_cast %321 : vector<1x14x1xf32> to vector<14x1xf32>
    %c154_481 = arith.constant 154 : index
    %c8_482 = arith.constant 8 : index
    %323 = vector.load %arg13[%c154_481, %c8_482] : memref<196x144xf32, #tpu.memory_space<vmem>>, vector<14x1xf32>
    tpu.vector_store %arg13[%c154_481, %c8_482], %322 {strides = array<i32>} : memref<196x144xf32, #tpu.memory_space<vmem>>, vector<14x1xf32>,
    %c0_483 = arith.constant 0 : index
    %c192_484 = arith.constant 192 : index
    %c0_485 = arith.constant 0 : index
    %324 = vector.load %arg1[%c0_483, %c192_484, %c0_485] : memref<1x256x1xf32, #tpu.memory_space<vmem>>, vector<1x14x1xf32>
    %325 = vector.shape_cast %324 : vector<1x14x1xf32> to vector<14x1xf32>
    %c168 = arith.constant 168 : index
    %c0_486 = arith.constant 0 : index
    %326 = vector.load %arg13[%c168, %c0_486] : memref<196x144xf32, #tpu.memory_space<vmem>>, vector<14x1xf32>
    tpu.vector_store %arg13[%c168, %c0_486], %325 {strides = array<i32>} : memref<196x144xf32, #tpu.memory_space<vmem>>, vector<14x1xf32>,
    %c0_487 = arith.constant 0 : index
    %c193_488 = arith.constant 193 : index
    %c0_489 = arith.constant 0 : index
    %327 = vector.load %arg1[%c0_487, %c193_488, %c0_489] : memref<1x256x1xf32, #tpu.memory_space<vmem>>, vector<1x14x1xf32>
    %328 = vector.shape_cast %327 : vector<1x14x1xf32> to vector<14x1xf32>
    %c168_490 = arith.constant 168 : index
    %c1_491 = arith.constant 1 : index
    %329 = vector.load %arg13[%c168_490, %c1_491] : memref<196x144xf32, #tpu.memory_space<vmem>>, vector<14x1xf32>
    tpu.vector_store %arg13[%c168_490, %c1_491], %328 {strides = array<i32>} : memref<196x144xf32, #tpu.memory_space<vmem>>, vector<14x1xf32>,
    %c0_492 = arith.constant 0 : index
    %c194_493 = arith.constant 194 : index
    %c0_494 = arith.constant 0 : index
    %330 = vector.load %arg1[%c0_492, %c194_493, %c0_494] : memref<1x256x1xf32, #tpu.memory_space<vmem>>, vector<1x14x1xf32>
    %331 = vector.shape_cast %330 : vector<1x14x1xf32> to vector<14x1xf32>
    %c168_495 = arith.constant 168 : index
    %c2_496 = arith.constant 2 : index
    %332 = vector.load %arg13[%c168_495, %c2_496] : memref<196x144xf32, #tpu.memory_space<vmem>>, vector<14x1xf32>
    tpu.vector_store %arg13[%c168_495, %c2_496], %331 {strides = array<i32>} : memref<196x144xf32, #tpu.memory_space<vmem>>, vector<14x1xf32>,
    %c0_497 = arith.constant 0 : index
    %c208_498 = arith.constant 208 : index
    %c0_499 = arith.constant 0 : index
    %333 = vector.load %arg1[%c0_497, %c208_498, %c0_499] : memref<1x256x1xf32, #tpu.memory_space<vmem>>, vector<1x14x1xf32>
    %334 = vector.shape_cast %333 : vector<1x14x1xf32> to vector<14x1xf32>
    %c168_500 = arith.constant 168 : index
    %c3_501 = arith.constant 3 : index
    %335 = vector.load %arg13[%c168_500, %c3_501] : memref<196x144xf32, #tpu.memory_space<vmem>>, vector<14x1xf32>
    tpu.vector_store %arg13[%c168_500, %c3_501], %334 {strides = array<i32>} : memref<196x144xf32, #tpu.memory_space<vmem>>, vector<14x1xf32>,
    %c0_502 = arith.constant 0 : index
    %c209_503 = arith.constant 209 : index
    %c0_504 = arith.constant 0 : index
    %336 = vector.load %arg1[%c0_502, %c209_503, %c0_504] : memref<1x256x1xf32, #tpu.memory_space<vmem>>, vector<1x14x1xf32>
    %337 = vector.shape_cast %336 : vector<1x14x1xf32> to vector<14x1xf32>
    %c168_505 = arith.constant 168 : index
    %c4_506 = arith.constant 4 : index
    %338 = vector.load %arg13[%c168_505, %c4_506] : memref<196x144xf32, #tpu.memory_space<vmem>>, vector<14x1xf32>
    tpu.vector_store %arg13[%c168_505, %c4_506], %337 {strides = array<i32>} : memref<196x144xf32, #tpu.memory_space<vmem>>, vector<14x1xf32>,
    %c0_507 = arith.constant 0 : index
    %c210_508 = arith.constant 210 : index
    %c0_509 = arith.constant 0 : index
    %339 = vector.load %arg1[%c0_507, %c210_508, %c0_509] : memref<1x256x1xf32, #tpu.memory_space<vmem>>, vector<1x14x1xf32>
    %340 = vector.shape_cast %339 : vector<1x14x1xf32> to vector<14x1xf32>
    %c168_510 = arith.constant 168 : index
    %c5_511 = arith.constant 5 : index
    %341 = vector.load %arg13[%c168_510, %c5_511] : memref<196x144xf32, #tpu.memory_space<vmem>>, vector<14x1xf32>
    tpu.vector_store %arg13[%c168_510, %c5_511], %340 {strides = array<i32>} : memref<196x144xf32, #tpu.memory_space<vmem>>, vector<14x1xf32>,
    %c0_512 = arith.constant 0 : index
    %c224 = arith.constant 224 : index
    %c0_513 = arith.constant 0 : index
    %342 = vector.load %arg1[%c0_512, %c224, %c0_513] : memref<1x256x1xf32, #tpu.memory_space<vmem>>, vector<1x14x1xf32>
    %343 = vector.shape_cast %342 : vector<1x14x1xf32> to vector<14x1xf32>
    %c168_514 = arith.constant 168 : index
    %c6_515 = arith.constant 6 : index
    %344 = vector.load %arg13[%c168_514, %c6_515] : memref<196x144xf32, #tpu.memory_space<vmem>>, vector<14x1xf32>
    tpu.vector_store %arg13[%c168_514, %c6_515], %343 {strides = array<i32>} : memref<196x144xf32, #tpu.memory_space<vmem>>, vector<14x1xf32>,
    %c0_516 = arith.constant 0 : index
    %c225 = arith.constant 225 : index
    %c0_517 = arith.constant 0 : index
    %345 = vector.load %arg1[%c0_516, %c225, %c0_517] : memref<1x256x1xf32, #tpu.memory_space<vmem>>, vector<1x14x1xf32>
    %346 = vector.shape_cast %345 : vector<1x14x1xf32> to vector<14x1xf32>
    %c168_518 = arith.constant 168 : index
    %c7_519 = arith.constant 7 : index
    %347 = vector.load %arg13[%c168_518, %c7_519] : memref<196x144xf32, #tpu.memory_space<vmem>>, vector<14x1xf32>
    tpu.vector_store %arg13[%c168_518, %c7_519], %346 {strides = array<i32>} : memref<196x144xf32, #tpu.memory_space<vmem>>, vector<14x1xf32>,
    %c0_520 = arith.constant 0 : index
    %c226 = arith.constant 226 : index
    %c0_521 = arith.constant 0 : index
    %348 = vector.load %arg1[%c0_520, %c226, %c0_521] : memref<1x256x1xf32, #tpu.memory_space<vmem>>, vector<1x14x1xf32>
    %349 = vector.shape_cast %348 : vector<1x14x1xf32> to vector<14x1xf32>
    %c168_522 = arith.constant 168 : index
    %c8_523 = arith.constant 8 : index
    %350 = vector.load %arg13[%c168_522, %c8_523] : memref<196x144xf32, #tpu.memory_space<vmem>>, vector<14x1xf32>
    tpu.vector_store %arg13[%c168_522, %c8_523], %349 {strides = array<i32>} : memref<196x144xf32, #tpu.memory_space<vmem>>, vector<14x1xf32>,
    %c0_524 = arith.constant 0 : index
    %c208_525 = arith.constant 208 : index
    %c0_526 = arith.constant 0 : index
    %351 = vector.load %arg1[%c0_524, %c208_525, %c0_526] : memref<1x256x1xf32, #tpu.memory_space<vmem>>, vector<1x14x1xf32>
    %352 = vector.shape_cast %351 : vector<1x14x1xf32> to vector<14x1xf32>
    %c182 = arith.constant 182 : index
    %c0_527 = arith.constant 0 : index
    %353 = vector.load %arg13[%c182, %c0_527] : memref<196x144xf32, #tpu.memory_space<vmem>>, vector<14x1xf32>
    tpu.vector_store %arg13[%c182, %c0_527], %352 {strides = array<i32>} : memref<196x144xf32, #tpu.memory_space<vmem>>, vector<14x1xf32>,
    %c0_528 = arith.constant 0 : index
    %c209_529 = arith.constant 209 : index
    %c0_530 = arith.constant 0 : index
    %354 = vector.load %arg1[%c0_528, %c209_529, %c0_530] : memref<1x256x1xf32, #tpu.memory_space<vmem>>, vector<1x14x1xf32>
    %355 = vector.shape_cast %354 : vector<1x14x1xf32> to vector<14x1xf32>
    %c182_531 = arith.constant 182 : index
    %c1_532 = arith.constant 1 : index
    %356 = vector.load %arg13[%c182_531, %c1_532] : memref<196x144xf32, #tpu.memory_space<vmem>>, vector<14x1xf32>
    tpu.vector_store %arg13[%c182_531, %c1_532], %355 {strides = array<i32>} : memref<196x144xf32, #tpu.memory_space<vmem>>, vector<14x1xf32>,
    %c0_533 = arith.constant 0 : index
    %c210_534 = arith.constant 210 : index
    %c0_535 = arith.constant 0 : index
    %357 = vector.load %arg1[%c0_533, %c210_534, %c0_535] : memref<1x256x1xf32, #tpu.memory_space<vmem>>, vector<1x14x1xf32>
    %358 = vector.shape_cast %357 : vector<1x14x1xf32> to vector<14x1xf32>
    %c182_536 = arith.constant 182 : index
    %c2_537 = arith.constant 2 : index
    %359 = vector.load %arg13[%c182_536, %c2_537] : memref<196x144xf32, #tpu.memory_space<vmem>>, vector<14x1xf32>
    tpu.vector_store %arg13[%c182_536, %c2_537], %358 {strides = array<i32>} : memref<196x144xf32, #tpu.memory_space<vmem>>, vector<14x1xf32>,
    %c0_538 = arith.constant 0 : index
    %c224_539 = arith.constant 224 : index
    %c0_540 = arith.constant 0 : index
    %360 = vector.load %arg1[%c0_538, %c224_539, %c0_540] : memref<1x256x1xf32, #tpu.memory_space<vmem>>, vector<1x14x1xf32>
    %361 = vector.shape_cast %360 : vector<1x14x1xf32> to vector<14x1xf32>
    %c182_541 = arith.constant 182 : index
    %c3_542 = arith.constant 3 : index
    %362 = vector.load %arg13[%c182_541, %c3_542] : memref<196x144xf32, #tpu.memory_space<vmem>>, vector<14x1xf32>
    tpu.vector_store %arg13[%c182_541, %c3_542], %361 {strides = array<i32>} : memref<196x144xf32, #tpu.memory_space<vmem>>, vector<14x1xf32>,
    %c0_543 = arith.constant 0 : index
    %c225_544 = arith.constant 225 : index
    %c0_545 = arith.constant 0 : index
    %363 = vector.load %arg1[%c0_543, %c225_544, %c0_545] : memref<1x256x1xf32, #tpu.memory_space<vmem>>, vector<1x14x1xf32>
    %364 = vector.shape_cast %363 : vector<1x14x1xf32> to vector<14x1xf32>
    %c182_546 = arith.constant 182 : index
    %c4_547 = arith.constant 4 : index
    %365 = vector.load %arg13[%c182_546, %c4_547] : memref<196x144xf32, #tpu.memory_space<vmem>>, vector<14x1xf32>
    tpu.vector_store %arg13[%c182_546, %c4_547], %364 {strides = array<i32>} : memref<196x144xf32, #tpu.memory_space<vmem>>, vector<14x1xf32>,
    %c0_548 = arith.constant 0 : index
    %c226_549 = arith.constant 226 : index
    %c0_550 = arith.constant 0 : index
    %366 = vector.load %arg1[%c0_548, %c226_549, %c0_550] : memref<1x256x1xf32, #tpu.memory_space<vmem>>, vector<1x14x1xf32>
    %367 = vector.shape_cast %366 : vector<1x14x1xf32> to vector<14x1xf32>
    %c182_551 = arith.constant 182 : index
    %c5_552 = arith.constant 5 : index
    %368 = vector.load %arg13[%c182_551, %c5_552] : memref<196x144xf32, #tpu.memory_space<vmem>>, vector<14x1xf32>
    tpu.vector_store %arg13[%c182_551, %c5_552], %367 {strides = array<i32>} : memref<196x144xf32, #tpu.memory_space<vmem>>, vector<14x1xf32>,
    %c0_553 = arith.constant 0 : index
    %c240 = arith.constant 240 : index
    %c0_554 = arith.constant 0 : index
    %369 = vector.load %arg1[%c0_553, %c240, %c0_554] : memref<1x256x1xf32, #tpu.memory_space<vmem>>, vector<1x14x1xf32>
    %370 = vector.shape_cast %369 : vector<1x14x1xf32> to vector<14x1xf32>
    %c182_555 = arith.constant 182 : index
    %c6_556 = arith.constant 6 : index
    %371 = vector.load %arg13[%c182_555, %c6_556] : memref<196x144xf32, #tpu.memory_space<vmem>>, vector<14x1xf32>
    tpu.vector_store %arg13[%c182_555, %c6_556], %370 {strides = array<i32>} : memref<196x144xf32, #tpu.memory_space<vmem>>, vector<14x1xf32>,
    %c0_557 = arith.constant 0 : index
    %c241 = arith.constant 241 : index
    %c0_558 = arith.constant 0 : index
    %372 = vector.load %arg1[%c0_557, %c241, %c0_558] : memref<1x256x1xf32, #tpu.memory_space<vmem>>, vector<1x14x1xf32>
    %373 = vector.shape_cast %372 : vector<1x14x1xf32> to vector<14x1xf32>
    %c182_559 = arith.constant 182 : index
    %c7_560 = arith.constant 7 : index
    %374 = vector.load %arg13[%c182_559, %c7_560] : memref<196x144xf32, #tpu.memory_space<vmem>>, vector<14x1xf32>
    tpu.vector_store %arg13[%c182_559, %c7_560], %373 {strides = array<i32>} : memref<196x144xf32, #tpu.memory_space<vmem>>, vector<14x1xf32>,
    %c0_561 = arith.constant 0 : index
    %c242 = arith.constant 242 : index
    %c0_562 = arith.constant 0 : index
    %375 = vector.load %arg1[%c0_561, %c242, %c0_562] : memref<1x256x1xf32, #tpu.memory_space<vmem>>, vector<1x14x1xf32>
    %376 = vector.shape_cast %375 : vector<1x14x1xf32> to vector<14x1xf32>
    %c182_563 = arith.constant 182 : index
    %c8_564 = arith.constant 8 : index
    %377 = vector.load %arg13[%c182_563, %c8_564] : memref<196x144xf32, #tpu.memory_space<vmem>>, vector<14x1xf32>
    tpu.vector_store %arg13[%c182_563, %c8_564], %376 {strides = array<i32>} : memref<196x144xf32, #tpu.memory_space<vmem>>, vector<14x1xf32>,
    %c0_565 = arith.constant 0 : index
    %c0_566 = arith.constant 0 : index
    %378 = vector.load %arg3[%c0_565, %c0_566] : memref<1x8xf32, #tpu.memory_space<vmem>>, vector<1x8xf32>
    %c0_567 = arith.constant 0 : index
    %c0_568 = arith.constant 0 : index
    %379 = vector.load %arg13[%c0_567, %c0_568] : memref<196x144xf32, #tpu.memory_space<vmem>>, vector<196x1xf32>
    %c0_569 = arith.constant 0 : index
    %c0_570 = arith.constant 0 : index
    %380 = vector.load %arg2[%c0_569, %c0_570] : memref<9x8xf32, #tpu.memory_space<vmem>>, vector<1x8xf32>
    %381 = vector.broadcast %379 : vector<196x1xf32> to vector<196x8xf32>
    %382 = vector.broadcast %380 : vector<1x8xf32> to vector<196x8xf32>
    %383 = arith.mulf %381, %382 : vector<196x8xf32>
    %384 = vector.broadcast %378 : vector<1x8xf32> to vector<196x8xf32>
    %385 = arith.addf %384, %383 : vector<196x8xf32>
    %c0_571 = arith.constant 0 : index
    %c1_572 = arith.constant 1 : index
    %386 = vector.load %arg13[%c0_571, %c1_572] : memref<196x144xf32, #tpu.memory_space<vmem>>, vector<196x1xf32>
    %c1_573 = arith.constant 1 : index
    %c0_574 = arith.constant 0 : index
    %387 = vector.load %arg2[%c1_573, %c0_574] : memref<9x8xf32, #tpu.memory_space<vmem>>, vector<1x8xf32>
    %388 = vector.broadcast %386 : vector<196x1xf32> to vector<196x8xf32>
    %389 = vector.broadcast %387 : vector<1x8xf32> to vector<196x8xf32>
    %390 = arith.mulf %388, %389 : vector<196x8xf32>
    %391 = arith.addf %385, %390 : vector<196x8xf32>
    %c0_575 = arith.constant 0 : index
    %c2_576 = arith.constant 2 : index
    %392 = vector.load %arg13[%c0_575, %c2_576] : memref<196x144xf32, #tpu.memory_space<vmem>>, vector<196x1xf32>
    %c2_577 = arith.constant 2 : index
    %c0_578 = arith.constant 0 : index
    %393 = vector.load %arg2[%c2_577, %c0_578] : memref<9x8xf32, #tpu.memory_space<vmem>>, vector<1x8xf32>
    %394 = vector.broadcast %392 : vector<196x1xf32> to vector<196x8xf32>
    %395 = vector.broadcast %393 : vector<1x8xf32> to vector<196x8xf32>
    %396 = arith.mulf %394, %395 : vector<196x8xf32>
    %397 = arith.addf %391, %396 : vector<196x8xf32>
    %c0_579 = arith.constant 0 : index
    %c3_580 = arith.constant 3 : index
    %398 = vector.load %arg13[%c0_579, %c3_580] : memref<196x144xf32, #tpu.memory_space<vmem>>, vector<196x1xf32>
    %c3_581 = arith.constant 3 : index
    %c0_582 = arith.constant 0 : index
    %399 = vector.load %arg2[%c3_581, %c0_582] : memref<9x8xf32, #tpu.memory_space<vmem>>, vector<1x8xf32>
    %400 = vector.broadcast %398 : vector<196x1xf32> to vector<196x8xf32>
    %401 = vector.broadcast %399 : vector<1x8xf32> to vector<196x8xf32>
    %402 = arith.mulf %400, %401 : vector<196x8xf32>
    %403 = arith.addf %397, %402 : vector<196x8xf32>
    %c0_583 = arith.constant 0 : index
    %c4_584 = arith.constant 4 : index
    %404 = vector.load %arg13[%c0_583, %c4_584] : memref<196x144xf32, #tpu.memory_space<vmem>>, vector<196x1xf32>
    %c4_585 = arith.constant 4 : index
    %c0_586 = arith.constant 0 : index
    %405 = vector.load %arg2[%c4_585, %c0_586] : memref<9x8xf32, #tpu.memory_space<vmem>>, vector<1x8xf32>
    %406 = vector.broadcast %404 : vector<196x1xf32> to vector<196x8xf32>
    %407 = vector.broadcast %405 : vector<1x8xf32> to vector<196x8xf32>
    %408 = arith.mulf %406, %407 : vector<196x8xf32>
    %409 = arith.addf %403, %408 : vector<196x8xf32>
    %c0_587 = arith.constant 0 : index
    %c5_588 = arith.constant 5 : index
    %410 = vector.load %arg13[%c0_587, %c5_588] : memref<196x144xf32, #tpu.memory_space<vmem>>, vector<196x1xf32>
    %c5_589 = arith.constant 5 : index
    %c0_590 = arith.constant 0 : index
    %411 = vector.load %arg2[%c5_589, %c0_590] : memref<9x8xf32, #tpu.memory_space<vmem>>, vector<1x8xf32>
    %412 = vector.broadcast %410 : vector<196x1xf32> to vector<196x8xf32>
    %413 = vector.broadcast %411 : vector<1x8xf32> to vector<196x8xf32>
    %414 = arith.mulf %412, %413 : vector<196x8xf32>
    %415 = arith.addf %409, %414 : vector<196x8xf32>
    %c0_591 = arith.constant 0 : index
    %c6_592 = arith.constant 6 : index
    %416 = vector.load %arg13[%c0_591, %c6_592] : memref<196x144xf32, #tpu.memory_space<vmem>>, vector<196x1xf32>
    %c6_593 = arith.constant 6 : index
    %c0_594 = arith.constant 0 : index
    %417 = vector.load %arg2[%c6_593, %c0_594] : memref<9x8xf32, #tpu.memory_space<vmem>>, vector<1x8xf32>
    %418 = vector.broadcast %416 : vector<196x1xf32> to vector<196x8xf32>
    %419 = vector.broadcast %417 : vector<1x8xf32> to vector<196x8xf32>
    %420 = arith.mulf %418, %419 : vector<196x8xf32>
    %421 = arith.addf %415, %420 : vector<196x8xf32>
    %c0_595 = arith.constant 0 : index
    %c7_596 = arith.constant 7 : index
    %422 = vector.load %arg13[%c0_595, %c7_596] : memref<196x144xf32, #tpu.memory_space<vmem>>, vector<196x1xf32>
    %c7_597 = arith.constant 7 : index
    %c0_598 = arith.constant 0 : index
    %423 = vector.load %arg2[%c7_597, %c0_598] : memref<9x8xf32, #tpu.memory_space<vmem>>, vector<1x8xf32>
    %424 = vector.broadcast %422 : vector<196x1xf32> to vector<196x8xf32>
    %425 = vector.broadcast %423 : vector<1x8xf32> to vector<196x8xf32>
    %426 = arith.mulf %424, %425 : vector<196x8xf32>
    %427 = arith.addf %421, %426 : vector<196x8xf32>
    %c0_599 = arith.constant 0 : index
    %c8_600 = arith.constant 8 : index
    %428 = vector.load %arg13[%c0_599, %c8_600] : memref<196x144xf32, #tpu.memory_space<vmem>>, vector<196x1xf32>
    %c8_601 = arith.constant 8 : index
    %c0_602 = arith.constant 0 : index
    %429 = vector.load %arg2[%c8_601, %c0_602] : memref<9x8xf32, #tpu.memory_space<vmem>>, vector<1x8xf32>
    %430 = vector.broadcast %428 : vector<196x1xf32> to vector<196x8xf32>
    %431 = vector.broadcast %429 : vector<1x8xf32> to vector<196x8xf32>
    %432 = arith.mulf %430, %431 : vector<196x8xf32>
    %433 = arith.addf %427, %432 : vector<196x8xf32>
    %cst = arith.constant 0.000000e+00 : f32
    %434 = vector.broadcast %cst : f32 to vector<196x8xf32>
    %435 = arith.maximumf %433, %434 : vector<196x8xf32>
    %c0_603 = arith.constant 0 : index
    %c0_604 = arith.constant 0 : index
    %436 = vector.load %arg14[%c0_603, %c0_604] : memref<196x8xf32, #tpu.memory_space<vmem>>, vector<196x8xf32>
    tpu.vector_store %arg14[%c0_603, %c0_604], %435 {strides = array<i32>} : memref<196x8xf32, #tpu.memory_space<vmem>>, vector<196x8xf32>,
    %c0_605 = arith.constant 0 : index
    %c0_606 = arith.constant 0 : index
    %437 = vector.load %arg14[%c0_605, %c0_606] : memref<196x8xf32, #tpu.memory_space<vmem>>, vector<12x8xf32>
    %c0_607 = arith.constant 0 : index
    %c0_608 = arith.constant 0 : index
    %438 = vector.load %arg13[%c0_607, %c0_608] : memref<196x144xf32, #tpu.memory_space<vmem>>, vector<12x8xf32>
    tpu.vector_store %arg13[%c0_607, %c0_608], %437 {strides = array<i32>} : memref<196x144xf32, #tpu.memory_space<vmem>>, vector<12x8xf32>,
    %c1_609 = arith.constant 1 : index
    %c0_610 = arith.constant 0 : index
    %439 = vector.load %arg14[%c1_609, %c0_610] : memref<196x8xf32, #tpu.memory_space<vmem>>, vector<12x8xf32>
    %c0_611 = arith.constant 0 : index
    %c8_612 = arith.constant 8 : index
    %440 = vector.load %arg13[%c0_611, %c8_612] : memref<196x144xf32, #tpu.memory_space<vmem>>, vector<12x8xf32>
    tpu.vector_store %arg13[%c0_611, %c8_612], %439 {strides = array<i32>} : memref<196x144xf32, #tpu.memory_space<vmem>>, vector<12x8xf32>,
    %c2_613 = arith.constant 2 : index
    %c0_614 = arith.constant 0 : index
    %441 = vector.load %arg14[%c2_613, %c0_614] : memref<196x8xf32, #tpu.memory_space<vmem>>, vector<12x8xf32>
    %c0_615 = arith.constant 0 : index
    %c16_616 = arith.constant 16 : index
    %442 = vector.load %arg13[%c0_615, %c16_616] : memref<196x144xf32, #tpu.memory_space<vmem>>, vector<12x8xf32>
    tpu.vector_store %arg13[%c0_615, %c16_616], %441 {strides = array<i32>} : memref<196x144xf32, #tpu.memory_space<vmem>>, vector<12x8xf32>,
    %c14_617 = arith.constant 14 : index
    %c0_618 = arith.constant 0 : index
    %443 = vector.load %arg14[%c14_617, %c0_618] : memref<196x8xf32, #tpu.memory_space<vmem>>, vector<12x8xf32>
    %c0_619 = arith.constant 0 : index
    %c24 = arith.constant 24 : index
    %444 = vector.load %arg13[%c0_619, %c24] : memref<196x144xf32, #tpu.memory_space<vmem>>, vector<12x8xf32>
    tpu.vector_store %arg13[%c0_619, %c24], %443 {strides = array<i32>} : memref<196x144xf32, #tpu.memory_space<vmem>>, vector<12x8xf32>,
    %c15 = arith.constant 15 : index
    %c0_620 = arith.constant 0 : index
    %445 = vector.load %arg14[%c15, %c0_620] : memref<196x8xf32, #tpu.memory_space<vmem>>, vector<12x8xf32>
    %c0_621 = arith.constant 0 : index
    %c32_622 = arith.constant 32 : index
    %446 = vector.load %arg13[%c0_621, %c32_622] : memref<196x144xf32, #tpu.memory_space<vmem>>, vector<12x8xf32>
    tpu.vector_store %arg13[%c0_621, %c32_622], %445 {strides = array<i32>} : memref<196x144xf32, #tpu.memory_space<vmem>>, vector<12x8xf32>,
    %c16_623 = arith.constant 16 : index
    %c0_624 = arith.constant 0 : index
    %447 = vector.load %arg14[%c16_623, %c0_624] : memref<196x8xf32, #tpu.memory_space<vmem>>, vector<12x8xf32>
    %c0_625 = arith.constant 0 : index
    %c40 = arith.constant 40 : index
    %448 = vector.load %arg13[%c0_625, %c40] : memref<196x144xf32, #tpu.memory_space<vmem>>, vector<12x8xf32>
    tpu.vector_store %arg13[%c0_625, %c40], %447 {strides = array<i32>} : memref<196x144xf32, #tpu.memory_space<vmem>>, vector<12x8xf32>,
    %c28_626 = arith.constant 28 : index
    %c0_627 = arith.constant 0 : index
    %449 = vector.load %arg14[%c28_626, %c0_627] : memref<196x8xf32, #tpu.memory_space<vmem>>, vector<12x8xf32>
    %c0_628 = arith.constant 0 : index
    %c48_629 = arith.constant 48 : index
    %450 = vector.load %arg13[%c0_628, %c48_629] : memref<196x144xf32, #tpu.memory_space<vmem>>, vector<12x8xf32>
    tpu.vector_store %arg13[%c0_628, %c48_629], %449 {strides = array<i32>} : memref<196x144xf32, #tpu.memory_space<vmem>>, vector<12x8xf32>,
    %c29 = arith.constant 29 : index
    %c0_630 = arith.constant 0 : index
    %451 = vector.load %arg14[%c29, %c0_630] : memref<196x8xf32, #tpu.memory_space<vmem>>, vector<12x8xf32>
    %c0_631 = arith.constant 0 : index
    %c56_632 = arith.constant 56 : index
    %452 = vector.load %arg13[%c0_631, %c56_632] : memref<196x144xf32, #tpu.memory_space<vmem>>, vector<12x8xf32>
    tpu.vector_store %arg13[%c0_631, %c56_632], %451 {strides = array<i32>} : memref<196x144xf32, #tpu.memory_space<vmem>>, vector<12x8xf32>,
    %c30 = arith.constant 30 : index
    %c0_633 = arith.constant 0 : index
    %453 = vector.load %arg14[%c30, %c0_633] : memref<196x8xf32, #tpu.memory_space<vmem>>, vector<12x8xf32>
    %c0_634 = arith.constant 0 : index
    %c64_635 = arith.constant 64 : index
    %454 = vector.load %arg13[%c0_634, %c64_635] : memref<196x144xf32, #tpu.memory_space<vmem>>, vector<12x8xf32>
    tpu.vector_store %arg13[%c0_634, %c64_635], %453 {strides = array<i32>} : memref<196x144xf32, #tpu.memory_space<vmem>>, vector<12x8xf32>,
    %c14_636 = arith.constant 14 : index
    %c0_637 = arith.constant 0 : index
    %455 = vector.load %arg14[%c14_636, %c0_637] : memref<196x8xf32, #tpu.memory_space<vmem>>, vector<12x8xf32>
    %c12 = arith.constant 12 : index
    %c0_638 = arith.constant 0 : index
    %456 = vector.load %arg13[%c12, %c0_638] : memref<196x144xf32, #tpu.memory_space<vmem>>, vector<12x8xf32>
    tpu.vector_store %arg13[%c12, %c0_638], %455 {strides = array<i32>} : memref<196x144xf32, #tpu.memory_space<vmem>>, vector<12x8xf32>,
    %c15_639 = arith.constant 15 : index
    %c0_640 = arith.constant 0 : index
    %457 = vector.load %arg14[%c15_639, %c0_640] : memref<196x8xf32, #tpu.memory_space<vmem>>, vector<12x8xf32>
    %c12_641 = arith.constant 12 : index
    %c8_642 = arith.constant 8 : index
    %458 = vector.load %arg13[%c12_641, %c8_642] : memref<196x144xf32, #tpu.memory_space<vmem>>, vector<12x8xf32>
    tpu.vector_store %arg13[%c12_641, %c8_642], %457 {strides = array<i32>} : memref<196x144xf32, #tpu.memory_space<vmem>>, vector<12x8xf32>,
    %c16_643 = arith.constant 16 : index
    %c0_644 = arith.constant 0 : index
    %459 = vector.load %arg14[%c16_643, %c0_644] : memref<196x8xf32, #tpu.memory_space<vmem>>, vector<12x8xf32>
    %c12_645 = arith.constant 12 : index
    %c16_646 = arith.constant 16 : index
    %460 = vector.load %arg13[%c12_645, %c16_646] : memref<196x144xf32, #tpu.memory_space<vmem>>, vector<12x8xf32>
    tpu.vector_store %arg13[%c12_645, %c16_646], %459 {strides = array<i32>} : memref<196x144xf32, #tpu.memory_space<vmem>>, vector<12x8xf32>,
    %c28_647 = arith.constant 28 : index
    %c0_648 = arith.constant 0 : index
    %461 = vector.load %arg14[%c28_647, %c0_648] : memref<196x8xf32, #tpu.memory_space<vmem>>, vector<12x8xf32>
    %c12_649 = arith.constant 12 : index
    %c24_650 = arith.constant 24 : index
    %462 = vector.load %arg13[%c12_649, %c24_650] : memref<196x144xf32, #tpu.memory_space<vmem>>, vector<12x8xf32>
    tpu.vector_store %arg13[%c12_649, %c24_650], %461 {strides = array<i32>} : memref<196x144xf32, #tpu.memory_space<vmem>>, vector<12x8xf32>,
    %c29_651 = arith.constant 29 : index
    %c0_652 = arith.constant 0 : index
    %463 = vector.load %arg14[%c29_651, %c0_652] : memref<196x8xf32, #tpu.memory_space<vmem>>, vector<12x8xf32>
    %c12_653 = arith.constant 12 : index
    %c32_654 = arith.constant 32 : index
    %464 = vector.load %arg13[%c12_653, %c32_654] : memref<196x144xf32, #tpu.memory_space<vmem>>, vector<12x8xf32>
    tpu.vector_store %arg13[%c12_653, %c32_654], %463 {strides = array<i32>} : memref<196x144xf32, #tpu.memory_space<vmem>>, vector<12x8xf32>,
    %c30_655 = arith.constant 30 : index
    %c0_656 = arith.constant 0 : index
    %465 = vector.load %arg14[%c30_655, %c0_656] : memref<196x8xf32, #tpu.memory_space<vmem>>, vector<12x8xf32>
    %c12_657 = arith.constant 12 : index
    %c40_658 = arith.constant 40 : index
    %466 = vector.load %arg13[%c12_657, %c40_658] : memref<196x144xf32, #tpu.memory_space<vmem>>, vector<12x8xf32>
    tpu.vector_store %arg13[%c12_657, %c40_658], %465 {strides = array<i32>} : memref<196x144xf32, #tpu.memory_space<vmem>>, vector<12x8xf32>,
    %c42_659 = arith.constant 42 : index
    %c0_660 = arith.constant 0 : index
    %467 = vector.load %arg14[%c42_659, %c0_660] : memref<196x8xf32, #tpu.memory_space<vmem>>, vector<12x8xf32>
    %c12_661 = arith.constant 12 : index
    %c48_662 = arith.constant 48 : index
    %468 = vector.load %arg13[%c12_661, %c48_662] : memref<196x144xf32, #tpu.memory_space<vmem>>, vector<12x8xf32>
    tpu.vector_store %arg13[%c12_661, %c48_662], %467 {strides = array<i32>} : memref<196x144xf32, #tpu.memory_space<vmem>>, vector<12x8xf32>,
    %c43 = arith.constant 43 : index
    %c0_663 = arith.constant 0 : index
    %469 = vector.load %arg14[%c43, %c0_663] : memref<196x8xf32, #tpu.memory_space<vmem>>, vector<12x8xf32>
    %c12_664 = arith.constant 12 : index
    %c56_665 = arith.constant 56 : index
    %470 = vector.load %arg13[%c12_664, %c56_665] : memref<196x144xf32, #tpu.memory_space<vmem>>, vector<12x8xf32>
    tpu.vector_store %arg13[%c12_664, %c56_665], %469 {strides = array<i32>} : memref<196x144xf32, #tpu.memory_space<vmem>>, vector<12x8xf32>,
    %c44 = arith.constant 44 : index
    %c0_666 = arith.constant 0 : index
    %471 = vector.load %arg14[%c44, %c0_666] : memref<196x8xf32, #tpu.memory_space<vmem>>, vector<12x8xf32>
    %c12_667 = arith.constant 12 : index
    %c64_668 = arith.constant 64 : index
    %472 = vector.load %arg13[%c12_667, %c64_668] : memref<196x144xf32, #tpu.memory_space<vmem>>, vector<12x8xf32>
    tpu.vector_store %arg13[%c12_667, %c64_668], %471 {strides = array<i32>} : memref<196x144xf32, #tpu.memory_space<vmem>>, vector<12x8xf32>,
    %c28_669 = arith.constant 28 : index
    %c0_670 = arith.constant 0 : index
    %473 = vector.load %arg14[%c28_669, %c0_670] : memref<196x8xf32, #tpu.memory_space<vmem>>, vector<12x8xf32>
    %c24_671 = arith.constant 24 : index
    %c0_672 = arith.constant 0 : index
    %474 = vector.load %arg13[%c24_671, %c0_672] : memref<196x144xf32, #tpu.memory_space<vmem>>, vector<12x8xf32>
    tpu.vector_store %arg13[%c24_671, %c0_672], %473 {strides = array<i32>} : memref<196x144xf32, #tpu.memory_space<vmem>>, vector<12x8xf32>,
    %c29_673 = arith.constant 29 : index
    %c0_674 = arith.constant 0 : index
    %475 = vector.load %arg14[%c29_673, %c0_674] : memref<196x8xf32, #tpu.memory_space<vmem>>, vector<12x8xf32>
    %c24_675 = arith.constant 24 : index
    %c8_676 = arith.constant 8 : index
    %476 = vector.load %arg13[%c24_675, %c8_676] : memref<196x144xf32, #tpu.memory_space<vmem>>, vector<12x8xf32>
    tpu.vector_store %arg13[%c24_675, %c8_676], %475 {strides = array<i32>} : memref<196x144xf32, #tpu.memory_space<vmem>>, vector<12x8xf32>,
    %c30_677 = arith.constant 30 : index
    %c0_678 = arith.constant 0 : index
    %477 = vector.load %arg14[%c30_677, %c0_678] : memref<196x8xf32, #tpu.memory_space<vmem>>, vector<12x8xf32>
    %c24_679 = arith.constant 24 : index
    %c16_680 = arith.constant 16 : index
    %478 = vector.load %arg13[%c24_679, %c16_680] : memref<196x144xf32, #tpu.memory_space<vmem>>, vector<12x8xf32>
    tpu.vector_store %arg13[%c24_679, %c16_680], %477 {strides = array<i32>} : memref<196x144xf32, #tpu.memory_space<vmem>>, vector<12x8xf32>,
    %c42_681 = arith.constant 42 : index
    %c0_682 = arith.constant 0 : index
    %479 = vector.load %arg14[%c42_681, %c0_682] : memref<196x8xf32, #tpu.memory_space<vmem>>, vector<12x8xf32>
    %c24_683 = arith.constant 24 : index
    %c24_684 = arith.constant 24 : index
    %480 = vector.load %arg13[%c24_683, %c24_684] : memref<196x144xf32, #tpu.memory_space<vmem>>, vector<12x8xf32>
    tpu.vector_store %arg13[%c24_683, %c24_684], %479 {strides = array<i32>} : memref<196x144xf32, #tpu.memory_space<vmem>>, vector<12x8xf32>,
    %c43_685 = arith.constant 43 : index
    %c0_686 = arith.constant 0 : index
    %481 = vector.load %arg14[%c43_685, %c0_686] : memref<196x8xf32, #tpu.memory_space<vmem>>, vector<12x8xf32>
    %c24_687 = arith.constant 24 : index
    %c32_688 = arith.constant 32 : index
    %482 = vector.load %arg13[%c24_687, %c32_688] : memref<196x144xf32, #tpu.memory_space<vmem>>, vector<12x8xf32>
    tpu.vector_store %arg13[%c24_687, %c32_688], %481 {strides = array<i32>} : memref<196x144xf32, #tpu.memory_space<vmem>>, vector<12x8xf32>,
    %c44_689 = arith.constant 44 : index
    %c0_690 = arith.constant 0 : index
    %483 = vector.load %arg14[%c44_689, %c0_690] : memref<196x8xf32, #tpu.memory_space<vmem>>, vector<12x8xf32>
    %c24_691 = arith.constant 24 : index
    %c40_692 = arith.constant 40 : index
    %484 = vector.load %arg13[%c24_691, %c40_692] : memref<196x144xf32, #tpu.memory_space<vmem>>, vector<12x8xf32>
    tpu.vector_store %arg13[%c24_691, %c40_692], %483 {strides = array<i32>} : memref<196x144xf32, #tpu.memory_space<vmem>>, vector<12x8xf32>,
    %c56_693 = arith.constant 56 : index
    %c0_694 = arith.constant 0 : index
    %485 = vector.load %arg14[%c56_693, %c0_694] : memref<196x8xf32, #tpu.memory_space<vmem>>, vector<12x8xf32>
    %c24_695 = arith.constant 24 : index
    %c48_696 = arith.constant 48 : index
    %486 = vector.load %arg13[%c24_695, %c48_696] : memref<196x144xf32, #tpu.memory_space<vmem>>, vector<12x8xf32>
    tpu.vector_store %arg13[%c24_695, %c48_696], %485 {strides = array<i32>} : memref<196x144xf32, #tpu.memory_space<vmem>>, vector<12x8xf32>,
    %c57 = arith.constant 57 : index
    %c0_697 = arith.constant 0 : index
    %487 = vector.load %arg14[%c57, %c0_697] : memref<196x8xf32, #tpu.memory_space<vmem>>, vector<12x8xf32>
    %c24_698 = arith.constant 24 : index
    %c56_699 = arith.constant 56 : index
    %488 = vector.load %arg13[%c24_698, %c56_699] : memref<196x144xf32, #tpu.memory_space<vmem>>, vector<12x8xf32>
    tpu.vector_store %arg13[%c24_698, %c56_699], %487 {strides = array<i32>} : memref<196x144xf32, #tpu.memory_space<vmem>>, vector<12x8xf32>,
    %c58 = arith.constant 58 : index
    %c0_700 = arith.constant 0 : index
    %489 = vector.load %arg14[%c58, %c0_700] : memref<196x8xf32, #tpu.memory_space<vmem>>, vector<12x8xf32>
    %c24_701 = arith.constant 24 : index
    %c64_702 = arith.constant 64 : index
    %490 = vector.load %arg13[%c24_701, %c64_702] : memref<196x144xf32, #tpu.memory_space<vmem>>, vector<12x8xf32>
    tpu.vector_store %arg13[%c24_701, %c64_702], %489 {strides = array<i32>} : memref<196x144xf32, #tpu.memory_space<vmem>>, vector<12x8xf32>,
    %c42_703 = arith.constant 42 : index
    %c0_704 = arith.constant 0 : index
    %491 = vector.load %arg14[%c42_703, %c0_704] : memref<196x8xf32, #tpu.memory_space<vmem>>, vector<12x8xf32>
    %c36 = arith.constant 36 : index
    %c0_705 = arith.constant 0 : index
    %492 = vector.load %arg13[%c36, %c0_705] : memref<196x144xf32, #tpu.memory_space<vmem>>, vector<12x8xf32>
    tpu.vector_store %arg13[%c36, %c0_705], %491 {strides = array<i32>} : memref<196x144xf32, #tpu.memory_space<vmem>>, vector<12x8xf32>,
    %c43_706 = arith.constant 43 : index
    %c0_707 = arith.constant 0 : index
    %493 = vector.load %arg14[%c43_706, %c0_707] : memref<196x8xf32, #tpu.memory_space<vmem>>, vector<12x8xf32>
    %c36_708 = arith.constant 36 : index
    %c8_709 = arith.constant 8 : index
    %494 = vector.load %arg13[%c36_708, %c8_709] : memref<196x144xf32, #tpu.memory_space<vmem>>, vector<12x8xf32>
    tpu.vector_store %arg13[%c36_708, %c8_709], %493 {strides = array<i32>} : memref<196x144xf32, #tpu.memory_space<vmem>>, vector<12x8xf32>,
    %c44_710 = arith.constant 44 : index
    %c0_711 = arith.constant 0 : index
    %495 = vector.load %arg14[%c44_710, %c0_711] : memref<196x8xf32, #tpu.memory_space<vmem>>, vector<12x8xf32>
    %c36_712 = arith.constant 36 : index
    %c16_713 = arith.constant 16 : index
    %496 = vector.load %arg13[%c36_712, %c16_713] : memref<196x144xf32, #tpu.memory_space<vmem>>, vector<12x8xf32>
    tpu.vector_store %arg13[%c36_712, %c16_713], %495 {strides = array<i32>} : memref<196x144xf32, #tpu.memory_space<vmem>>, vector<12x8xf32>,
    %c56_714 = arith.constant 56 : index
    %c0_715 = arith.constant 0 : index
    %497 = vector.load %arg14[%c56_714, %c0_715] : memref<196x8xf32, #tpu.memory_space<vmem>>, vector<12x8xf32>
    %c36_716 = arith.constant 36 : index
    %c24_717 = arith.constant 24 : index
    %498 = vector.load %arg13[%c36_716, %c24_717] : memref<196x144xf32, #tpu.memory_space<vmem>>, vector<12x8xf32>
    tpu.vector_store %arg13[%c36_716, %c24_717], %497 {strides = array<i32>} : memref<196x144xf32, #tpu.memory_space<vmem>>, vector<12x8xf32>,
    %c57_718 = arith.constant 57 : index
    %c0_719 = arith.constant 0 : index
    %499 = vector.load %arg14[%c57_718, %c0_719] : memref<196x8xf32, #tpu.memory_space<vmem>>, vector<12x8xf32>
    %c36_720 = arith.constant 36 : index
    %c32_721 = arith.constant 32 : index
    %500 = vector.load %arg13[%c36_720, %c32_721] : memref<196x144xf32, #tpu.memory_space<vmem>>, vector<12x8xf32>
    tpu.vector_store %arg13[%c36_720, %c32_721], %499 {strides = array<i32>} : memref<196x144xf32, #tpu.memory_space<vmem>>, vector<12x8xf32>,
    %c58_722 = arith.constant 58 : index
    %c0_723 = arith.constant 0 : index
    %501 = vector.load %arg14[%c58_722, %c0_723] : memref<196x8xf32, #tpu.memory_space<vmem>>, vector<12x8xf32>
    %c36_724 = arith.constant 36 : index
    %c40_725 = arith.constant 40 : index
    %502 = vector.load %arg13[%c36_724, %c40_725] : memref<196x144xf32, #tpu.memory_space<vmem>>, vector<12x8xf32>
    tpu.vector_store %arg13[%c36_724, %c40_725], %501 {strides = array<i32>} : memref<196x144xf32, #tpu.memory_space<vmem>>, vector<12x8xf32>,
    %c70_726 = arith.constant 70 : index
    %c0_727 = arith.constant 0 : index
    %503 = vector.load %arg14[%c70_726, %c0_727] : memref<196x8xf32, #tpu.memory_space<vmem>>, vector<12x8xf32>
    %c36_728 = arith.constant 36 : index
    %c48_729 = arith.constant 48 : index
    %504 = vector.load %arg13[%c36_728, %c48_729] : memref<196x144xf32, #tpu.memory_space<vmem>>, vector<12x8xf32>
    tpu.vector_store %arg13[%c36_728, %c48_729], %503 {strides = array<i32>} : memref<196x144xf32, #tpu.memory_space<vmem>>, vector<12x8xf32>,
    %c71 = arith.constant 71 : index
    %c0_730 = arith.constant 0 : index
    %505 = vector.load %arg14[%c71, %c0_730] : memref<196x8xf32, #tpu.memory_space<vmem>>, vector<12x8xf32>
    %c36_731 = arith.constant 36 : index
    %c56_732 = arith.constant 56 : index
    %506 = vector.load %arg13[%c36_731, %c56_732] : memref<196x144xf32, #tpu.memory_space<vmem>>, vector<12x8xf32>
    tpu.vector_store %arg13[%c36_731, %c56_732], %505 {strides = array<i32>} : memref<196x144xf32, #tpu.memory_space<vmem>>, vector<12x8xf32>,
    %c72 = arith.constant 72 : index
    %c0_733 = arith.constant 0 : index
    %507 = vector.load %arg14[%c72, %c0_733] : memref<196x8xf32, #tpu.memory_space<vmem>>, vector<12x8xf32>
    %c36_734 = arith.constant 36 : index
    %c64_735 = arith.constant 64 : index
    %508 = vector.load %arg13[%c36_734, %c64_735] : memref<196x144xf32, #tpu.memory_space<vmem>>, vector<12x8xf32>
    tpu.vector_store %arg13[%c36_734, %c64_735], %507 {strides = array<i32>} : memref<196x144xf32, #tpu.memory_space<vmem>>, vector<12x8xf32>,
    %c56_736 = arith.constant 56 : index
    %c0_737 = arith.constant 0 : index
    %509 = vector.load %arg14[%c56_736, %c0_737] : memref<196x8xf32, #tpu.memory_space<vmem>>, vector<12x8xf32>
    %c48_738 = arith.constant 48 : index
    %c0_739 = arith.constant 0 : index
    %510 = vector.load %arg13[%c48_738, %c0_739] : memref<196x144xf32, #tpu.memory_space<vmem>>, vector<12x8xf32>
    tpu.vector_store %arg13[%c48_738, %c0_739], %509 {strides = array<i32>} : memref<196x144xf32, #tpu.memory_space<vmem>>, vector<12x8xf32>,
    %c57_740 = arith.constant 57 : index
    %c0_741 = arith.constant 0 : index
    %511 = vector.load %arg14[%c57_740, %c0_741] : memref<196x8xf32, #tpu.memory_space<vmem>>, vector<12x8xf32>
    %c48_742 = arith.constant 48 : index
    %c8_743 = arith.constant 8 : index
    %512 = vector.load %arg13[%c48_742, %c8_743] : memref<196x144xf32, #tpu.memory_space<vmem>>, vector<12x8xf32>
    tpu.vector_store %arg13[%c48_742, %c8_743], %511 {strides = array<i32>} : memref<196x144xf32, #tpu.memory_space<vmem>>, vector<12x8xf32>,
    %c58_744 = arith.constant 58 : index
    %c0_745 = arith.constant 0 : index
    %513 = vector.load %arg14[%c58_744, %c0_745] : memref<196x8xf32, #tpu.memory_space<vmem>>, vector<12x8xf32>
    %c48_746 = arith.constant 48 : index
    %c16_747 = arith.constant 16 : index
    %514 = vector.load %arg13[%c48_746, %c16_747] : memref<196x144xf32, #tpu.memory_space<vmem>>, vector<12x8xf32>
    tpu.vector_store %arg13[%c48_746, %c16_747], %513 {strides = array<i32>} : memref<196x144xf32, #tpu.memory_space<vmem>>, vector<12x8xf32>,
    %c70_748 = arith.constant 70 : index
    %c0_749 = arith.constant 0 : index
    %515 = vector.load %arg14[%c70_748, %c0_749] : memref<196x8xf32, #tpu.memory_space<vmem>>, vector<12x8xf32>
    %c48_750 = arith.constant 48 : index
    %c24_751 = arith.constant 24 : index
    %516 = vector.load %arg13[%c48_750, %c24_751] : memref<196x144xf32, #tpu.memory_space<vmem>>, vector<12x8xf32>
    tpu.vector_store %arg13[%c48_750, %c24_751], %515 {strides = array<i32>} : memref<196x144xf32, #tpu.memory_space<vmem>>, vector<12x8xf32>,
    %c71_752 = arith.constant 71 : index
    %c0_753 = arith.constant 0 : index
    %517 = vector.load %arg14[%c71_752, %c0_753] : memref<196x8xf32, #tpu.memory_space<vmem>>, vector<12x8xf32>
    %c48_754 = arith.constant 48 : index
    %c32_755 = arith.constant 32 : index
    %518 = vector.load %arg13[%c48_754, %c32_755] : memref<196x144xf32, #tpu.memory_space<vmem>>, vector<12x8xf32>
    tpu.vector_store %arg13[%c48_754, %c32_755], %517 {strides = array<i32>} : memref<196x144xf32, #tpu.memory_space<vmem>>, vector<12x8xf32>,
    %c72_756 = arith.constant 72 : index
    %c0_757 = arith.constant 0 : index
    %519 = vector.load %arg14[%c72_756, %c0_757] : memref<196x8xf32, #tpu.memory_space<vmem>>, vector<12x8xf32>
    %c48_758 = arith.constant 48 : index
    %c40_759 = arith.constant 40 : index
    %520 = vector.load %arg13[%c48_758, %c40_759] : memref<196x144xf32, #tpu.memory_space<vmem>>, vector<12x8xf32>
    tpu.vector_store %arg13[%c48_758, %c40_759], %519 {strides = array<i32>} : memref<196x144xf32, #tpu.memory_space<vmem>>, vector<12x8xf32>,
    %c84_760 = arith.constant 84 : index
    %c0_761 = arith.constant 0 : index
    %521 = vector.load %arg14[%c84_760, %c0_761] : memref<196x8xf32, #tpu.memory_space<vmem>>, vector<12x8xf32>
    %c48_762 = arith.constant 48 : index
    %c48_763 = arith.constant 48 : index
    %522 = vector.load %arg13[%c48_762, %c48_763] : memref<196x144xf32, #tpu.memory_space<vmem>>, vector<12x8xf32>
    tpu.vector_store %arg13[%c48_762, %c48_763], %521 {strides = array<i32>} : memref<196x144xf32, #tpu.memory_space<vmem>>, vector<12x8xf32>,
    %c85 = arith.constant 85 : index
    %c0_764 = arith.constant 0 : index
    %523 = vector.load %arg14[%c85, %c0_764] : memref<196x8xf32, #tpu.memory_space<vmem>>, vector<12x8xf32>
    %c48_765 = arith.constant 48 : index
    %c56_766 = arith.constant 56 : index
    %524 = vector.load %arg13[%c48_765, %c56_766] : memref<196x144xf32, #tpu.memory_space<vmem>>, vector<12x8xf32>
    tpu.vector_store %arg13[%c48_765, %c56_766], %523 {strides = array<i32>} : memref<196x144xf32, #tpu.memory_space<vmem>>, vector<12x8xf32>,
    %c86 = arith.constant 86 : index
    %c0_767 = arith.constant 0 : index
    %525 = vector.load %arg14[%c86, %c0_767] : memref<196x8xf32, #tpu.memory_space<vmem>>, vector<12x8xf32>
    %c48_768 = arith.constant 48 : index
    %c64_769 = arith.constant 64 : index
    %526 = vector.load %arg13[%c48_768, %c64_769] : memref<196x144xf32, #tpu.memory_space<vmem>>, vector<12x8xf32>
    tpu.vector_store %arg13[%c48_768, %c64_769], %525 {strides = array<i32>} : memref<196x144xf32, #tpu.memory_space<vmem>>, vector<12x8xf32>,
    %c70_770 = arith.constant 70 : index
    %c0_771 = arith.constant 0 : index
    %527 = vector.load %arg14[%c70_770, %c0_771] : memref<196x8xf32, #tpu.memory_space<vmem>>, vector<12x8xf32>
    %c60 = arith.constant 60 : index
    %c0_772 = arith.constant 0 : index
    %528 = vector.load %arg13[%c60, %c0_772] : memref<196x144xf32, #tpu.memory_space<vmem>>, vector<12x8xf32>
    tpu.vector_store %arg13[%c60, %c0_772], %527 {strides = array<i32>} : memref<196x144xf32, #tpu.memory_space<vmem>>, vector<12x8xf32>,
    %c71_773 = arith.constant 71 : index
    %c0_774 = arith.constant 0 : index
    %529 = vector.load %arg14[%c71_773, %c0_774] : memref<196x8xf32, #tpu.memory_space<vmem>>, vector<12x8xf32>
    %c60_775 = arith.constant 60 : index
    %c8_776 = arith.constant 8 : index
    %530 = vector.load %arg13[%c60_775, %c8_776] : memref<196x144xf32, #tpu.memory_space<vmem>>, vector<12x8xf32>
    tpu.vector_store %arg13[%c60_775, %c8_776], %529 {strides = array<i32>} : memref<196x144xf32, #tpu.memory_space<vmem>>, vector<12x8xf32>,
    %c72_777 = arith.constant 72 : index
    %c0_778 = arith.constant 0 : index
    %531 = vector.load %arg14[%c72_777, %c0_778] : memref<196x8xf32, #tpu.memory_space<vmem>>, vector<12x8xf32>
    %c60_779 = arith.constant 60 : index
    %c16_780 = arith.constant 16 : index
    %532 = vector.load %arg13[%c60_779, %c16_780] : memref<196x144xf32, #tpu.memory_space<vmem>>, vector<12x8xf32>
    tpu.vector_store %arg13[%c60_779, %c16_780], %531 {strides = array<i32>} : memref<196x144xf32, #tpu.memory_space<vmem>>, vector<12x8xf32>,
    %c84_781 = arith.constant 84 : index
    %c0_782 = arith.constant 0 : index
    %533 = vector.load %arg14[%c84_781, %c0_782] : memref<196x8xf32, #tpu.memory_space<vmem>>, vector<12x8xf32>
    %c60_783 = arith.constant 60 : index
    %c24_784 = arith.constant 24 : index
    %534 = vector.load %arg13[%c60_783, %c24_784] : memref<196x144xf32, #tpu.memory_space<vmem>>, vector<12x8xf32>
    tpu.vector_store %arg13[%c60_783, %c24_784], %533 {strides = array<i32>} : memref<196x144xf32, #tpu.memory_space<vmem>>, vector<12x8xf32>,
    %c85_785 = arith.constant 85 : index
    %c0_786 = arith.constant 0 : index
    %535 = vector.load %arg14[%c85_785, %c0_786] : memref<196x8xf32, #tpu.memory_space<vmem>>, vector<12x8xf32>
    %c60_787 = arith.constant 60 : index
    %c32_788 = arith.constant 32 : index
    %536 = vector.load %arg13[%c60_787, %c32_788] : memref<196x144xf32, #tpu.memory_space<vmem>>, vector<12x8xf32>
    tpu.vector_store %arg13[%c60_787, %c32_788], %535 {strides = array<i32>} : memref<196x144xf32, #tpu.memory_space<vmem>>, vector<12x8xf32>,
    %c86_789 = arith.constant 86 : index
    %c0_790 = arith.constant 0 : index
    %537 = vector.load %arg14[%c86_789, %c0_790] : memref<196x8xf32, #tpu.memory_space<vmem>>, vector<12x8xf32>
    %c60_791 = arith.constant 60 : index
    %c40_792 = arith.constant 40 : index
    %538 = vector.load %arg13[%c60_791, %c40_792] : memref<196x144xf32, #tpu.memory_space<vmem>>, vector<12x8xf32>
    tpu.vector_store %arg13[%c60_791, %c40_792], %537 {strides = array<i32>} : memref<196x144xf32, #tpu.memory_space<vmem>>, vector<12x8xf32>,
    %c98_793 = arith.constant 98 : index
    %c0_794 = arith.constant 0 : index
    %539 = vector.load %arg14[%c98_793, %c0_794] : memref<196x8xf32, #tpu.memory_space<vmem>>, vector<12x8xf32>
    %c60_795 = arith.constant 60 : index
    %c48_796 = arith.constant 48 : index
    %540 = vector.load %arg13[%c60_795, %c48_796] : memref<196x144xf32, #tpu.memory_space<vmem>>, vector<12x8xf32>
    tpu.vector_store %arg13[%c60_795, %c48_796], %539 {strides = array<i32>} : memref<196x144xf32, #tpu.memory_space<vmem>>, vector<12x8xf32>,
    %c99 = arith.constant 99 : index
    %c0_797 = arith.constant 0 : index
    %541 = vector.load %arg14[%c99, %c0_797] : memref<196x8xf32, #tpu.memory_space<vmem>>, vector<12x8xf32>
    %c60_798 = arith.constant 60 : index
    %c56_799 = arith.constant 56 : index
    %542 = vector.load %arg13[%c60_798, %c56_799] : memref<196x144xf32, #tpu.memory_space<vmem>>, vector<12x8xf32>
    tpu.vector_store %arg13[%c60_798, %c56_799], %541 {strides = array<i32>} : memref<196x144xf32, #tpu.memory_space<vmem>>, vector<12x8xf32>,
    %c100 = arith.constant 100 : index
    %c0_800 = arith.constant 0 : index
    %543 = vector.load %arg14[%c100, %c0_800] : memref<196x8xf32, #tpu.memory_space<vmem>>, vector<12x8xf32>
    %c60_801 = arith.constant 60 : index
    %c64_802 = arith.constant 64 : index
    %544 = vector.load %arg13[%c60_801, %c64_802] : memref<196x144xf32, #tpu.memory_space<vmem>>, vector<12x8xf32>
    tpu.vector_store %arg13[%c60_801, %c64_802], %543 {strides = array<i32>} : memref<196x144xf32, #tpu.memory_space<vmem>>, vector<12x8xf32>,
    %c84_803 = arith.constant 84 : index
    %c0_804 = arith.constant 0 : index
    %545 = vector.load %arg14[%c84_803, %c0_804] : memref<196x8xf32, #tpu.memory_space<vmem>>, vector<12x8xf32>
    %c72_805 = arith.constant 72 : index
    %c0_806 = arith.constant 0 : index
    %546 = vector.load %arg13[%c72_805, %c0_806] : memref<196x144xf32, #tpu.memory_space<vmem>>, vector<12x8xf32>
    tpu.vector_store %arg13[%c72_805, %c0_806], %545 {strides = array<i32>} : memref<196x144xf32, #tpu.memory_space<vmem>>, vector<12x8xf32>,
    %c85_807 = arith.constant 85 : index
    %c0_808 = arith.constant 0 : index
    %547 = vector.load %arg14[%c85_807, %c0_808] : memref<196x8xf32, #tpu.memory_space<vmem>>, vector<12x8xf32>
    %c72_809 = arith.constant 72 : index
    %c8_810 = arith.constant 8 : index
    %548 = vector.load %arg13[%c72_809, %c8_810] : memref<196x144xf32, #tpu.memory_space<vmem>>, vector<12x8xf32>
    tpu.vector_store %arg13[%c72_809, %c8_810], %547 {strides = array<i32>} : memref<196x144xf32, #tpu.memory_space<vmem>>, vector<12x8xf32>,
    %c86_811 = arith.constant 86 : index
    %c0_812 = arith.constant 0 : index
    %549 = vector.load %arg14[%c86_811, %c0_812] : memref<196x8xf32, #tpu.memory_space<vmem>>, vector<12x8xf32>
    %c72_813 = arith.constant 72 : index
    %c16_814 = arith.constant 16 : index
    %550 = vector.load %arg13[%c72_813, %c16_814] : memref<196x144xf32, #tpu.memory_space<vmem>>, vector<12x8xf32>
    tpu.vector_store %arg13[%c72_813, %c16_814], %549 {strides = array<i32>} : memref<196x144xf32, #tpu.memory_space<vmem>>, vector<12x8xf32>,
    %c98_815 = arith.constant 98 : index
    %c0_816 = arith.constant 0 : index
    %551 = vector.load %arg14[%c98_815, %c0_816] : memref<196x8xf32, #tpu.memory_space<vmem>>, vector<12x8xf32>
    %c72_817 = arith.constant 72 : index
    %c24_818 = arith.constant 24 : index
    %552 = vector.load %arg13[%c72_817, %c24_818] : memref<196x144xf32, #tpu.memory_space<vmem>>, vector<12x8xf32>
    tpu.vector_store %arg13[%c72_817, %c24_818], %551 {strides = array<i32>} : memref<196x144xf32, #tpu.memory_space<vmem>>, vector<12x8xf32>,
    %c99_819 = arith.constant 99 : index
    %c0_820 = arith.constant 0 : index
    %553 = vector.load %arg14[%c99_819, %c0_820] : memref<196x8xf32, #tpu.memory_space<vmem>>, vector<12x8xf32>
    %c72_821 = arith.constant 72 : index
    %c32_822 = arith.constant 32 : index
    %554 = vector.load %arg13[%c72_821, %c32_822] : memref<196x144xf32, #tpu.memory_space<vmem>>, vector<12x8xf32>
    tpu.vector_store %arg13[%c72_821, %c32_822], %553 {strides = array<i32>} : memref<196x144xf32, #tpu.memory_space<vmem>>, vector<12x8xf32>,
    %c100_823 = arith.constant 100 : index
    %c0_824 = arith.constant 0 : index
    %555 = vector.load %arg14[%c100_823, %c0_824] : memref<196x8xf32, #tpu.memory_space<vmem>>, vector<12x8xf32>
    %c72_825 = arith.constant 72 : index
    %c40_826 = arith.constant 40 : index
    %556 = vector.load %arg13[%c72_825, %c40_826] : memref<196x144xf32, #tpu.memory_space<vmem>>, vector<12x8xf32>
    tpu.vector_store %arg13[%c72_825, %c40_826], %555 {strides = array<i32>} : memref<196x144xf32, #tpu.memory_space<vmem>>, vector<12x8xf32>,
    %c112_827 = arith.constant 112 : index
    %c0_828 = arith.constant 0 : index
    %557 = vector.load %arg14[%c112_827, %c0_828] : memref<196x8xf32, #tpu.memory_space<vmem>>, vector<12x8xf32>
    %c72_829 = arith.constant 72 : index
    %c48_830 = arith.constant 48 : index
    %558 = vector.load %arg13[%c72_829, %c48_830] : memref<196x144xf32, #tpu.memory_space<vmem>>, vector<12x8xf32>
    tpu.vector_store %arg13[%c72_829, %c48_830], %557 {strides = array<i32>} : memref<196x144xf32, #tpu.memory_space<vmem>>, vector<12x8xf32>,
    %c113_831 = arith.constant 113 : index
    %c0_832 = arith.constant 0 : index
    %559 = vector.load %arg14[%c113_831, %c0_832] : memref<196x8xf32, #tpu.memory_space<vmem>>, vector<12x8xf32>
    %c72_833 = arith.constant 72 : index
    %c56_834 = arith.constant 56 : index
    %560 = vector.load %arg13[%c72_833, %c56_834] : memref<196x144xf32, #tpu.memory_space<vmem>>, vector<12x8xf32>
    tpu.vector_store %arg13[%c72_833, %c56_834], %559 {strides = array<i32>} : memref<196x144xf32, #tpu.memory_space<vmem>>, vector<12x8xf32>,
    %c114_835 = arith.constant 114 : index
    %c0_836 = arith.constant 0 : index
    %561 = vector.load %arg14[%c114_835, %c0_836] : memref<196x8xf32, #tpu.memory_space<vmem>>, vector<12x8xf32>
    %c72_837 = arith.constant 72 : index
    %c64_838 = arith.constant 64 : index
    %562 = vector.load %arg13[%c72_837, %c64_838] : memref<196x144xf32, #tpu.memory_space<vmem>>, vector<12x8xf32>
    tpu.vector_store %arg13[%c72_837, %c64_838], %561 {strides = array<i32>} : memref<196x144xf32, #tpu.memory_space<vmem>>, vector<12x8xf32>,
    %c98_839 = arith.constant 98 : index
    %c0_840 = arith.constant 0 : index
    %563 = vector.load %arg14[%c98_839, %c0_840] : memref<196x8xf32, #tpu.memory_space<vmem>>, vector<12x8xf32>
    %c84_841 = arith.constant 84 : index
    %c0_842 = arith.constant 0 : index
    %564 = vector.load %arg13[%c84_841, %c0_842] : memref<196x144xf32, #tpu.memory_space<vmem>>, vector<12x8xf32>
    tpu.vector_store %arg13[%c84_841, %c0_842], %563 {strides = array<i32>} : memref<196x144xf32, #tpu.memory_space<vmem>>, vector<12x8xf32>,
    %c99_843 = arith.constant 99 : index
    %c0_844 = arith.constant 0 : index
    %565 = vector.load %arg14[%c99_843, %c0_844] : memref<196x8xf32, #tpu.memory_space<vmem>>, vector<12x8xf32>
    %c84_845 = arith.constant 84 : index
    %c8_846 = arith.constant 8 : index
    %566 = vector.load %arg13[%c84_845, %c8_846] : memref<196x144xf32, #tpu.memory_space<vmem>>, vector<12x8xf32>
    tpu.vector_store %arg13[%c84_845, %c8_846], %565 {strides = array<i32>} : memref<196x144xf32, #tpu.memory_space<vmem>>, vector<12x8xf32>,
    %c100_847 = arith.constant 100 : index
    %c0_848 = arith.constant 0 : index
    %567 = vector.load %arg14[%c100_847, %c0_848] : memref<196x8xf32, #tpu.memory_space<vmem>>, vector<12x8xf32>
    %c84_849 = arith.constant 84 : index
    %c16_850 = arith.constant 16 : index
    %568 = vector.load %arg13[%c84_849, %c16_850] : memref<196x144xf32, #tpu.memory_space<vmem>>, vector<12x8xf32>
    tpu.vector_store %arg13[%c84_849, %c16_850], %567 {strides = array<i32>} : memref<196x144xf32, #tpu.memory_space<vmem>>, vector<12x8xf32>,
    %c112_851 = arith.constant 112 : index
    %c0_852 = arith.constant 0 : index
    %569 = vector.load %arg14[%c112_851, %c0_852] : memref<196x8xf32, #tpu.memory_space<vmem>>, vector<12x8xf32>
    %c84_853 = arith.constant 84 : index
    %c24_854 = arith.constant 24 : index
    %570 = vector.load %arg13[%c84_853, %c24_854] : memref<196x144xf32, #tpu.memory_space<vmem>>, vector<12x8xf32>
    tpu.vector_store %arg13[%c84_853, %c24_854], %569 {strides = array<i32>} : memref<196x144xf32, #tpu.memory_space<vmem>>, vector<12x8xf32>,
    %c113_855 = arith.constant 113 : index
    %c0_856 = arith.constant 0 : index
    %571 = vector.load %arg14[%c113_855, %c0_856] : memref<196x8xf32, #tpu.memory_space<vmem>>, vector<12x8xf32>
    %c84_857 = arith.constant 84 : index
    %c32_858 = arith.constant 32 : index
    %572 = vector.load %arg13[%c84_857, %c32_858] : memref<196x144xf32, #tpu.memory_space<vmem>>, vector<12x8xf32>
    tpu.vector_store %arg13[%c84_857, %c32_858], %571 {strides = array<i32>} : memref<196x144xf32, #tpu.memory_space<vmem>>, vector<12x8xf32>,
    %c114_859 = arith.constant 114 : index
    %c0_860 = arith.constant 0 : index
    %573 = vector.load %arg14[%c114_859, %c0_860] : memref<196x8xf32, #tpu.memory_space<vmem>>, vector<12x8xf32>
    %c84_861 = arith.constant 84 : index
    %c40_862 = arith.constant 40 : index
    %574 = vector.load %arg13[%c84_861, %c40_862] : memref<196x144xf32, #tpu.memory_space<vmem>>, vector<12x8xf32>
    tpu.vector_store %arg13[%c84_861, %c40_862], %573 {strides = array<i32>} : memref<196x144xf32, #tpu.memory_space<vmem>>, vector<12x8xf32>,
    %c126_863 = arith.constant 126 : index
    %c0_864 = arith.constant 0 : index
    %575 = vector.load %arg14[%c126_863, %c0_864] : memref<196x8xf32, #tpu.memory_space<vmem>>, vector<12x8xf32>
    %c84_865 = arith.constant 84 : index
    %c48_866 = arith.constant 48 : index
    %576 = vector.load %arg13[%c84_865, %c48_866] : memref<196x144xf32, #tpu.memory_space<vmem>>, vector<12x8xf32>
    tpu.vector_store %arg13[%c84_865, %c48_866], %575 {strides = array<i32>} : memref<196x144xf32, #tpu.memory_space<vmem>>, vector<12x8xf32>,
    %c127 = arith.constant 127 : index
    %c0_867 = arith.constant 0 : index
    %577 = vector.load %arg14[%c127, %c0_867] : memref<196x8xf32, #tpu.memory_space<vmem>>, vector<12x8xf32>
    %c84_868 = arith.constant 84 : index
    %c56_869 = arith.constant 56 : index
    %578 = vector.load %arg13[%c84_868, %c56_869] : memref<196x144xf32, #tpu.memory_space<vmem>>, vector<12x8xf32>
    tpu.vector_store %arg13[%c84_868, %c56_869], %577 {strides = array<i32>} : memref<196x144xf32, #tpu.memory_space<vmem>>, vector<12x8xf32>,
    %c128_870 = arith.constant 128 : index
    %c0_871 = arith.constant 0 : index
    %579 = vector.load %arg14[%c128_870, %c0_871] : memref<196x8xf32, #tpu.memory_space<vmem>>, vector<12x8xf32>
    %c84_872 = arith.constant 84 : index
    %c64_873 = arith.constant 64 : index
    %580 = vector.load %arg13[%c84_872, %c64_873] : memref<196x144xf32, #tpu.memory_space<vmem>>, vector<12x8xf32>
    tpu.vector_store %arg13[%c84_872, %c64_873], %579 {strides = array<i32>} : memref<196x144xf32, #tpu.memory_space<vmem>>, vector<12x8xf32>,
    %c112_874 = arith.constant 112 : index
    %c0_875 = arith.constant 0 : index
    %581 = vector.load %arg14[%c112_874, %c0_875] : memref<196x8xf32, #tpu.memory_space<vmem>>, vector<12x8xf32>
    %c96_876 = arith.constant 96 : index
    %c0_877 = arith.constant 0 : index
    %582 = vector.load %arg13[%c96_876, %c0_877] : memref<196x144xf32, #tpu.memory_space<vmem>>, vector<12x8xf32>
    tpu.vector_store %arg13[%c96_876, %c0_877], %581 {strides = array<i32>} : memref<196x144xf32, #tpu.memory_space<vmem>>, vector<12x8xf32>,
    %c113_878 = arith.constant 113 : index
    %c0_879 = arith.constant 0 : index
    %583 = vector.load %arg14[%c113_878, %c0_879] : memref<196x8xf32, #tpu.memory_space<vmem>>, vector<12x8xf32>
    %c96_880 = arith.constant 96 : index
    %c8_881 = arith.constant 8 : index
    %584 = vector.load %arg13[%c96_880, %c8_881] : memref<196x144xf32, #tpu.memory_space<vmem>>, vector<12x8xf32>
    tpu.vector_store %arg13[%c96_880, %c8_881], %583 {strides = array<i32>} : memref<196x144xf32, #tpu.memory_space<vmem>>, vector<12x8xf32>,
    %c114_882 = arith.constant 114 : index
    %c0_883 = arith.constant 0 : index
    %585 = vector.load %arg14[%c114_882, %c0_883] : memref<196x8xf32, #tpu.memory_space<vmem>>, vector<12x8xf32>
    %c96_884 = arith.constant 96 : index
    %c16_885 = arith.constant 16 : index
    %586 = vector.load %arg13[%c96_884, %c16_885] : memref<196x144xf32, #tpu.memory_space<vmem>>, vector<12x8xf32>
    tpu.vector_store %arg13[%c96_884, %c16_885], %585 {strides = array<i32>} : memref<196x144xf32, #tpu.memory_space<vmem>>, vector<12x8xf32>,
    %c126_886 = arith.constant 126 : index
    %c0_887 = arith.constant 0 : index
    %587 = vector.load %arg14[%c126_886, %c0_887] : memref<196x8xf32, #tpu.memory_space<vmem>>, vector<12x8xf32>
    %c96_888 = arith.constant 96 : index
    %c24_889 = arith.constant 24 : index
    %588 = vector.load %arg13[%c96_888, %c24_889] : memref<196x144xf32, #tpu.memory_space<vmem>>, vector<12x8xf32>
    tpu.vector_store %arg13[%c96_888, %c24_889], %587 {strides = array<i32>} : memref<196x144xf32, #tpu.memory_space<vmem>>, vector<12x8xf32>,
    %c127_890 = arith.constant 127 : index
    %c0_891 = arith.constant 0 : index
    %589 = vector.load %arg14[%c127_890, %c0_891] : memref<196x8xf32, #tpu.memory_space<vmem>>, vector<12x8xf32>
    %c96_892 = arith.constant 96 : index
    %c32_893 = arith.constant 32 : index
    %590 = vector.load %arg13[%c96_892, %c32_893] : memref<196x144xf32, #tpu.memory_space<vmem>>, vector<12x8xf32>
    tpu.vector_store %arg13[%c96_892, %c32_893], %589 {strides = array<i32>} : memref<196x144xf32, #tpu.memory_space<vmem>>, vector<12x8xf32>,
    %c128_894 = arith.constant 128 : index
    %c0_895 = arith.constant 0 : index
    %591 = vector.load %arg14[%c128_894, %c0_895] : memref<196x8xf32, #tpu.memory_space<vmem>>, vector<12x8xf32>
    %c96_896 = arith.constant 96 : index
    %c40_897 = arith.constant 40 : index
    %592 = vector.load %arg13[%c96_896, %c40_897] : memref<196x144xf32, #tpu.memory_space<vmem>>, vector<12x8xf32>
    tpu.vector_store %arg13[%c96_896, %c40_897], %591 {strides = array<i32>} : memref<196x144xf32, #tpu.memory_space<vmem>>, vector<12x8xf32>,
    %c140_898 = arith.constant 140 : index
    %c0_899 = arith.constant 0 : index
    %593 = vector.load %arg14[%c140_898, %c0_899] : memref<196x8xf32, #tpu.memory_space<vmem>>, vector<12x8xf32>
    %c96_900 = arith.constant 96 : index
    %c48_901 = arith.constant 48 : index
    %594 = vector.load %arg13[%c96_900, %c48_901] : memref<196x144xf32, #tpu.memory_space<vmem>>, vector<12x8xf32>
    tpu.vector_store %arg13[%c96_900, %c48_901], %593 {strides = array<i32>} : memref<196x144xf32, #tpu.memory_space<vmem>>, vector<12x8xf32>,
    %c141 = arith.constant 141 : index
    %c0_902 = arith.constant 0 : index
    %595 = vector.load %arg14[%c141, %c0_902] : memref<196x8xf32, #tpu.memory_space<vmem>>, vector<12x8xf32>
    %c96_903 = arith.constant 96 : index
    %c56_904 = arith.constant 56 : index
    %596 = vector.load %arg13[%c96_903, %c56_904] : memref<196x144xf32, #tpu.memory_space<vmem>>, vector<12x8xf32>
    tpu.vector_store %arg13[%c96_903, %c56_904], %595 {strides = array<i32>} : memref<196x144xf32, #tpu.memory_space<vmem>>, vector<12x8xf32>,
    %c142 = arith.constant 142 : index
    %c0_905 = arith.constant 0 : index
    %597 = vector.load %arg14[%c142, %c0_905] : memref<196x8xf32, #tpu.memory_space<vmem>>, vector<12x8xf32>
    %c96_906 = arith.constant 96 : index
    %c64_907 = arith.constant 64 : index
    %598 = vector.load %arg13[%c96_906, %c64_907] : memref<196x144xf32, #tpu.memory_space<vmem>>, vector<12x8xf32>
    tpu.vector_store %arg13[%c96_906, %c64_907], %597 {strides = array<i32>} : memref<196x144xf32, #tpu.memory_space<vmem>>, vector<12x8xf32>,
    %c126_908 = arith.constant 126 : index
    %c0_909 = arith.constant 0 : index
    %599 = vector.load %arg14[%c126_908, %c0_909] : memref<196x8xf32, #tpu.memory_space<vmem>>, vector<12x8xf32>
    %c108 = arith.constant 108 : index
    %c0_910 = arith.constant 0 : index
    %600 = vector.load %arg13[%c108, %c0_910] : memref<196x144xf32, #tpu.memory_space<vmem>>, vector<12x8xf32>
    tpu.vector_store %arg13[%c108, %c0_910], %599 {strides = array<i32>} : memref<196x144xf32, #tpu.memory_space<vmem>>, vector<12x8xf32>,
    %c127_911 = arith.constant 127 : index
    %c0_912 = arith.constant 0 : index
    %601 = vector.load %arg14[%c127_911, %c0_912] : memref<196x8xf32, #tpu.memory_space<vmem>>, vector<12x8xf32>
    %c108_913 = arith.constant 108 : index
    %c8_914 = arith.constant 8 : index
    %602 = vector.load %arg13[%c108_913, %c8_914] : memref<196x144xf32, #tpu.memory_space<vmem>>, vector<12x8xf32>
    tpu.vector_store %arg13[%c108_913, %c8_914], %601 {strides = array<i32>} : memref<196x144xf32, #tpu.memory_space<vmem>>, vector<12x8xf32>,
    %c128_915 = arith.constant 128 : index
    %c0_916 = arith.constant 0 : index
    %603 = vector.load %arg14[%c128_915, %c0_916] : memref<196x8xf32, #tpu.memory_space<vmem>>, vector<12x8xf32>
    %c108_917 = arith.constant 108 : index
    %c16_918 = arith.constant 16 : index
    %604 = vector.load %arg13[%c108_917, %c16_918] : memref<196x144xf32, #tpu.memory_space<vmem>>, vector<12x8xf32>
    tpu.vector_store %arg13[%c108_917, %c16_918], %603 {strides = array<i32>} : memref<196x144xf32, #tpu.memory_space<vmem>>, vector<12x8xf32>,
    %c140_919 = arith.constant 140 : index
    %c0_920 = arith.constant 0 : index
    %605 = vector.load %arg14[%c140_919, %c0_920] : memref<196x8xf32, #tpu.memory_space<vmem>>, vector<12x8xf32>
    %c108_921 = arith.constant 108 : index
    %c24_922 = arith.constant 24 : index
    %606 = vector.load %arg13[%c108_921, %c24_922] : memref<196x144xf32, #tpu.memory_space<vmem>>, vector<12x8xf32>
    tpu.vector_store %arg13[%c108_921, %c24_922], %605 {strides = array<i32>} : memref<196x144xf32, #tpu.memory_space<vmem>>, vector<12x8xf32>,
    %c141_923 = arith.constant 141 : index
    %c0_924 = arith.constant 0 : index
    %607 = vector.load %arg14[%c141_923, %c0_924] : memref<196x8xf32, #tpu.memory_space<vmem>>, vector<12x8xf32>
    %c108_925 = arith.constant 108 : index
    %c32_926 = arith.constant 32 : index
    %608 = vector.load %arg13[%c108_925, %c32_926] : memref<196x144xf32, #tpu.memory_space<vmem>>, vector<12x8xf32>
    tpu.vector_store %arg13[%c108_925, %c32_926], %607 {strides = array<i32>} : memref<196x144xf32, #tpu.memory_space<vmem>>, vector<12x8xf32>,
    %c142_927 = arith.constant 142 : index
    %c0_928 = arith.constant 0 : index
    %609 = vector.load %arg14[%c142_927, %c0_928] : memref<196x8xf32, #tpu.memory_space<vmem>>, vector<12x8xf32>
    %c108_929 = arith.constant 108 : index
    %c40_930 = arith.constant 40 : index
    %610 = vector.load %arg13[%c108_929, %c40_930] : memref<196x144xf32, #tpu.memory_space<vmem>>, vector<12x8xf32>
    tpu.vector_store %arg13[%c108_929, %c40_930], %609 {strides = array<i32>} : memref<196x144xf32, #tpu.memory_space<vmem>>, vector<12x8xf32>,
    %c154_931 = arith.constant 154 : index
    %c0_932 = arith.constant 0 : index
    %611 = vector.load %arg14[%c154_931, %c0_932] : memref<196x8xf32, #tpu.memory_space<vmem>>, vector<12x8xf32>
    %c108_933 = arith.constant 108 : index
    %c48_934 = arith.constant 48 : index
    %612 = vector.load %arg13[%c108_933, %c48_934] : memref<196x144xf32, #tpu.memory_space<vmem>>, vector<12x8xf32>
    tpu.vector_store %arg13[%c108_933, %c48_934], %611 {strides = array<i32>} : memref<196x144xf32, #tpu.memory_space<vmem>>, vector<12x8xf32>,
    %c155 = arith.constant 155 : index
    %c0_935 = arith.constant 0 : index
    %613 = vector.load %arg14[%c155, %c0_935] : memref<196x8xf32, #tpu.memory_space<vmem>>, vector<12x8xf32>
    %c108_936 = arith.constant 108 : index
    %c56_937 = arith.constant 56 : index
    %614 = vector.load %arg13[%c108_936, %c56_937] : memref<196x144xf32, #tpu.memory_space<vmem>>, vector<12x8xf32>
    tpu.vector_store %arg13[%c108_936, %c56_937], %613 {strides = array<i32>} : memref<196x144xf32, #tpu.memory_space<vmem>>, vector<12x8xf32>,
    %c156 = arith.constant 156 : index
    %c0_938 = arith.constant 0 : index
    %615 = vector.load %arg14[%c156, %c0_938] : memref<196x8xf32, #tpu.memory_space<vmem>>, vector<12x8xf32>
    %c108_939 = arith.constant 108 : index
    %c64_940 = arith.constant 64 : index
    %616 = vector.load %arg13[%c108_939, %c64_940] : memref<196x144xf32, #tpu.memory_space<vmem>>, vector<12x8xf32>
    tpu.vector_store %arg13[%c108_939, %c64_940], %615 {strides = array<i32>} : memref<196x144xf32, #tpu.memory_space<vmem>>, vector<12x8xf32>,
    %c140_941 = arith.constant 140 : index
    %c0_942 = arith.constant 0 : index
    %617 = vector.load %arg14[%c140_941, %c0_942] : memref<196x8xf32, #tpu.memory_space<vmem>>, vector<12x8xf32>
    %c120 = arith.constant 120 : index
    %c0_943 = arith.constant 0 : index
    %618 = vector.load %arg13[%c120, %c0_943] : memref<196x144xf32, #tpu.memory_space<vmem>>, vector<12x8xf32>
    tpu.vector_store %arg13[%c120, %c0_943], %617 {strides = array<i32>} : memref<196x144xf32, #tpu.memory_space<vmem>>, vector<12x8xf32>,
    %c141_944 = arith.constant 141 : index
    %c0_945 = arith.constant 0 : index
    %619 = vector.load %arg14[%c141_944, %c0_945] : memref<196x8xf32, #tpu.memory_space<vmem>>, vector<12x8xf32>
    %c120_946 = arith.constant 120 : index
    %c8_947 = arith.constant 8 : index
    %620 = vector.load %arg13[%c120_946, %c8_947] : memref<196x144xf32, #tpu.memory_space<vmem>>, vector<12x8xf32>
    tpu.vector_store %arg13[%c120_946, %c8_947], %619 {strides = array<i32>} : memref<196x144xf32, #tpu.memory_space<vmem>>, vector<12x8xf32>,
    %c142_948 = arith.constant 142 : index
    %c0_949 = arith.constant 0 : index
    %621 = vector.load %arg14[%c142_948, %c0_949] : memref<196x8xf32, #tpu.memory_space<vmem>>, vector<12x8xf32>
    %c120_950 = arith.constant 120 : index
    %c16_951 = arith.constant 16 : index
    %622 = vector.load %arg13[%c120_950, %c16_951] : memref<196x144xf32, #tpu.memory_space<vmem>>, vector<12x8xf32>
    tpu.vector_store %arg13[%c120_950, %c16_951], %621 {strides = array<i32>} : memref<196x144xf32, #tpu.memory_space<vmem>>, vector<12x8xf32>,
    %c154_952 = arith.constant 154 : index
    %c0_953 = arith.constant 0 : index
    %623 = vector.load %arg14[%c154_952, %c0_953] : memref<196x8xf32, #tpu.memory_space<vmem>>, vector<12x8xf32>
    %c120_954 = arith.constant 120 : index
    %c24_955 = arith.constant 24 : index
    %624 = vector.load %arg13[%c120_954, %c24_955] : memref<196x144xf32, #tpu.memory_space<vmem>>, vector<12x8xf32>
    tpu.vector_store %arg13[%c120_954, %c24_955], %623 {strides = array<i32>} : memref<196x144xf32, #tpu.memory_space<vmem>>, vector<12x8xf32>,
    %c155_956 = arith.constant 155 : index
    %c0_957 = arith.constant 0 : index
    %625 = vector.load %arg14[%c155_956, %c0_957] : memref<196x8xf32, #tpu.memory_space<vmem>>, vector<12x8xf32>
    %c120_958 = arith.constant 120 : index
    %c32_959 = arith.constant 32 : index
    %626 = vector.load %arg13[%c120_958, %c32_959] : memref<196x144xf32, #tpu.memory_space<vmem>>, vector<12x8xf32>
    tpu.vector_store %arg13[%c120_958, %c32_959], %625 {strides = array<i32>} : memref<196x144xf32, #tpu.memory_space<vmem>>, vector<12x8xf32>,
    %c156_960 = arith.constant 156 : index
    %c0_961 = arith.constant 0 : index
    %627 = vector.load %arg14[%c156_960, %c0_961] : memref<196x8xf32, #tpu.memory_space<vmem>>, vector<12x8xf32>
    %c120_962 = arith.constant 120 : index
    %c40_963 = arith.constant 40 : index
    %628 = vector.load %arg13[%c120_962, %c40_963] : memref<196x144xf32, #tpu.memory_space<vmem>>, vector<12x8xf32>
    tpu.vector_store %arg13[%c120_962, %c40_963], %627 {strides = array<i32>} : memref<196x144xf32, #tpu.memory_space<vmem>>, vector<12x8xf32>,
    %c168_964 = arith.constant 168 : index
    %c0_965 = arith.constant 0 : index
    %629 = vector.load %arg14[%c168_964, %c0_965] : memref<196x8xf32, #tpu.memory_space<vmem>>, vector<12x8xf32>
    %c120_966 = arith.constant 120 : index
    %c48_967 = arith.constant 48 : index
    %630 = vector.load %arg13[%c120_966, %c48_967] : memref<196x144xf32, #tpu.memory_space<vmem>>, vector<12x8xf32>
    tpu.vector_store %arg13[%c120_966, %c48_967], %629 {strides = array<i32>} : memref<196x144xf32, #tpu.memory_space<vmem>>, vector<12x8xf32>,
    %c169 = arith.constant 169 : index
    %c0_968 = arith.constant 0 : index
    %631 = vector.load %arg14[%c169, %c0_968] : memref<196x8xf32, #tpu.memory_space<vmem>>, vector<12x8xf32>
    %c120_969 = arith.constant 120 : index
    %c56_970 = arith.constant 56 : index
    %632 = vector.load %arg13[%c120_969, %c56_970] : memref<196x144xf32, #tpu.memory_space<vmem>>, vector<12x8xf32>
    tpu.vector_store %arg13[%c120_969, %c56_970], %631 {strides = array<i32>} : memref<196x144xf32, #tpu.memory_space<vmem>>, vector<12x8xf32>,
    %c170 = arith.constant 170 : index
    %c0_971 = arith.constant 0 : index
    %633 = vector.load %arg14[%c170, %c0_971] : memref<196x8xf32, #tpu.memory_space<vmem>>, vector<12x8xf32>
    %c120_972 = arith.constant 120 : index
    %c64_973 = arith.constant 64 : index
    %634 = vector.load %arg13[%c120_972, %c64_973] : memref<196x144xf32, #tpu.memory_space<vmem>>, vector<12x8xf32>
    tpu.vector_store %arg13[%c120_972, %c64_973], %633 {strides = array<i32>} : memref<196x144xf32, #tpu.memory_space<vmem>>, vector<12x8xf32>,
    %c154_974 = arith.constant 154 : index
    %c0_975 = arith.constant 0 : index
    %635 = vector.load %arg14[%c154_974, %c0_975] : memref<196x8xf32, #tpu.memory_space<vmem>>, vector<12x8xf32>
    %c132 = arith.constant 132 : index
    %c0_976 = arith.constant 0 : index
    %636 = vector.load %arg13[%c132, %c0_976] : memref<196x144xf32, #tpu.memory_space<vmem>>, vector<12x8xf32>
    tpu.vector_store %arg13[%c132, %c0_976], %635 {strides = array<i32>} : memref<196x144xf32, #tpu.memory_space<vmem>>, vector<12x8xf32>,
    %c155_977 = arith.constant 155 : index
    %c0_978 = arith.constant 0 : index
    %637 = vector.load %arg14[%c155_977, %c0_978] : memref<196x8xf32, #tpu.memory_space<vmem>>, vector<12x8xf32>
    %c132_979 = arith.constant 132 : index
    %c8_980 = arith.constant 8 : index
    %638 = vector.load %arg13[%c132_979, %c8_980] : memref<196x144xf32, #tpu.memory_space<vmem>>, vector<12x8xf32>
    tpu.vector_store %arg13[%c132_979, %c8_980], %637 {strides = array<i32>} : memref<196x144xf32, #tpu.memory_space<vmem>>, vector<12x8xf32>,
    %c156_981 = arith.constant 156 : index
    %c0_982 = arith.constant 0 : index
    %639 = vector.load %arg14[%c156_981, %c0_982] : memref<196x8xf32, #tpu.memory_space<vmem>>, vector<12x8xf32>
    %c132_983 = arith.constant 132 : index
    %c16_984 = arith.constant 16 : index
    %640 = vector.load %arg13[%c132_983, %c16_984] : memref<196x144xf32, #tpu.memory_space<vmem>>, vector<12x8xf32>
    tpu.vector_store %arg13[%c132_983, %c16_984], %639 {strides = array<i32>} : memref<196x144xf32, #tpu.memory_space<vmem>>, vector<12x8xf32>,
    %c168_985 = arith.constant 168 : index
    %c0_986 = arith.constant 0 : index
    %641 = vector.load %arg14[%c168_985, %c0_986] : memref<196x8xf32, #tpu.memory_space<vmem>>, vector<12x8xf32>
    %c132_987 = arith.constant 132 : index
    %c24_988 = arith.constant 24 : index
    %642 = vector.load %arg13[%c132_987, %c24_988] : memref<196x144xf32, #tpu.memory_space<vmem>>, vector<12x8xf32>
    tpu.vector_store %arg13[%c132_987, %c24_988], %641 {strides = array<i32>} : memref<196x144xf32, #tpu.memory_space<vmem>>, vector<12x8xf32>,
    %c169_989 = arith.constant 169 : index
    %c0_990 = arith.constant 0 : index
    %643 = vector.load %arg14[%c169_989, %c0_990] : memref<196x8xf32, #tpu.memory_space<vmem>>, vector<12x8xf32>
    %c132_991 = arith.constant 132 : index
    %c32_992 = arith.constant 32 : index
    %644 = vector.load %arg13[%c132_991, %c32_992] : memref<196x144xf32, #tpu.memory_space<vmem>>, vector<12x8xf32>
    tpu.vector_store %arg13[%c132_991, %c32_992], %643 {strides = array<i32>} : memref<196x144xf32, #tpu.memory_space<vmem>>, vector<12x8xf32>,
    %c170_993 = arith.constant 170 : index
    %c0_994 = arith.constant 0 : index
    %645 = vector.load %arg14[%c170_993, %c0_994] : memref<196x8xf32, #tpu.memory_space<vmem>>, vector<12x8xf32>
    %c132_995 = arith.constant 132 : index
    %c40_996 = arith.constant 40 : index
    %646 = vector.load %arg13[%c132_995, %c40_996] : memref<196x144xf32, #tpu.memory_space<vmem>>, vector<12x8xf32>
    tpu.vector_store %arg13[%c132_995, %c40_996], %645 {strides = array<i32>} : memref<196x144xf32, #tpu.memory_space<vmem>>, vector<12x8xf32>,
    %c182_997 = arith.constant 182 : index
    %c0_998 = arith.constant 0 : index
    %647 = vector.load %arg14[%c182_997, %c0_998] : memref<196x8xf32, #tpu.memory_space<vmem>>, vector<12x8xf32>
    %c132_999 = arith.constant 132 : index
    %c48_1000 = arith.constant 48 : index
    %648 = vector.load %arg13[%c132_999, %c48_1000] : memref<196x144xf32, #tpu.memory_space<vmem>>, vector<12x8xf32>
    tpu.vector_store %arg13[%c132_999, %c48_1000], %647 {strides = array<i32>} : memref<196x144xf32, #tpu.memory_space<vmem>>, vector<12x8xf32>,
    %c183 = arith.constant 183 : index
    %c0_1001 = arith.constant 0 : index
    %649 = vector.load %arg14[%c183, %c0_1001] : memref<196x8xf32, #tpu.memory_space<vmem>>, vector<12x8xf32>
    %c132_1002 = arith.constant 132 : index
    %c56_1003 = arith.constant 56 : index
    %650 = vector.load %arg13[%c132_1002, %c56_1003] : memref<196x144xf32, #tpu.memory_space<vmem>>, vector<12x8xf32>
    tpu.vector_store %arg13[%c132_1002, %c56_1003], %649 {strides = array<i32>} : memref<196x144xf32, #tpu.memory_space<vmem>>, vector<12x8xf32>,
    %c184 = arith.constant 184 : index
    %c0_1004 = arith.constant 0 : index
    %651 = vector.load %arg14[%c184, %c0_1004] : memref<196x8xf32, #tpu.memory_space<vmem>>, vector<12x8xf32>
    %c132_1005 = arith.constant 132 : index
    %c64_1006 = arith.constant 64 : index
    %652 = vector.load %arg13[%c132_1005, %c64_1006] : memref<196x144xf32, #tpu.memory_space<vmem>>, vector<12x8xf32>
    tpu.vector_store %arg13[%c132_1005, %c64_1006], %651 {strides = array<i32>} : memref<196x144xf32, #tpu.memory_space<vmem>>, vector<12x8xf32>,
    %c0_1007 = arith.constant 0 : index
    %c0_1008 = arith.constant 0 : index
    %653 = vector.load %arg13[%c0_1007, %c0_1008] : memref<196x144xf32, #tpu.memory_space<vmem>>, vector<144x72xf32>
    %c0_1009 = arith.constant 0 : index
    %c0_1010 = arith.constant 0 : index
    %654 = vector.load %arg4[%c0_1009, %c0_1010] : memref<72x8xf32, #tpu.memory_space<vmem>>, vector<72x8xf32>
    %cst_1011 = arith.constant dense<0.000000e+00> : vector<144x8xf32>
    %655 = tpu.matmul %653, %654, %cst_1011 {dimension_numbers = #tpu.dot_dimension_numbers<[1], [0], [0], [1], [0, 0, 1, 1], [], []>} : vector<144x72xf32>, vector<72x8xf32>, vector<144x8xf32> -> vector<144x8xf32>
    %c0_1012 = arith.constant 0 : index
    %c0_1013 = arith.constant 0 : index
    %656 = vector.load %arg5[%c0_1012, %c0_1013] : memref<1x8xf32, #tpu.memory_space<vmem>>, vector<1x8xf32>
    %657 = vector.broadcast %656 : vector<1x8xf32> to vector<144x8xf32>
    %658 = arith.addf %655, %657 : vector<144x8xf32>
    %cst_1014 = arith.constant 0.000000e+00 : f32
    %659 = vector.broadcast %cst_1014 : f32 to vector<144x8xf32>
    %660 = arith.maximumf %658, %659 : vector<144x8xf32>
    %c0_1015 = arith.constant 0 : index
    %c0_1016 = arith.constant 0 : index
    %661 = vector.load %arg15[%c0_1015, %c0_1016] : memref<144x8xf32, #tpu.memory_space<vmem>>, vector<144x8xf32>
    tpu.vector_store %arg15[%c0_1015, %c0_1016], %660 {strides = array<i32>} : memref<144x8xf32, #tpu.memory_space<vmem>>, vector<144x8xf32>,
    %c0_1017 = arith.constant 0 : index
    %c0_1018 = arith.constant 0 : index
    %662 = vector.load %arg15[%c0_1017, %c0_1018] : memref<144x8xf32, #tpu.memory_space<vmem>>, vector<2x8xf32>
    %c12_1019 = arith.constant 12 : index
    %c0_1020 = arith.constant 0 : index
    %663 = vector.load %arg15[%c12_1019, %c0_1020] : memref<144x8xf32, #tpu.memory_space<vmem>>, vector<2x8xf32>
    %664 = arith.maximumf %662, %663 : vector<2x8xf32>
    %cst_1021 = arith.constant dense<0xFF800000> : vector<8xf32>
    %665 = vector.multi_reduction <maximumf>, %664, %cst_1021 [0] : vector<2x8xf32> to vector<8xf32>
    %666 = vector.shape_cast %665 : vector<8xf32> to vector<1x8xf32>
    %c0_1022 = arith.constant 0 : index
    %c0_1023 = arith.constant 0 : index
    %667 = vector.load %arg16[%c0_1022, %c0_1023] : memref<36x8xf32, #tpu.memory_space<vmem>>, vector<1x8xf32>
    tpu.vector_store %arg16[%c0_1022, %c0_1023], %666 {strides = array<i32>} : memref<36x8xf32, #tpu.memory_space<vmem>>, vector<1x8xf32>,
    %c2_1024 = arith.constant 2 : index
    %c0_1025 = arith.constant 0 : index
    %668 = vector.load %arg15[%c2_1024, %c0_1025] : memref<144x8xf32, #tpu.memory_space<vmem>>, vector<2x8xf32>
    %c14_1026 = arith.constant 14 : index
    %c0_1027 = arith.constant 0 : index
    %669 = vector.load %arg15[%c14_1026, %c0_1027] : memref<144x8xf32, #tpu.memory_space<vmem>>, vector<2x8xf32>
    %670 = arith.maximumf %668, %669 : vector<2x8xf32>
    %cst_1028 = arith.constant dense<0xFF800000> : vector<8xf32>
    %671 = vector.multi_reduction <maximumf>, %670, %cst_1028 [0] : vector<2x8xf32> to vector<8xf32>
    %672 = vector.shape_cast %671 : vector<8xf32> to vector<1x8xf32>
    %c1_1029 = arith.constant 1 : index
    %c0_1030 = arith.constant 0 : index
    %673 = vector.load %arg16[%c1_1029, %c0_1030] : memref<36x8xf32, #tpu.memory_space<vmem>>, vector<1x8xf32>
    tpu.vector_store %arg16[%c1_1029, %c0_1030], %672 {strides = array<i32>} : memref<36x8xf32, #tpu.memory_space<vmem>>, vector<1x8xf32>,
    %c4_1031 = arith.constant 4 : index
    %c0_1032 = arith.constant 0 : index
    %674 = vector.load %arg15[%c4_1031, %c0_1032] : memref<144x8xf32, #tpu.memory_space<vmem>>, vector<2x8xf32>
    %c16_1033 = arith.constant 16 : index
    %c0_1034 = arith.constant 0 : index
    %675 = vector.load %arg15[%c16_1033, %c0_1034] : memref<144x8xf32, #tpu.memory_space<vmem>>, vector<2x8xf32>
    %676 = arith.maximumf %674, %675 : vector<2x8xf32>
    %cst_1035 = arith.constant dense<0xFF800000> : vector<8xf32>
    %677 = vector.multi_reduction <maximumf>, %676, %cst_1035 [0] : vector<2x8xf32> to vector<8xf32>
    %678 = vector.shape_cast %677 : vector<8xf32> to vector<1x8xf32>
    %c2_1036 = arith.constant 2 : index
    %c0_1037 = arith.constant 0 : index
    %679 = vector.load %arg16[%c2_1036, %c0_1037] : memref<36x8xf32, #tpu.memory_space<vmem>>, vector<1x8xf32>
    tpu.vector_store %arg16[%c2_1036, %c0_1037], %678 {strides = array<i32>} : memref<36x8xf32, #tpu.memory_space<vmem>>, vector<1x8xf32>,
    %c6_1038 = arith.constant 6 : index
    %c0_1039 = arith.constant 0 : index
    %680 = vector.load %arg15[%c6_1038, %c0_1039] : memref<144x8xf32, #tpu.memory_space<vmem>>, vector<2x8xf32>
    %c18_1040 = arith.constant 18 : index
    %c0_1041 = arith.constant 0 : index
    %681 = vector.load %arg15[%c18_1040, %c0_1041] : memref<144x8xf32, #tpu.memory_space<vmem>>, vector<2x8xf32>
    %682 = arith.maximumf %680, %681 : vector<2x8xf32>
    %cst_1042 = arith.constant dense<0xFF800000> : vector<8xf32>
    %683 = vector.multi_reduction <maximumf>, %682, %cst_1042 [0] : vector<2x8xf32> to vector<8xf32>
    %684 = vector.shape_cast %683 : vector<8xf32> to vector<1x8xf32>
    %c3_1043 = arith.constant 3 : index
    %c0_1044 = arith.constant 0 : index
    %685 = vector.load %arg16[%c3_1043, %c0_1044] : memref<36x8xf32, #tpu.memory_space<vmem>>, vector<1x8xf32>
    tpu.vector_store %arg16[%c3_1043, %c0_1044], %684 {strides = array<i32>} : memref<36x8xf32, #tpu.memory_space<vmem>>, vector<1x8xf32>,
    %c8_1045 = arith.constant 8 : index
    %c0_1046 = arith.constant 0 : index
    %686 = vector.load %arg15[%c8_1045, %c0_1046] : memref<144x8xf32, #tpu.memory_space<vmem>>, vector<2x8xf32>
    %c20 = arith.constant 20 : index
    %c0_1047 = arith.constant 0 : index
    %687 = vector.load %arg15[%c20, %c0_1047] : memref<144x8xf32, #tpu.memory_space<vmem>>, vector<2x8xf32>
    %688 = arith.maximumf %686, %687 : vector<2x8xf32>
    %cst_1048 = arith.constant dense<0xFF800000> : vector<8xf32>
    %689 = vector.multi_reduction <maximumf>, %688, %cst_1048 [0] : vector<2x8xf32> to vector<8xf32>
    %690 = vector.shape_cast %689 : vector<8xf32> to vector<1x8xf32>
    %c4_1049 = arith.constant 4 : index
    %c0_1050 = arith.constant 0 : index
    %691 = vector.load %arg16[%c4_1049, %c0_1050] : memref<36x8xf32, #tpu.memory_space<vmem>>, vector<1x8xf32>
    tpu.vector_store %arg16[%c4_1049, %c0_1050], %690 {strides = array<i32>} : memref<36x8xf32, #tpu.memory_space<vmem>>, vector<1x8xf32>,
    %c10 = arith.constant 10 : index
    %c0_1051 = arith.constant 0 : index
    %692 = vector.load %arg15[%c10, %c0_1051] : memref<144x8xf32, #tpu.memory_space<vmem>>, vector<2x8xf32>
    %c22 = arith.constant 22 : index
    %c0_1052 = arith.constant 0 : index
    %693 = vector.load %arg15[%c22, %c0_1052] : memref<144x8xf32, #tpu.memory_space<vmem>>, vector<2x8xf32>
    %694 = arith.maximumf %692, %693 : vector<2x8xf32>
    %cst_1053 = arith.constant dense<0xFF800000> : vector<8xf32>
    %695 = vector.multi_reduction <maximumf>, %694, %cst_1053 [0] : vector<2x8xf32> to vector<8xf32>
    %696 = vector.shape_cast %695 : vector<8xf32> to vector<1x8xf32>
    %c5_1054 = arith.constant 5 : index
    %c0_1055 = arith.constant 0 : index
    %697 = vector.load %arg16[%c5_1054, %c0_1055] : memref<36x8xf32, #tpu.memory_space<vmem>>, vector<1x8xf32>
    tpu.vector_store %arg16[%c5_1054, %c0_1055], %696 {strides = array<i32>} : memref<36x8xf32, #tpu.memory_space<vmem>>, vector<1x8xf32>,
    %c24_1056 = arith.constant 24 : index
    %c0_1057 = arith.constant 0 : index
    %698 = vector.load %arg15[%c24_1056, %c0_1057] : memref<144x8xf32, #tpu.memory_space<vmem>>, vector<2x8xf32>
    %c36_1058 = arith.constant 36 : index
    %c0_1059 = arith.constant 0 : index
    %699 = vector.load %arg15[%c36_1058, %c0_1059] : memref<144x8xf32, #tpu.memory_space<vmem>>, vector<2x8xf32>
    %700 = arith.maximumf %698, %699 : vector<2x8xf32>
    %cst_1060 = arith.constant dense<0xFF800000> : vector<8xf32>
    %701 = vector.multi_reduction <maximumf>, %700, %cst_1060 [0] : vector<2x8xf32> to vector<8xf32>
    %702 = vector.shape_cast %701 : vector<8xf32> to vector<1x8xf32>
    %c6_1061 = arith.constant 6 : index
    %c0_1062 = arith.constant 0 : index
    %703 = vector.load %arg16[%c6_1061, %c0_1062] : memref<36x8xf32, #tpu.memory_space<vmem>>, vector<1x8xf32>
    tpu.vector_store %arg16[%c6_1061, %c0_1062], %702 {strides = array<i32>} : memref<36x8xf32, #tpu.memory_space<vmem>>, vector<1x8xf32>,
    %c26 = arith.constant 26 : index
    %c0_1063 = arith.constant 0 : index
    %704 = vector.load %arg15[%c26, %c0_1063] : memref<144x8xf32, #tpu.memory_space<vmem>>, vector<2x8xf32>
    %c38 = arith.constant 38 : index
    %c0_1064 = arith.constant 0 : index
    %705 = vector.load %arg15[%c38, %c0_1064] : memref<144x8xf32, #tpu.memory_space<vmem>>, vector<2x8xf32>
    %706 = arith.maximumf %704, %705 : vector<2x8xf32>
    %cst_1065 = arith.constant dense<0xFF800000> : vector<8xf32>
    %707 = vector.multi_reduction <maximumf>, %706, %cst_1065 [0] : vector<2x8xf32> to vector<8xf32>
    %708 = vector.shape_cast %707 : vector<8xf32> to vector<1x8xf32>
    %c7_1066 = arith.constant 7 : index
    %c0_1067 = arith.constant 0 : index
    %709 = vector.load %arg16[%c7_1066, %c0_1067] : memref<36x8xf32, #tpu.memory_space<vmem>>, vector<1x8xf32>
    tpu.vector_store %arg16[%c7_1066, %c0_1067], %708 {strides = array<i32>} : memref<36x8xf32, #tpu.memory_space<vmem>>, vector<1x8xf32>,
    %c28_1068 = arith.constant 28 : index
    %c0_1069 = arith.constant 0 : index
    %710 = vector.load %arg15[%c28_1068, %c0_1069] : memref<144x8xf32, #tpu.memory_space<vmem>>, vector<2x8xf32>
    %c40_1070 = arith.constant 40 : index
    %c0_1071 = arith.constant 0 : index
    %711 = vector.load %arg15[%c40_1070, %c0_1071] : memref<144x8xf32, #tpu.memory_space<vmem>>, vector<2x8xf32>
    %712 = arith.maximumf %710, %711 : vector<2x8xf32>
    %cst_1072 = arith.constant dense<0xFF800000> : vector<8xf32>
    %713 = vector.multi_reduction <maximumf>, %712, %cst_1072 [0] : vector<2x8xf32> to vector<8xf32>
    %714 = vector.shape_cast %713 : vector<8xf32> to vector<1x8xf32>
    %c8_1073 = arith.constant 8 : index
    %c0_1074 = arith.constant 0 : index
    %715 = vector.load %arg16[%c8_1073, %c0_1074] : memref<36x8xf32, #tpu.memory_space<vmem>>, vector<1x8xf32>
    tpu.vector_store %arg16[%c8_1073, %c0_1074], %714 {strides = array<i32>} : memref<36x8xf32, #tpu.memory_space<vmem>>, vector<1x8xf32>,
    %c30_1075 = arith.constant 30 : index
    %c0_1076 = arith.constant 0 : index
    %716 = vector.load %arg15[%c30_1075, %c0_1076] : memref<144x8xf32, #tpu.memory_space<vmem>>, vector<2x8xf32>
    %c42_1077 = arith.constant 42 : index
    %c0_1078 = arith.constant 0 : index
    %717 = vector.load %arg15[%c42_1077, %c0_1078] : memref<144x8xf32, #tpu.memory_space<vmem>>, vector<2x8xf32>
    %718 = arith.maximumf %716, %717 : vector<2x8xf32>
    %cst_1079 = arith.constant dense<0xFF800000> : vector<8xf32>
    %719 = vector.multi_reduction <maximumf>, %718, %cst_1079 [0] : vector<2x8xf32> to vector<8xf32>
    %720 = vector.shape_cast %719 : vector<8xf32> to vector<1x8xf32>
    %c9 = arith.constant 9 : index
    %c0_1080 = arith.constant 0 : index
    %721 = vector.load %arg16[%c9, %c0_1080] : memref<36x8xf32, #tpu.memory_space<vmem>>, vector<1x8xf32>
    tpu.vector_store %arg16[%c9, %c0_1080], %720 {strides = array<i32>} : memref<36x8xf32, #tpu.memory_space<vmem>>, vector<1x8xf32>,
    %c32_1081 = arith.constant 32 : index
    %c0_1082 = arith.constant 0 : index
    %722 = vector.load %arg15[%c32_1081, %c0_1082] : memref<144x8xf32, #tpu.memory_space<vmem>>, vector<2x8xf32>
    %c44_1083 = arith.constant 44 : index
    %c0_1084 = arith.constant 0 : index
    %723 = vector.load %arg15[%c44_1083, %c0_1084] : memref<144x8xf32, #tpu.memory_space<vmem>>, vector<2x8xf32>
    %724 = arith.maximumf %722, %723 : vector<2x8xf32>
    %cst_1085 = arith.constant dense<0xFF800000> : vector<8xf32>
    %725 = vector.multi_reduction <maximumf>, %724, %cst_1085 [0] : vector<2x8xf32> to vector<8xf32>
    %726 = vector.shape_cast %725 : vector<8xf32> to vector<1x8xf32>
    %c10_1086 = arith.constant 10 : index
    %c0_1087 = arith.constant 0 : index
    %727 = vector.load %arg16[%c10_1086, %c0_1087] : memref<36x8xf32, #tpu.memory_space<vmem>>, vector<1x8xf32>
    tpu.vector_store %arg16[%c10_1086, %c0_1087], %726 {strides = array<i32>} : memref<36x8xf32, #tpu.memory_space<vmem>>, vector<1x8xf32>,
    %c34_1088 = arith.constant 34 : index
    %c0_1089 = arith.constant 0 : index
    %728 = vector.load %arg15[%c34_1088, %c0_1089] : memref<144x8xf32, #tpu.memory_space<vmem>>, vector<2x8xf32>
    %c46 = arith.constant 46 : index
    %c0_1090 = arith.constant 0 : index
    %729 = vector.load %arg15[%c46, %c0_1090] : memref<144x8xf32, #tpu.memory_space<vmem>>, vector<2x8xf32>
    %730 = arith.maximumf %728, %729 : vector<2x8xf32>
    %cst_1091 = arith.constant dense<0xFF800000> : vector<8xf32>
    %731 = vector.multi_reduction <maximumf>, %730, %cst_1091 [0] : vector<2x8xf32> to vector<8xf32>
    %732 = vector.shape_cast %731 : vector<8xf32> to vector<1x8xf32>
    %c11 = arith.constant 11 : index
    %c0_1092 = arith.constant 0 : index
    %733 = vector.load %arg16[%c11, %c0_1092] : memref<36x8xf32, #tpu.memory_space<vmem>>, vector<1x8xf32>
    tpu.vector_store %arg16[%c11, %c0_1092], %732 {strides = array<i32>} : memref<36x8xf32, #tpu.memory_space<vmem>>, vector<1x8xf32>,
    %c48_1093 = arith.constant 48 : index
    %c0_1094 = arith.constant 0 : index
    %734 = vector.load %arg15[%c48_1093, %c0_1094] : memref<144x8xf32, #tpu.memory_space<vmem>>, vector<2x8xf32>
    %c60_1095 = arith.constant 60 : index
    %c0_1096 = arith.constant 0 : index
    %735 = vector.load %arg15[%c60_1095, %c0_1096] : memref<144x8xf32, #tpu.memory_space<vmem>>, vector<2x8xf32>
    %736 = arith.maximumf %734, %735 : vector<2x8xf32>
    %cst_1097 = arith.constant dense<0xFF800000> : vector<8xf32>
    %737 = vector.multi_reduction <maximumf>, %736, %cst_1097 [0] : vector<2x8xf32> to vector<8xf32>
    %738 = vector.shape_cast %737 : vector<8xf32> to vector<1x8xf32>
    %c12_1098 = arith.constant 12 : index
    %c0_1099 = arith.constant 0 : index
    %739 = vector.load %arg16[%c12_1098, %c0_1099] : memref<36x8xf32, #tpu.memory_space<vmem>>, vector<1x8xf32>
    tpu.vector_store %arg16[%c12_1098, %c0_1099], %738 {strides = array<i32>} : memref<36x8xf32, #tpu.memory_space<vmem>>, vector<1x8xf32>,
    %c50_1100 = arith.constant 50 : index
    %c0_1101 = arith.constant 0 : index
    %740 = vector.load %arg15[%c50_1100, %c0_1101] : memref<144x8xf32, #tpu.memory_space<vmem>>, vector<2x8xf32>
    %c62 = arith.constant 62 : index
    %c0_1102 = arith.constant 0 : index
    %741 = vector.load %arg15[%c62, %c0_1102] : memref<144x8xf32, #tpu.memory_space<vmem>>, vector<2x8xf32>
    %742 = arith.maximumf %740, %741 : vector<2x8xf32>
    %cst_1103 = arith.constant dense<0xFF800000> : vector<8xf32>
    %743 = vector.multi_reduction <maximumf>, %742, %cst_1103 [0] : vector<2x8xf32> to vector<8xf32>
    %744 = vector.shape_cast %743 : vector<8xf32> to vector<1x8xf32>
    %c13 = arith.constant 13 : index
    %c0_1104 = arith.constant 0 : index
    %745 = vector.load %arg16[%c13, %c0_1104] : memref<36x8xf32, #tpu.memory_space<vmem>>, vector<1x8xf32>
    tpu.vector_store %arg16[%c13, %c0_1104], %744 {strides = array<i32>} : memref<36x8xf32, #tpu.memory_space<vmem>>, vector<1x8xf32>,
    %c52 = arith.constant 52 : index
    %c0_1105 = arith.constant 0 : index
    %746 = vector.load %arg15[%c52, %c0_1105] : memref<144x8xf32, #tpu.memory_space<vmem>>, vector<2x8xf32>
    %c64_1106 = arith.constant 64 : index
    %c0_1107 = arith.constant 0 : index
    %747 = vector.load %arg15[%c64_1106, %c0_1107] : memref<144x8xf32, #tpu.memory_space<vmem>>, vector<2x8xf32>
    %748 = arith.maximumf %746, %747 : vector<2x8xf32>
    %cst_1108 = arith.constant dense<0xFF800000> : vector<8xf32>
    %749 = vector.multi_reduction <maximumf>, %748, %cst_1108 [0] : vector<2x8xf32> to vector<8xf32>
    %750 = vector.shape_cast %749 : vector<8xf32> to vector<1x8xf32>
    %c14_1109 = arith.constant 14 : index
    %c0_1110 = arith.constant 0 : index
    %751 = vector.load %arg16[%c14_1109, %c0_1110] : memref<36x8xf32, #tpu.memory_space<vmem>>, vector<1x8xf32>
    tpu.vector_store %arg16[%c14_1109, %c0_1110], %750 {strides = array<i32>} : memref<36x8xf32, #tpu.memory_space<vmem>>, vector<1x8xf32>,
    %c54 = arith.constant 54 : index
    %c0_1111 = arith.constant 0 : index
    %752 = vector.load %arg15[%c54, %c0_1111] : memref<144x8xf32, #tpu.memory_space<vmem>>, vector<2x8xf32>
    %c66_1112 = arith.constant 66 : index
    %c0_1113 = arith.constant 0 : index
    %753 = vector.load %arg15[%c66_1112, %c0_1113] : memref<144x8xf32, #tpu.memory_space<vmem>>, vector<2x8xf32>
    %754 = arith.maximumf %752, %753 : vector<2x8xf32>
    %cst_1114 = arith.constant dense<0xFF800000> : vector<8xf32>
    %755 = vector.multi_reduction <maximumf>, %754, %cst_1114 [0] : vector<2x8xf32> to vector<8xf32>
    %756 = vector.shape_cast %755 : vector<8xf32> to vector<1x8xf32>
    %c15_1115 = arith.constant 15 : index
    %c0_1116 = arith.constant 0 : index
    %757 = vector.load %arg16[%c15_1115, %c0_1116] : memref<36x8xf32, #tpu.memory_space<vmem>>, vector<1x8xf32>
    tpu.vector_store %arg16[%c15_1115, %c0_1116], %756 {strides = array<i32>} : memref<36x8xf32, #tpu.memory_space<vmem>>, vector<1x8xf32>,
    %c56_1117 = arith.constant 56 : index
    %c0_1118 = arith.constant 0 : index
    %758 = vector.load %arg15[%c56_1117, %c0_1118] : memref<144x8xf32, #tpu.memory_space<vmem>>, vector<2x8xf32>
    %c68 = arith.constant 68 : index
    %c0_1119 = arith.constant 0 : index
    %759 = vector.load %arg15[%c68, %c0_1119] : memref<144x8xf32, #tpu.memory_space<vmem>>, vector<2x8xf32>
    %760 = arith.maximumf %758, %759 : vector<2x8xf32>
    %cst_1120 = arith.constant dense<0xFF800000> : vector<8xf32>
    %761 = vector.multi_reduction <maximumf>, %760, %cst_1120 [0] : vector<2x8xf32> to vector<8xf32>
    %762 = vector.shape_cast %761 : vector<8xf32> to vector<1x8xf32>
    %c16_1121 = arith.constant 16 : index
    %c0_1122 = arith.constant 0 : index
    %763 = vector.load %arg16[%c16_1121, %c0_1122] : memref<36x8xf32, #tpu.memory_space<vmem>>, vector<1x8xf32>
    tpu.vector_store %arg16[%c16_1121, %c0_1122], %762 {strides = array<i32>} : memref<36x8xf32, #tpu.memory_space<vmem>>, vector<1x8xf32>,
    %c58_1123 = arith.constant 58 : index
    %c0_1124 = arith.constant 0 : index
    %764 = vector.load %arg15[%c58_1123, %c0_1124] : memref<144x8xf32, #tpu.memory_space<vmem>>, vector<2x8xf32>
    %c70_1125 = arith.constant 70 : index
    %c0_1126 = arith.constant 0 : index
    %765 = vector.load %arg15[%c70_1125, %c0_1126] : memref<144x8xf32, #tpu.memory_space<vmem>>, vector<2x8xf32>
    %766 = arith.maximumf %764, %765 : vector<2x8xf32>
    %cst_1127 = arith.constant dense<0xFF800000> : vector<8xf32>
    %767 = vector.multi_reduction <maximumf>, %766, %cst_1127 [0] : vector<2x8xf32> to vector<8xf32>
    %768 = vector.shape_cast %767 : vector<8xf32> to vector<1x8xf32>
    %c17_1128 = arith.constant 17 : index
    %c0_1129 = arith.constant 0 : index
    %769 = vector.load %arg16[%c17_1128, %c0_1129] : memref<36x8xf32, #tpu.memory_space<vmem>>, vector<1x8xf32>
    tpu.vector_store %arg16[%c17_1128, %c0_1129], %768 {strides = array<i32>} : memref<36x8xf32, #tpu.memory_space<vmem>>, vector<1x8xf32>,
    %c72_1130 = arith.constant 72 : index
    %c0_1131 = arith.constant 0 : index
    %770 = vector.load %arg15[%c72_1130, %c0_1131] : memref<144x8xf32, #tpu.memory_space<vmem>>, vector<2x8xf32>
    %c84_1132 = arith.constant 84 : index
    %c0_1133 = arith.constant 0 : index
    %771 = vector.load %arg15[%c84_1132, %c0_1133] : memref<144x8xf32, #tpu.memory_space<vmem>>, vector<2x8xf32>
    %772 = arith.maximumf %770, %771 : vector<2x8xf32>
    %cst_1134 = arith.constant dense<0xFF800000> : vector<8xf32>
    %773 = vector.multi_reduction <maximumf>, %772, %cst_1134 [0] : vector<2x8xf32> to vector<8xf32>
    %774 = vector.shape_cast %773 : vector<8xf32> to vector<1x8xf32>
    %c18_1135 = arith.constant 18 : index
    %c0_1136 = arith.constant 0 : index
    %775 = vector.load %arg16[%c18_1135, %c0_1136] : memref<36x8xf32, #tpu.memory_space<vmem>>, vector<1x8xf32>
    tpu.vector_store %arg16[%c18_1135, %c0_1136], %774 {strides = array<i32>} : memref<36x8xf32, #tpu.memory_space<vmem>>, vector<1x8xf32>,
    %c74 = arith.constant 74 : index
    %c0_1137 = arith.constant 0 : index
    %776 = vector.load %arg15[%c74, %c0_1137] : memref<144x8xf32, #tpu.memory_space<vmem>>, vector<2x8xf32>
    %c86_1138 = arith.constant 86 : index
    %c0_1139 = arith.constant 0 : index
    %777 = vector.load %arg15[%c86_1138, %c0_1139] : memref<144x8xf32, #tpu.memory_space<vmem>>, vector<2x8xf32>
    %778 = arith.maximumf %776, %777 : vector<2x8xf32>
    %cst_1140 = arith.constant dense<0xFF800000> : vector<8xf32>
    %779 = vector.multi_reduction <maximumf>, %778, %cst_1140 [0] : vector<2x8xf32> to vector<8xf32>
    %780 = vector.shape_cast %779 : vector<8xf32> to vector<1x8xf32>
    %c19 = arith.constant 19 : index
    %c0_1141 = arith.constant 0 : index
    %781 = vector.load %arg16[%c19, %c0_1141] : memref<36x8xf32, #tpu.memory_space<vmem>>, vector<1x8xf32>
    tpu.vector_store %arg16[%c19, %c0_1141], %780 {strides = array<i32>} : memref<36x8xf32, #tpu.memory_space<vmem>>, vector<1x8xf32>,
    %c76 = arith.constant 76 : index
    %c0_1142 = arith.constant 0 : index
    %782 = vector.load %arg15[%c76, %c0_1142] : memref<144x8xf32, #tpu.memory_space<vmem>>, vector<2x8xf32>
    %c88 = arith.constant 88 : index
    %c0_1143 = arith.constant 0 : index
    %783 = vector.load %arg15[%c88, %c0_1143] : memref<144x8xf32, #tpu.memory_space<vmem>>, vector<2x8xf32>
    %784 = arith.maximumf %782, %783 : vector<2x8xf32>
    %cst_1144 = arith.constant dense<0xFF800000> : vector<8xf32>
    %785 = vector.multi_reduction <maximumf>, %784, %cst_1144 [0] : vector<2x8xf32> to vector<8xf32>
    %786 = vector.shape_cast %785 : vector<8xf32> to vector<1x8xf32>
    %c20_1145 = arith.constant 20 : index
    %c0_1146 = arith.constant 0 : index
    %787 = vector.load %arg16[%c20_1145, %c0_1146] : memref<36x8xf32, #tpu.memory_space<vmem>>, vector<1x8xf32>
    tpu.vector_store %arg16[%c20_1145, %c0_1146], %786 {strides = array<i32>} : memref<36x8xf32, #tpu.memory_space<vmem>>, vector<1x8xf32>,
    %c78 = arith.constant 78 : index
    %c0_1147 = arith.constant 0 : index
    %788 = vector.load %arg15[%c78, %c0_1147] : memref<144x8xf32, #tpu.memory_space<vmem>>, vector<2x8xf32>
    %c90 = arith.constant 90 : index
    %c0_1148 = arith.constant 0 : index
    %789 = vector.load %arg15[%c90, %c0_1148] : memref<144x8xf32, #tpu.memory_space<vmem>>, vector<2x8xf32>
    %790 = arith.maximumf %788, %789 : vector<2x8xf32>
    %cst_1149 = arith.constant dense<0xFF800000> : vector<8xf32>
    %791 = vector.multi_reduction <maximumf>, %790, %cst_1149 [0] : vector<2x8xf32> to vector<8xf32>
    %792 = vector.shape_cast %791 : vector<8xf32> to vector<1x8xf32>
    %c21 = arith.constant 21 : index
    %c0_1150 = arith.constant 0 : index
    %793 = vector.load %arg16[%c21, %c0_1150] : memref<36x8xf32, #tpu.memory_space<vmem>>, vector<1x8xf32>
    tpu.vector_store %arg16[%c21, %c0_1150], %792 {strides = array<i32>} : memref<36x8xf32, #tpu.memory_space<vmem>>, vector<1x8xf32>,
    %c80_1151 = arith.constant 80 : index
    %c0_1152 = arith.constant 0 : index
    %794 = vector.load %arg15[%c80_1151, %c0_1152] : memref<144x8xf32, #tpu.memory_space<vmem>>, vector<2x8xf32>
    %c92 = arith.constant 92 : index
    %c0_1153 = arith.constant 0 : index
    %795 = vector.load %arg15[%c92, %c0_1153] : memref<144x8xf32, #tpu.memory_space<vmem>>, vector<2x8xf32>
    %796 = arith.maximumf %794, %795 : vector<2x8xf32>
    %cst_1154 = arith.constant dense<0xFF800000> : vector<8xf32>
    %797 = vector.multi_reduction <maximumf>, %796, %cst_1154 [0] : vector<2x8xf32> to vector<8xf32>
    %798 = vector.shape_cast %797 : vector<8xf32> to vector<1x8xf32>
    %c22_1155 = arith.constant 22 : index
    %c0_1156 = arith.constant 0 : index
    %799 = vector.load %arg16[%c22_1155, %c0_1156] : memref<36x8xf32, #tpu.memory_space<vmem>>, vector<1x8xf32>
    tpu.vector_store %arg16[%c22_1155, %c0_1156], %798 {strides = array<i32>} : memref<36x8xf32, #tpu.memory_space<vmem>>, vector<1x8xf32>,
    %c82_1157 = arith.constant 82 : index
    %c0_1158 = arith.constant 0 : index
    %800 = vector.load %arg15[%c82_1157, %c0_1158] : memref<144x8xf32, #tpu.memory_space<vmem>>, vector<2x8xf32>
    %c94 = arith.constant 94 : index
    %c0_1159 = arith.constant 0 : index
    %801 = vector.load %arg15[%c94, %c0_1159] : memref<144x8xf32, #tpu.memory_space<vmem>>, vector<2x8xf32>
    %802 = arith.maximumf %800, %801 : vector<2x8xf32>
    %cst_1160 = arith.constant dense<0xFF800000> : vector<8xf32>
    %803 = vector.multi_reduction <maximumf>, %802, %cst_1160 [0] : vector<2x8xf32> to vector<8xf32>
    %804 = vector.shape_cast %803 : vector<8xf32> to vector<1x8xf32>
    %c23 = arith.constant 23 : index
    %c0_1161 = arith.constant 0 : index
    %805 = vector.load %arg16[%c23, %c0_1161] : memref<36x8xf32, #tpu.memory_space<vmem>>, vector<1x8xf32>
    tpu.vector_store %arg16[%c23, %c0_1161], %804 {strides = array<i32>} : memref<36x8xf32, #tpu.memory_space<vmem>>, vector<1x8xf32>,
    %c96_1162 = arith.constant 96 : index
    %c0_1163 = arith.constant 0 : index
    %806 = vector.load %arg15[%c96_1162, %c0_1163] : memref<144x8xf32, #tpu.memory_space<vmem>>, vector<2x8xf32>
    %c108_1164 = arith.constant 108 : index
    %c0_1165 = arith.constant 0 : index
    %807 = vector.load %arg15[%c108_1164, %c0_1165] : memref<144x8xf32, #tpu.memory_space<vmem>>, vector<2x8xf32>
    %808 = arith.maximumf %806, %807 : vector<2x8xf32>
    %cst_1166 = arith.constant dense<0xFF800000> : vector<8xf32>
    %809 = vector.multi_reduction <maximumf>, %808, %cst_1166 [0] : vector<2x8xf32> to vector<8xf32>
    %810 = vector.shape_cast %809 : vector<8xf32> to vector<1x8xf32>
    %c24_1167 = arith.constant 24 : index
    %c0_1168 = arith.constant 0 : index
    %811 = vector.load %arg16[%c24_1167, %c0_1168] : memref<36x8xf32, #tpu.memory_space<vmem>>, vector<1x8xf32>
    tpu.vector_store %arg16[%c24_1167, %c0_1168], %810 {strides = array<i32>} : memref<36x8xf32, #tpu.memory_space<vmem>>, vector<1x8xf32>,
    %c98_1169 = arith.constant 98 : index
    %c0_1170 = arith.constant 0 : index
    %812 = vector.load %arg15[%c98_1169, %c0_1170] : memref<144x8xf32, #tpu.memory_space<vmem>>, vector<2x8xf32>
    %c110 = arith.constant 110 : index
    %c0_1171 = arith.constant 0 : index
    %813 = vector.load %arg15[%c110, %c0_1171] : memref<144x8xf32, #tpu.memory_space<vmem>>, vector<2x8xf32>
    %814 = arith.maximumf %812, %813 : vector<2x8xf32>
    %cst_1172 = arith.constant dense<0xFF800000> : vector<8xf32>
    %815 = vector.multi_reduction <maximumf>, %814, %cst_1172 [0] : vector<2x8xf32> to vector<8xf32>
    %816 = vector.shape_cast %815 : vector<8xf32> to vector<1x8xf32>
    %c25 = arith.constant 25 : index
    %c0_1173 = arith.constant 0 : index
    %817 = vector.load %arg16[%c25, %c0_1173] : memref<36x8xf32, #tpu.memory_space<vmem>>, vector<1x8xf32>
    tpu.vector_store %arg16[%c25, %c0_1173], %816 {strides = array<i32>} : memref<36x8xf32, #tpu.memory_space<vmem>>, vector<1x8xf32>,
    %c100_1174 = arith.constant 100 : index
    %c0_1175 = arith.constant 0 : index
    %818 = vector.load %arg15[%c100_1174, %c0_1175] : memref<144x8xf32, #tpu.memory_space<vmem>>, vector<2x8xf32>
    %c112_1176 = arith.constant 112 : index
    %c0_1177 = arith.constant 0 : index
    %819 = vector.load %arg15[%c112_1176, %c0_1177] : memref<144x8xf32, #tpu.memory_space<vmem>>, vector<2x8xf32>
    %820 = arith.maximumf %818, %819 : vector<2x8xf32>
    %cst_1178 = arith.constant dense<0xFF800000> : vector<8xf32>
    %821 = vector.multi_reduction <maximumf>, %820, %cst_1178 [0] : vector<2x8xf32> to vector<8xf32>
    %822 = vector.shape_cast %821 : vector<8xf32> to vector<1x8xf32>
    %c26_1179 = arith.constant 26 : index
    %c0_1180 = arith.constant 0 : index
    %823 = vector.load %arg16[%c26_1179, %c0_1180] : memref<36x8xf32, #tpu.memory_space<vmem>>, vector<1x8xf32>
    tpu.vector_store %arg16[%c26_1179, %c0_1180], %822 {strides = array<i32>} : memref<36x8xf32, #tpu.memory_space<vmem>>, vector<1x8xf32>,
    %c102 = arith.constant 102 : index
    %c0_1181 = arith.constant 0 : index
    %824 = vector.load %arg15[%c102, %c0_1181] : memref<144x8xf32, #tpu.memory_space<vmem>>, vector<2x8xf32>
    %c114_1182 = arith.constant 114 : index
    %c0_1183 = arith.constant 0 : index
    %825 = vector.load %arg15[%c114_1182, %c0_1183] : memref<144x8xf32, #tpu.memory_space<vmem>>, vector<2x8xf32>
    %826 = arith.maximumf %824, %825 : vector<2x8xf32>
    %cst_1184 = arith.constant dense<0xFF800000> : vector<8xf32>
    %827 = vector.multi_reduction <maximumf>, %826, %cst_1184 [0] : vector<2x8xf32> to vector<8xf32>
    %828 = vector.shape_cast %827 : vector<8xf32> to vector<1x8xf32>
    %c27 = arith.constant 27 : index
    %c0_1185 = arith.constant 0 : index
    %829 = vector.load %arg16[%c27, %c0_1185] : memref<36x8xf32, #tpu.memory_space<vmem>>, vector<1x8xf32>
    tpu.vector_store %arg16[%c27, %c0_1185], %828 {strides = array<i32>} : memref<36x8xf32, #tpu.memory_space<vmem>>, vector<1x8xf32>,
    %c104 = arith.constant 104 : index
    %c0_1186 = arith.constant 0 : index
    %830 = vector.load %arg15[%c104, %c0_1186] : memref<144x8xf32, #tpu.memory_space<vmem>>, vector<2x8xf32>
    %c116 = arith.constant 116 : index
    %c0_1187 = arith.constant 0 : index
    %831 = vector.load %arg15[%c116, %c0_1187] : memref<144x8xf32, #tpu.memory_space<vmem>>, vector<2x8xf32>
    %832 = arith.maximumf %830, %831 : vector<2x8xf32>
    %cst_1188 = arith.constant dense<0xFF800000> : vector<8xf32>
    %833 = vector.multi_reduction <maximumf>, %832, %cst_1188 [0] : vector<2x8xf32> to vector<8xf32>
    %834 = vector.shape_cast %833 : vector<8xf32> to vector<1x8xf32>
    %c28_1189 = arith.constant 28 : index
    %c0_1190 = arith.constant 0 : index
    %835 = vector.load %arg16[%c28_1189, %c0_1190] : memref<36x8xf32, #tpu.memory_space<vmem>>, vector<1x8xf32>
    tpu.vector_store %arg16[%c28_1189, %c0_1190], %834 {strides = array<i32>} : memref<36x8xf32, #tpu.memory_space<vmem>>, vector<1x8xf32>,
    %c106 = arith.constant 106 : index
    %c0_1191 = arith.constant 0 : index
    %836 = vector.load %arg15[%c106, %c0_1191] : memref<144x8xf32, #tpu.memory_space<vmem>>, vector<2x8xf32>
    %c118 = arith.constant 118 : index
    %c0_1192 = arith.constant 0 : index
    %837 = vector.load %arg15[%c118, %c0_1192] : memref<144x8xf32, #tpu.memory_space<vmem>>, vector<2x8xf32>
    %838 = arith.maximumf %836, %837 : vector<2x8xf32>
    %cst_1193 = arith.constant dense<0xFF800000> : vector<8xf32>
    %839 = vector.multi_reduction <maximumf>, %838, %cst_1193 [0] : vector<2x8xf32> to vector<8xf32>
    %840 = vector.shape_cast %839 : vector<8xf32> to vector<1x8xf32>
    %c29_1194 = arith.constant 29 : index
    %c0_1195 = arith.constant 0 : index
    %841 = vector.load %arg16[%c29_1194, %c0_1195] : memref<36x8xf32, #tpu.memory_space<vmem>>, vector<1x8xf32>
    tpu.vector_store %arg16[%c29_1194, %c0_1195], %840 {strides = array<i32>} : memref<36x8xf32, #tpu.memory_space<vmem>>, vector<1x8xf32>,
    %c120_1196 = arith.constant 120 : index
    %c0_1197 = arith.constant 0 : index
    %842 = vector.load %arg15[%c120_1196, %c0_1197] : memref<144x8xf32, #tpu.memory_space<vmem>>, vector<2x8xf32>
    %c132_1198 = arith.constant 132 : index
    %c0_1199 = arith.constant 0 : index
    %843 = vector.load %arg15[%c132_1198, %c0_1199] : memref<144x8xf32, #tpu.memory_space<vmem>>, vector<2x8xf32>
    %844 = arith.maximumf %842, %843 : vector<2x8xf32>
    %cst_1200 = arith.constant dense<0xFF800000> : vector<8xf32>
    %845 = vector.multi_reduction <maximumf>, %844, %cst_1200 [0] : vector<2x8xf32> to vector<8xf32>
    %846 = vector.shape_cast %845 : vector<8xf32> to vector<1x8xf32>
    %c30_1201 = arith.constant 30 : index
    %c0_1202 = arith.constant 0 : index
    %847 = vector.load %arg16[%c30_1201, %c0_1202] : memref<36x8xf32, #tpu.memory_space<vmem>>, vector<1x8xf32>
    tpu.vector_store %arg16[%c30_1201, %c0_1202], %846 {strides = array<i32>} : memref<36x8xf32, #tpu.memory_space<vmem>>, vector<1x8xf32>,
    %c122 = arith.constant 122 : index
    %c0_1203 = arith.constant 0 : index
    %848 = vector.load %arg15[%c122, %c0_1203] : memref<144x8xf32, #tpu.memory_space<vmem>>, vector<2x8xf32>
    %c134 = arith.constant 134 : index
    %c0_1204 = arith.constant 0 : index
    %849 = vector.load %arg15[%c134, %c0_1204] : memref<144x8xf32, #tpu.memory_space<vmem>>, vector<2x8xf32>
    %850 = arith.maximumf %848, %849 : vector<2x8xf32>
    %cst_1205 = arith.constant dense<0xFF800000> : vector<8xf32>
    %851 = vector.multi_reduction <maximumf>, %850, %cst_1205 [0] : vector<2x8xf32> to vector<8xf32>
    %852 = vector.shape_cast %851 : vector<8xf32> to vector<1x8xf32>
    %c31 = arith.constant 31 : index
    %c0_1206 = arith.constant 0 : index
    %853 = vector.load %arg16[%c31, %c0_1206] : memref<36x8xf32, #tpu.memory_space<vmem>>, vector<1x8xf32>
    tpu.vector_store %arg16[%c31, %c0_1206], %852 {strides = array<i32>} : memref<36x8xf32, #tpu.memory_space<vmem>>, vector<1x8xf32>,
    %c124 = arith.constant 124 : index
    %c0_1207 = arith.constant 0 : index
    %854 = vector.load %arg15[%c124, %c0_1207] : memref<144x8xf32, #tpu.memory_space<vmem>>, vector<2x8xf32>
    %c136 = arith.constant 136 : index
    %c0_1208 = arith.constant 0 : index
    %855 = vector.load %arg15[%c136, %c0_1208] : memref<144x8xf32, #tpu.memory_space<vmem>>, vector<2x8xf32>
    %856 = arith.maximumf %854, %855 : vector<2x8xf32>
    %cst_1209 = arith.constant dense<0xFF800000> : vector<8xf32>
    %857 = vector.multi_reduction <maximumf>, %856, %cst_1209 [0] : vector<2x8xf32> to vector<8xf32>
    %858 = vector.shape_cast %857 : vector<8xf32> to vector<1x8xf32>
    %c32_1210 = arith.constant 32 : index
    %c0_1211 = arith.constant 0 : index
    %859 = vector.load %arg16[%c32_1210, %c0_1211] : memref<36x8xf32, #tpu.memory_space<vmem>>, vector<1x8xf32>
    tpu.vector_store %arg16[%c32_1210, %c0_1211], %858 {strides = array<i32>} : memref<36x8xf32, #tpu.memory_space<vmem>>, vector<1x8xf32>,
    %c126_1212 = arith.constant 126 : index
    %c0_1213 = arith.constant 0 : index
    %860 = vector.load %arg15[%c126_1212, %c0_1213] : memref<144x8xf32, #tpu.memory_space<vmem>>, vector<2x8xf32>
    %c138 = arith.constant 138 : index
    %c0_1214 = arith.constant 0 : index
    %861 = vector.load %arg15[%c138, %c0_1214] : memref<144x8xf32, #tpu.memory_space<vmem>>, vector<2x8xf32>
    %862 = arith.maximumf %860, %861 : vector<2x8xf32>
    %cst_1215 = arith.constant dense<0xFF800000> : vector<8xf32>
    %863 = vector.multi_reduction <maximumf>, %862, %cst_1215 [0] : vector<2x8xf32> to vector<8xf32>
    %864 = vector.shape_cast %863 : vector<8xf32> to vector<1x8xf32>
    %c33_1216 = arith.constant 33 : index
    %c0_1217 = arith.constant 0 : index
    %865 = vector.load %arg16[%c33_1216, %c0_1217] : memref<36x8xf32, #tpu.memory_space<vmem>>, vector<1x8xf32>
    tpu.vector_store %arg16[%c33_1216, %c0_1217], %864 {strides = array<i32>} : memref<36x8xf32, #tpu.memory_space<vmem>>, vector<1x8xf32>,
    %c128_1218 = arith.constant 128 : index
    %c0_1219 = arith.constant 0 : index
    %866 = vector.load %arg15[%c128_1218, %c0_1219] : memref<144x8xf32, #tpu.memory_space<vmem>>, vector<2x8xf32>
    %c140_1220 = arith.constant 140 : index
    %c0_1221 = arith.constant 0 : index
    %867 = vector.load %arg15[%c140_1220, %c0_1221] : memref<144x8xf32, #tpu.memory_space<vmem>>, vector<2x8xf32>
    %868 = arith.maximumf %866, %867 : vector<2x8xf32>
    %cst_1222 = arith.constant dense<0xFF800000> : vector<8xf32>
    %869 = vector.multi_reduction <maximumf>, %868, %cst_1222 [0] : vector<2x8xf32> to vector<8xf32>
    %870 = vector.shape_cast %869 : vector<8xf32> to vector<1x8xf32>
    %c34_1223 = arith.constant 34 : index
    %c0_1224 = arith.constant 0 : index
    %871 = vector.load %arg16[%c34_1223, %c0_1224] : memref<36x8xf32, #tpu.memory_space<vmem>>, vector<1x8xf32>
    tpu.vector_store %arg16[%c34_1223, %c0_1224], %870 {strides = array<i32>} : memref<36x8xf32, #tpu.memory_space<vmem>>, vector<1x8xf32>,
    %c130_1225 = arith.constant 130 : index
    %c0_1226 = arith.constant 0 : index
    %872 = vector.load %arg15[%c130_1225, %c0_1226] : memref<144x8xf32, #tpu.memory_space<vmem>>, vector<2x8xf32>
    %c142_1227 = arith.constant 142 : index
    %c0_1228 = arith.constant 0 : index
    %873 = vector.load %arg15[%c142_1227, %c0_1228] : memref<144x8xf32, #tpu.memory_space<vmem>>, vector<2x8xf32>
    %874 = arith.maximumf %872, %873 : vector<2x8xf32>
    %cst_1229 = arith.constant dense<0xFF800000> : vector<8xf32>
    %875 = vector.multi_reduction <maximumf>, %874, %cst_1229 [0] : vector<2x8xf32> to vector<8xf32>
    %876 = vector.shape_cast %875 : vector<8xf32> to vector<1x8xf32>
    %c35 = arith.constant 35 : index
    %c0_1230 = arith.constant 0 : index
    %877 = vector.load %arg16[%c35, %c0_1230] : memref<36x8xf32, #tpu.memory_space<vmem>>, vector<1x8xf32>
    tpu.vector_store %arg16[%c35, %c0_1230], %876 {strides = array<i32>} : memref<36x8xf32, #tpu.memory_space<vmem>>, vector<1x8xf32>,
    %c0_1231 = arith.constant 0 : index
    %c0_1232 = arith.constant 0 : index
    %878 = vector.load %arg16[%c0_1231, %c0_1232] : memref<36x8xf32, #tpu.memory_space<vmem>>, vector<4x8xf32>
    %c0_1233 = arith.constant 0 : index
    %c0_1234 = arith.constant 0 : index
    %879 = vector.load %arg13[%c0_1233, %c0_1234] : memref<196x144xf32, #tpu.memory_space<vmem>>, vector<4x8xf32>
    tpu.vector_store %arg13[%c0_1233, %c0_1234], %878 {strides = array<i32>} : memref<196x144xf32, #tpu.memory_space<vmem>>, vector<4x8xf32>,
    %c1_1235 = arith.constant 1 : index
    %c0_1236 = arith.constant 0 : index
    %880 = vector.load %arg16[%c1_1235, %c0_1236] : memref<36x8xf32, #tpu.memory_space<vmem>>, vector<4x8xf32>
    %c0_1237 = arith.constant 0 : index
    %c8_1238 = arith.constant 8 : index
    %881 = vector.load %arg13[%c0_1237, %c8_1238] : memref<196x144xf32, #tpu.memory_space<vmem>>, vector<4x8xf32>
    tpu.vector_store %arg13[%c0_1237, %c8_1238], %880 {strides = array<i32>} : memref<196x144xf32, #tpu.memory_space<vmem>>, vector<4x8xf32>,
    %c2_1239 = arith.constant 2 : index
    %c0_1240 = arith.constant 0 : index
    %882 = vector.load %arg16[%c2_1239, %c0_1240] : memref<36x8xf32, #tpu.memory_space<vmem>>, vector<4x8xf32>
    %c0_1241 = arith.constant 0 : index
    %c16_1242 = arith.constant 16 : index
    %883 = vector.load %arg13[%c0_1241, %c16_1242] : memref<196x144xf32, #tpu.memory_space<vmem>>, vector<4x8xf32>
    tpu.vector_store %arg13[%c0_1241, %c16_1242], %882 {strides = array<i32>} : memref<196x144xf32, #tpu.memory_space<vmem>>, vector<4x8xf32>,
    %c6_1243 = arith.constant 6 : index
    %c0_1244 = arith.constant 0 : index
    %884 = vector.load %arg16[%c6_1243, %c0_1244] : memref<36x8xf32, #tpu.memory_space<vmem>>, vector<4x8xf32>
    %c0_1245 = arith.constant 0 : index
    %c24_1246 = arith.constant 24 : index
    %885 = vector.load %arg13[%c0_1245, %c24_1246] : memref<196x144xf32, #tpu.memory_space<vmem>>, vector<4x8xf32>
    tpu.vector_store %arg13[%c0_1245, %c24_1246], %884 {strides = array<i32>} : memref<196x144xf32, #tpu.memory_space<vmem>>, vector<4x8xf32>,
    %c7_1247 = arith.constant 7 : index
    %c0_1248 = arith.constant 0 : index
    %886 = vector.load %arg16[%c7_1247, %c0_1248] : memref<36x8xf32, #tpu.memory_space<vmem>>, vector<4x8xf32>
    %c0_1249 = arith.constant 0 : index
    %c32_1250 = arith.constant 32 : index
    %887 = vector.load %arg13[%c0_1249, %c32_1250] : memref<196x144xf32, #tpu.memory_space<vmem>>, vector<4x8xf32>
    tpu.vector_store %arg13[%c0_1249, %c32_1250], %886 {strides = array<i32>} : memref<196x144xf32, #tpu.memory_space<vmem>>, vector<4x8xf32>,
    %c8_1251 = arith.constant 8 : index
    %c0_1252 = arith.constant 0 : index
    %888 = vector.load %arg16[%c8_1251, %c0_1252] : memref<36x8xf32, #tpu.memory_space<vmem>>, vector<4x8xf32>
    %c0_1253 = arith.constant 0 : index
    %c40_1254 = arith.constant 40 : index
    %889 = vector.load %arg13[%c0_1253, %c40_1254] : memref<196x144xf32, #tpu.memory_space<vmem>>, vector<4x8xf32>
    tpu.vector_store %arg13[%c0_1253, %c40_1254], %888 {strides = array<i32>} : memref<196x144xf32, #tpu.memory_space<vmem>>, vector<4x8xf32>,
    %c12_1255 = arith.constant 12 : index
    %c0_1256 = arith.constant 0 : index
    %890 = vector.load %arg16[%c12_1255, %c0_1256] : memref<36x8xf32, #tpu.memory_space<vmem>>, vector<4x8xf32>
    %c0_1257 = arith.constant 0 : index
    %c48_1258 = arith.constant 48 : index
    %891 = vector.load %arg13[%c0_1257, %c48_1258] : memref<196x144xf32, #tpu.memory_space<vmem>>, vector<4x8xf32>
    tpu.vector_store %arg13[%c0_1257, %c48_1258], %890 {strides = array<i32>} : memref<196x144xf32, #tpu.memory_space<vmem>>, vector<4x8xf32>,
    %c13_1259 = arith.constant 13 : index
    %c0_1260 = arith.constant 0 : index
    %892 = vector.load %arg16[%c13_1259, %c0_1260] : memref<36x8xf32, #tpu.memory_space<vmem>>, vector<4x8xf32>
    %c0_1261 = arith.constant 0 : index
    %c56_1262 = arith.constant 56 : index
    %893 = vector.load %arg13[%c0_1261, %c56_1262] : memref<196x144xf32, #tpu.memory_space<vmem>>, vector<4x8xf32>
    tpu.vector_store %arg13[%c0_1261, %c56_1262], %892 {strides = array<i32>} : memref<196x144xf32, #tpu.memory_space<vmem>>, vector<4x8xf32>,
    %c14_1263 = arith.constant 14 : index
    %c0_1264 = arith.constant 0 : index
    %894 = vector.load %arg16[%c14_1263, %c0_1264] : memref<36x8xf32, #tpu.memory_space<vmem>>, vector<4x8xf32>
    %c0_1265 = arith.constant 0 : index
    %c64_1266 = arith.constant 64 : index
    %895 = vector.load %arg13[%c0_1265, %c64_1266] : memref<196x144xf32, #tpu.memory_space<vmem>>, vector<4x8xf32>
    tpu.vector_store %arg13[%c0_1265, %c64_1266], %894 {strides = array<i32>} : memref<196x144xf32, #tpu.memory_space<vmem>>, vector<4x8xf32>,
    %c6_1267 = arith.constant 6 : index
    %c0_1268 = arith.constant 0 : index
    %896 = vector.load %arg16[%c6_1267, %c0_1268] : memref<36x8xf32, #tpu.memory_space<vmem>>, vector<4x8xf32>
    %c4_1269 = arith.constant 4 : index
    %c0_1270 = arith.constant 0 : index
    %897 = vector.load %arg13[%c4_1269, %c0_1270] : memref<196x144xf32, #tpu.memory_space<vmem>>, vector<4x8xf32>
    tpu.vector_store %arg13[%c4_1269, %c0_1270], %896 {strides = array<i32>} : memref<196x144xf32, #tpu.memory_space<vmem>>, vector<4x8xf32>,
    %c7_1271 = arith.constant 7 : index
    %c0_1272 = arith.constant 0 : index
    %898 = vector.load %arg16[%c7_1271, %c0_1272] : memref<36x8xf32, #tpu.memory_space<vmem>>, vector<4x8xf32>
    %c4_1273 = arith.constant 4 : index
    %c8_1274 = arith.constant 8 : index
    %899 = vector.load %arg13[%c4_1273, %c8_1274] : memref<196x144xf32, #tpu.memory_space<vmem>>, vector<4x8xf32>
    tpu.vector_store %arg13[%c4_1273, %c8_1274], %898 {strides = array<i32>} : memref<196x144xf32, #tpu.memory_space<vmem>>, vector<4x8xf32>,
    %c8_1275 = arith.constant 8 : index
    %c0_1276 = arith.constant 0 : index
    %900 = vector.load %arg16[%c8_1275, %c0_1276] : memref<36x8xf32, #tpu.memory_space<vmem>>, vector<4x8xf32>
    %c4_1277 = arith.constant 4 : index
    %c16_1278 = arith.constant 16 : index
    %901 = vector.load %arg13[%c4_1277, %c16_1278] : memref<196x144xf32, #tpu.memory_space<vmem>>, vector<4x8xf32>
    tpu.vector_store %arg13[%c4_1277, %c16_1278], %900 {strides = array<i32>} : memref<196x144xf32, #tpu.memory_space<vmem>>, vector<4x8xf32>,
    %c12_1279 = arith.constant 12 : index
    %c0_1280 = arith.constant 0 : index
    %902 = vector.load %arg16[%c12_1279, %c0_1280] : memref<36x8xf32, #tpu.memory_space<vmem>>, vector<4x8xf32>
    %c4_1281 = arith.constant 4 : index
    %c24_1282 = arith.constant 24 : index
    %903 = vector.load %arg13[%c4_1281, %c24_1282] : memref<196x144xf32, #tpu.memory_space<vmem>>, vector<4x8xf32>
    tpu.vector_store %arg13[%c4_1281, %c24_1282], %902 {strides = array<i32>} : memref<196x144xf32, #tpu.memory_space<vmem>>, vector<4x8xf32>,
    %c13_1283 = arith.constant 13 : index
    %c0_1284 = arith.constant 0 : index
    %904 = vector.load %arg16[%c13_1283, %c0_1284] : memref<36x8xf32, #tpu.memory_space<vmem>>, vector<4x8xf32>
    %c4_1285 = arith.constant 4 : index
    %c32_1286 = arith.constant 32 : index
    %905 = vector.load %arg13[%c4_1285, %c32_1286] : memref<196x144xf32, #tpu.memory_space<vmem>>, vector<4x8xf32>
    tpu.vector_store %arg13[%c4_1285, %c32_1286], %904 {strides = array<i32>} : memref<196x144xf32, #tpu.memory_space<vmem>>, vector<4x8xf32>,
    %c14_1287 = arith.constant 14 : index
    %c0_1288 = arith.constant 0 : index
    %906 = vector.load %arg16[%c14_1287, %c0_1288] : memref<36x8xf32, #tpu.memory_space<vmem>>, vector<4x8xf32>
    %c4_1289 = arith.constant 4 : index
    %c40_1290 = arith.constant 40 : index
    %907 = vector.load %arg13[%c4_1289, %c40_1290] : memref<196x144xf32, #tpu.memory_space<vmem>>, vector<4x8xf32>
    tpu.vector_store %arg13[%c4_1289, %c40_1290], %906 {strides = array<i32>} : memref<196x144xf32, #tpu.memory_space<vmem>>, vector<4x8xf32>,
    %c18_1291 = arith.constant 18 : index
    %c0_1292 = arith.constant 0 : index
    %908 = vector.load %arg16[%c18_1291, %c0_1292] : memref<36x8xf32, #tpu.memory_space<vmem>>, vector<4x8xf32>
    %c4_1293 = arith.constant 4 : index
    %c48_1294 = arith.constant 48 : index
    %909 = vector.load %arg13[%c4_1293, %c48_1294] : memref<196x144xf32, #tpu.memory_space<vmem>>, vector<4x8xf32>
    tpu.vector_store %arg13[%c4_1293, %c48_1294], %908 {strides = array<i32>} : memref<196x144xf32, #tpu.memory_space<vmem>>, vector<4x8xf32>,
    %c19_1295 = arith.constant 19 : index
    %c0_1296 = arith.constant 0 : index
    %910 = vector.load %arg16[%c19_1295, %c0_1296] : memref<36x8xf32, #tpu.memory_space<vmem>>, vector<4x8xf32>
    %c4_1297 = arith.constant 4 : index
    %c56_1298 = arith.constant 56 : index
    %911 = vector.load %arg13[%c4_1297, %c56_1298] : memref<196x144xf32, #tpu.memory_space<vmem>>, vector<4x8xf32>
    tpu.vector_store %arg13[%c4_1297, %c56_1298], %910 {strides = array<i32>} : memref<196x144xf32, #tpu.memory_space<vmem>>, vector<4x8xf32>,
    %c20_1299 = arith.constant 20 : index
    %c0_1300 = arith.constant 0 : index
    %912 = vector.load %arg16[%c20_1299, %c0_1300] : memref<36x8xf32, #tpu.memory_space<vmem>>, vector<4x8xf32>
    %c4_1301 = arith.constant 4 : index
    %c64_1302 = arith.constant 64 : index
    %913 = vector.load %arg13[%c4_1301, %c64_1302] : memref<196x144xf32, #tpu.memory_space<vmem>>, vector<4x8xf32>
    tpu.vector_store %arg13[%c4_1301, %c64_1302], %912 {strides = array<i32>} : memref<196x144xf32, #tpu.memory_space<vmem>>, vector<4x8xf32>,
    %c12_1303 = arith.constant 12 : index
    %c0_1304 = arith.constant 0 : index
    %914 = vector.load %arg16[%c12_1303, %c0_1304] : memref<36x8xf32, #tpu.memory_space<vmem>>, vector<4x8xf32>
    %c8_1305 = arith.constant 8 : index
    %c0_1306 = arith.constant 0 : index
    %915 = vector.load %arg13[%c8_1305, %c0_1306] : memref<196x144xf32, #tpu.memory_space<vmem>>, vector<4x8xf32>
    tpu.vector_store %arg13[%c8_1305, %c0_1306], %914 {strides = array<i32>} : memref<196x144xf32, #tpu.memory_space<vmem>>, vector<4x8xf32>,
    %c13_1307 = arith.constant 13 : index
    %c0_1308 = arith.constant 0 : index
    %916 = vector.load %arg16[%c13_1307, %c0_1308] : memref<36x8xf32, #tpu.memory_space<vmem>>, vector<4x8xf32>
    %c8_1309 = arith.constant 8 : index
    %c8_1310 = arith.constant 8 : index
    %917 = vector.load %arg13[%c8_1309, %c8_1310] : memref<196x144xf32, #tpu.memory_space<vmem>>, vector<4x8xf32>
    tpu.vector_store %arg13[%c8_1309, %c8_1310], %916 {strides = array<i32>} : memref<196x144xf32, #tpu.memory_space<vmem>>, vector<4x8xf32>,
    %c14_1311 = arith.constant 14 : index
    %c0_1312 = arith.constant 0 : index
    %918 = vector.load %arg16[%c14_1311, %c0_1312] : memref<36x8xf32, #tpu.memory_space<vmem>>, vector<4x8xf32>
    %c8_1313 = arith.constant 8 : index
    %c16_1314 = arith.constant 16 : index
    %919 = vector.load %arg13[%c8_1313, %c16_1314] : memref<196x144xf32, #tpu.memory_space<vmem>>, vector<4x8xf32>
    tpu.vector_store %arg13[%c8_1313, %c16_1314], %918 {strides = array<i32>} : memref<196x144xf32, #tpu.memory_space<vmem>>, vector<4x8xf32>,
    %c18_1315 = arith.constant 18 : index
    %c0_1316 = arith.constant 0 : index
    %920 = vector.load %arg16[%c18_1315, %c0_1316] : memref<36x8xf32, #tpu.memory_space<vmem>>, vector<4x8xf32>
    %c8_1317 = arith.constant 8 : index
    %c24_1318 = arith.constant 24 : index
    %921 = vector.load %arg13[%c8_1317, %c24_1318] : memref<196x144xf32, #tpu.memory_space<vmem>>, vector<4x8xf32>
    tpu.vector_store %arg13[%c8_1317, %c24_1318], %920 {strides = array<i32>} : memref<196x144xf32, #tpu.memory_space<vmem>>, vector<4x8xf32>,
    %c19_1319 = arith.constant 19 : index
    %c0_1320 = arith.constant 0 : index
    %922 = vector.load %arg16[%c19_1319, %c0_1320] : memref<36x8xf32, #tpu.memory_space<vmem>>, vector<4x8xf32>
    %c8_1321 = arith.constant 8 : index
    %c32_1322 = arith.constant 32 : index
    %923 = vector.load %arg13[%c8_1321, %c32_1322] : memref<196x144xf32, #tpu.memory_space<vmem>>, vector<4x8xf32>
    tpu.vector_store %arg13[%c8_1321, %c32_1322], %922 {strides = array<i32>} : memref<196x144xf32, #tpu.memory_space<vmem>>, vector<4x8xf32>,
    %c20_1323 = arith.constant 20 : index
    %c0_1324 = arith.constant 0 : index
    %924 = vector.load %arg16[%c20_1323, %c0_1324] : memref<36x8xf32, #tpu.memory_space<vmem>>, vector<4x8xf32>
    %c8_1325 = arith.constant 8 : index
    %c40_1326 = arith.constant 40 : index
    %925 = vector.load %arg13[%c8_1325, %c40_1326] : memref<196x144xf32, #tpu.memory_space<vmem>>, vector<4x8xf32>
    tpu.vector_store %arg13[%c8_1325, %c40_1326], %924 {strides = array<i32>} : memref<196x144xf32, #tpu.memory_space<vmem>>, vector<4x8xf32>,
    %c24_1327 = arith.constant 24 : index
    %c0_1328 = arith.constant 0 : index
    %926 = vector.load %arg16[%c24_1327, %c0_1328] : memref<36x8xf32, #tpu.memory_space<vmem>>, vector<4x8xf32>
    %c8_1329 = arith.constant 8 : index
    %c48_1330 = arith.constant 48 : index
    %927 = vector.load %arg13[%c8_1329, %c48_1330] : memref<196x144xf32, #tpu.memory_space<vmem>>, vector<4x8xf32>
    tpu.vector_store %arg13[%c8_1329, %c48_1330], %926 {strides = array<i32>} : memref<196x144xf32, #tpu.memory_space<vmem>>, vector<4x8xf32>,
    %c25_1331 = arith.constant 25 : index
    %c0_1332 = arith.constant 0 : index
    %928 = vector.load %arg16[%c25_1331, %c0_1332] : memref<36x8xf32, #tpu.memory_space<vmem>>, vector<4x8xf32>
    %c8_1333 = arith.constant 8 : index
    %c56_1334 = arith.constant 56 : index
    %929 = vector.load %arg13[%c8_1333, %c56_1334] : memref<196x144xf32, #tpu.memory_space<vmem>>, vector<4x8xf32>
    tpu.vector_store %arg13[%c8_1333, %c56_1334], %928 {strides = array<i32>} : memref<196x144xf32, #tpu.memory_space<vmem>>, vector<4x8xf32>,
    %c26_1335 = arith.constant 26 : index
    %c0_1336 = arith.constant 0 : index
    %930 = vector.load %arg16[%c26_1335, %c0_1336] : memref<36x8xf32, #tpu.memory_space<vmem>>, vector<4x8xf32>
    %c8_1337 = arith.constant 8 : index
    %c64_1338 = arith.constant 64 : index
    %931 = vector.load %arg13[%c8_1337, %c64_1338] : memref<196x144xf32, #tpu.memory_space<vmem>>, vector<4x8xf32>
    tpu.vector_store %arg13[%c8_1337, %c64_1338], %930 {strides = array<i32>} : memref<196x144xf32, #tpu.memory_space<vmem>>, vector<4x8xf32>,
    %c18_1339 = arith.constant 18 : index
    %c0_1340 = arith.constant 0 : index
    %932 = vector.load %arg16[%c18_1339, %c0_1340] : memref<36x8xf32, #tpu.memory_space<vmem>>, vector<4x8xf32>
    %c12_1341 = arith.constant 12 : index
    %c0_1342 = arith.constant 0 : index
    %933 = vector.load %arg13[%c12_1341, %c0_1342] : memref<196x144xf32, #tpu.memory_space<vmem>>, vector<4x8xf32>
    tpu.vector_store %arg13[%c12_1341, %c0_1342], %932 {strides = array<i32>} : memref<196x144xf32, #tpu.memory_space<vmem>>, vector<4x8xf32>,
    %c19_1343 = arith.constant 19 : index
    %c0_1344 = arith.constant 0 : index
    %934 = vector.load %arg16[%c19_1343, %c0_1344] : memref<36x8xf32, #tpu.memory_space<vmem>>, vector<4x8xf32>
    %c12_1345 = arith.constant 12 : index
    %c8_1346 = arith.constant 8 : index
    %935 = vector.load %arg13[%c12_1345, %c8_1346] : memref<196x144xf32, #tpu.memory_space<vmem>>, vector<4x8xf32>
    tpu.vector_store %arg13[%c12_1345, %c8_1346], %934 {strides = array<i32>} : memref<196x144xf32, #tpu.memory_space<vmem>>, vector<4x8xf32>,
    %c20_1347 = arith.constant 20 : index
    %c0_1348 = arith.constant 0 : index
    %936 = vector.load %arg16[%c20_1347, %c0_1348] : memref<36x8xf32, #tpu.memory_space<vmem>>, vector<4x8xf32>
    %c12_1349 = arith.constant 12 : index
    %c16_1350 = arith.constant 16 : index
    %937 = vector.load %arg13[%c12_1349, %c16_1350] : memref<196x144xf32, #tpu.memory_space<vmem>>, vector<4x8xf32>
    tpu.vector_store %arg13[%c12_1349, %c16_1350], %936 {strides = array<i32>} : memref<196x144xf32, #tpu.memory_space<vmem>>, vector<4x8xf32>,
    %c24_1351 = arith.constant 24 : index
    %c0_1352 = arith.constant 0 : index
    %938 = vector.load %arg16[%c24_1351, %c0_1352] : memref<36x8xf32, #tpu.memory_space<vmem>>, vector<4x8xf32>
    %c12_1353 = arith.constant 12 : index
    %c24_1354 = arith.constant 24 : index
    %939 = vector.load %arg13[%c12_1353, %c24_1354] : memref<196x144xf32, #tpu.memory_space<vmem>>, vector<4x8xf32>
    tpu.vector_store %arg13[%c12_1353, %c24_1354], %938 {strides = array<i32>} : memref<196x144xf32, #tpu.memory_space<vmem>>, vector<4x8xf32>,
    %c25_1355 = arith.constant 25 : index
    %c0_1356 = arith.constant 0 : index
    %940 = vector.load %arg16[%c25_1355, %c0_1356] : memref<36x8xf32, #tpu.memory_space<vmem>>, vector<4x8xf32>
    %c12_1357 = arith.constant 12 : index
    %c32_1358 = arith.constant 32 : index
    %941 = vector.load %arg13[%c12_1357, %c32_1358] : memref<196x144xf32, #tpu.memory_space<vmem>>, vector<4x8xf32>
    tpu.vector_store %arg13[%c12_1357, %c32_1358], %940 {strides = array<i32>} : memref<196x144xf32, #tpu.memory_space<vmem>>, vector<4x8xf32>,
    %c26_1359 = arith.constant 26 : index
    %c0_1360 = arith.constant 0 : index
    %942 = vector.load %arg16[%c26_1359, %c0_1360] : memref<36x8xf32, #tpu.memory_space<vmem>>, vector<4x8xf32>
    %c12_1361 = arith.constant 12 : index
    %c40_1362 = arith.constant 40 : index
    %943 = vector.load %arg13[%c12_1361, %c40_1362] : memref<196x144xf32, #tpu.memory_space<vmem>>, vector<4x8xf32>
    tpu.vector_store %arg13[%c12_1361, %c40_1362], %942 {strides = array<i32>} : memref<196x144xf32, #tpu.memory_space<vmem>>, vector<4x8xf32>,
    %c30_1363 = arith.constant 30 : index
    %c0_1364 = arith.constant 0 : index
    %944 = vector.load %arg16[%c30_1363, %c0_1364] : memref<36x8xf32, #tpu.memory_space<vmem>>, vector<4x8xf32>
    %c12_1365 = arith.constant 12 : index
    %c48_1366 = arith.constant 48 : index
    %945 = vector.load %arg13[%c12_1365, %c48_1366] : memref<196x144xf32, #tpu.memory_space<vmem>>, vector<4x8xf32>
    tpu.vector_store %arg13[%c12_1365, %c48_1366], %944 {strides = array<i32>} : memref<196x144xf32, #tpu.memory_space<vmem>>, vector<4x8xf32>,
    %c31_1367 = arith.constant 31 : index
    %c0_1368 = arith.constant 0 : index
    %946 = vector.load %arg16[%c31_1367, %c0_1368] : memref<36x8xf32, #tpu.memory_space<vmem>>, vector<4x8xf32>
    %c12_1369 = arith.constant 12 : index
    %c56_1370 = arith.constant 56 : index
    %947 = vector.load %arg13[%c12_1369, %c56_1370] : memref<196x144xf32, #tpu.memory_space<vmem>>, vector<4x8xf32>
    tpu.vector_store %arg13[%c12_1369, %c56_1370], %946 {strides = array<i32>} : memref<196x144xf32, #tpu.memory_space<vmem>>, vector<4x8xf32>,
    %c32_1371 = arith.constant 32 : index
    %c0_1372 = arith.constant 0 : index
    %948 = vector.load %arg16[%c32_1371, %c0_1372] : memref<36x8xf32, #tpu.memory_space<vmem>>, vector<4x8xf32>
    %c12_1373 = arith.constant 12 : index
    %c64_1374 = arith.constant 64 : index
    %949 = vector.load %arg13[%c12_1373, %c64_1374] : memref<196x144xf32, #tpu.memory_space<vmem>>, vector<4x8xf32>
    tpu.vector_store %arg13[%c12_1373, %c64_1374], %948 {strides = array<i32>} : memref<196x144xf32, #tpu.memory_space<vmem>>, vector<4x8xf32>,
    %c0_1375 = arith.constant 0 : index
    %c0_1376 = arith.constant 0 : index
    %950 = vector.load %arg13[%c0_1375, %c0_1376] : memref<196x144xf32, #tpu.memory_space<vmem>>, vector<16x72xf32>
    %c0_1377 = arith.constant 0 : index
    %c0_1378 = arith.constant 0 : index
    %951 = vector.load %arg6[%c0_1377, %c0_1378] : memref<72x16xf32, #tpu.memory_space<vmem>>, vector<72x16xf32>
    %cst_1379 = arith.constant dense<0.000000e+00> : vector<16x16xf32>
    %952 = tpu.matmul %950, %951, %cst_1379 {dimension_numbers = #tpu.dot_dimension_numbers<[1], [0], [0], [1], [0, 0, 1, 1], [], []>} : vector<16x72xf32>, vector<72x16xf32>, vector<16x16xf32> -> vector<16x16xf32>
    %c0_1380 = arith.constant 0 : index
    %c0_1381 = arith.constant 0 : index
    %953 = vector.load %arg7[%c0_1380, %c0_1381] : memref<1x16xf32, #tpu.memory_space<vmem>>, vector<1x16xf32>
    %954 = vector.broadcast %953 : vector<1x16xf32> to vector<16x16xf32>
    %955 = arith.addf %952, %954 : vector<16x16xf32>
    %cst_1382 = arith.constant 0.000000e+00 : f32
    %956 = vector.broadcast %cst_1382 : f32 to vector<16x16xf32>
    %957 = arith.maximumf %955, %956 : vector<16x16xf32>
    %c0_1383 = arith.constant 0 : index
    %c0_1384 = arith.constant 0 : index
    %958 = vector.load %arg17[%c0_1383, %c0_1384] : memref<16x16xf32, #tpu.memory_space<vmem>>, vector<16x16xf32>
    tpu.vector_store %arg17[%c0_1383, %c0_1384], %957 {strides = array<i32>} : memref<16x16xf32, #tpu.memory_space<vmem>>, vector<16x16xf32>,
    %c0_1385 = arith.constant 0 : index
    %c0_1386 = arith.constant 0 : index
    %959 = vector.load %arg17[%c0_1385, %c0_1386] : memref<16x16xf32, #tpu.memory_space<vmem>>, vector<2x16xf32>
    %c0_1387 = arith.constant 0 : index
    %c0_1388 = arith.constant 0 : index
    %960 = vector.load %arg13[%c0_1387, %c0_1388] : memref<196x144xf32, #tpu.memory_space<vmem>>, vector<2x16xf32>
    tpu.vector_store %arg13[%c0_1387, %c0_1388], %959 {strides = array<i32>} : memref<196x144xf32, #tpu.memory_space<vmem>>, vector<2x16xf32>,
    %c1_1389 = arith.constant 1 : index
    %c0_1390 = arith.constant 0 : index
    %961 = vector.load %arg17[%c1_1389, %c0_1390] : memref<16x16xf32, #tpu.memory_space<vmem>>, vector<2x16xf32>
    %c0_1391 = arith.constant 0 : index
    %c16_1392 = arith.constant 16 : index
    %962 = vector.load %arg13[%c0_1391, %c16_1392] : memref<196x144xf32, #tpu.memory_space<vmem>>, vector<2x16xf32>
    tpu.vector_store %arg13[%c0_1391, %c16_1392], %961 {strides = array<i32>} : memref<196x144xf32, #tpu.memory_space<vmem>>, vector<2x16xf32>,
    %c2_1393 = arith.constant 2 : index
    %c0_1394 = arith.constant 0 : index
    %963 = vector.load %arg17[%c2_1393, %c0_1394] : memref<16x16xf32, #tpu.memory_space<vmem>>, vector<2x16xf32>
    %c0_1395 = arith.constant 0 : index
    %c32_1396 = arith.constant 32 : index
    %964 = vector.load %arg13[%c0_1395, %c32_1396] : memref<196x144xf32, #tpu.memory_space<vmem>>, vector<2x16xf32>
    tpu.vector_store %arg13[%c0_1395, %c32_1396], %963 {strides = array<i32>} : memref<196x144xf32, #tpu.memory_space<vmem>>, vector<2x16xf32>,
    %c4_1397 = arith.constant 4 : index
    %c0_1398 = arith.constant 0 : index
    %965 = vector.load %arg17[%c4_1397, %c0_1398] : memref<16x16xf32, #tpu.memory_space<vmem>>, vector<2x16xf32>
    %c0_1399 = arith.constant 0 : index
    %c48_1400 = arith.constant 48 : index
    %966 = vector.load %arg13[%c0_1399, %c48_1400] : memref<196x144xf32, #tpu.memory_space<vmem>>, vector<2x16xf32>
    tpu.vector_store %arg13[%c0_1399, %c48_1400], %965 {strides = array<i32>} : memref<196x144xf32, #tpu.memory_space<vmem>>, vector<2x16xf32>,
    %c5_1401 = arith.constant 5 : index
    %c0_1402 = arith.constant 0 : index
    %967 = vector.load %arg17[%c5_1401, %c0_1402] : memref<16x16xf32, #tpu.memory_space<vmem>>, vector<2x16xf32>
    %c0_1403 = arith.constant 0 : index
    %c64_1404 = arith.constant 64 : index
    %968 = vector.load %arg13[%c0_1403, %c64_1404] : memref<196x144xf32, #tpu.memory_space<vmem>>, vector<2x16xf32>
    tpu.vector_store %arg13[%c0_1403, %c64_1404], %967 {strides = array<i32>} : memref<196x144xf32, #tpu.memory_space<vmem>>, vector<2x16xf32>,
    %c6_1405 = arith.constant 6 : index
    %c0_1406 = arith.constant 0 : index
    %969 = vector.load %arg17[%c6_1405, %c0_1406] : memref<16x16xf32, #tpu.memory_space<vmem>>, vector<2x16xf32>
    %c0_1407 = arith.constant 0 : index
    %c80_1408 = arith.constant 80 : index
    %970 = vector.load %arg13[%c0_1407, %c80_1408] : memref<196x144xf32, #tpu.memory_space<vmem>>, vector<2x16xf32>
    tpu.vector_store %arg13[%c0_1407, %c80_1408], %969 {strides = array<i32>} : memref<196x144xf32, #tpu.memory_space<vmem>>, vector<2x16xf32>,
    %c8_1409 = arith.constant 8 : index
    %c0_1410 = arith.constant 0 : index
    %971 = vector.load %arg17[%c8_1409, %c0_1410] : memref<16x16xf32, #tpu.memory_space<vmem>>, vector<2x16xf32>
    %c0_1411 = arith.constant 0 : index
    %c96_1412 = arith.constant 96 : index
    %972 = vector.load %arg13[%c0_1411, %c96_1412] : memref<196x144xf32, #tpu.memory_space<vmem>>, vector<2x16xf32>
    tpu.vector_store %arg13[%c0_1411, %c96_1412], %971 {strides = array<i32>} : memref<196x144xf32, #tpu.memory_space<vmem>>, vector<2x16xf32>,
    %c9_1413 = arith.constant 9 : index
    %c0_1414 = arith.constant 0 : index
    %973 = vector.load %arg17[%c9_1413, %c0_1414] : memref<16x16xf32, #tpu.memory_space<vmem>>, vector<2x16xf32>
    %c0_1415 = arith.constant 0 : index
    %c112_1416 = arith.constant 112 : index
    %974 = vector.load %arg13[%c0_1415, %c112_1416] : memref<196x144xf32, #tpu.memory_space<vmem>>, vector<2x16xf32>
    tpu.vector_store %arg13[%c0_1415, %c112_1416], %973 {strides = array<i32>} : memref<196x144xf32, #tpu.memory_space<vmem>>, vector<2x16xf32>,
    %c10_1417 = arith.constant 10 : index
    %c0_1418 = arith.constant 0 : index
    %975 = vector.load %arg17[%c10_1417, %c0_1418] : memref<16x16xf32, #tpu.memory_space<vmem>>, vector<2x16xf32>
    %c0_1419 = arith.constant 0 : index
    %c128_1420 = arith.constant 128 : index
    %976 = vector.load %arg13[%c0_1419, %c128_1420] : memref<196x144xf32, #tpu.memory_space<vmem>>, vector<2x16xf32>
    tpu.vector_store %arg13[%c0_1419, %c128_1420], %975 {strides = array<i32>} : memref<196x144xf32, #tpu.memory_space<vmem>>, vector<2x16xf32>,
    %c4_1421 = arith.constant 4 : index
    %c0_1422 = arith.constant 0 : index
    %977 = vector.load %arg17[%c4_1421, %c0_1422] : memref<16x16xf32, #tpu.memory_space<vmem>>, vector<2x16xf32>
    %c2_1423 = arith.constant 2 : index
    %c0_1424 = arith.constant 0 : index
    %978 = vector.load %arg13[%c2_1423, %c0_1424] : memref<196x144xf32, #tpu.memory_space<vmem>>, vector<2x16xf32>
    tpu.vector_store %arg13[%c2_1423, %c0_1424], %977 {strides = array<i32>} : memref<196x144xf32, #tpu.memory_space<vmem>>, vector<2x16xf32>,
    %c5_1425 = arith.constant 5 : index
    %c0_1426 = arith.constant 0 : index
    %979 = vector.load %arg17[%c5_1425, %c0_1426] : memref<16x16xf32, #tpu.memory_space<vmem>>, vector<2x16xf32>
    %c2_1427 = arith.constant 2 : index
    %c16_1428 = arith.constant 16 : index
    %980 = vector.load %arg13[%c2_1427, %c16_1428] : memref<196x144xf32, #tpu.memory_space<vmem>>, vector<2x16xf32>
    tpu.vector_store %arg13[%c2_1427, %c16_1428], %979 {strides = array<i32>} : memref<196x144xf32, #tpu.memory_space<vmem>>, vector<2x16xf32>,
    %c6_1429 = arith.constant 6 : index
    %c0_1430 = arith.constant 0 : index
    %981 = vector.load %arg17[%c6_1429, %c0_1430] : memref<16x16xf32, #tpu.memory_space<vmem>>, vector<2x16xf32>
    %c2_1431 = arith.constant 2 : index
    %c32_1432 = arith.constant 32 : index
    %982 = vector.load %arg13[%c2_1431, %c32_1432] : memref<196x144xf32, #tpu.memory_space<vmem>>, vector<2x16xf32>
    tpu.vector_store %arg13[%c2_1431, %c32_1432], %981 {strides = array<i32>} : memref<196x144xf32, #tpu.memory_space<vmem>>, vector<2x16xf32>,
    %c8_1433 = arith.constant 8 : index
    %c0_1434 = arith.constant 0 : index
    %983 = vector.load %arg17[%c8_1433, %c0_1434] : memref<16x16xf32, #tpu.memory_space<vmem>>, vector<2x16xf32>
    %c2_1435 = arith.constant 2 : index
    %c48_1436 = arith.constant 48 : index
    %984 = vector.load %arg13[%c2_1435, %c48_1436] : memref<196x144xf32, #tpu.memory_space<vmem>>, vector<2x16xf32>
    tpu.vector_store %arg13[%c2_1435, %c48_1436], %983 {strides = array<i32>} : memref<196x144xf32, #tpu.memory_space<vmem>>, vector<2x16xf32>,
    %c9_1437 = arith.constant 9 : index
    %c0_1438 = arith.constant 0 : index
    %985 = vector.load %arg17[%c9_1437, %c0_1438] : memref<16x16xf32, #tpu.memory_space<vmem>>, vector<2x16xf32>
    %c2_1439 = arith.constant 2 : index
    %c64_1440 = arith.constant 64 : index
    %986 = vector.load %arg13[%c2_1439, %c64_1440] : memref<196x144xf32, #tpu.memory_space<vmem>>, vector<2x16xf32>
    tpu.vector_store %arg13[%c2_1439, %c64_1440], %985 {strides = array<i32>} : memref<196x144xf32, #tpu.memory_space<vmem>>, vector<2x16xf32>,
    %c10_1441 = arith.constant 10 : index
    %c0_1442 = arith.constant 0 : index
    %987 = vector.load %arg17[%c10_1441, %c0_1442] : memref<16x16xf32, #tpu.memory_space<vmem>>, vector<2x16xf32>
    %c2_1443 = arith.constant 2 : index
    %c80_1444 = arith.constant 80 : index
    %988 = vector.load %arg13[%c2_1443, %c80_1444] : memref<196x144xf32, #tpu.memory_space<vmem>>, vector<2x16xf32>
    tpu.vector_store %arg13[%c2_1443, %c80_1444], %987 {strides = array<i32>} : memref<196x144xf32, #tpu.memory_space<vmem>>, vector<2x16xf32>,
    %c12_1445 = arith.constant 12 : index
    %c0_1446 = arith.constant 0 : index
    %989 = vector.load %arg17[%c12_1445, %c0_1446] : memref<16x16xf32, #tpu.memory_space<vmem>>, vector<2x16xf32>
    %c2_1447 = arith.constant 2 : index
    %c96_1448 = arith.constant 96 : index
    %990 = vector.load %arg13[%c2_1447, %c96_1448] : memref<196x144xf32, #tpu.memory_space<vmem>>, vector<2x16xf32>
    tpu.vector_store %arg13[%c2_1447, %c96_1448], %989 {strides = array<i32>} : memref<196x144xf32, #tpu.memory_space<vmem>>, vector<2x16xf32>,
    %c13_1449 = arith.constant 13 : index
    %c0_1450 = arith.constant 0 : index
    %991 = vector.load %arg17[%c13_1449, %c0_1450] : memref<16x16xf32, #tpu.memory_space<vmem>>, vector<2x16xf32>
    %c2_1451 = arith.constant 2 : index
    %c112_1452 = arith.constant 112 : index
    %992 = vector.load %arg13[%c2_1451, %c112_1452] : memref<196x144xf32, #tpu.memory_space<vmem>>, vector<2x16xf32>
    tpu.vector_store %arg13[%c2_1451, %c112_1452], %991 {strides = array<i32>} : memref<196x144xf32, #tpu.memory_space<vmem>>, vector<2x16xf32>,
    %c14_1453 = arith.constant 14 : index
    %c0_1454 = arith.constant 0 : index
    %993 = vector.load %arg17[%c14_1453, %c0_1454] : memref<16x16xf32, #tpu.memory_space<vmem>>, vector<2x16xf32>
    %c2_1455 = arith.constant 2 : index
    %c128_1456 = arith.constant 128 : index
    %994 = vector.load %arg13[%c2_1455, %c128_1456] : memref<196x144xf32, #tpu.memory_space<vmem>>, vector<2x16xf32>
    tpu.vector_store %arg13[%c2_1455, %c128_1456], %993 {strides = array<i32>} : memref<196x144xf32, #tpu.memory_space<vmem>>, vector<2x16xf32>,
    %c0_1457 = arith.constant 0 : index
    %c0_1458 = arith.constant 0 : index
    %995 = vector.load %arg13[%c0_1457, %c0_1458] : memref<196x144xf32, #tpu.memory_space<vmem>>, vector<4x144xf32>
    %c0_1459 = arith.constant 0 : index
    %c0_1460 = arith.constant 0 : index
    %996 = vector.load %arg8[%c0_1459, %c0_1460] : memref<144x16xf32, #tpu.memory_space<vmem>>, vector<144x16xf32>
    %cst_1461 = arith.constant dense<0.000000e+00> : vector<4x16xf32>
    %997 = tpu.matmul %995, %996, %cst_1461 {dimension_numbers = #tpu.dot_dimension_numbers<[1], [0], [0], [1], [0, 0, 1, 1], [], []>} : vector<4x144xf32>, vector<144x16xf32>, vector<4x16xf32> -> vector<4x16xf32>
    %c0_1462 = arith.constant 0 : index
    %c0_1463 = arith.constant 0 : index
    %998 = vector.load %arg9[%c0_1462, %c0_1463] : memref<1x16xf32, #tpu.memory_space<vmem>>, vector<1x16xf32>
    %999 = vector.broadcast %998 : vector<1x16xf32> to vector<4x16xf32>
    %1000 = arith.addf %997, %999 : vector<4x16xf32>
    %cst_1464 = arith.constant 0.000000e+00 : f32
    %1001 = vector.broadcast %cst_1464 : f32 to vector<4x16xf32>
    %1002 = arith.maximumf %1000, %1001 : vector<4x16xf32>
    %c0_1465 = arith.constant 0 : index
    %c0_1466 = arith.constant 0 : index
    %1003 = vector.load %arg18[%c0_1465, %c0_1466] : memref<4x16xf32, #tpu.memory_space<vmem>>, vector<4x16xf32>
    tpu.vector_store %arg18[%c0_1465, %c0_1466], %1002 {strides = array<i32>} : memref<4x16xf32, #tpu.memory_space<vmem>>, vector<4x16xf32>,
    %c0_1467 = arith.constant 0 : index
    %c0_1468 = arith.constant 0 : index
    %1004 = vector.load %arg18[%c0_1467, %c0_1468] : memref<4x16xf32, #tpu.memory_space<vmem>>, vector<4x16xf32>
    %cst_1469 = arith.constant dense<0.000000e+00> : vector<16xf32>
    %1005 = vector.multi_reduction <add>, %1004, %cst_1469 [0] : vector<4x16xf32> to vector<16xf32>
    %1006 = vector.shape_cast %1005 : vector<16xf32> to vector<1x16xf32>
    %cst_1470 = arith.constant 2.500000e-01 : f32
    %1007 = vector.broadcast %cst_1470 : f32 to vector<1x16xf32>
    %1008 = arith.mulf %1006, %1007 : vector<1x16xf32>
    %c0_1471 = arith.constant 0 : index
    %c0_1472 = arith.constant 0 : index
    %1009 = vector.load %arg10[%c0_1471, %c0_1472] : memref<16x2xf32, #tpu.memory_space<vmem>>, vector<16x2xf32>
    %cst_1473 = arith.constant dense<0.000000e+00> : vector<1x2xf32>
    %1010 = tpu.matmul %1008, %1009, %cst_1473 {dimension_numbers = #tpu.dot_dimension_numbers<[1], [0], [0], [1], [0, 0, 1, 1], [], []>} : vector<1x16xf32>, vector<16x2xf32>, vector<1x2xf32> -> vector<1x2xf32>
    %c0_1474 = arith.constant 0 : index
    %c0_1475 = arith.constant 0 : index
    %1011 = vector.load %arg11[%c0_1474, %c0_1475] : memref<1x2xf32, #tpu.memory_space<vmem>>, vector<1x2xf32>
    %1012 = arith.addf %1010, %1011 : vector<1x2xf32>
    %c0_1476 = arith.constant 0 : index
    %c0_1477 = arith.constant 0 : index
    %c0_1478 = arith.constant 0 : index
    %1013 = vector.load %arg12[%c0_1476, %c0_1477, %c0_1478] : memref<1x1x2xf32, #tpu.memory_space<vmem>>, vector<1x1x2xf32>
    %1014 = vector.shape_cast %1013 : vector<1x1x2xf32> to vector<1x2xf32>
    %1015 = vector.shape_cast %1012 : vector<1x2xf32> to vector<1x1x2xf32>
    tpu.vector_store %arg12[%c0_1476, %c0_1477, %c0_1478], %1015 {strides = array<i32>} : memref<1x1x2xf32, #tpu.memory_space<vmem>>, vector<1x1x2xf32>,
    return
  }
  func.func @transform_0(%arg0: i32) -> (i32, i32, i32) {
    %c0_i32 = arith.constant 0 : i32
    %c0_i32_0 = arith.constant 0 : i32
    %c0_i32_1 = arith.constant 0 : i32
    return %arg0, %c0_i32, %c0_i32_0 : i32, i32, i32
  }
  func.func @transform_1(%arg0: i32) -> (i32, i32) {
    %c0_i32 = arith.constant 0 : i32
    %c0_i32_0 = arith.constant 0 : i32
    %c0_i32_1 = arith.constant 0 : i32
    return %c0_i32, %c0_i32_0 : i32, i32
  }
  func.func @transform_2(%arg0: i32) -> (i32, i32) {
    %c0_i32 = arith.constant 0 : i32
    %c0_i32_0 = arith.constant 0 : i32
    %c0_i32_1 = arith.constant 0 : i32
    return %c0_i32, %c0_i32_0 : i32, i32
  }
  func.func @transform_3(%arg0: i32) -> (i32, i32) {
    %c0_i32 = arith.constant 0 : i32
    %c0_i32_0 = arith.constant 0 : i32
    %c0_i32_1 = arith.constant 0 : i32
    return %c0_i32, %c0_i32_0 : i32, i32
  }
  func.func @transform_4(%arg0: i32) -> (i32, i32) {
    %c0_i32 = arith.constant 0 : i32
    %c0_i32_0 = arith.constant 0 : i32
    %c0_i32_1 = arith.constant 0 : i32
    return %c0_i32, %c0_i32_0 : i32, i32
  }
  func.func @transform_5(%arg0: i32) -> (i32, i32) {
    %c0_i32 = arith.constant 0 : i32
    %c0_i32_0 = arith.constant 0 : i32
    %c0_i32_1 = arith.constant 0 : i32
    return %c0_i32, %c0_i32_0 : i32, i32
  }
  func.func @transform_6(%arg0: i32) -> (i32, i32) {
    %c0_i32 = arith.constant 0 : i32
    %c0_i32_0 = arith.constant 0 : i32
    %c0_i32_1 = arith.constant 0 : i32
    return %c0_i32, %c0_i32_0 : i32, i32
  }
  func.func @transform_7(%arg0: i32) -> (i32, i32) {
    %c0_i32 = arith.constant 0 : i32
    %c0_i32_0 = arith.constant 0 : i32
    %c0_i32_1 = arith.constant 0 : i32
    return %c0_i32, %c0_i32_0 : i32, i32
  }
  func.func @transform_8(%arg0: i32) -> (i32, i32) {
    %c0_i32 = arith.constant 0 : i32
    %c0_i32_0 = arith.constant 0 : i32
    %c0_i32_1 = arith.constant 0 : i32
    return %c0_i32, %c0_i32_0 : i32, i32
  }
  func.func @transform_9(%arg0: i32) -> (i32, i32) {
    %c0_i32 = arith.constant 0 : i32
    %c0_i32_0 = arith.constant 0 : i32
    %c0_i32_1 = arith.constant 0 : i32
    return %c0_i32, %c0_i32_0 : i32, i32
  }
  func.func @transform_10(%arg0: i32) -> (i32, i32) {
    %c0_i32 = arith.constant 0 : i32
    %c0_i32_0 = arith.constant 0 : i32
    %c0_i32_1 = arith.constant 0 : i32
    return %c0_i32, %c0_i32_0 : i32, i32
  }
  func.func @transform_11(%arg0: i32) -> (i32, i32, i32) {
    %c0_i32 = arith.constant 0 : i32
    %c0_i32_0 = arith.constant 0 : i32
    %c0_i32_1 = arith.constant 0 : i32
    return %arg0, %c0_i32, %c0_i32_0 : i32, i32, i32
  }
}

</mosaic_0001>

<llo_original>
// kernel: forward.1
$region0: #{forward.1}
  #allocation0 [shape = 'u32[]', space=smem, size = 0x4, offset = 0x4, fixed_abs, tag = 'smem constant byte address 0x4 - core index']
  #allocation1 [shape = 'u32[144,128]{1,0:T(1,128)}', space=vmem, size = 0x12000, scoped, tag = 'internal scratch']
  #allocation2 [shape = 'f32[196,144]{1,0:T(8,128)}', space=vmem, size = 0x32000, scoped, tag = 'scratch operand']
  #allocation3 [shape = 'f32[196,8]{1,0:T(8,128)}', space=vmem, size = 0x19000, scoped, tag = 'scratch operand']
  #allocation4 [shape = 'f32[144,8]{1,0:T(8,128)}', space=vmem, size = 0x12000, scoped, tag = 'scratch operand']
  #allocation5 [shape = 'f32[36,8]{1,0:T(8,128)}', space=vmem, size = 0x5000, scoped, tag = 'scratch operand']
  #allocation6 [shape = 'f32[16,16]{1,0:T(8,128)}', space=vmem, size = 0x2000, scoped, tag = 'scratch operand']
  #allocation7 [shape = 'f32[4,16]{1,0:T(4,128)}', space=vmem, size = 0x800, scoped, tag = 'scratch operand']
  %s0 = inlined_call_operand.vmem [shape: f32[2,256,1], index: 0, kind: input, shape index: {}]
  %s1 = inlined_call_operand.vmem [shape: f32[9,8], index: 1, kind: input, shape index: {}]
  %s2 = inlined_call_operand.vmem [shape: f32[1,8], index: 2, kind: input, shape index: {}]
  %s3 = inlined_call_operand.vmem [shape: f32[72,8], index: 3, kind: input, shape index: {}]
  %s4 = inlined_call_operand.vmem [shape: f32[1,8], index: 4, kind: input, shape index: {}]
  %s5 = inlined_call_operand.vmem [shape: f32[72,16], index: 5, kind: input, shape index: {}]
  %s6 = inlined_call_operand.vmem [shape: f32[1,16], index: 6, kind: input, shape index: {}]
  %s7 = inlined_call_operand.vmem [shape: f32[144,16], index: 7, kind: input, shape index: {}]
  %s8 = inlined_call_operand.vmem [shape: f32[1,16], index: 8, kind: input, shape index: {}]
  %s9 = inlined_call_operand.vmem [shape: f32[16,2], index: 9, kind: input, shape index: {}]
  %s10 = inlined_call_operand.vmem [shape: f32[1,2], index: 10, kind: input, shape index: {}]
  %s11 = inlined_call_operand.hbm [shape: f32[2,1,2], index: 11, kind: output, shape index: {}]
  %s12 = sld [smem:[#allocation0]]
  $region77: #{forward.1} parent=0
    _
  %s14 = ssub.s32 1, %s12
  %s15 = scalar_select 0, %s14, %s12
  $region1: #{forward.1} parent=0
    #allocation8 [shape = 'u8[1024]{0}', space=vmem, size = 0x400, scoped, tag = 'output window, operand 0']
    #allocation9 [shape = 's32[2]{0}', space=sflag, size = 0x8, scoped, tag = 'scoped memory for forward.1']
    %16 = vsyncpa [#allocation9], 0
    %s17 = scalar_lea.sflag [#allocation9], 1
    %18 = vsyncpa %s17, 0
    loop: start=0, step=1, limit=4
    $region2: #{forward.1} parent=1 // loop_pre_header
      _
    $region3: #{forward.1} parent=1 // loop_header
      %s20 = sphi 0, %s24
      %p21 = scmp.ge.s32.totalorder %s20, 4
      %s30 = sphi 0, %s32
      %s33 = sphi 0, %s30
      %s34 = sphi 0, %s33
      %s50 = sphi 0, %s34
      %s54 = sphi 0, %s54
      %s56 = sphi 0, %s54
      %s57 = sphi 0, %s56
      %s71 = sphi 0, %s57
      %s75 = sphi 0, %s75
      %s77 = sphi 0, %s75
      %s78 = sphi 0, %s77
      %s92 = sphi 0, %s78
      %s96 = sphi 0, %s96
      %s98 = sphi 0, %s96
      %s99 = sphi 0, %s98
      %s113 = sphi 0, %s99
      %s117 = sphi 0, %s117
      %s119 = sphi 0, %s117
      %s120 = sphi 0, %s119
      %s134 = sphi 0, %s120
      %s138 = sphi 0, %s138
      %s140 = sphi 0, %s138
      %s141 = sphi 0, %s140
      %s155 = sphi 0, %s141
      %s159 = sphi 0, %s159
      %s161 = sphi 0, %s159
      %s162 = sphi 0, %s161
      %s176 = sphi 0, %s162
      %s180 = sphi 0, %s180
      %s182 = sphi 0, %s180
      %s183 = sphi 0, %s182
      %s197 = sphi 0, %s183
      %s201 = sphi 0, %s201
      %s203 = sphi 0, %s201
      %s204 = sphi 0, %s203
      %s218 = sphi 0, %s204
      %s222 = sphi 0, %s222
      %s224 = sphi 0, %s222
      %s225 = sphi 0, %s224
      %s239 = sphi 0, %s225
      %s243 = sphi 0, %s243
      %s245 = sphi 0, %s243
      %s246 = sphi 0, %s245
      %s260 = sphi 0, %s246
      %s266 = sphi 0, %s268
      %s269 = sphi 0, %s266
      %s270 = sphi 0, %s269
      %s286 = sphi 0, %s270
    $region4: #{forward.1} parent=1 // loop_header_branch
      %23 = sbr.rel (%p21) target = $region8
    $region5: #{forward.1} parent=1 // loop_body
      %s25 = ssub.s32 %s20, 1
      %s26 = ssub.s32 %s20, 2
      %s27 = sadd.s32 %s20, 1
      %s28 = ssub.s32 %s20, %s27
      %p29 = scmp.eq.s32.totalorder %s28, 0
      %s31 = sadd.s32 %s30, 1
      %s32 = scalar_select %p29, %s30, %s31
      %p35 = pneg %p29
      %p36 = scmp.eq.s32.totalorder %s20, 1
      %p37 = por %p35, %p36
      %p38 = scmp.ne.s32.totalorder %s30, %s33
      %p39 = scmp.eq.s32.totalorder %s20, 0
      %p40 = por %p38, %p39
      %p41 = scmp.ne.s32.totalorder %s30, %s33
      %p42 = scmp.eq.s32.totalorder %s25, 1
      %p43 = por %p41, %p42
      %p44 = scmp.ne.s32.totalorder %s33, %s34
      %p45 = scmp.eq.s32.totalorder %s25, 0
      %p46 = por %p44, %p45
      %p47 = scmp.ne.s32.totalorder %s33, %s34
      %p48 = scmp.eq.s32.totalorder %s26, 1
      %p49 = por %p47, %p48
      %p51 = scmp.ne.s32.totalorder %s34, %s50
      %p52 = scmp.eq.s32.totalorder %s26, 0
      %p53 = por %p51, %p52
      %s55 = sadd.s32 %s54, 1
      %p58 = scmp.eq.s32.totalorder %s20, 1
      %p59 = scmp.ne.s32.totalorder %s54, %s56
      %p60 = scmp.eq.s32.totalorder %s20, 0
      %p61 = por %p59, %p60
      %p62 = scmp.ne.s32.totalorder %s54, %s56
      %p63 = scmp.eq.s32.totalorder %s25, 1
      %p64 = por %p62, %p63
      %p65 = scmp.ne.s32.totalorder %s56, %s57
      %p66 = scmp.eq.s32.totalorder %s25, 0
      %p67 = por %p65, %p66
      %p68 = scmp.ne.s32.totalorder %s56, %s57
      %p69 = scmp.eq.s32.totalorder %s26, 1
      %p70 = por %p68, %p69
      %p72 = scmp.ne.s32.totalorder %s57, %s71
      %p73 = scmp.eq.s32.totalorder %s26, 0
      %p74 = por %p72, %p73
      %s76 = sadd.s32 %s75, 1
      %p79 = scmp.eq.s32.totalorder %s20, 1
      %p80 = scmp.ne.s32.totalorder %s75, %s77
      %p81 = scmp.eq.s32.totalorder %s20, 0
      %p82 = por %p80, %p81
      %p83 = scmp.ne.s32.totalorder %s75, %s77
      %p84 = scmp.eq.s32.totalorder %s25, 1
      %p85 = por %p83, %p84
      %p86 = scmp.ne.s32.totalorder %s77, %s78
      %p87 = scmp.eq.s32.totalorder %s25, 0
      %p88 = por %p86, %p87
      %p89 = scmp.ne.s32.totalorder %s77, %s78
      %p90 = scmp.eq.s32.totalorder %s26, 1
      %p91 = por %p89, %p90
      %p93 = scmp.ne.s32.totalorder %s78, %s92
      %p94 = scmp.eq.s32.totalorder %s26, 0
      %p95 = por %p93, %p94
      %s97 = sadd.s32 %s96, 1
      %p100 = scmp.eq.s32.totalorder %s20, 1
      %p101 = scmp.ne.s32.totalorder %s96, %s98
      %p102 = scmp.eq.s32.totalorder %s20, 0
      %p103 = por %p101, %p102
      %p104 = scmp.ne.s32.totalorder %s96, %s98
      %p105 = scmp.eq.s32.totalorder %s25, 1
      %p106 = por %p104, %p105
      %p107 = scmp.ne.s32.totalorder %s98, %s99
      %p108 = scmp.eq.s32.totalorder %s25, 0
      %p109 = por %p107, %p108
      %p110 = scmp.ne.s32.totalorder %s98, %s99
      %p111 = scmp.eq.s32.totalorder %s26, 1
      %p112 = por %p110, %p111
      %p114 = scmp.ne.s32.totalorder %s99, %s113
      %p115 = scmp.eq.s32.totalorder %s26, 0
      %p116 = por %p114, %p115
      %s118 = sadd.s32 %s117, 1
      %p121 = scmp.eq.s32.totalorder %s20, 1
      %p122 = scmp.ne.s32.totalorder %s117, %s119
      %p123 = scmp.eq.s32.totalorder %s20, 0
      %p124 = por %p122, %p123
      %p125 = scmp.ne.s32.totalorder %s117, %s119
      %p126 = scmp.eq.s32.totalorder %s25, 1
      %p127 = por %p125, %p126
      %p128 = scmp.ne.s32.totalorder %s119, %s120
      %p129 = scmp.eq.s32.totalorder %s25, 0
      %p130 = por %p128, %p129
      %p131 = scmp.ne.s32.totalorder %s119, %s120
      %p132 = scmp.eq.s32.totalorder %s26, 1
      %p133 = por %p131, %p132
      %p135 = scmp.ne.s32.totalorder %s120, %s134
      %p136 = scmp.eq.s32.totalorder %s26, 0
      %p137 = por %p135, %p136
      %s139 = sadd.s32 %s138, 1
      %p142 = scmp.eq.s32.totalorder %s20, 1
      %p143 = scmp.ne.s32.totalorder %s138, %s140
      %p144 = scmp.eq.s32.totalorder %s20, 0
      %p145 = por %p143, %p144
      %p146 = scmp.ne.s32.totalorder %s138, %s140
      %p147 = scmp.eq.s32.totalorder %s25, 1
      %p148 = por %p146, %p147
      %p149 = scmp.ne.s32.totalorder %s140, %s141
      %p150 = scmp.eq.s32.totalorder %s25, 0
      %p151 = por %p149, %p150
      %p152 = scmp.ne.s32.totalorder %s140, %s141
      %p153 = scmp.eq.s32.totalorder %s26, 1
      %p154 = por %p152, %p153
      %p156 = scmp.ne.s32.totalorder %s141, %s155
      %p157 = scmp.eq.s32.totalorder %s26, 0
      %p158 = por %p156, %p157
      %s160 = sadd.s32 %s159, 1
      %p163 = scmp.eq.s32.totalorder %s20, 1
      %p164 = scmp.ne.s32.totalorder %s159, %s161
      %p165 = scmp.eq.s32.totalorder %s20, 0
      %p166 = por %p164, %p165
      %p167 = scmp.ne.s32.totalorder %s159, %s161
      %p168 = scmp.eq.s32.totalorder %s25, 1
      %p169 = por %p167, %p168
      %p170 = scmp.ne.s32.totalorder %s161, %s162
      %p171 = scmp.eq.s32.totalorder %s25, 0
      %p172 = por %p170, %p171
      %p173 = scmp.ne.s32.totalorder %s161, %s162
      %p174 = scmp.eq.s32.totalorder %s26, 1
      %p175 = por %p173, %p174
      %p177 = scmp.ne.s32.totalorder %s162, %s176
      %p178 = scmp.eq.s32.totalorder %s26, 0
      %p179 = por %p177, %p178
      %s181 = sadd.s32 %s180, 1
      %p184 = scmp.eq.s32.totalorder %s20, 1
      %p185 = scmp.ne.s32.totalorder %s180, %s182
      %p186 = scmp.eq.s32.totalorder %s20, 0
      %p187 = por %p185, %p186
      %p188 = scmp.ne.s32.totalorder %s180, %s182
      %p189 = scmp.eq.s32.totalorder %s25, 1
      %p190 = por %p188, %p189
      %p191 = scmp.ne.s32.totalorder %s182, %s183
      %p192 = scmp.eq.s32.totalorder %s25, 0
      %p193 = por %p191, %p192
      %p194 = scmp.ne.s32.totalorder %s182, %s183
      %p195 = scmp.eq.s32.totalorder %s26, 1
      %p196 = por %p194, %p195
      %p198 = scmp.ne.s32.totalorder %s183, %s197
      %p199 = scmp.eq.s32.totalorder %s26, 0
      %p200 = por %p198, %p199
      %s202 = sadd.s32 %s201, 1
      %p205 = scmp.eq.s32.totalorder %s20, 1
      %p206 = scmp.ne.s32.totalorder %s201, %s203
      %p207 = scmp.eq.s32.totalorder %s20, 0
      %p208 = por %p206, %p207
      %p209 = scmp.ne.s32.totalorder %s201, %s203
      %p210 = scmp.eq.s32.totalorder %s25, 1
      %p211 = por %p209, %p210
      %p212 = scmp.ne.s32.totalorder %s203, %s204
      %p213 = scmp.eq.s32.totalorder %s25, 0
      %p214 = por %p212, %p213
      %p215 = scmp.ne.s32.totalorder %s203, %s204
      %p216 = scmp.eq.s32.totalorder %s26, 1
      %p217 = por %p215, %p216
      %p219 = scmp.ne.s32.totalorder %s204, %s218
      %p220 = scmp.eq.s32.totalorder %s26, 0
      %p221 = por %p219, %p220
      %s223 = sadd.s32 %s222, 1
      %p226 = scmp.eq.s32.totalorder %s20, 1
      %p227 = scmp.ne.s32.totalorder %s222, %s224
      %p228 = scmp.eq.s32.totalorder %s20, 0
      %p229 = por %p227, %p228
      %p230 = scmp.ne.s32.totalorder %s222, %s224
      %p231 = scmp.eq.s32.totalorder %s25, 1
      %p232 = por %p230, %p231
      %p233 = scmp.ne.s32.totalorder %s224, %s225
      %p234 = scmp.eq.s32.totalorder %s25, 0
      %p235 = por %p233, %p234
      %p236 = scmp.ne.s32.totalorder %s224, %s225
      %p237 = scmp.eq.s32.totalorder %s26, 1
      %p238 = por %p236, %p237
      %p240 = scmp.ne.s32.totalorder %s225, %s239
      %p241 = scmp.eq.s32.totalorder %s26, 0
      %p242 = por %p240, %p241
      %s244 = sadd.s32 %s243, 1
      %p247 = scmp.eq.s32.totalorder %s20, 1
      %p248 = scmp.ne.s32.totalorder %s243, %s245
      %p249 = scmp.eq.s32.totalorder %s20, 0
      %p250 = por %p248, %p249
      %p251 = scmp.ne.s32.totalorder %s243, %s245
      %p252 = scmp.eq.s32.totalorder %s25, 1
      %p253 = por %p251, %p252
      %p254 = scmp.ne.s32.totalorder %s245, %s246
      %p255 = scmp.eq.s32.totalorder %s25, 0
      %p256 = por %p254, %p255
      %p257 = scmp.ne.s32.totalorder %s245, %s246
      %p258 = scmp.eq.s32.totalorder %s26, 1
      %p259 = por %p257, %p258
      %p261 = scmp.ne.s32.totalorder %s246, %s260
      %p262 = scmp.eq.s32.totalorder %s26, 0
      %p263 = por %p261, %p262
      %s264 = ssub.s32 %s20, %s27
      %p265 = scmp.eq.s32.totalorder %s264, 0
      %s267 = sadd.s32 %s266, 1
      %s268 = scalar_select %p265, %s266, %s267
      %p271 = pneg %p265
      %p272 = scmp.eq.s32.totalorder %s20, 1
      %p273 = por %p271, %p272
      %p274 = scmp.ne.s32.totalorder %s266, %s269
      %p275 = scmp.eq.s32.totalorder %s20, 0
      %p276 = por %p274, %p275
      %p277 = scmp.ne.s32.totalorder %s266, %s269
      %p278 = scmp.eq.s32.totalorder %s25, 1
      %p279 = por %p277, %p278
      %p280 = scmp.ne.s32.totalorder %s269, %s270
      %p281 = scmp.eq.s32.totalorder %s25, 0
      %p282 = por %p280, %p281
      %p283 = scmp.ne.s32.totalorder %s269, %s270
      %p284 = scmp.eq.s32.totalorder %s26, 1
      %p285 = por %p283, %p284
      %p287 = scmp.ne.s32.totalorder %s270, %s286
      %p288 = scmp.eq.s32.totalorder %s26, 0
      %p289 = por %p287, %p288
      %p290 = scmp.le.s32.totalorder 1, %s20
      %p291 = scmp.lt.s32.totalorder %s20, 3
      %p292 = pnand %p290, %p291
      %p293 = pneg %p292
      // Predicated region
      $region9: #{forward.1} parent=5 // pred_check
        _
      $region10: #{forward.1} parent=5 // pred_check_branch
        %295 = sbr.rel (%p292) target = $region12
      $region11: #{forward.1} parent=5 // pred_region
        %s296 = ssub.s32 %s20, 1
        // Predicated region
        $region13: #{forward.1} parent=11 // pred_check
          %p297 = pneg %p67
        $region14: #{forward.1} parent=11 // pred_check_branch
          %299 = sbr.rel (%p297) target = $region16
        $region15: #{forward.1} parent=11 // pred_region
          _
        $region16: #{forward.1} parent=11 // pred_fallthru
          _
        // Predicated region
        $region17: #{forward.1} parent=11 // pred_check
          %p300 = pneg %p88
        $region18: #{forward.1} parent=11 // pred_check_branch
          %302 = sbr.rel (%p300) target = $region20
        $region19: #{forward.1} parent=11 // pred_region
          _
        $region20: #{forward.1} parent=11 // pred_fallthru
          _
        // Predicated region
        $region21: #{forward.1} parent=11 // pred_check
          %p303 = pneg %p109
        $region22: #{forward.1} parent=11 // pred_check_branch
          %305 = sbr.rel (%p303) target = $region24
        $region23: #{forward.1} parent=11 // pred_region
          _
        $region24: #{forward.1} parent=11 // pred_fallthru
          _
        // Predicated region
        $region25: #{forward.1} parent=11 // pred_check
          %p306 = pneg %p130
        $region26: #{forward.1} parent=11 // pred_check_branch
          %308 = sbr.rel (%p306) target = $region28
        $region27: #{forward.1} parent=11 // pred_region
          _
        $region28: #{forward.1} parent=11 // pred_fallthru
          _
        // Predicated region
        $region29: #{forward.1} parent=11 // pred_check
          %p309 = pneg %p151
        $region30: #{forward.1} parent=11 // pred_check_branch
          %311 = sbr.rel (%p309) target = $region32
        $region31: #{forward.1} parent=11 // pred_region
          _
        $region32: #{forward.1} parent=11 // pred_fallthru
          _
        // Predicated region
        $region33: #{forward.1} parent=11 // pred_check
          %p312 = pneg %p172
        $region34: #{forward.1} parent=11 // pred_check_branch
          %314 = sbr.rel (%p312) target = $region36
        $region35: #{forward.1} parent=11 // pred_region
          _
        $region36: #{forward.1} parent=11 // pred_fallthru
          _
        // Predicated region
        $region37: #{forward.1} parent=11 // pred_check
          %p315 = pneg %p193
        $region38: #{forward.1} parent=11 // pred_check_branch
          %317 = sbr.rel (%p315) target = $region40
        $region39: #{forward.1} parent=11 // pred_region
          _
        $region40: #{forward.1} parent=11 // pred_fallthru
          _
        // Predicated region
        $region41: #{forward.1} parent=11 // pred_check
          %p318 = pneg %p214
        $region42: #{forward.1} parent=11 // pred_check_branch
          %320 = sbr.rel (%p318) target = $region44
        $region43: #{forward.1} parent=11 // pred_region
          _
        $region44: #{forward.1} parent=11 // pred_fallthru
          _
        // Predicated region
        $region45: #{forward.1} parent=11 // pred_check
          %p321 = pneg %p235
        $region46: #{forward.1} parent=11 // pred_check_branch
          %323 = sbr.rel (%p321) target = $region48
        $region47: #{forward.1} parent=11 // pred_region
          _
        $region48: #{forward.1} parent=11 // pred_fallthru
          _
        // Predicated region
        $region49: #{forward.1} parent=11 // pred_check
          %p324 = pneg %p256
        $region50: #{forward.1} parent=11 // pred_check_branch
          %326 = sbr.rel (%p324) target = $region52
        $region51: #{forward.1} parent=11 // pred_region
          _
        $region52: #{forward.1} parent=11 // pred_fallthru
          _
      $region12: #{forward.1} parent=5 // pred_fallthru
        _
      %p327 = scmp.lt.s32.totalorder %s20, 2
      // Predicated region
      $region53: #{forward.1} parent=5 // pred_check
        %p328 = pneg %p327
      $region54: #{forward.1} parent=5 // pred_check_branch
        %330 = sbr.rel (%p328) target = $region56
      $region55: #{forward.1} parent=5 // pred_region
        // Predicated region
        $region57: #{forward.1} parent=55 // pred_check
          %p331 = pneg %p40
        $region58: #{forward.1} parent=55 // pred_check_branch
          %333 = sbr.rel (%p331) target = $region60
        $region59: #{forward.1} parent=55 // pred_region
          %p334 = scmp.lt.s32.totalorder %s20, 1
          %s335 = scalar_select %p334, %s20, 1
          %s336 = smul.addr %s335, 32
          %s337 = smul.addr %s336, 8
          %s338 = scalar_lea.vmem %s0, %s337
        $region60: #{forward.1} parent=55 // pred_fallthru
          _
      $region56: #{forward.1} parent=5 // pred_fallthru
        _
      %p339 = scmp.le.s32.totalorder 1, %s20
      %p340 = scmp.lt.s32.totalorder %s20, 3
      %p341 = pnand %p339, %p340
      %p342 = pneg %p341
      // Predicated region
      $region61: #{forward.1} parent=5 // pred_check
        _
      $region62: #{forward.1} parent=5 // pred_check_branch
        %344 = sbr.rel (%p341) target = $region64
      $region63: #{forward.1} parent=5 // pred_region
        %s345 = ssub.s32 %s20, 1
        %p346 = scmp.lt.s32.totalorder %s25, 1
        %s347 = scalar_select %p346, %s25, 1
        %s348 = smul.addr %s347, 32
        %s349 = smul.addr %s348, 8
        %s350 = scalar_lea.vmem %s0, %s349
        %p351 = pneg %p46
        %p352 = pneg %p43
        %p353 = pneg %p67
        %p354 = pneg %p64
        %p355 = pneg %p88
        %p356 = pneg %p85
        %p357 = pneg %p109
        %p358 = pneg %p106
        %p359 = pneg %p130
        %p360 = pneg %p127
        %p361 = pneg %p151
        %p362 = pneg %p148
        %p363 = pneg %p172
        %p364 = pneg %p169
        %p365 = pneg %p193
        %p366 = pneg %p190
        %p367 = pneg %p214
        %p368 = pneg %p211
        %p369 = pneg %p235
        %p370 = pneg %p232
        %p371 = pneg %p256
        %p372 = pneg %p253
        %p373 = pneg %p282
        %p374 = pneg %p279
        %s375 = sand.u32 %s269, 1
        %s376 = scalar_lea.sflag [#allocation9], %s375
        %s377 = sand.u32 %s269, 1
        %s378 = scalar_lea.vmem [#allocation8], %s377
        %p379 = scmp.lt.s32.totalorder %s25, 1
        %s380 = scalar_select %p379, %s25, 1
        %s381 = smul.addr %s380, 32
        %s382 = smul.addr %s381, 8
        %s383 = scalar_lea.vmem %s0, %s382
        %v384 = vld [vmem:[%s383] sm:$0xff]
        %v385 = vld [vmem:[%s383 + $0x8] sm:$0x3f]
        %vm386 = vcmask 7168
        %387 = vst.msk [vmem:[#allocation2] sm:$0xff] %vm386, %v384
        %vm388 = vcmask 5120
        %389 = vst.msk [vmem:[#allocation2 + $0x10] sm:$0x3f] %vm388, %v385
        %v390 = vld [vmem:[%s383 + $0x1] sm:$0xff]
        %v391 = vld [vmem:[%s383 + $0x9] sm:$0x3f]
        %394 = vrot.lane.b32.xlu0 %v390, 1
        %v395 = vpop.permute.xlu0 %394
        %396 = vrot.lane.b32.xlu0 %v391, 1
        %v397 = vpop.permute.xlu0 %396
        %vm400 = vcmask 15368
        %401 = vst.msk [vmem:[#allocation2] sm:$0xff] %vm400, %v395
        %vm402 = vcmask 13320
        %403 = vst.msk [vmem:[#allocation2 + $0x10] sm:$0x3f] %vm402, %v397
        %v404 = vld [vmem:[%s383 + $0x2] sm:$0xff]
        %v405 = vld [vmem:[%s383 + $0xa] sm:$0x3f]
        %408 = vrot.lane.b32.xlu0 %v404, 2
        %v409 = vpop.permute.xlu0 %408
        %410 = vrot.lane.b32.xlu0 %v405, 2
        %v411 = vpop.permute.xlu0 %410
        %vm414 = vcmask 23568
        %415 = vst.msk [vmem:[#allocation2] sm:$0xff] %vm414, %v409
        %vm416 = vcmask 21520
        %417 = vst.msk [vmem:[#allocation2 + $0x10] sm:$0x3f] %vm416, %v411
        %v418 = vld [vmem:[%s383 + $0x10] sm:$0xff]
        %v419 = vld [vmem:[%s383 + $0x18] sm:$0x3f]
        %422 = vrot.lane.b32.xlu0 %v418, 3
        %v423 = vpop.permute.xlu0 %422
        %424 = vrot.lane.b32.xlu0 %v419, 3
        %v425 = vpop.permute.xlu0 %424
        %vm428 = vcmask 31768
        %429 = vst.msk [vmem:[#allocation2] sm:$0xff] %vm428, %v423
        %vm430 = vcmask 29720
        %431 = vst.msk [vmem:[#allocation2 + $0x10] sm:$0x3f] %vm430, %v425
        %v432 = vld [vmem:[%s383 + $0x11] sm:$0xff]
        %v433 = vld [vmem:[%s383 + $0x19] sm:$0x3f]
        %436 = vrot.lane.b32.xlu0 %v432, 4
        %v437 = vpop.permute.xlu0 %436
        %438 = vrot.lane.b32.xlu0 %v433, 4
        %v439 = vpop.permute.xlu0 %438
        %vm442 = vcmask 39968
        %443 = vst.msk [vmem:[#allocation2] sm:$0xff] %vm442, %v437
        %vm444 = vcmask 37920
        %445 = vst.msk [vmem:[#allocation2 + $0x10] sm:$0x3f] %vm444, %v439
        %v446 = vld [vmem:[%s383 + $0x12] sm:$0xff]
        %v447 = vld [vmem:[%s383 + $0x1a] sm:$0x3f]
        %450 = vrot.lane.b32.xlu0 %v446, 5
        %v451 = vpop.permute.xlu0 %450
        %452 = vrot.lane.b32.xlu0 %v447, 5
        %v453 = vpop.permute.xlu0 %452
        %vm456 = vcmask 48168
        %457 = vst.msk [vmem:[#allocation2] sm:$0xff] %vm456, %v451
        %vm458 = vcmask 46120
        %459 = vst.msk [vmem:[#allocation2 + $0x10] sm:$0x3f] %vm458, %v453
        %v460 = vld [vmem:[%s383 + $0x20] sm:$0xff]
        %v461 = vld [vmem:[%s383 + $0x28] sm:$0x3f]
        %464 = vrot.lane.b32.xlu0 %v460, 6
        %v465 = vpop.permute.xlu0 %464
        %466 = vrot.lane.b32.xlu0 %v461, 6
        %v467 = vpop.permute.xlu0 %466
        %vm470 = vcmask 56368
        %471 = vst.msk [vmem:[#allocation2] sm:$0xff] %vm470, %v465
        %vm472 = vcmask 54320
        %473 = vst.msk [vmem:[#allocation2 + $0x10] sm:$0x3f] %vm472, %v467
        %v474 = vld [vmem:[%s383 + $0x21] sm:$0xff]
        %v475 = vld [vmem:[%s383 + $0x29] sm:$0x3f]
        %478 = vrot.lane.b32.xlu0 %v474, 7
        %v479 = vpop.permute.xlu0 %478
        %480 = vrot.lane.b32.xlu0 %v475, 7
        %v481 = vpop.permute.xlu0 %480
        %vm484 = vcmask 64568
        %485 = vst.msk [vmem:[#allocation2] sm:$0xff] %vm484, %v479
        %vm486 = vcmask 62520
        %487 = vst.msk [vmem:[#allocation2 + $0x10] sm:$0x3f] %vm486, %v481
        %v488 = vld [vmem:[%s383 + $0x22] sm:$0xff]
        %v489 = vld [vmem:[%s383 + $0x2a] sm:$0x3f]
        %492 = vrot.lane.b32.xlu0 %v488, 8
        %v493 = vpop.permute.xlu0 %492
        %494 = vrot.lane.b32.xlu0 %v489, 8
        %v495 = vpop.permute.xlu0 %494
        %vm498 = vcmask 72768
        %499 = vst.msk [vmem:[#allocation2] sm:$0xff] %vm498, %v493
        %vm500 = vcmask 70720
        %501 = vst.msk [vmem:[#allocation2 + $0x10] sm:$0x3f] %vm500, %v495
        %v502 = vld [vmem:[%s383 + $0x10] sm:$0xff]
        %v503 = vld [vmem:[%s383 + $0x18] sm:$0x3f]
        %vm506 = vcmask 1045504
        %v507 = vrot.slane %v502, 2
        %v508 = vrot.slane %v503, 2
        %v509 = vsel %vm506, %v507, %v508
        %vm513 = vcmask 7174
        %514 = vst.msk [vmem:[#allocation2 + $0x10] sm:$0xc0] %vm513, %v507
        %515 = vst.msk [vmem:[#allocation2 + $0x20] sm:$0xff] %vm386, %v509
        %vm516 = vcmask 3072
        %517 = vst.msk [vmem:[#allocation2 + $0x30] sm:$0xf] %vm516, %v508
        %v518 = vld [vmem:[%s383 + $0x11] sm:$0xff]
        %v519 = vld [vmem:[%s383 + $0x19] sm:$0x3f]
        %v522 = vrot.slane %v518, 2
        %v523 = vrot.slane %v519, 2
        %v524 = vsel %vm506, %v522, %v523
        %525 = vrot.lane.b32.xlu0 %v522, 1
        %v526 = vpop.permute.xlu0 %525
        %527 = vrot.lane.b32.xlu0 %v524, 1
        %v528 = vpop.permute.xlu0 %527
        %529 = vrot.lane.b32.xlu0 %v523, 1
        %v530 = vpop.permute.xlu0 %529
        %vm534 = vcmask 15374
        %535 = vst.msk [vmem:[#allocation2 + $0x10] sm:$0xc0] %vm534, %v526
        %536 = vst.msk [vmem:[#allocation2 + $0x20] sm:$0xff] %vm400, %v528
        %vm537 = vcmask 11272
        %538 = vst.msk [vmem:[#allocation2 + $0x30] sm:$0xf] %vm537, %v530
        %v539 = vld [vmem:[%s383 + $0x12] sm:$0xff]
        %v540 = vld [vmem:[%s383 + $0x1a] sm:$0x3f]
        %v543 = vrot.slane %v539, 2
        %v544 = vrot.slane %v540, 2
        %v545 = vsel %vm506, %v543, %v544
        %546 = vrot.lane.b32.xlu0 %v543, 2
        %v547 = vpop.permute.xlu0 %546
        %548 = vrot.lane.b32.xlu0 %v545, 2
        %v549 = vpop.permute.xlu0 %548
        %550 = vrot.lane.b32.xlu0 %v544, 2
        %v551 = vpop.permute.xlu0 %550
        %vm555 = vcmask 23574
        %556 = vst.msk [vmem:[#allocation2 + $0x10] sm:$0xc0] %vm555, %v547
        %557 = vst.msk [vmem:[#allocation2 + $0x20] sm:$0xff] %vm414, %v549
        %vm558 = vcmask 19472
        %559 = vst.msk [vmem:[#allocation2 + $0x30] sm:$0xf] %vm558, %v551
        %v560 = vld [vmem:[%s383 + $0x20] sm:$0xff]
        %v561 = vld [vmem:[%s383 + $0x28] sm:$0x3f]
        %v564 = vrot.slane %v560, 2
        %v565 = vrot.slane %v561, 2
        %v566 = vsel %vm506, %v564, %v565
        %567 = vrot.lane.b32.xlu0 %v564, 3
        %v568 = vpop.permute.xlu0 %567
        %569 = vrot.lane.b32.xlu0 %v566, 3
        %v570 = vpop.permute.xlu0 %569
        %571 = vrot.lane.b32.xlu0 %v565, 3
        %v572 = vpop.permute.xlu0 %571
        %vm576 = vcmask 31774
        %577 = vst.msk [vmem:[#allocation2 + $0x10] sm:$0xc0] %vm576, %v568
        %578 = vst.msk [vmem:[#allocation2 + $0x20] sm:$0xff] %vm428, %v570
        %vm579 = vcmask 27672
        %580 = vst.msk [vmem:[#allocation2 + $0x30] sm:$0xf] %vm579, %v572
        %v581 = vld [vmem:[%s383 + $0x21] sm:$0xff]
        %v582 = vld [vmem:[%s383 + $0x29] sm:$0x3f]
        %v585 = vrot.slane %v581, 2
        %v586 = vrot.slane %v582, 2
        %v587 = vsel %vm506, %v585, %v586
        %588 = vrot.lane.b32.xlu0 %v585, 4
        %v589 = vpop.permute.xlu0 %588
        %590 = vrot.lane.b32.xlu0 %v587, 4
        %v591 = vpop.permute.xlu0 %590
        %592 = vrot.lane.b32.xlu0 %v586, 4
        %v593 = vpop.permute.xlu0 %592
        %vm597 = vcmask 39974
        %598 = vst.msk [vmem:[#allocation2 + $0x10] sm:$0xc0] %vm597, %v589
        %599 = vst.msk [vmem:[#allocation2 + $0x20] sm:$0xff] %vm442, %v591
        %vm600 = vcmask 35872
        %601 = vst.msk [vmem:[#allocation2 + $0x30] sm:$0xf] %vm600, %v593
        %v602 = vld [vmem:[%s383 + $0x22] sm:$0xff]
        %v603 = vld [vmem:[%s383 + $0x2a] sm:$0x3f]
        %v606 = vrot.slane %v602, 2
        %v607 = vrot.slane %v603, 2
        %v608 = vsel %vm506, %v606, %v607
        %609 = vrot.lane.b32.xlu0 %v606, 5
        %v610 = vpop.permute.xlu0 %609
        %611 = vrot.lane.b32.xlu0 %v608, 5
        %v612 = vpop.permute.xlu0 %611
        %613 = vrot.lane.b32.xlu0 %v607, 5
        %v614 = vpop.permute.xlu0 %613
        %vm618 = vcmask 48174
        %619 = vst.msk [vmem:[#allocation2 + $0x10] sm:$0xc0] %vm618, %v610
        %620 = vst.msk [vmem:[#allocation2 + $0x20] sm:$0xff] %vm456, %v612
        %vm621 = vcmask 44072
        %622 = vst.msk [vmem:[#allocation2 + $0x30] sm:$0xf] %vm621, %v614
        %v623 = vld [vmem:[%s383 + $0x30] sm:$0xff]
        %v624 = vld [vmem:[%s383 + $0x38] sm:$0x3f]
        %v627 = vrot.slane %v623, 2
        %v628 = vrot.slane %v624, 2
        %v629 = vsel %vm506, %v627, %v628
        %630 = vrot.lane.b32.xlu0 %v627, 6
        %v631 = vpop.permute.xlu0 %630
        %632 = vrot.lane.b32.xlu0 %v629, 6
        %v633 = vpop.permute.xlu0 %632
        %634 = vrot.lane.b32.xlu0 %v628, 6
        %v635 = vpop.permute.xlu0 %634
        %vm639 = vcmask 56374
        %640 = vst.msk [vmem:[#allocation2 + $0x10] sm:$0xc0] %vm639, %v631
        %641 = vst.msk [vmem:[#allocation2 + $0x20] sm:$0xff] %vm470, %v633
        %vm642 = vcmask 52272
        %643 = vst.msk [vmem:[#allocation2 + $0x30] sm:$0xf] %vm642, %v635
        %v644 = vld [vmem:[%s383 + $0x31] sm:$0xff]
        %v645 = vld [vmem:[%s383 + $0x39] sm:$0x3f]
        %v648 = vrot.slane %v644, 2
        %v649 = vrot.slane %v645, 2
        %v650 = vsel %vm506, %v648, %v649
        %651 = vrot.lane.b32.xlu0 %v648, 7
        %v652 = vpop.permute.xlu0 %651
        %653 = vrot.lane.b32.xlu0 %v650, 7
        %v654 = vpop.permute.xlu0 %653
        %655 = vrot.lane.b32.xlu0 %v649, 7
        %v656 = vpop.permute.xlu0 %655
        %vm660 = vcmask 64574
        %661 = vst.msk [vmem:[#allocation2 + $0x10] sm:$0xc0] %vm660, %v652
        %662 = vst.msk [vmem:[#allocation2 + $0x20] sm:$0xff] %vm484, %v654
        %vm663 = vcmask 60472
        %664 = vst.msk [vmem:[#allocation2 + $0x30] sm:$0xf] %vm663, %v656
        %v665 = vld [vmem:[%s383 + $0x32] sm:$0xff]
        %v666 = vld [vmem:[%s383 + $0x3a] sm:$0x3f]
        %v669 = vrot.slane %v665, 2
        %v670 = vrot.slane %v666, 2
        %v671 = vsel %vm506, %v669, %v670
        %672 = vrot.lane.b32.xlu0 %v669, 8
        %v673 = vpop.permute.xlu0 %672
        %674 = vrot.lane.b32.xlu0 %v671, 8
        %v675 = vpop.permute.xlu0 %674
        %676 = vrot.lane.b32.xlu0 %v670, 8
        %v677 = vpop.permute.xlu0 %676
        %vm681 = vcmask 72774
        %682 = vst.msk [vmem:[#allocation2 + $0x10] sm:$0xc0] %vm681, %v673
        %683 = vst.msk [vmem:[#allocation2 + $0x20] sm:$0xff] %vm498, %v675
        %vm684 = vcmask 68672
        %685 = vst.msk [vmem:[#allocation2 + $0x30] sm:$0xf] %vm684, %v677
        %v686 = vld [vmem:[%s383 + $0x20] sm:$0xff]
        %v687 = vld [vmem:[%s383 + $0x28] sm:$0x3f]
        %vm690 = vcmask 1043456
        %v691 = vrot.slane %v686, 4
        %v692 = vrot.slane %v687, 4
        %v693 = vsel %vm690, %v691, %v692
        %vm697 = vcmask 7172
        %698 = vst.msk [vmem:[#allocation2 + $0x30] sm:$0xf0] %vm697, %v691
        %699 = vst.msk [vmem:[#allocation2 + $0x40] sm:$0xff] %vm386, %v693
        %vm700 = vcmask 1024
        %701 = vst.msk [vmem:[#allocation2 + $0x50] sm:$0x3] %vm700, %v692
        %v702 = vld [vmem:[%s383 + $0x21] sm:$0xff]
        %v703 = vld [vmem:[%s383 + $0x29] sm:$0x3f]
        %v706 = vrot.slane %v702, 4
        %v707 = vrot.slane %v703, 4
        %v708 = vsel %vm690, %v706, %v707
        %709 = vrot.lane.b32.xlu0 %v706, 1
        %v710 = vpop.permute.xlu0 %709
        %711 = vrot.lane.b32.xlu0 %v708, 1
        %v712 = vpop.permute.xlu0 %711
        %713 = vrot.lane.b32.xlu0 %v707, 1
        %v714 = vpop.permute.xlu0 %713
        %vm718 = vcmask 15372
        %719 = vst.msk [vmem:[#allocation2 + $0x30] sm:$0xf0] %vm718, %v710
        %720 = vst.msk [vmem:[#allocation2 + $0x40] sm:$0xff] %vm400, %v712
        %vm721 = vcmask 9224
        %722 = vst.msk [vmem:[#allocation2 + $0x50] sm:$0x3] %vm721, %v714
        %v723 = vld [vmem:[%s383 + $0x22] sm:$0xff]
        %v724 = vld [vmem:[%s383 + $0x2a] sm:$0x3f]
        %v727 = vrot.slane %v723, 4
        %v728 = vrot.slane %v724, 4
        %v729 = vsel %vm690, %v727, %v728
        %730 = vrot.lane.b32.xlu0 %v727, 2
        %v731 = vpop.permute.xlu0 %730
        %732 = vrot.lane.b32.xlu0 %v729, 2
        %v733 = vpop.permute.xlu0 %732
        %734 = vrot.lane.b32.xlu0 %v728, 2
        %v735 = vpop.permute.xlu0 %734
        %vm739 = vcmask 23572
        %740 = vst.msk [vmem:[#allocation2 + $0x30] sm:$0xf0] %vm739, %v731
        %741 = vst.msk [vmem:[#allocation2 + $0x40] sm:$0xff] %vm414, %v733
        %vm742 = vcmask 17424
        %743 = vst.msk [vmem:[#allocation2 + $0x50] sm:$0x3] %vm742, %v735
        %v744 = vld [vmem:[%s383 + $0x30] sm:$0xff]
        %v745 = vld [vmem:[%s383 + $0x38] sm:$0x3f]
        %v748 = vrot.slane %v744, 4
        %v749 = vrot.slane %v745, 4
        %v750 = vsel %vm690, %v748, %v749
        %751 = vrot.lane.b32.xlu0 %v748, 3
        %v752 = vpop.permute.xlu0 %751
        %753 = vrot.lane.b32.xlu0 %v750, 3
        %v754 = vpop.permute.xlu0 %753
        %755 = vrot.lane.b32.xlu0 %v749, 3
        %v756 = vpop.permute.xlu0 %755
        %vm760 = vcmask 31772
        %761 = vst.msk [vmem:[#allocation2 + $0x30] sm:$0xf0] %vm760, %v752
        %762 = vst.msk [vmem:[#allocation2 + $0x40] sm:$0xff] %vm428, %v754
        %vm763 = vcmask 25624
        %764 = vst.msk [vmem:[#allocation2 + $0x50] sm:$0x3] %vm763, %v756
        %v765 = vld [vmem:[%s383 + $0x31] sm:$0xff]
        %v766 = vld [vmem:[%s383 + $0x39] sm:$0x3f]
        %v769 = vrot.slane %v765, 4
        %v770 = vrot.slane %v766, 4
        %v771 = vsel %vm690, %v769, %v770
        %772 = vrot.lane.b32.xlu0 %v769, 4
        %v773 = vpop.permute.xlu0 %772
        %774 = vrot.lane.b32.xlu0 %v771, 4
        %v775 = vpop.permute.xlu0 %774
        %776 = vrot.lane.b32.xlu0 %v770, 4
        %v777 = vpop.permute.xlu0 %776
        %vm781 = vcmask 39972
        %782 = vst.msk [vmem:[#allocation2 + $0x30] sm:$0xf0] %vm781, %v773
        %783 = vst.msk [vmem:[#allocation2 + $0x40] sm:$0xff] %vm442, %v775
        %vm784 = vcmask 33824
        %785 = vst.msk [vmem:[#allocation2 + $0x50] sm:$0x3] %vm784, %v777
        %v786 = vld [vmem:[%s383 + $0x32] sm:$0xff]
        %v787 = vld [vmem:[%s383 + $0x3a] sm:$0x3f]
        %v790 = vrot.slane %v786, 4
        %v791 = vrot.slane %v787, 4
        %v792 = vsel %vm690, %v790, %v791
        %793 = vrot.lane.b32.xlu0 %v790, 5
        %v794 = vpop.permute.xlu0 %793
        %795 = vrot.lane.b32.xlu0 %v792, 5
        %v796 = vpop.permute.xlu0 %795
        %797 = vrot.lane.b32.xlu0 %v791, 5
        %v798 = vpop.permute.xlu0 %797
        %vm802 = vcmask 48172
        %803 = vst.msk [vmem:[#allocation2 + $0x30] sm:$0xf0] %vm802, %v794
        %804 = vst.msk [vmem:[#allocation2 + $0x40] sm:$0xff] %vm456, %v796
        %vm805 = vcmask 42024
        %806 = vst.msk [vmem:[#allocation2 + $0x50] sm:$0x3] %vm805, %v798
        %v807 = vld [vmem:[%s383 + $0x40] sm:$0xff]
        %v808 = vld [vmem:[%s383 + $0x48] sm:$0x3f]
        %v811 = vrot.slane %v807, 4
        %v812 = vrot.slane %v808, 4
        %v813 = vsel %vm690, %v811, %v812
        %814 = vrot.lane.b32.xlu0 %v811, 6
        %v815 = vpop.permute.xlu0 %814
        %816 = vrot.lane.b32.xlu0 %v813, 6
        %v817 = vpop.permute.xlu0 %816
        %818 = vrot.lane.b32.xlu0 %v812, 6
        %v819 = vpop.permute.xlu0 %818
        %vm823 = vcmask 56372
        %824 = vst.msk [vmem:[#allocation2 + $0x30] sm:$0xf0] %vm823, %v815
        %825 = vst.msk [vmem:[#allocation2 + $0x40] sm:$0xff] %vm470, %v817
        %vm826 = vcmask 50224
        %827 = vst.msk [vmem:[#allocation2 + $0x50] sm:$0x3] %vm826, %v819
        %v828 = vld [vmem:[%s383 + $0x41] sm:$0xff]
        %v829 = vld [vmem:[%s383 + $0x49] sm:$0x3f]
        %v832 = vrot.slane %v828, 4
        %v833 = vrot.slane %v829, 4
        %v834 = vsel %vm690, %v832, %v833
        %835 = vrot.lane.b32.xlu0 %v832, 7
        %v836 = vpop.permute.xlu0 %835
        %837 = vrot.lane.b32.xlu0 %v834, 7
        %v838 = vpop.permute.xlu0 %837
        %839 = vrot.lane.b32.xlu0 %v833, 7
        %v840 = vpop.permute.xlu0 %839
        %vm844 = vcmask 64572
        %845 = vst.msk [vmem:[#allocation2 + $0x30] sm:$0xf0] %vm844, %v836
        %846 = vst.msk [vmem:[#allocation2 + $0x40] sm:$0xff] %vm484, %v838
        %vm847 = vcmask 58424
        %848 = vst.msk [vmem:[#allocation2 + $0x50] sm:$0x3] %vm847, %v840
        %v849 = vld [vmem:[%s383 + $0x42] sm:$0xff]
        %v850 = vld [vmem:[%s383 + $0x4a] sm:$0x3f]
        %v853 = vrot.slane %v849, 4
        %v854 = vrot.slane %v850, 4
        %v855 = vsel %vm690, %v853, %v854
        %856 = vrot.lane.b32.xlu0 %v853, 8
        %v857 = vpop.permute.xlu0 %856
        %858 = vrot.lane.b32.xlu0 %v855, 8
        %v859 = vpop.permute.xlu0 %858
        %860 = vrot.lane.b32.xlu0 %v854, 8
        %v861 = vpop.permute.xlu0 %860
        %vm865 = vcmask 72772
        %866 = vst.msk [vmem:[#allocation2 + $0x30] sm:$0xf0] %vm865, %v857
        %867 = vst.msk [vmem:[#allocation2 + $0x40] sm:$0xff] %vm498, %v859
        %vm868 = vcmask 66624
        %869 = vst.msk [vmem:[#allocation2 + $0x50] sm:$0x3] %vm868, %v861
        %v870 = vld [vmem:[%s383 + $0x30] sm:$0xff]
        %v871 = vld [vmem:[%s383 + $0x38] sm:$0x3f]
        %vm874 = vcmask 1041408
        %v875 = vrot.slane %v870, 6
        %v876 = vrot.slane %v871, 6
        %v877 = vsel %vm874, %v875, %v876
        %vm880 = vcmask 7170
        %881 = vst.msk [vmem:[#allocation2 + $0x50] sm:$0xfc] %vm880, %v875
        %882 = vst.msk [vmem:[#allocation2 + $0x60] sm:$0xff] %vm386, %v877
        %v883 = vld [vmem:[%s383 + $0x31] sm:$0xff]
        %v884 = vld [vmem:[%s383 + $0x39] sm:$0x3f]
        %v887 = vrot.slane %v883, 6
        %v888 = vrot.slane %v884, 6
        %v889 = vsel %vm874, %v887, %v888
        %890 = vrot.lane.b32.xlu0 %v887, 1
        %v891 = vpop.permute.xlu0 %890
        %892 = vrot.lane.b32.xlu0 %v889, 1
        %v893 = vpop.permute.xlu0 %892
        %vm896 = vcmask 15370
        %897 = vst.msk [vmem:[#allocation2 + $0x50] sm:$0xfc] %vm896, %v891
        %898 = vst.msk [vmem:[#allocation2 + $0x60] sm:$0xff] %vm400, %v893
        %v899 = vld [vmem:[%s383 + $0x32] sm:$0xff]
        %v900 = vld [vmem:[%s383 + $0x3a] sm:$0x3f]
        %v903 = vrot.slane %v899, 6
        %v904 = vrot.slane %v900, 6
        %v905 = vsel %vm874, %v903, %v904
        %906 = vrot.lane.b32.xlu0 %v903, 2
        %v907 = vpop.permute.xlu0 %906
        %908 = vrot.lane.b32.xlu0 %v905, 2
        %v909 = vpop.permute.xlu0 %908
        %vm912 = vcmask 23570
        %913 = vst.msk [vmem:[#allocation2 + $0x50] sm:$0xfc] %vm912, %v907
        %914 = vst.msk [vmem:[#allocation2 + $0x60] sm:$0xff] %vm414, %v909
        %v915 = vld [vmem:[%s383 + $0x40] sm:$0xff]
        %v916 = vld [vmem:[%s383 + $0x48] sm:$0x3f]
        %v919 = vrot.slane %v915, 6
        %v920 = vrot.slane %v916, 6
        %v921 = vsel %vm874, %v919, %v920
        %922 = vrot.lane.b32.xlu0 %v919, 3
        %v923 = vpop.permute.xlu0 %922
        %924 = vrot.lane.b32.xlu0 %v921, 3
        %v925 = vpop.permute.xlu0 %924
        %vm928 = vcmask 31770
        %929 = vst.msk [vmem:[#allocation2 + $0x50] sm:$0xfc] %vm928, %v923
        %930 = vst.msk [vmem:[#allocation2 + $0x60] sm:$0xff] %vm428, %v925
        %v931 = vld [vmem:[%s383 + $0x41] sm:$0xff]
        %v932 = vld [vmem:[%s383 + $0x49] sm:$0x3f]
        %v935 = vrot.slane %v931, 6
        %v936 = vrot.slane %v932, 6
        %v937 = vsel %vm874, %v935, %v936
        %938 = vrot.lane.b32.xlu0 %v935, 4
        %v939 = vpop.permute.xlu0 %938
        %940 = vrot.lane.b32.xlu0 %v937, 4
        %v941 = vpop.permute.xlu0 %940
        %vm944 = vcmask 39970
        %945 = vst.msk [vmem:[#allocation2 + $0x50] sm:$0xfc] %vm944, %v939
        %946 = vst.msk [vmem:[#allocation2 + $0x60] sm:$0xff] %vm442, %v941
        %v947 = vld [vmem:[%s383 + $0x42] sm:$0xff]
        %v948 = vld [vmem:[%s383 + $0x4a] sm:$0x3f]
        %v951 = vrot.slane %v947, 6
        %v952 = vrot.slane %v948, 6
        %v953 = vsel %vm874, %v951, %v952
        %954 = vrot.lane.b32.xlu0 %v951, 5
        %v955 = vpop.permute.xlu0 %954
        %956 = vrot.lane.b32.xlu0 %v953, 5
        %v957 = vpop.permute.xlu0 %956
        %vm960 = vcmask 48170
        %961 = vst.msk [vmem:[#allocation2 + $0x50] sm:$0xfc] %vm960, %v955
        %962 = vst.msk [vmem:[#allocation2 + $0x60] sm:$0xff] %vm456, %v957
        %v963 = vld [vmem:[%s383 + $0x50] sm:$0xff]
        %v964 = vld [vmem:[%s383 + $0x58] sm:$0x3f]
        %v967 = vrot.slane %v963, 6
        %v968 = vrot.slane %v964, 6
        %v969 = vsel %vm874, %v967, %v968
        %970 = vrot.lane.b32.xlu0 %v967, 6
        %v971 = vpop.permute.xlu0 %970
        %972 = vrot.lane.b32.xlu0 %v969, 6
        %v973 = vpop.permute.xlu0 %972
        %vm976 = vcmask 56370
        %977 = vst.msk [vmem:[#allocation2 + $0x50] sm:$0xfc] %vm976, %v971
        %978 = vst.msk [vmem:[#allocation2 + $0x60] sm:$0xff] %vm470, %v973
        %v979 = vld [vmem:[%s383 + $0x51] sm:$0xff]
        %v980 = vld [vmem:[%s383 + $0x59] sm:$0x3f]
        %v983 = vrot.slane %v979, 6
        %v984 = vrot.slane %v980, 6
        %v985 = vsel %vm874, %v983, %v984
        %986 = vrot.lane.b32.xlu0 %v983, 7
        %v987 = vpop.permute.xlu0 %986
        %988 = vrot.lane.b32.xlu0 %v985, 7
        %v989 = vpop.permute.xlu0 %988
        %vm992 = vcmask 64570
        %993 = vst.msk [vmem:[#allocation2 + $0x50] sm:$0xfc] %vm992, %v987
        %994 = vst.msk [vmem:[#allocation2 + $0x60] sm:$0xff] %vm484, %v989
        %v995 = vld [vmem:[%s383 + $0x52] sm:$0xff]
        %v996 = vld [vmem:[%s383 + $0x5a] sm:$0x3f]
        %v999 = vrot.slane %v995, 6
        %v1000 = vrot.slane %v996, 6
        %v1001 = vsel %vm874, %v999, %v1000
        %1002 = vrot.lane.b32.xlu0 %v999, 8
        %v1003 = vpop.permute.xlu0 %1002
        %1004 = vrot.lane.b32.xlu0 %v1001, 8
        %v1005 = vpop.permute.xlu0 %1004
        %vm1008 = vcmask 72770
        %1009 = vst.msk [vmem:[#allocation2 + $0x50] sm:$0xfc] %vm1008, %v1003
        %1010 = vst.msk [vmem:[#allocation2 + $0x60] sm:$0xff] %vm498, %v1005
        %v1011 = vld [vmem:[%s383 + $0x40] sm:$0xff]
        %v1012 = vld [vmem:[%s383 + $0x48] sm:$0x3f]
        %1013 = vst.msk [vmem:[#allocation2 + $0x70] sm:$0xff] %vm386, %v1011
        %1014 = vst.msk [vmem:[#allocation2 + $0x80] sm:$0x3f] %vm388, %v1012
        %v1015 = vld [vmem:[%s383 + $0x41] sm:$0xff]
        %v1016 = vld [vmem:[%s383 + $0x49] sm:$0x3f]
        %1019 = vrot.lane.b32.xlu0 %v1015, 1
        %v1020 = vpop.permute.xlu0 %1019
        %1021 = vrot.lane.b32.xlu0 %v1016, 1
        %v1022 = vpop.permute.xlu0 %1021
        %1025 = vst.msk [vmem:[#allocation2 + $0x70] sm:$0xff] %vm400, %v1020
        %1026 = vst.msk [vmem:[#allocation2 + $0x80] sm:$0x3f] %vm402, %v1022
        %v1027 = vld [vmem:[%s383 + $0x42] sm:$0xff]
        %v1028 = vld [vmem:[%s383 + $0x4a] sm:$0x3f]
        %1031 = vrot.lane.b32.xlu0 %v1027, 2
        %v1032 = vpop.permute.xlu0 %1031
        %1033 = vrot.lane.b32.xlu0 %v1028, 2
        %v1034 = vpop.permute.xlu0 %1033
        %1037 = vst.msk [vmem:[#allocation2 + $0x70] sm:$0xff] %vm414, %v1032
        %1038 = vst.msk [vmem:[#allocation2 + $0x80] sm:$0x3f] %vm416, %v1034
        %v1039 = vld [vmem:[%s383 + $0x50] sm:$0xff]
        %v1040 = vld [vmem:[%s383 + $0x58] sm:$0x3f]
        %1043 = vrot.lane.b32.xlu0 %v1039, 3
        %v1044 = vpop.permute.xlu0 %1043
        %1045 = vrot.lane.b32.xlu0 %v1040, 3
        %v1046 = vpop.permute.xlu0 %1045
        %1049 = vst.msk [vmem:[#allocation2 + $0x70] sm:$0xff] %vm428, %v1044
        %1050 = vst.msk [vmem:[#allocation2 + $0x80] sm:$0x3f] %vm430, %v1046
        %v1051 = vld [vmem:[%s383 + $0x51] sm:$0xff]
        %v1052 = vld [vmem:[%s383 + $0x59] sm:$0x3f]
        %1055 = vrot.lane.b32.xlu0 %v1051, 4
        %v1056 = vpop.permute.xlu0 %1055
        %1057 = vrot.lane.b32.xlu0 %v1052, 4
        %v1058 = vpop.permute.xlu0 %1057
        %1061 = vst.msk [vmem:[#allocation2 + $0x70] sm:$0xff] %vm442, %v1056
        %1062 = vst.msk [vmem:[#allocation2 + $0x80] sm:$0x3f] %vm444, %v1058
        %v1063 = vld [vmem:[%s383 + $0x52] sm:$0xff]
        %v1064 = vld [vmem:[%s383 + $0x5a] sm:$0x3f]
        %1067 = vrot.lane.b32.xlu0 %v1063, 5
        %v1068 = vpop.permute.xlu0 %1067
        %1069 = vrot.lane.b32.xlu0 %v1064, 5
        %v1070 = vpop.permute.xlu0 %1069
        %1073 = vst.msk [vmem:[#allocation2 + $0x70] sm:$0xff] %vm456, %v1068
        %1074 = vst.msk [vmem:[#allocation2 + $0x80] sm:$0x3f] %vm458, %v1070
        %v1075 = vld [vmem:[%s383 + $0x60] sm:$0xff]
        %v1076 = vld [vmem:[%s383 + $0x68] sm:$0x3f]
        %1079 = vrot.lane.b32.xlu0 %v1075, 6
        %v1080 = vpop.permute.xlu0 %1079
        %1081 = vrot.lane.b32.xlu0 %v1076, 6
        %v1082 = vpop.permute.xlu0 %1081
        %1085 = vst.msk [vmem:[#allocation2 + $0x70] sm:$0xff] %vm470, %v1080
        %1086 = vst.msk [vmem:[#allocation2 + $0x80] sm:$0x3f] %vm472, %v1082
        %v1087 = vld [vmem:[%s383 + $0x61] sm:$0xff]
        %v1088 = vld [vmem:[%s383 + $0x69] sm:$0x3f]
        %1091 = vrot.lane.b32.xlu0 %v1087, 7
        %v1092 = vpop.permute.xlu0 %1091
        %1093 = vrot.lane.b32.xlu0 %v1088, 7
        %v1094 = vpop.permute.xlu0 %1093
        %1097 = vst.msk [vmem:[#allocation2 + $0x70] sm:$0xff] %vm484, %v1092
        %1098 = vst.msk [vmem:[#allocation2 + $0x80] sm:$0x3f] %vm486, %v1094
        %v1099 = vld [vmem:[%s383 + $0x62] sm:$0xff]
        %v1100 = vld [vmem:[%s383 + $0x6a] sm:$0x3f]
        %1103 = vrot.lane.b32.xlu0 %v1099, 8
        %v1104 = vpop.permute.xlu0 %1103
        %1105 = vrot.lane.b32.xlu0 %v1100, 8
        %v1106 = vpop.permute.xlu0 %1105
        %1109 = vst.msk [vmem:[#allocation2 + $0x70] sm:$0xff] %vm498, %v1104
        %1110 = vst.msk [vmem:[#allocation2 + $0x80] sm:$0x3f] %vm500, %v1106
        %v1111 = vld [vmem:[%s383 + $0x50] sm:$0xff]
        %v1112 = vld [vmem:[%s383 + $0x58] sm:$0x3f]
        %v1115 = vrot.slane %v1111, 2
        %v1116 = vrot.slane %v1112, 2
        %v1117 = vsel %vm506, %v1115, %v1116
        %1121 = vst.msk [vmem:[#allocation2 + $0x80] sm:$0xc0] %vm513, %v1115
        %1122 = vst.msk [vmem:[#allocation2 + $0x90] sm:$0xff] %vm386, %v1117
        %1123 = vst.msk [vmem:[#allocation2 + $0xa0] sm:$0xf] %vm516, %v1116
        %v1124 = vld [vmem:[%s383 + $0x51] sm:$0xff]
        %v1125 = vld [vmem:[%s383 + $0x59] sm:$0x3f]
        %v1128 = vrot.slane %v1124, 2
        %v1129 = vrot.slane %v1125, 2
        %v1130 = vsel %vm506, %v1128, %v1129
        %1131 = vrot.lane.b32.xlu0 %v1128, 1
        %v1132 = vpop.permute.xlu0 %1131
        %1133 = vrot.lane.b32.xlu0 %v1130, 1
        %v1134 = vpop.permute.xlu0 %1133
        %1135 = vrot.lane.b32.xlu0 %v1129, 1
        %v1136 = vpop.permute.xlu0 %1135
        %1140 = vst.msk [vmem:[#allocation2 + $0x80] sm:$0xc0] %vm534, %v1132
        %1141 = vst.msk [vmem:[#allocation2 + $0x90] sm:$0xff] %vm400, %v1134
        %1142 = vst.msk [vmem:[#allocation2 + $0xa0] sm:$0xf] %vm537, %v1136
        %v1143 = vld [vmem:[%s383 + $0x52] sm:$0xff]
        %v1144 = vld [vmem:[%s383 + $0x5a] sm:$0x3f]
        %v1147 = vrot.slane %v1143, 2
        %v1148 = vrot.slane %v1144, 2
        %v1149 = vsel %vm506, %v1147, %v1148
        %1150 = vrot.lane.b32.xlu0 %v1147, 2
        %v1151 = vpop.permute.xlu0 %1150
        %1152 = vrot.lane.b32.xlu0 %v1149, 2
        %v1153 = vpop.permute.xlu0 %1152
        %1154 = vrot.lane.b32.xlu0 %v1148, 2
        %v1155 = vpop.permute.xlu0 %1154
        %1159 = vst.msk [vmem:[#allocation2 + $0x80] sm:$0xc0] %vm555, %v1151
        %1160 = vst.msk [vmem:[#allocation2 + $0x90] sm:$0xff] %vm414, %v1153
        %1161 = vst.msk [vmem:[#allocation2 + $0xa0] sm:$0xf] %vm558, %v1155
        %v1162 = vld [vmem:[%s383 + $0x60] sm:$0xff]
        %v1163 = vld [vmem:[%s383 + $0x68] sm:$0x3f]
        %v1166 = vrot.slane %v1162, 2
        %v1167 = vrot.slane %v1163, 2
        %v1168 = vsel %vm506, %v1166, %v1167
        %1169 = vrot.lane.b32.xlu0 %v1166, 3
        %v1170 = vpop.permute.xlu0 %1169
        %1171 = vrot.lane.b32.xlu0 %v1168, 3
        %v1172 = vpop.permute.xlu0 %1171
        %1173 = vrot.lane.b32.xlu0 %v1167, 3
        %v1174 = vpop.permute.xlu0 %1173
        %1178 = vst.msk [vmem:[#allocation2 + $0x80] sm:$0xc0] %vm576, %v1170
        %1179 = vst.msk [vmem:[#allocation2 + $0x90] sm:$0xff] %vm428, %v1172
        %1180 = vst.msk [vmem:[#allocation2 + $0xa0] sm:$0xf] %vm579, %v1174
        %v1181 = vld [vmem:[%s383 + $0x61] sm:$0xff]
        %v1182 = vld [vmem:[%s383 + $0x69] sm:$0x3f]
        %v1185 = vrot.slane %v1181, 2
        %v1186 = vrot.slane %v1182, 2
        %v1187 = vsel %vm506, %v1185, %v1186
        %1188 = vrot.lane.b32.xlu0 %v1185, 4
        %v1189 = vpop.permute.xlu0 %1188
        %1190 = vrot.lane.b32.xlu0 %v1187, 4
        %v1191 = vpop.permute.xlu0 %1190
        %1192 = vrot.lane.b32.xlu0 %v1186, 4
        %v1193 = vpop.permute.xlu0 %1192
        %1197 = vst.msk [vmem:[#allocation2 + $0x80] sm:$0xc0] %vm597, %v1189
        %1198 = vst.msk [vmem:[#allocation2 + $0x90] sm:$0xff] %vm442, %v1191
        %1199 = vst.msk [vmem:[#allocation2 + $0xa0] sm:$0xf] %vm600, %v1193
        %v1200 = vld [vmem:[%s383 + $0x62] sm:$0xff]
        %v1201 = vld [vmem:[%s383 + $0x6a] sm:$0x3f]
        %v1204 = vrot.slane %v1200, 2
        %v1205 = vrot.slane %v1201, 2
        %v1206 = vsel %vm506, %v1204, %v1205
        %1207 = vrot.lane.b32.xlu0 %v1204, 5
        %v1208 = vpop.permute.xlu0 %1207
        %1209 = vrot.lane.b32.xlu0 %v1206, 5
        %v1210 = vpop.permute.xlu0 %1209
        %1211 = vrot.lane.b32.xlu0 %v1205, 5
        %v1212 = vpop.permute.xlu0 %1211
        %1216 = vst.msk [vmem:[#allocation2 + $0x80] sm:$0xc0] %vm618, %v1208
        %1217 = vst.msk [vmem:[#allocation2 + $0x90] sm:$0xff] %vm456, %v1210
        %1218 = vst.msk [vmem:[#allocation2 + $0xa0] sm:$0xf] %vm621, %v1212
        %v1219 = vld [vmem:[%s383 + $0x70] sm:$0xff]
        %v1220 = vld [vmem:[%s383 + $0x78] sm:$0x3f]
        %v1223 = vrot.slane %v1219, 2
        %v1224 = vrot.slane %v1220, 2
        %v1225 = vsel %vm506, %v1223, %v1224
        %1226 = vrot.lane.b32.xlu0 %v1223, 6
        %v1227 = vpop.permute.xlu0 %1226
        %1228 = vrot.lane.b32.xlu0 %v1225, 6
        %v1229 = vpop.permute.xlu0 %1228
        %1230 = vrot.lane.b32.xlu0 %v1224, 6
        %v1231 = vpop.permute.xlu0 %1230
        %1235 = vst.msk [vmem:[#allocation2 + $0x80] sm:$0xc0] %vm639, %v1227
        %1236 = vst.msk [vmem:[#allocation2 + $0x90] sm:$0xff] %vm470, %v1229
        %1237 = vst.msk [vmem:[#allocation2 + $0xa0] sm:$0xf] %vm642, %v1231
        %v1238 = vld [vmem:[%s383 + $0x71] sm:$0xff]
        %v1239 = vld [vmem:[%s383 + $0x79] sm:$0x3f]
        %v1242 = vrot.slane %v1238, 2
        %v1243 = vrot.slane %v1239, 2
        %v1244 = vsel %vm506, %v1242, %v1243
        %1245 = vrot.lane.b32.xlu0 %v1242, 7
        %v1246 = vpop.permute.xlu0 %1245
        %1247 = vrot.lane.b32.xlu0 %v1244, 7
        %v1248 = vpop.permute.xlu0 %1247
        %1249 = vrot.lane.b32.xlu0 %v1243, 7
        %v1250 = vpop.permute.xlu0 %1249
        %1254 = vst.msk [vmem:[#allocation2 + $0x80] sm:$0xc0] %vm660, %v1246
        %1255 = vst.msk [vmem:[#allocation2 + $0x90] sm:$0xff] %vm484, %v1248
        %1256 = vst.msk [vmem:[#allocation2 + $0xa0] sm:$0xf] %vm663, %v1250
        %v1257 = vld [vmem:[%s383 + $0x72] sm:$0xff]
        %v1258 = vld [vmem:[%s383 + $0x7a] sm:$0x3f]
        %v1261 = vrot.slane %v1257, 2
        %v1262 = vrot.slane %v1258, 2
        %v1263 = vsel %vm506, %v1261, %v1262
        %1264 = vrot.lane.b32.xlu0 %v1261, 8
        %v1265 = vpop.permute.xlu0 %1264
        %1266 = vrot.lane.b32.xlu0 %v1263, 8
        %v1267 = vpop.permute.xlu0 %1266
        %1268 = vrot.lane.b32.xlu0 %v1262, 8
        %v1269 = vpop.permute.xlu0 %1268
        %1273 = vst.msk [vmem:[#allocation2 + $0x80] sm:$0xc0] %vm681, %v1265
        %1274 = vst.msk [vmem:[#allocation2 + $0x90] sm:$0xff] %vm498, %v1267
        %1275 = vst.msk [vmem:[#allocation2 + $0xa0] sm:$0xf] %vm684, %v1269
        %v1276 = vld [vmem:[%s383 + $0x60] sm:$0xff]
        %v1277 = vld [vmem:[%s383 + $0x68] sm:$0x3f]
        %v1280 = vrot.slane %v1276, 4
        %v1281 = vrot.slane %v1277, 4
        %v1282 = vsel %vm690, %v1280, %v1281
        %1286 = vst.msk [vmem:[#allocation2 + $0xa0] sm:$0xf0] %vm697, %v1280
        %1287 = vst.msk [vmem:[#allocation2 + $0xb0] sm:$0xff] %vm386, %v1282
        %1288 = vst.msk [vmem:[#allocation2 + $0xc0] sm:$0x3] %vm700, %v1281
        %v1289 = vld [vmem:[%s383 + $0x61] sm:$0xff]
        %v1290 = vld [vmem:[%s383 + $0x69] sm:$0x3f]
        %v1293 = vrot.slane %v1289, 4
        %v1294 = vrot.slane %v1290, 4
        %v1295 = vsel %vm690, %v1293, %v1294
        %1296 = vrot.lane.b32.xlu0 %v1293, 1
        %v1297 = vpop.permute.xlu0 %1296
        %1298 = vrot.lane.b32.xlu0 %v1295, 1
        %v1299 = vpop.permute.xlu0 %1298
        %1300 = vrot.lane.b32.xlu0 %v1294, 1
        %v1301 = vpop.permute.xlu0 %1300
        %1305 = vst.msk [vmem:[#allocation2 + $0xa0] sm:$0xf0] %vm718, %v1297
        %1306 = vst.msk [vmem:[#allocation2 + $0xb0] sm:$0xff] %vm400, %v1299
        %1307 = vst.msk [vmem:[#allocation2 + $0xc0] sm:$0x3] %vm721, %v1301
        %v1308 = vld [vmem:[%s383 + $0x62] sm:$0xff]
        %v1309 = vld [vmem:[%s383 + $0x6a] sm:$0x3f]
        %v1312 = vrot.slane %v1308, 4
        %v1313 = vrot.slane %v1309, 4
        %v1314 = vsel %vm690, %v1312, %v1313
        %1315 = vrot.lane.b32.xlu0 %v1312, 2
        %v1316 = vpop.permute.xlu0 %1315
        %1317 = vrot.lane.b32.xlu0 %v1314, 2
        %v1318 = vpop.permute.xlu0 %1317
        %1319 = vrot.lane.b32.xlu0 %v1313, 2
        %v1320 = vpop.permute.xlu0 %1319
        %1324 = vst.msk [vmem:[#allocation2 + $0xa0] sm:$0xf0] %vm739, %v1316
        %1325 = vst.msk [vmem:[#allocation2 + $0xb0] sm:$0xff] %vm414, %v1318
        %1326 = vst.msk [vmem:[#allocation2 + $0xc0] sm:$0x3] %vm742, %v1320
        %v1327 = vld [vmem:[%s383 + $0x70] sm:$0xff]
        %v1328 = vld [vmem:[%s383 + $0x78] sm:$0x3f]
        %v1331 = vrot.slane %v1327, 4
        %v1332 = vrot.slane %v1328, 4
        %v1333 = vsel %vm690, %v1331, %v1332
        %1334 = vrot.lane.b32.xlu0 %v1331, 3
        %v1335 = vpop.permute.xlu0 %1334
        %1336 = vrot.lane.b32.xlu0 %v1333, 3
        %v1337 = vpop.permute.xlu0 %1336
        %1338 = vrot.lane.b32.xlu0 %v1332, 3
        %v1339 = vpop.permute.xlu0 %1338
        %1343 = vst.msk [vmem:[#allocation2 + $0xa0] sm:$0xf0] %vm760, %v1335
        %1344 = vst.msk [vmem:[#allocation2 + $0xb0] sm:$0xff] %vm428, %v1337
        %1345 = vst.msk [vmem:[#allocation2 + $0xc0] sm:$0x3] %vm763, %v1339
        %v1346 = vld [vmem:[%s383 + $0x71] sm:$0xff]
        %v1347 = vld [vmem:[%s383 + $0x79] sm:$0x3f]
        %v1350 = vrot.slane %v1346, 4
        %v1351 = vrot.slane %v1347, 4
        %v1352 = vsel %vm690, %v1350, %v1351
        %1353 = vrot.lane.b32.xlu0 %v1350, 4
        %v1354 = vpop.permute.xlu0 %1353
        %1355 = vrot.lane.b32.xlu0 %v1352, 4
        %v1356 = vpop.permute.xlu0 %1355
        %1357 = vrot.lane.b32.xlu0 %v1351, 4
        %v1358 = vpop.permute.xlu0 %1357
        %1362 = vst.msk [vmem:[#allocation2 + $0xa0] sm:$0xf0] %vm781, %v1354
        %1363 = vst.msk [vmem:[#allocation2 + $0xb0] sm:$0xff] %vm442, %v1356
        %1364 = vst.msk [vmem:[#allocation2 + $0xc0] sm:$0x3] %vm784, %v1358
        %v1365 = vld [vmem:[%s383 + $0x72] sm:$0xff]
        %v1366 = vld [vmem:[%s383 + $0x7a] sm:$0x3f]
        %v1369 = vrot.slane %v1365, 4
        %v1370 = vrot.slane %v1366, 4
        %v1371 = vsel %vm690, %v1369, %v1370
        %1372 = vrot.lane.b32.xlu0 %v1369, 5
        %v1373 = vpop.permute.xlu0 %1372
        %1374 = vrot.lane.b32.xlu0 %v1371, 5
        %v1375 = vpop.permute.xlu0 %1374
        %1376 = vrot.lane.b32.xlu0 %v1370, 5
        %v1377 = vpop.permute.xlu0 %1376
        %1381 = vst.msk [vmem:[#allocation2 + $0xa0] sm:$0xf0] %vm802, %v1373
        %1382 = vst.msk [vmem:[#allocation2 + $0xb0] sm:$0xff] %vm456, %v1375
        %1383 = vst.msk [vmem:[#allocation2 + $0xc0] sm:$0x3] %vm805, %v1377
        %v1384 = vld [vmem:[%s383 + $0x80] sm:$0xff]
        %v1385 = vld [vmem:[%s383 + $0x88] sm:$0x3f]
        %v1388 = vrot.slane %v1384, 4
        %v1389 = vrot.slane %v1385, 4
        %v1390 = vsel %vm690, %v1388, %v1389
        %1391 = vrot.lane.b32.xlu0 %v1388, 6
        %v1392 = vpop.permute.xlu0 %1391
        %1393 = vrot.lane.b32.xlu0 %v1390, 6
        %v1394 = vpop.permute.xlu0 %1393
        %1395 = vrot.lane.b32.xlu0 %v1389, 6
        %v1396 = vpop.permute.xlu0 %1395
        %1400 = vst.msk [vmem:[#allocation2 + $0xa0] sm:$0xf0] %vm823, %v1392
        %1401 = vst.msk [vmem:[#allocation2 + $0xb0] sm:$0xff] %vm470, %v1394
        %1402 = vst.msk [vmem:[#allocation2 + $0xc0] sm:$0x3] %vm826, %v1396
        %v1403 = vld [vmem:[%s383 + $0x81] sm:$0xff]
        %v1404 = vld [vmem:[%s383 + $0x89] sm:$0x3f]
        %v1407 = vrot.slane %v1403, 4
        %v1408 = vrot.slane %v1404, 4
        %v1409 = vsel %vm690, %v1407, %v1408
        %1410 = vrot.lane.b32.xlu0 %v1407, 7
        %v1411 = vpop.permute.xlu0 %1410
        %1412 = vrot.lane.b32.xlu0 %v1409, 7
        %v1413 = vpop.permute.xlu0 %1412
        %1414 = vrot.lane.b32.xlu0 %v1408, 7
        %v1415 = vpop.permute.xlu0 %1414
        %1419 = vst.msk [vmem:[#allocation2 + $0xa0] sm:$0xf0] %vm844, %v1411
        %1420 = vst.msk [vmem:[#allocation2 + $0xb0] sm:$0xff] %vm484, %v1413
        %1421 = vst.msk [vmem:[#allocation2 + $0xc0] sm:$0x3] %vm847, %v1415
        %v1422 = vld [vmem:[%s383 + $0x82] sm:$0xff]
        %v1423 = vld [vmem:[%s383 + $0x8a] sm:$0x3f]
        %v1426 = vrot.slane %v1422, 4
        %v1427 = vrot.slane %v1423, 4
        %v1428 = vsel %vm690, %v1426, %v1427
        %1429 = vrot.lane.b32.xlu0 %v1426, 8
        %v1430 = vpop.permute.xlu0 %1429
        %1431 = vrot.lane.b32.xlu0 %v1428, 8
        %v1432 = vpop.permute.xlu0 %1431
        %1433 = vrot.lane.b32.xlu0 %v1427, 8
        %v1434 = vpop.permute.xlu0 %1433
        %1438 = vst.msk [vmem:[#allocation2 + $0xa0] sm:$0xf0] %vm865, %v1430
        %1439 = vst.msk [vmem:[#allocation2 + $0xb0] sm:$0xff] %vm498, %v1432
        %1440 = vst.msk [vmem:[#allocation2 + $0xc0] sm:$0x3] %vm868, %v1434
        %v1441 = vld [vmem:[%s383 + $0x70] sm:$0xff]
        %v1442 = vld [vmem:[%s383 + $0x78] sm:$0x3f]
        %v1445 = vrot.slane %v1441, 6
        %v1446 = vrot.slane %v1442, 6
        %v1447 = vsel %vm874, %v1445, %v1446
        %1450 = vst.msk [vmem:[#allocation2 + $0xc0] sm:$0xfc] %vm880, %v1445
        %1451 = vst.msk [vmem:[#allocation2 + $0xd0] sm:$0xff] %vm386, %v1447
        %v1452 = vld [vmem:[%s383 + $0x71] sm:$0xff]
        %v1453 = vld [vmem:[%s383 + $0x79] sm:$0x3f]
        %v1456 = vrot.slane %v1452, 6
        %v1457 = vrot.slane %v1453, 6
        %v1458 = vsel %vm874, %v1456, %v1457
        %1459 = vrot.lane.b32.xlu0 %v1456, 1
        %v1460 = vpop.permute.xlu0 %1459
        %1461 = vrot.lane.b32.xlu0 %v1458, 1
        %v1462 = vpop.permute.xlu0 %1461
        %1465 = vst.msk [vmem:[#allocation2 + $0xc0] sm:$0xfc] %vm896, %v1460
        %1466 = vst.msk [vmem:[#allocation2 + $0xd0] sm:$0xff] %vm400, %v1462
        %v1467 = vld [vmem:[%s383 + $0x72] sm:$0xff]
        %v1468 = vld [vmem:[%s383 + $0x7a] sm:$0x3f]
        %v1471 = vrot.slane %v1467, 6
        %v1472 = vrot.slane %v1468, 6
        %v1473 = vsel %vm874, %v1471, %v1472
        %1474 = vrot.lane.b32.xlu0 %v1471, 2
        %v1475 = vpop.permute.xlu0 %1474
        %1476 = vrot.lane.b32.xlu0 %v1473, 2
        %v1477 = vpop.permute.xlu0 %1476
        %1480 = vst.msk [vmem:[#allocation2 + $0xc0] sm:$0xfc] %vm912, %v1475
        %1481 = vst.msk [vmem:[#allocation2 + $0xd0] sm:$0xff] %vm414, %v1477
        %v1482 = vld [vmem:[%s383 + $0x80] sm:$0xff]
        %v1483 = vld [vmem:[%s383 + $0x88] sm:$0x3f]
        %v1486 = vrot.slane %v1482, 6
        %v1487 = vrot.slane %v1483, 6
        %v1488 = vsel %vm874, %v1486, %v1487
        %1489 = vrot.lane.b32.xlu0 %v1486, 3
        %v1490 = vpop.permute.xlu0 %1489
        %1491 = vrot.lane.b32.xlu0 %v1488, 3
        %v1492 = vpop.permute.xlu0 %1491
        %1495 = vst.msk [vmem:[#allocation2 + $0xc0] sm:$0xfc] %vm928, %v1490
        %1496 = vst.msk [vmem:[#allocation2 + $0xd0] sm:$0xff] %vm428, %v1492
        %v1497 = vld [vmem:[%s383 + $0x81] sm:$0xff]
        %v1498 = vld [vmem:[%s383 + $0x89] sm:$0x3f]
        %v1501 = vrot.slane %v1497, 6
        %v1502 = vrot.slane %v1498, 6
        %v1503 = vsel %vm874, %v1501, %v1502
        %1504 = vrot.lane.b32.xlu0 %v1501, 4
        %v1505 = vpop.permute.xlu0 %1504
        %1506 = vrot.lane.b32.xlu0 %v1503, 4
        %v1507 = vpop.permute.xlu0 %1506
        %1510 = vst.msk [vmem:[#allocation2 + $0xc0] sm:$0xfc] %vm944, %v1505
        %1511 = vst.msk [vmem:[#allocation2 + $0xd0] sm:$0xff] %vm442, %v1507
        %v1512 = vld [vmem:[%s383 + $0x82] sm:$0xff]
        %v1513 = vld [vmem:[%s383 + $0x8a] sm:$0x3f]
        %v1516 = vrot.slane %v1512, 6
        %v1517 = vrot.slane %v1513, 6
        %v1518 = vsel %vm874, %v1516, %v1517
        %1519 = vrot.lane.b32.xlu0 %v1516, 5
        %v1520 = vpop.permute.xlu0 %1519
        %1521 = vrot.lane.b32.xlu0 %v1518, 5
        %v1522 = vpop.permute.xlu0 %1521
        %1525 = vst.msk [vmem:[#allocation2 + $0xc0] sm:$0xfc] %vm960, %v1520
        %1526 = vst.msk [vmem:[#allocation2 + $0xd0] sm:$0xff] %vm456, %v1522
        %v1527 = vld [vmem:[%s383 + $0x90] sm:$0xff]
        %v1528 = vld [vmem:[%s383 + $0x98] sm:$0x3f]
        %v1531 = vrot.slane %v1527, 6
        %v1532 = vrot.slane %v1528, 6
        %v1533 = vsel %vm874, %v1531, %v1532
        %1534 = vrot.lane.b32.xlu0 %v1531, 6
        %v1535 = vpop.permute.xlu0 %1534
        %1536 = vrot.lane.b32.xlu0 %v1533, 6
        %v1537 = vpop.permute.xlu0 %1536
        %1540 = vst.msk [vmem:[#allocation2 + $0xc0] sm:$0xfc] %vm976, %v1535
        %1541 = vst.msk [vmem:[#allocation2 + $0xd0] sm:$0xff] %vm470, %v1537
        %v1542 = vld [vmem:[%s383 + $0x91] sm:$0xff]
        %v1543 = vld [vmem:[%s383 + $0x99] sm:$0x3f]
        %v1546 = vrot.slane %v1542, 6
        %v1547 = vrot.slane %v1543, 6
        %v1548 = vsel %vm874, %v1546, %v1547
        %1549 = vrot.lane.b32.xlu0 %v1546, 7
        %v1550 = vpop.permute.xlu0 %1549
        %1551 = vrot.lane.b32.xlu0 %v1548, 7
        %v1552 = vpop.permute.xlu0 %1551
        %1555 = vst.msk [vmem:[#allocation2 + $0xc0] sm:$0xfc] %vm992, %v1550
        %1556 = vst.msk [vmem:[#allocation2 + $0xd0] sm:$0xff] %vm484, %v1552
        %v1557 = vld [vmem:[%s383 + $0x92] sm:$0xff]
        %v1558 = vld [vmem:[%s383 + $0x9a] sm:$0x3f]
        %v1561 = vrot.slane %v1557, 6
        %v1562 = vrot.slane %v1558, 6
        %v1563 = vsel %vm874, %v1561, %v1562
        %1564 = vrot.lane.b32.xlu0 %v1561, 8
        %v1565 = vpop.permute.xlu0 %1564
        %1566 = vrot.lane.b32.xlu0 %v1563, 8
        %v1567 = vpop.permute.xlu0 %1566
        %1570 = vst.msk [vmem:[#allocation2 + $0xc0] sm:$0xfc] %vm1008, %v1565
        %1571 = vst.msk [vmem:[#allocation2 + $0xd0] sm:$0xff] %vm498, %v1567
        %v1572 = vld [vmem:[%s383 + $0x80] sm:$0xff]
        %v1573 = vld [vmem:[%s383 + $0x88] sm:$0x3f]
        %1574 = vst.msk [vmem:[#allocation2 + $0xe0] sm:$0xff] %vm386, %v1572
        %1575 = vst.msk [vmem:[#allocation2 + $0xf0] sm:$0x3f] %vm388, %v1573
        %v1576 = vld [vmem:[%s383 + $0x81] sm:$0xff]
        %v1577 = vld [vmem:[%s383 + $0x89] sm:$0x3f]
        %1580 = vrot.lane.b32.xlu0 %v1576, 1
        %v1581 = vpop.permute.xlu0 %1580
        %1582 = vrot.lane.b32.xlu0 %v1577, 1
        %v1583 = vpop.permute.xlu0 %1582
        %1586 = vst.msk [vmem:[#allocation2 + $0xe0] sm:$0xff] %vm400, %v1581
        %1587 = vst.msk [vmem:[#allocation2 + $0xf0] sm:$0x3f] %vm402, %v1583
        %v1588 = vld [vmem:[%s383 + $0x82] sm:$0xff]
        %v1589 = vld [vmem:[%s383 + $0x8a] sm:$0x3f]
        %1592 = vrot.lane.b32.xlu0 %v1588, 2
        %v1593 = vpop.permute.xlu0 %1592
        %1594 = vrot.lane.b32.xlu0 %v1589, 2
        %v1595 = vpop.permute.xlu0 %1594
        %1598 = vst.msk [vmem:[#allocation2 + $0xe0] sm:$0xff] %vm414, %v1593
        %1599 = vst.msk [vmem:[#allocation2 + $0xf0] sm:$0x3f] %vm416, %v1595
        %v1600 = vld [vmem:[%s383 + $0x90] sm:$0xff]
        %v1601 = vld [vmem:[%s383 + $0x98] sm:$0x3f]
        %1604 = vrot.lane.b32.xlu0 %v1600, 3
        %v1605 = vpop.permute.xlu0 %1604
        %1606 = vrot.lane.b32.xlu0 %v1601, 3
        %v1607 = vpop.permute.xlu0 %1606
        %1610 = vst.msk [vmem:[#allocation2 + $0xe0] sm:$0xff] %vm428, %v1605
        %1611 = vst.msk [vmem:[#allocation2 + $0xf0] sm:$0x3f] %vm430, %v1607
        %v1612 = vld [vmem:[%s383 + $0x91] sm:$0xff]
        %v1613 = vld [vmem:[%s383 + $0x99] sm:$0x3f]
        %1616 = vrot.lane.b32.xlu0 %v1612, 4
        %v1617 = vpop.permute.xlu0 %1616
        %1618 = vrot.lane.b32.xlu0 %v1613, 4
        %v1619 = vpop.permute.xlu0 %1618
        %1622 = vst.msk [vmem:[#allocation2 + $0xe0] sm:$0xff] %vm442, %v1617
        %1623 = vst.msk [vmem:[#allocation2 + $0xf0] sm:$0x3f] %vm444, %v1619
        %v1624 = vld [vmem:[%s383 + $0x92] sm:$0xff]
        %v1625 = vld [vmem:[%s383 + $0x9a] sm:$0x3f]
        %1628 = vrot.lane.b32.xlu0 %v1624, 5
        %v1629 = vpop.permute.xlu0 %1628
        %1630 = vrot.lane.b32.xlu0 %v1625, 5
        %v1631 = vpop.permute.xlu0 %1630
        %1634 = vst.msk [vmem:[#allocation2 + $0xe0] sm:$0xff] %vm456, %v1629
        %1635 = vst.msk [vmem:[#allocation2 + $0xf0] sm:$0x3f] %vm458, %v1631
        %v1636 = vld [vmem:[%s383 + $0xa0] sm:$0xff]
        %v1637 = vld [vmem:[%s383 + $0xa8] sm:$0x3f]
        %1640 = vrot.lane.b32.xlu0 %v1636, 6
        %v1641 = vpop.permute.xlu0 %1640
        %1642 = vrot.lane.b32.xlu0 %v1637, 6
        %v1643 = vpop.permute.xlu0 %1642
        %1646 = vst.msk [vmem:[#allocation2 + $0xe0] sm:$0xff] %vm470, %v1641
        %1647 = vst.msk [vmem:[#allocation2 + $0xf0] sm:$0x3f] %vm472, %v1643
        %v1648 = vld [vmem:[%s383 + $0xa1] sm:$0xff]
        %v1649 = vld [vmem:[%s383 + $0xa9] sm:$0x3f]
        %1652 = vrot.lane.b32.xlu0 %v1648, 7
        %v1653 = vpop.permute.xlu0 %1652
        %1654 = vrot.lane.b32.xlu0 %v1649, 7
        %v1655 = vpop.permute.xlu0 %1654
        %1658 = vst.msk [vmem:[#allocation2 + $0xe0] sm:$0xff] %vm484, %v1653
        %1659 = vst.msk [vmem:[#allocation2 + $0xf0] sm:$0x3f] %vm486, %v1655
        %v1660 = vld [vmem:[%s383 + $0xa2] sm:$0xff]
        %v1661 = vld [vmem:[%s383 + $0xaa] sm:$0x3f]
        %1664 = vrot.lane.b32.xlu0 %v1660, 8
        %v1665 = vpop.permute.xlu0 %1664
        %1666 = vrot.lane.b32.xlu0 %v1661, 8
        %v1667 = vpop.permute.xlu0 %1666
        %1670 = vst.msk [vmem:[#allocation2 + $0xe0] sm:$0xff] %vm498, %v1665
        %1671 = vst.msk [vmem:[#allocation2 + $0xf0] sm:$0x3f] %vm500, %v1667
        %v1672 = vld [vmem:[%s383 + $0x90] sm:$0xff]
        %v1673 = vld [vmem:[%s383 + $0x98] sm:$0x3f]
        %v1676 = vrot.slane %v1672, 2
        %v1677 = vrot.slane %v1673, 2
        %v1678 = vsel %vm506, %v1676, %v1677
        %1682 = vst.msk [vmem:[#allocation2 + $0xf0] sm:$0xc0] %vm513, %v1676
        %1683 = vst.msk [vmem:[#allocation2 + $0x100] sm:$0xff] %vm386, %v1678
        %1684 = vst.msk [vmem:[#allocation2 + $0x110] sm:$0xf] %vm516, %v1677
        %v1685 = vld [vmem:[%s383 + $0x91] sm:$0xff]
        %v1686 = vld [vmem:[%s383 + $0x99] sm:$0x3f]
        %v1689 = vrot.slane %v1685, 2
        %v1690 = vrot.slane %v1686, 2
        %v1691 = vsel %vm506, %v1689, %v1690
        %1692 = vrot.lane.b32.xlu0 %v1689, 1
        %v1693 = vpop.permute.xlu0 %1692
        %1694 = vrot.lane.b32.xlu0 %v1691, 1
        %v1695 = vpop.permute.xlu0 %1694
        %1696 = vrot.lane.b32.xlu0 %v1690, 1
        %v1697 = vpop.permute.xlu0 %1696
        %1701 = vst.msk [vmem:[#allocation2 + $0xf0] sm:$0xc0] %vm534, %v1693
        %1702 = vst.msk [vmem:[#allocation2 + $0x100] sm:$0xff] %vm400, %v1695
        %1703 = vst.msk [vmem:[#allocation2 + $0x110] sm:$0xf] %vm537, %v1697
        %v1704 = vld [vmem:[%s383 + $0x92] sm:$0xff]
        %v1705 = vld [vmem:[%s383 + $0x9a] sm:$0x3f]
        %v1708 = vrot.slane %v1704, 2
        %v1709 = vrot.slane %v1705, 2
        %v1710 = vsel %vm506, %v1708, %v1709
        %1711 = vrot.lane.b32.xlu0 %v1708, 2
        %v1712 = vpop.permute.xlu0 %1711
        %1713 = vrot.lane.b32.xlu0 %v1710, 2
        %v1714 = vpop.permute.xlu0 %1713
        %1715 = vrot.lane.b32.xlu0 %v1709, 2
        %v1716 = vpop.permute.xlu0 %1715
        %1720 = vst.msk [vmem:[#allocation2 + $0xf0] sm:$0xc0] %vm555, %v1712
        %1721 = vst.msk [vmem:[#allocation2 + $0x100] sm:$0xff] %vm414, %v1714
        %1722 = vst.msk [vmem:[#allocation2 + $0x110] sm:$0xf] %vm558, %v1716
        %v1723 = vld [vmem:[%s383 + $0xa0] sm:$0xff]
        %v1724 = vld [vmem:[%s383 + $0xa8] sm:$0x3f]
        %v1727 = vrot.slane %v1723, 2
        %v1728 = vrot.slane %v1724, 2
        %v1729 = vsel %vm506, %v1727, %v1728
        %1730 = vrot.lane.b32.xlu0 %v1727, 3
        %v1731 = vpop.permute.xlu0 %1730
        %1732 = vrot.lane.b32.xlu0 %v1729, 3
        %v1733 = vpop.permute.xlu0 %1732
        %1734 = vrot.lane.b32.xlu0 %v1728, 3
        %v1735 = vpop.permute.xlu0 %1734
        %1739 = vst.msk [vmem:[#allocation2 + $0xf0] sm:$0xc0] %vm576, %v1731
        %1740 = vst.msk [vmem:[#allocation2 + $0x100] sm:$0xff] %vm428, %v1733
        %1741 = vst.msk [vmem:[#allocation2 + $0x110] sm:$0xf] %vm579, %v1735
        %v1742 = vld [vmem:[%s383 + $0xa1] sm:$0xff]
        %v1743 = vld [vmem:[%s383 + $0xa9] sm:$0x3f]
        %v1746 = vrot.slane %v1742, 2
        %v1747 = vrot.slane %v1743, 2
        %v1748 = vsel %vm506, %v1746, %v1747
        %1749 = vrot.lane.b32.xlu0 %v1746, 4
        %v1750 = vpop.permute.xlu0 %1749
        %1751 = vrot.lane.b32.xlu0 %v1748, 4
        %v1752 = vpop.permute.xlu0 %1751
        %1753 = vrot.lane.b32.xlu0 %v1747, 4
        %v1754 = vpop.permute.xlu0 %1753
        %1758 = vst.msk [vmem:[#allocation2 + $0xf0] sm:$0xc0] %vm597, %v1750
        %1759 = vst.msk [vmem:[#allocation2 + $0x100] sm:$0xff] %vm442, %v1752
        %1760 = vst.msk [vmem:[#allocation2 + $0x110] sm:$0xf] %vm600, %v1754
        %v1761 = vld [vmem:[%s383 + $0xa2] sm:$0xff]
        %v1762 = vld [vmem:[%s383 + $0xaa] sm:$0x3f]
        %v1765 = vrot.slane %v1761, 2
        %v1766 = vrot.slane %v1762, 2
        %v1767 = vsel %vm506, %v1765, %v1766
        %1768 = vrot.lane.b32.xlu0 %v1765, 5
        %v1769 = vpop.permute.xlu0 %1768
        %1770 = vrot.lane.b32.xlu0 %v1767, 5
        %v1771 = vpop.permute.xlu0 %1770
        %1772 = vrot.lane.b32.xlu0 %v1766, 5
        %v1773 = vpop.permute.xlu0 %1772
        %1777 = vst.msk [vmem:[#allocation2 + $0xf0] sm:$0xc0] %vm618, %v1769
        %1778 = vst.msk [vmem:[#allocation2 + $0x100] sm:$0xff] %vm456, %v1771
        %1779 = vst.msk [vmem:[#allocation2 + $0x110] sm:$0xf] %vm621, %v1773
        %v1780 = vld [vmem:[%s383 + $0xb0] sm:$0xff]
        %v1781 = vld [vmem:[%s383 + $0xb8] sm:$0x3f]
        %v1784 = vrot.slane %v1780, 2
        %v1785 = vrot.slane %v1781, 2
        %v1786 = vsel %vm506, %v1784, %v1785
        %1787 = vrot.lane.b32.xlu0 %v1784, 6
        %v1788 = vpop.permute.xlu0 %1787
        %1789 = vrot.lane.b32.xlu0 %v1786, 6
        %v1790 = vpop.permute.xlu0 %1789
        %1791 = vrot.lane.b32.xlu0 %v1785, 6
        %v1792 = vpop.permute.xlu0 %1791
        %1796 = vst.msk [vmem:[#allocation2 + $0xf0] sm:$0xc0] %vm639, %v1788
        %1797 = vst.msk [vmem:[#allocation2 + $0x100] sm:$0xff] %vm470, %v1790
        %1798 = vst.msk [vmem:[#allocation2 + $0x110] sm:$0xf] %vm642, %v1792
        %v1799 = vld [vmem:[%s383 + $0xb1] sm:$0xff]
        %v1800 = vld [vmem:[%s383 + $0xb9] sm:$0x3f]
        %v1803 = vrot.slane %v1799, 2
        %v1804 = vrot.slane %v1800, 2
        %v1805 = vsel %vm506, %v1803, %v1804
        %1806 = vrot.lane.b32.xlu0 %v1803, 7
        %v1807 = vpop.permute.xlu0 %1806
        %1808 = vrot.lane.b32.xlu0 %v1805, 7
        %v1809 = vpop.permute.xlu0 %1808
        %1810 = vrot.lane.b32.xlu0 %v1804, 7
        %v1811 = vpop.permute.xlu0 %1810
        %1815 = vst.msk [vmem:[#allocation2 + $0xf0] sm:$0xc0] %vm660, %v1807
        %1816 = vst.msk [vmem:[#allocation2 + $0x100] sm:$0xff] %vm484, %v1809
        %1817 = vst.msk [vmem:[#allocation2 + $0x110] sm:$0xf] %vm663, %v1811
        %v1818 = vld [vmem:[%s383 + $0xb2] sm:$0xff]
        %v1819 = vld [vmem:[%s383 + $0xba] sm:$0x3f]
        %v1822 = vrot.slane %v1818, 2
        %v1823 = vrot.slane %v1819, 2
        %v1824 = vsel %vm506, %v1822, %v1823
        %1825 = vrot.lane.b32.xlu0 %v1822, 8
        %v1826 = vpop.permute.xlu0 %1825
        %1827 = vrot.lane.b32.xlu0 %v1824, 8
        %v1828 = vpop.permute.xlu0 %1827
        %1829 = vrot.lane.b32.xlu0 %v1823, 8
        %v1830 = vpop.permute.xlu0 %1829
        %1834 = vst.msk [vmem:[#allocation2 + $0xf0] sm:$0xc0] %vm681, %v1826
        %1835 = vst.msk [vmem:[#allocation2 + $0x100] sm:$0xff] %vm498, %v1828
        %1836 = vst.msk [vmem:[#allocation2 + $0x110] sm:$0xf] %vm684, %v1830
        %v1837 = vld [vmem:[%s383 + $0xa0] sm:$0xff]
        %v1838 = vld [vmem:[%s383 + $0xa8] sm:$0x3f]
        %v1841 = vrot.slane %v1837, 4
        %v1842 = vrot.slane %v1838, 4
        %v1843 = vsel %vm690, %v1841, %v1842
        %1847 = vst.msk [vmem:[#allocation2 + $0x110] sm:$0xf0] %vm697, %v1841
        %1848 = vst.msk [vmem:[#allocation2 + $0x120] sm:$0xff] %vm386, %v1843
        %1849 = vst.msk [vmem:[#allocation2 + $0x130] sm:$0x3] %vm700, %v1842
        %v1850 = vld [vmem:[%s383 + $0xa1] sm:$0xff]
        %v1851 = vld [vmem:[%s383 + $0xa9] sm:$0x3f]
        %v1854 = vrot.slane %v1850, 4
        %v1855 = vrot.slane %v1851, 4
        %v1856 = vsel %vm690, %v1854, %v1855
        %1857 = vrot.lane.b32.xlu0 %v1854, 1
        %v1858 = vpop.permute.xlu0 %1857
        %1859 = vrot.lane.b32.xlu0 %v1856, 1
        %v1860 = vpop.permute.xlu0 %1859
        %1861 = vrot.lane.b32.xlu0 %v1855, 1
        %v1862 = vpop.permute.xlu0 %1861
        %1866 = vst.msk [vmem:[#allocation2 + $0x110] sm:$0xf0] %vm718, %v1858
        %1867 = vst.msk [vmem:[#allocation2 + $0x120] sm:$0xff] %vm400, %v1860
        %1868 = vst.msk [vmem:[#allocation2 + $0x130] sm:$0x3] %vm721, %v1862
        %v1869 = vld [vmem:[%s383 + $0xa2] sm:$0xff]
        %v1870 = vld [vmem:[%s383 + $0xaa] sm:$0x3f]
        %v1873 = vrot.slane %v1869, 4
        %v1874 = vrot.slane %v1870, 4
        %v1875 = vsel %vm690, %v1873, %v1874
        %1876 = vrot.lane.b32.xlu0 %v1873, 2
        %v1877 = vpop.permute.xlu0 %1876
        %1878 = vrot.lane.b32.xlu0 %v1875, 2
        %v1879 = vpop.permute.xlu0 %1878
        %1880 = vrot.lane.b32.xlu0 %v1874, 2
        %v1881 = vpop.permute.xlu0 %1880
        %1885 = vst.msk [vmem:[#allocation2 + $0x110] sm:$0xf0] %vm739, %v1877
        %1886 = vst.msk [vmem:[#allocation2 + $0x120] sm:$0xff] %vm414, %v1879
        %1887 = vst.msk [vmem:[#allocation2 + $0x130] sm:$0x3] %vm742, %v1881
        %v1888 = vld [vmem:[%s383 + $0xb0] sm:$0xff]
        %v1889 = vld [vmem:[%s383 + $0xb8] sm:$0x3f]
        %v1892 = vrot.slane %v1888, 4
        %v1893 = vrot.slane %v1889, 4
        %v1894 = vsel %vm690, %v1892, %v1893
        %1895 = vrot.lane.b32.xlu0 %v1892, 3
        %v1896 = vpop.permute.xlu0 %1895
        %1897 = vrot.lane.b32.xlu0 %v1894, 3
        %v1898 = vpop.permute.xlu0 %1897
        %1899 = vrot.lane.b32.xlu0 %v1893, 3
        %v1900 = vpop.permute.xlu0 %1899
        %1904 = vst.msk [vmem:[#allocation2 + $0x110] sm:$0xf0] %vm760, %v1896
        %1905 = vst.msk [vmem:[#allocation2 + $0x120] sm:$0xff] %vm428, %v1898
        %1906 = vst.msk [vmem:[#allocation2 + $0x130] sm:$0x3] %vm763, %v1900
        %v1907 = vld [vmem:[%s383 + $0xb1] sm:$0xff]
        %v1908 = vld [vmem:[%s383 + $0xb9] sm:$0x3f]
        %v1911 = vrot.slane %v1907, 4
        %v1912 = vrot.slane %v1908, 4
        %v1913 = vsel %vm690, %v1911, %v1912
        %1914 = vrot.lane.b32.xlu0 %v1911, 4
        %v1915 = vpop.permute.xlu0 %1914
        %1916 = vrot.lane.b32.xlu0 %v1913, 4
        %v1917 = vpop.permute.xlu0 %1916
        %1918 = vrot.lane.b32.xlu0 %v1912, 4
        %v1919 = vpop.permute.xlu0 %1918
        %1923 = vst.msk [vmem:[#allocation2 + $0x110] sm:$0xf0] %vm781, %v1915
        %1924 = vst.msk [vmem:[#allocation2 + $0x120] sm:$0xff] %vm442, %v1917
        %1925 = vst.msk [vmem:[#allocation2 + $0x130] sm:$0x3] %vm784, %v1919
        %v1926 = vld [vmem:[%s383 + $0xb2] sm:$0xff]
        %v1927 = vld [vmem:[%s383 + $0xba] sm:$0x3f]
        %v1930 = vrot.slane %v1926, 4
        %v1931 = vrot.slane %v1927, 4
        %v1932 = vsel %vm690, %v1930, %v1931
        %1933 = vrot.lane.b32.xlu0 %v1930, 5
        %v1934 = vpop.permute.xlu0 %1933
        %1935 = vrot.lane.b32.xlu0 %v1932, 5
        %v1936 = vpop.permute.xlu0 %1935
        %1937 = vrot.lane.b32.xlu0 %v1931, 5
        %v1938 = vpop.permute.xlu0 %1937
        %1942 = vst.msk [vmem:[#allocation2 + $0x110] sm:$0xf0] %vm802, %v1934
        %1943 = vst.msk [vmem:[#allocation2 + $0x120] sm:$0xff] %vm456, %v1936
        %1944 = vst.msk [vmem:[#allocation2 + $0x130] sm:$0x3] %vm805, %v1938
        %v1945 = vld [vmem:[%s383 + $0xc0] sm:$0xff]
        %v1946 = vld [vmem:[%s383 + $0xc8] sm:$0x3f]
        %v1949 = vrot.slane %v1945, 4
        %v1950 = vrot.slane %v1946, 4
        %v1951 = vsel %vm690, %v1949, %v1950
        %1952 = vrot.lane.b32.xlu0 %v1949, 6
        %v1953 = vpop.permute.xlu0 %1952
        %1954 = vrot.lane.b32.xlu0 %v1951, 6
        %v1955 = vpop.permute.xlu0 %1954
        %1956 = vrot.lane.b32.xlu0 %v1950, 6
        %v1957 = vpop.permute.xlu0 %1956
        %1961 = vst.msk [vmem:[#allocation2 + $0x110] sm:$0xf0] %vm823, %v1953
        %1962 = vst.msk [vmem:[#allocation2 + $0x120] sm:$0xff] %vm470, %v1955
        %1963 = vst.msk [vmem:[#allocation2 + $0x130] sm:$0x3] %vm826, %v1957
        %v1964 = vld [vmem:[%s383 + $0xc1] sm:$0xff]
        %v1965 = vld [vmem:[%s383 + $0xc9] sm:$0x3f]
        %v1968 = vrot.slane %v1964, 4
        %v1969 = vrot.slane %v1965, 4
        %v1970 = vsel %vm690, %v1968, %v1969
        %1971 = vrot.lane.b32.xlu0 %v1968, 7
        %v1972 = vpop.permute.xlu0 %1971
        %1973 = vrot.lane.b32.xlu0 %v1970, 7
        %v1974 = vpop.permute.xlu0 %1973
        %1975 = vrot.lane.b32.xlu0 %v1969, 7
        %v1976 = vpop.permute.xlu0 %1975
        %1980 = vst.msk [vmem:[#allocation2 + $0x110] sm:$0xf0] %vm844, %v1972
        %1981 = vst.msk [vmem:[#allocation2 + $0x120] sm:$0xff] %vm484, %v1974
        %1982 = vst.msk [vmem:[#allocation2 + $0x130] sm:$0x3] %vm847, %v1976
        %v1983 = vld [vmem:[%s383 + $0xc2] sm:$0xff]
        %v1984 = vld [vmem:[%s383 + $0xca] sm:$0x3f]
        %v1987 = vrot.slane %v1983, 4
        %v1988 = vrot.slane %v1984, 4
        %v1989 = vsel %vm690, %v1987, %v1988
        %1990 = vrot.lane.b32.xlu0 %v1987, 8
        %v1991 = vpop.permute.xlu0 %1990
        %1992 = vrot.lane.b32.xlu0 %v1989, 8
        %v1993 = vpop.permute.xlu0 %1992
        %1994 = vrot.lane.b32.xlu0 %v1988, 8
        %v1995 = vpop.permute.xlu0 %1994
        %1999 = vst.msk [vmem:[#allocation2 + $0x110] sm:$0xf0] %vm865, %v1991
        %2000 = vst.msk [vmem:[#allocation2 + $0x120] sm:$0xff] %vm498, %v1993
        %2001 = vst.msk [vmem:[#allocation2 + $0x130] sm:$0x3] %vm868, %v1995
        %v2002 = vld [vmem:[%s383 + $0xb0] sm:$0xff]
        %v2003 = vld [vmem:[%s383 + $0xb8] sm:$0x3f]
        %v2006 = vrot.slane %v2002, 6
        %v2007 = vrot.slane %v2003, 6
        %v2008 = vsel %vm874, %v2006, %v2007
        %2011 = vst.msk [vmem:[#allocation2 + $0x130] sm:$0xfc] %vm880, %v2006
        %2012 = vst.msk [vmem:[#allocation2 + $0x140] sm:$0xff] %vm386, %v2008
        %v2013 = vld [vmem:[%s383 + $0xb1] sm:$0xff]
        %v2014 = vld [vmem:[%s383 + $0xb9] sm:$0x3f]
        %v2017 = vrot.slane %v2013, 6
        %v2018 = vrot.slane %v2014, 6
        %v2019 = vsel %vm874, %v2017, %v2018
        %2020 = vrot.lane.b32.xlu0 %v2017, 1
        %v2021 = vpop.permute.xlu0 %2020
        %2022 = vrot.lane.b32.xlu0 %v2019, 1
        %v2023 = vpop.permute.xlu0 %2022
        %2026 = vst.msk [vmem:[#allocation2 + $0x130] sm:$0xfc] %vm896, %v2021
        %2027 = vst.msk [vmem:[#allocation2 + $0x140] sm:$0xff] %vm400, %v2023
        %v2028 = vld [vmem:[%s383 + $0xb2] sm:$0xff]
        %v2029 = vld [vmem:[%s383 + $0xba] sm:$0x3f]
        %v2032 = vrot.slane %v2028, 6
        %v2033 = vrot.slane %v2029, 6
        %v2034 = vsel %vm874, %v2032, %v2033
        %2035 = vrot.lane.b32.xlu0 %v2032, 2
        %v2036 = vpop.permute.xlu0 %2035
        %2037 = vrot.lane.b32.xlu0 %v2034, 2
        %v2038 = vpop.permute.xlu0 %2037
        %2041 = vst.msk [vmem:[#allocation2 + $0x130] sm:$0xfc] %vm912, %v2036
        %2042 = vst.msk [vmem:[#allocation2 + $0x140] sm:$0xff] %vm414, %v2038
        %v2043 = vld [vmem:[%s383 + $0xc0] sm:$0xff]
        %v2044 = vld [vmem:[%s383 + $0xc8] sm:$0x3f]
        %v2047 = vrot.slane %v2043, 6
        %v2048 = vrot.slane %v2044, 6
        %v2049 = vsel %vm874, %v2047, %v2048
        %2050 = vrot.lane.b32.xlu0 %v2047, 3
        %v2051 = vpop.permute.xlu0 %2050
        %2052 = vrot.lane.b32.xlu0 %v2049, 3
        %v2053 = vpop.permute.xlu0 %2052
        %2056 = vst.msk [vmem:[#allocation2 + $0x130] sm:$0xfc] %vm928, %v2051
        %2057 = vst.msk [vmem:[#allocation2 + $0x140] sm:$0xff] %vm428, %v2053
        %v2058 = vld [vmem:[%s383 + $0xc1] sm:$0xff]
        %v2059 = vld [vmem:[%s383 + $0xc9] sm:$0x3f]
        %v2062 = vrot.slane %v2058, 6
        %v2063 = vrot.slane %v2059, 6
        %v2064 = vsel %vm874, %v2062, %v2063
        %2065 = vrot.lane.b32.xlu0 %v2062, 4
        %v2066 = vpop.permute.xlu0 %2065
        %2067 = vrot.lane.b32.xlu0 %v2064, 4
        %v2068 = vpop.permute.xlu0 %2067
        %2071 = vst.msk [vmem:[#allocation2 + $0x130] sm:$0xfc] %vm944, %v2066
        %2072 = vst.msk [vmem:[#allocation2 + $0x140] sm:$0xff] %vm442, %v2068
        %v2073 = vld [vmem:[%s383 + $0xc2] sm:$0xff]
        %v2074 = vld [vmem:[%s383 + $0xca] sm:$0x3f]
        %v2077 = vrot.slane %v2073, 6
        %v2078 = vrot.slane %v2074, 6
        %v2079 = vsel %vm874, %v2077, %v2078
        %2080 = vrot.lane.b32.xlu0 %v2077, 5
        %v2081 = vpop.permute.xlu0 %2080
        %2082 = vrot.lane.b32.xlu0 %v2079, 5
        %v2083 = vpop.permute.xlu0 %2082
        %2086 = vst.msk [vmem:[#allocation2 + $0x130] sm:$0xfc] %vm960, %v2081
        %2087 = vst.msk [vmem:[#allocation2 + $0x140] sm:$0xff] %vm456, %v2083
        %v2088 = vld [vmem:[%s383 + $0xd0] sm:$0xff]
        %v2089 = vld [vmem:[%s383 + $0xd8] sm:$0x3f]
        %v2092 = vrot.slane %v2088, 6
        %v2093 = vrot.slane %v2089, 6
        %v2094 = vsel %vm874, %v2092, %v2093
        %2095 = vrot.lane.b32.xlu0 %v2092, 6
        %v2096 = vpop.permute.xlu0 %2095
        %2097 = vrot.lane.b32.xlu0 %v2094, 6
        %v2098 = vpop.permute.xlu0 %2097
        %2101 = vst.msk [vmem:[#allocation2 + $0x130] sm:$0xfc] %vm976, %v2096
        %2102 = vst.msk [vmem:[#allocation2 + $0x140] sm:$0xff] %vm470, %v2098
        %v2103 = vld [vmem:[%s383 + $0xd1] sm:$0xff]
        %v2104 = vld [vmem:[%s383 + $0xd9] sm:$0x3f]
        %v2107 = vrot.slane %v2103, 6
        %v2108 = vrot.slane %v2104, 6
        %v2109 = vsel %vm874, %v2107, %v2108
        %2110 = vrot.lane.b32.xlu0 %v2107, 7
        %v2111 = vpop.permute.xlu0 %2110
        %2112 = vrot.lane.b32.xlu0 %v2109, 7
        %v2113 = vpop.permute.xlu0 %2112
        %2116 = vst.msk [vmem:[#allocation2 + $0x130] sm:$0xfc] %vm992, %v2111
        %2117 = vst.msk [vmem:[#allocation2 + $0x140] sm:$0xff] %vm484, %v2113
        %v2118 = vld [vmem:[%s383 + $0xd2] sm:$0xff]
        %v2119 = vld [vmem:[%s383 + $0xda] sm:$0x3f]
        %v2122 = vrot.slane %v2118, 6
        %v2123 = vrot.slane %v2119, 6
        %v2124 = vsel %vm874, %v2122, %v2123
        %2125 = vrot.lane.b32.xlu0 %v2122, 8
        %v2126 = vpop.permute.xlu0 %2125
        %2127 = vrot.lane.b32.xlu0 %v2124, 8
        %v2128 = vpop.permute.xlu0 %2127
        %2131 = vst.msk [vmem:[#allocation2 + $0x130] sm:$0xfc] %vm1008, %v2126
        %2132 = vst.msk [vmem:[#allocation2 + $0x140] sm:$0xff] %vm498, %v2128
        %v2133 = vld [vmem:[%s383 + $0xc0] sm:$0xff]
        %v2134 = vld [vmem:[%s383 + $0xc8] sm:$0x3f]
        %2135 = vst.msk [vmem:[#allocation2 + $0x150] sm:$0xff] %vm386, %v2133
        %2136 = vst.msk [vmem:[#allocation2 + $0x160] sm:$0x3f] %vm388, %v2134
        %v2137 = vld [vmem:[%s383 + $0xc1] sm:$0xff]
        %v2138 = vld [vmem:[%s383 + $0xc9] sm:$0x3f]
        %2141 = vrot.lane.b32.xlu0 %v2137, 1
        %v2142 = vpop.permute.xlu0 %2141
        %2143 = vrot.lane.b32.xlu0 %v2138, 1
        %v2144 = vpop.permute.xlu0 %2143
        %2147 = vst.msk [vmem:[#allocation2 + $0x150] sm:$0xff] %vm400, %v2142
        %2148 = vst.msk [vmem:[#allocation2 + $0x160] sm:$0x3f] %vm402, %v2144
        %v2149 = vld [vmem:[%s383 + $0xc2] sm:$0xff]
        %v2150 = vld [vmem:[%s383 + $0xca] sm:$0x3f]
        %2153 = vrot.lane.b32.xlu0 %v2149, 2
        %v2154 = vpop.permute.xlu0 %2153
        %2155 = vrot.lane.b32.xlu0 %v2150, 2
        %v2156 = vpop.permute.xlu0 %2155
        %2159 = vst.msk [vmem:[#allocation2 + $0x150] sm:$0xff] %vm414, %v2154
        %2160 = vst.msk [vmem:[#allocation2 + $0x160] sm:$0x3f] %vm416, %v2156
        %v2161 = vld [vmem:[%s383 + $0xd0] sm:$0xff]
        %v2162 = vld [vmem:[%s383 + $0xd8] sm:$0x3f]
        %2165 = vrot.lane.b32.xlu0 %v2161, 3
        %v2166 = vpop.permute.xlu0 %2165
        %2167 = vrot.lane.b32.xlu0 %v2162, 3
        %v2168 = vpop.permute.xlu0 %2167
        %2171 = vst.msk [vmem:[#allocation2 + $0x150] sm:$0xff] %vm428, %v2166
        %2172 = vst.msk [vmem:[#allocation2 + $0x160] sm:$0x3f] %vm430, %v2168
        %v2173 = vld [vmem:[%s383 + $0xd1] sm:$0xff]
        %v2174 = vld [vmem:[%s383 + $0xd9] sm:$0x3f]
        %2177 = vrot.lane.b32.xlu0 %v2173, 4
        %v2178 = vpop.permute.xlu0 %2177
        %2179 = vrot.lane.b32.xlu0 %v2174, 4
        %v2180 = vpop.permute.xlu0 %2179
        %2183 = vst.msk [vmem:[#allocation2 + $0x150] sm:$0xff] %vm442, %v2178
        %2184 = vst.msk [vmem:[#allocation2 + $0x160] sm:$0x3f] %vm444, %v2180
        %v2185 = vld [vmem:[%s383 + $0xd2] sm:$0xff]
        %v2186 = vld [vmem:[%s383 + $0xda] sm:$0x3f]
        %2189 = vrot.lane.b32.xlu0 %v2185, 5
        %v2190 = vpop.permute.xlu0 %2189
        %2191 = vrot.lane.b32.xlu0 %v2186, 5
        %v2192 = vpop.permute.xlu0 %2191
        %2195 = vst.msk [vmem:[#allocation2 + $0x150] sm:$0xff] %vm456, %v2190
        %2196 = vst.msk [vmem:[#allocation2 + $0x160] sm:$0x3f] %vm458, %v2192
        %v2197 = vld [vmem:[%s383 + $0xe0] sm:$0xff]
        %v2198 = vld [vmem:[%s383 + $0xe8] sm:$0x3f]
        %2201 = vrot.lane.b32.xlu0 %v2197, 6
        %v2202 = vpop.permute.xlu0 %2201
        %2203 = vrot.lane.b32.xlu0 %v2198, 6
        %v2204 = vpop.permute.xlu0 %2203
        %2207 = vst.msk [vmem:[#allocation2 + $0x150] sm:$0xff] %vm470, %v2202
        %2208 = vst.msk [vmem:[#allocation2 + $0x160] sm:$0x3f] %vm472, %v2204
        %v2209 = vld [vmem:[%s383 + $0xe1] sm:$0xff]
        %v2210 = vld [vmem:[%s383 + $0xe9] sm:$0x3f]
        %2213 = vrot.lane.b32.xlu0 %v2209, 7
        %v2214 = vpop.permute.xlu0 %2213
        %2215 = vrot.lane.b32.xlu0 %v2210, 7
        %v2216 = vpop.permute.xlu0 %2215
        %2219 = vst.msk [vmem:[#allocation2 + $0x150] sm:$0xff] %vm484, %v2214
        %2220 = vst.msk [vmem:[#allocation2 + $0x160] sm:$0x3f] %vm486, %v2216
        %v2221 = vld [vmem:[%s383 + $0xe2] sm:$0xff]
        %v2222 = vld [vmem:[%s383 + $0xea] sm:$0x3f]
        %2225 = vrot.lane.b32.xlu0 %v2221, 8
        %v2226 = vpop.permute.xlu0 %2225
        %2227 = vrot.lane.b32.xlu0 %v2222, 8
        %v2228 = vpop.permute.xlu0 %2227
        %2231 = vst.msk [vmem:[#allocation2 + $0x150] sm:$0xff] %vm498, %v2226
        %2232 = vst.msk [vmem:[#allocation2 + $0x160] sm:$0x3f] %vm500, %v2228
        %v2233 = vld [vmem:[%s383 + $0xd0] sm:$0xff]
        %v2234 = vld [vmem:[%s383 + $0xd8] sm:$0x3f]
        %v2237 = vrot.slane %v2233, 2
        %v2238 = vrot.slane %v2234, 2
        %v2239 = vsel %vm506, %v2237, %v2238
        %2243 = vst.msk [vmem:[#allocation2 + $0x160] sm:$0xc0] %vm513, %v2237
        %2244 = vst.msk [vmem:[#allocation2 + $0x170] sm:$0xff] %vm386, %v2239
        %2245 = vst.msk [vmem:[#allocation2 + $0x180] sm:$0xf] %vm516, %v2238
        %v2246 = vld [vmem:[%s383 + $0xd1] sm:$0xff]
        %v2247 = vld [vmem:[%s383 + $0xd9] sm:$0x3f]
        %v2250 = vrot.slane %v2246, 2
        %v2251 = vrot.slane %v2247, 2
        %v2252 = vsel %vm506, %v2250, %v2251
        %2253 = vrot.lane.b32.xlu0 %v2250, 1
        %v2254 = vpop.permute.xlu0 %2253
        %2255 = vrot.lane.b32.xlu0 %v2252, 1
        %v2256 = vpop.permute.xlu0 %2255
        %2257 = vrot.lane.b32.xlu0 %v2251, 1
        %v2258 = vpop.permute.xlu0 %2257
        %2262 = vst.msk [vmem:[#allocation2 + $0x160] sm:$0xc0] %vm534, %v2254
        %2263 = vst.msk [vmem:[#allocation2 + $0x170] sm:$0xff] %vm400, %v2256
        %2264 = vst.msk [vmem:[#allocation2 + $0x180] sm:$0xf] %vm537, %v2258
        %v2265 = vld [vmem:[%s383 + $0xd2] sm:$0xff]
        %v2266 = vld [vmem:[%s383 + $0xda] sm:$0x3f]
        %v2269 = vrot.slane %v2265, 2
        %v2270 = vrot.slane %v2266, 2
        %v2271 = vsel %vm506, %v2269, %v2270
        %2272 = vrot.lane.b32.xlu0 %v2269, 2
        %v2273 = vpop.permute.xlu0 %2272
        %2274 = vrot.lane.b32.xlu0 %v2271, 2
        %v2275 = vpop.permute.xlu0 %2274
        %2276 = vrot.lane.b32.xlu0 %v2270, 2
        %v2277 = vpop.permute.xlu0 %2276
        %2281 = vst.msk [vmem:[#allocation2 + $0x160] sm:$0xc0] %vm555, %v2273
        %2282 = vst.msk [vmem:[#allocation2 + $0x170] sm:$0xff] %vm414, %v2275
        %2283 = vst.msk [vmem:[#allocation2 + $0x180] sm:$0xf] %vm558, %v2277
        %v2284 = vld [vmem:[%s383 + $0xe0] sm:$0xff]
        %v2285 = vld [vmem:[%s383 + $0xe8] sm:$0x3f]
        %v2288 = vrot.slane %v2284, 2
        %v2289 = vrot.slane %v2285, 2
        %v2290 = vsel %vm506, %v2288, %v2289
        %2291 = vrot.lane.b32.xlu0 %v2288, 3
        %v2292 = vpop.permute.xlu0 %2291
        %2293 = vrot.lane.b32.xlu0 %v2290, 3
        %v2294 = vpop.permute.xlu0 %2293
        %2295 = vrot.lane.b32.xlu0 %v2289, 3
        %v2296 = vpop.permute.xlu0 %2295
        %2300 = vst.msk [vmem:[#allocation2 + $0x160] sm:$0xc0] %vm576, %v2292
        %2301 = vst.msk [vmem:[#allocation2 + $0x170] sm:$0xff] %vm428, %v2294
        %2302 = vst.msk [vmem:[#allocation2 + $0x180] sm:$0xf] %vm579, %v2296
        %v2303 = vld [vmem:[%s383 + $0xe1] sm:$0xff]
        %v2304 = vld [vmem:[%s383 + $0xe9] sm:$0x3f]
        %v2307 = vrot.slane %v2303, 2
        %v2308 = vrot.slane %v2304, 2
        %v2309 = vsel %vm506, %v2307, %v2308
        %2310 = vrot.lane.b32.xlu0 %v2307, 4
        %v2311 = vpop.permute.xlu0 %2310
        %2312 = vrot.lane.b32.xlu0 %v2309, 4
        %v2313 = vpop.permute.xlu0 %2312
        %2314 = vrot.lane.b32.xlu0 %v2308, 4
        %v2315 = vpop.permute.xlu0 %2314
        %2319 = vst.msk [vmem:[#allocation2 + $0x160] sm:$0xc0] %vm597, %v2311
        %2320 = vst.msk [vmem:[#allocation2 + $0x170] sm:$0xff] %vm442, %v2313
        %2321 = vst.msk [vmem:[#allocation2 + $0x180] sm:$0xf] %vm600, %v2315
        %v2322 = vld [vmem:[%s383 + $0xe2] sm:$0xff]
        %v2323 = vld [vmem:[%s383 + $0xea] sm:$0x3f]
        %v2326 = vrot.slane %v2322, 2
        %v2327 = vrot.slane %v2323, 2
        %v2328 = vsel %vm506, %v2326, %v2327
        %2329 = vrot.lane.b32.xlu0 %v2326, 5
        %v2330 = vpop.permute.xlu0 %2329
        %2331 = vrot.lane.b32.xlu0 %v2328, 5
        %v2332 = vpop.permute.xlu0 %2331
        %2333 = vrot.lane.b32.xlu0 %v2327, 5
        %v2334 = vpop.permute.xlu0 %2333
        %2338 = vst.msk [vmem:[#allocation2 + $0x160] sm:$0xc0] %vm618, %v2330
        %2339 = vst.msk [vmem:[#allocation2 + $0x170] sm:$0xff] %vm456, %v2332
        %2340 = vst.msk [vmem:[#allocation2 + $0x180] sm:$0xf] %vm621, %v2334
        %v2341 = vld [vmem:[%s383 + $0xf0] sm:$0xff]
        %v2342 = vld [vmem:[%s383 + $0xf8] sm:$0x3f]
        %v2345 = vrot.slane %v2341, 2
        %v2346 = vrot.slane %v2342, 2
        %v2347 = vsel %vm506, %v2345, %v2346
        %2348 = vrot.lane.b32.xlu0 %v2345, 6
        %v2349 = vpop.permute.xlu0 %2348
        %2350 = vrot.lane.b32.xlu0 %v2347, 6
        %v2351 = vpop.permute.xlu0 %2350
        %2352 = vrot.lane.b32.xlu0 %v2346, 6
        %v2353 = vpop.permute.xlu0 %2352
        %2357 = vst.msk [vmem:[#allocation2 + $0x160] sm:$0xc0] %vm639, %v2349
        %2358 = vst.msk [vmem:[#allocation2 + $0x170] sm:$0xff] %vm470, %v2351
        %2359 = vst.msk [vmem:[#allocation2 + $0x180] sm:$0xf] %vm642, %v2353
        %v2360 = vld [vmem:[%s383 + $0xf1] sm:$0xff]
        %v2361 = vld [vmem:[%s383 + $0xf9] sm:$0x3f]
        %v2364 = vrot.slane %v2360, 2
        %v2365 = vrot.slane %v2361, 2
        %v2366 = vsel %vm506, %v2364, %v2365
        %2367 = vrot.lane.b32.xlu0 %v2364, 7
        %v2368 = vpop.permute.xlu0 %2367
        %2369 = vrot.lane.b32.xlu0 %v2366, 7
        %v2370 = vpop.permute.xlu0 %2369
        %2371 = vrot.lane.b32.xlu0 %v2365, 7
        %v2372 = vpop.permute.xlu0 %2371
        %2376 = vst.msk [vmem:[#allocation2 + $0x160] sm:$0xc0] %vm660, %v2368
        %2377 = vst.msk [vmem:[#allocation2 + $0x170] sm:$0xff] %vm484, %v2370
        %2378 = vst.msk [vmem:[#allocation2 + $0x180] sm:$0xf] %vm663, %v2372
        %v2379 = vld [vmem:[%s383 + $0xf2] sm:$0xff]
        %v2380 = vld [vmem:[%s383 + $0xfa] sm:$0x3f]
        %v2383 = vrot.slane %v2379, 2
        %v2384 = vrot.slane %v2380, 2
        %v2385 = vsel %vm506, %v2383, %v2384
        %2386 = vrot.lane.b32.xlu0 %v2383, 8
        %v2387 = vpop.permute.xlu0 %2386
        %2388 = vrot.lane.b32.xlu0 %v2385, 8
        %v2389 = vpop.permute.xlu0 %2388
        %2390 = vrot.lane.b32.xlu0 %v2384, 8
        %v2391 = vpop.permute.xlu0 %2390
        %2395 = vst.msk [vmem:[#allocation2 + $0x160] sm:$0xc0] %vm681, %v2387
        %2396 = vst.msk [vmem:[#allocation2 + $0x170] sm:$0xff] %vm498, %v2389
        %2397 = vst.msk [vmem:[#allocation2 + $0x180] sm:$0xf] %vm684, %v2391
        %v2398 = vld [vmem:[%s2] sm:$0x1]
        %v2399 = vld [vmem:[#allocation2] sm:$0xff]
        %v2400 = vld [vmem:[#allocation2 + $0x10] sm:$0xff]
        %v2401 = vld [vmem:[#allocation2 + $0x20] sm:$0xff]
        %v2402 = vld [vmem:[#allocation2 + $0x30] sm:$0xff]
        %v2403 = vld [vmem:[#allocation2 + $0x40] sm:$0xff]
        %v2404 = vld [vmem:[#allocation2 + $0x50] sm:$0xff]
        %v2405 = vld [vmem:[#allocation2 + $0x60] sm:$0xff]
        %v2406 = vld [vmem:[#allocation2 + $0x70] sm:$0xff]
        %v2407 = vld [vmem:[#allocation2 + $0x80] sm:$0xff]
        %v2408 = vld [vmem:[#allocation2 + $0x90] sm:$0xff]
        %v2409 = vld [vmem:[#allocation2 + $0xa0] sm:$0xff]
        %v2410 = vld [vmem:[#allocation2 + $0xb0] sm:$0xff]
        %v2411 = vld [vmem:[#allocation2 + $0xc0] sm:$0xff]
        %v2412 = vld [vmem:[#allocation2 + $0xd0] sm:$0xff]
        %v2413 = vld [vmem:[#allocation2 + $0xe0] sm:$0xff]
        %v2414 = vld [vmem:[#allocation2 + $0xf0] sm:$0xff]
        %v2415 = vld [vmem:[#allocation2 + $0x100] sm:$0xff]
        %v2416 = vld [vmem:[#allocation2 + $0x110] sm:$0xff]
        %v2417 = vld [vmem:[#allocation2 + $0x120] sm:$0xff]
        %v2418 = vld [vmem:[#allocation2 + $0x130] sm:$0xff]
        %v2419 = vld [vmem:[#allocation2 + $0x140] sm:$0xff]
        %v2420 = vld [vmem:[#allocation2 + $0x150] sm:$0xff]
        %v2421 = vld [vmem:[#allocation2 + $0x160] sm:$0xff]
        %v2422 = vld [vmem:[#allocation2 + $0x170] sm:$0xff]
        %v2423 = vld [vmem:[#allocation2 + $0x180] sm:$0xf]
        %v2424 = vld [vmem:[%s1] sm:$0x1]
        %2426 = vset.pattern.permute.xlu0 0
        %2427 = vperm.xlu0 %2426, %v2399
        %v2428 = vpop.permute.xlu0 %2427
        %2431 = vset.pattern.permute.xlu0 0
        %2432 = vperm.xlu0 %2431, %v2400
        %v2433 = vpop.permute.xlu0 %2432
        %2436 = vset.pattern.permute.xlu0 0
        %2437 = vperm.xlu0 %2436, %v2401
        %v2438 = vpop.permute.xlu0 %2437
        %2441 = vset.pattern.permute.xlu0 0
        %2442 = vperm.xlu0 %2441, %v2402
        %v2443 = vpop.permute.xlu0 %2442
        %2446 = vset.pattern.permute.xlu0 0
        %2447 = vperm.xlu0 %2446, %v2403
        %v2448 = vpop.permute.xlu0 %2447
        %2451 = vset.pattern.permute.xlu0 0
        %2452 = vperm.xlu0 %2451, %v2404
        %v2453 = vpop.permute.xlu0 %2452
        %2456 = vset.pattern.permute.xlu0 0
        %2457 = vperm.xlu0 %2456, %v2405
        %v2458 = vpop.permute.xlu0 %2457
        %2461 = vset.pattern.permute.xlu0 0
        %2462 = vperm.xlu0 %2461, %v2406
        %v2463 = vpop.permute.xlu0 %2462
        %2466 = vset.pattern.permute.xlu0 0
        %2467 = vperm.xlu0 %2466, %v2407
        %v2468 = vpop.permute.xlu0 %2467
        %2471 = vset.pattern.permute.xlu0 0
        %2472 = vperm.xlu0 %2471, %v2408
        %v2473 = vpop.permute.xlu0 %2472
        %2476 = vset.pattern.permute.xlu0 0
        %2477 = vperm.xlu0 %2476, %v2409
        %v2478 = vpop.permute.xlu0 %2477
        %2481 = vset.pattern.permute.xlu0 0
        %2482 = vperm.xlu0 %2481, %v2410
        %v2483 = vpop.permute.xlu0 %2482
        %2486 = vset.pattern.permute.xlu0 0
        %2487 = vperm.xlu0 %2486, %v2411
        %v2488 = vpop.permute.xlu0 %2487
        %2491 = vset.pattern.permute.xlu0 0
        %2492 = vperm.xlu0 %2491, %v2412
        %v2493 = vpop.permute.xlu0 %2492
        %2496 = vset.pattern.permute.xlu0 0
        %2497 = vperm.xlu0 %2496, %v2413
        %v2498 = vpop.permute.xlu0 %2497
        %2501 = vset.pattern.permute.xlu0 0
        %2502 = vperm.xlu0 %2501, %v2414
        %v2503 = vpop.permute.xlu0 %2502
        %2506 = vset.pattern.permute.xlu0 0
        %2507 = vperm.xlu0 %2506, %v2415
        %v2508 = vpop.permute.xlu0 %2507
        %2511 = vset.pattern.permute.xlu0 0
        %2512 = vperm.xlu0 %2511, %v2416
        %v2513 = vpop.permute.xlu0 %2512
        %2516 = vset.pattern.permute.xlu0 0
        %2517 = vperm.xlu0 %2516, %v2417
        %v2518 = vpop.permute.xlu0 %2517
        %2521 = vset.pattern.permute.xlu0 0
        %2522 = vperm.xlu0 %2521, %v2418
        %v2523 = vpop.permute.xlu0 %2522
        %2526 = vset.pattern.permute.xlu0 0
        %2527 = vperm.xlu0 %2526, %v2419
        %v2528 = vpop.permute.xlu0 %2527
        %2531 = vset.pattern.permute.xlu0 0
        %2532 = vperm.xlu0 %2531, %v2420
        %v2533 = vpop.permute.xlu0 %2532
        %2536 = vset.pattern.permute.xlu0 0
        %2537 = vperm.xlu0 %2536, %v2421
        %v2538 = vpop.permute.xlu0 %2537
        %2541 = vset.pattern.permute.xlu0 0
        %2542 = vperm.xlu0 %2541, %v2422
        %v2543 = vpop.permute.xlu0 %2542
        %2546 = vset.pattern.permute.xlu0 0
        %2547 = vperm.xlu0 %2546, %v2423
        %v2548 = vpop.permute.xlu0 %2547
        %v2550 = vlaneseq
        %v2551 = vshrl.u32 %v2550, 7
        %v2552 = vsub.s32 0, %v2551
        %v2553 = vrot.slane %v2424, %v2552
        %v2554 = vmul.f32 %v2428, %v2553
        %v2555 = vmul.f32 %v2433, %v2553
        %v2556 = vmul.f32 %v2438, %v2553
        %v2557 = vmul.f32 %v2443, %v2553
        %v2558 = vmul.f32 %v2448, %v2553
        %v2559 = vmul.f32 %v2453, %v2553
        %v2560 = vmul.f32 %v2458, %v2553
        %v2561 = vmul.f32 %v2463, %v2553
        %v2562 = vmul.f32 %v2468, %v2553
        %v2563 = vmul.f32 %v2473, %v2553
        %v2564 = vmul.f32 %v2478, %v2553
        %v2565 = vmul.f32 %v2483, %v2553
        %v2566 = vmul.f32 %v2488, %v2553
        %v2567 = vmul.f32 %v2493, %v2553
        %v2568 = vmul.f32 %v2498, %v2553
        %v2569 = vmul.f32 %v2503, %v2553
        %v2570 = vmul.f32 %v2508, %v2553
        %v2571 = vmul.f32 %v2513, %v2553
        %v2572 = vmul.f32 %v2518, %v2553
        %v2573 = vmul.f32 %v2523, %v2553
        %v2574 = vmul.f32 %v2528, %v2553
        %v2575 = vmul.f32 %v2533, %v2553
        %v2576 = vmul.f32 %v2538, %v2553
        %v2577 = vmul.f32 %v2543, %v2553
        %v2578 = vmul.f32 %v2548, %v2553
        %v2580 = vlaneseq
        %v2581 = vshrl.u32 %v2580, 7
        %v2582 = vsub.s32 0, %v2581
        %v2583 = vrot.slane %v2398, %v2582
        %v2585 = vadd.f32 %v2583, %v2554
        %v2586 = vadd.f32 %v2583, %v2555
        %v2587 = vadd.f32 %v2583, %v2556
        %v2588 = vadd.f32 %v2583, %v2557
        %v2589 = vadd.f32 %v2583, %v2558
        %v2590 = vadd.f32 %v2583, %v2559
        %v2591 = vadd.f32 %v2583, %v2560
        %v2592 = vadd.f32 %v2583, %v2561
        %v2593 = vadd.f32 %v2583, %v2562
        %v2594 = vadd.f32 %v2583, %v2563
        %v2595 = vadd.f32 %v2583, %v2564
        %v2596 = vadd.f32 %v2583, %v2565
        %v2597 = vadd.f32 %v2583, %v2566
        %v2598 = vadd.f32 %v2583, %v2567
        %v2599 = vadd.f32 %v2583, %v2568
        %v2600 = vadd.f32 %v2583, %v2569
        %v2601 = vadd.f32 %v2583, %v2570
        %v2602 = vadd.f32 %v2583, %v2571
        %v2603 = vadd.f32 %v2583, %v2572
        %v2604 = vadd.f32 %v2583, %v2573
        %v2605 = vadd.f32 %v2583, %v2574
        %v2606 = vadd.f32 %v2583, %v2575
        %v2607 = vadd.f32 %v2583, %v2576
        %v2608 = vadd.f32 %v2583, %v2577
        %v2609 = vadd.f32 %v2583, %v2578
        %v2610 = vld [vmem:[%s1 + $0x1] sm:$0x1]
        %2611 = vset.pattern.permute.xlu0 1
        %2612 = vperm.xlu0 %2611, %v2399
        %v2613 = vpop.permute.xlu0 %2612
        %2615 = vset.pattern.permute.xlu0 1
        %2616 = vperm.xlu0 %2615, %v2400
        %v2617 = vpop.permute.xlu0 %2616
        %2619 = vset.pattern.permute.xlu0 1
        %2620 = vperm.xlu0 %2619, %v2401
        %v2621 = vpop.permute.xlu0 %2620
        %2623 = vset.pattern.permute.xlu0 1
        %2624 = vperm.xlu0 %2623, %v2402
        %v2625 = vpop.permute.xlu0 %2624
        %2627 = vset.pattern.permute.xlu0 1
        %2628 = vperm.xlu0 %2627, %v2403
        %v2629 = vpop.permute.xlu0 %2628
        %2631 = vset.pattern.permute.xlu0 1
        %2632 = vperm.xlu0 %2631, %v2404
        %v2633 = vpop.permute.xlu0 %2632
        %2635 = vset.pattern.permute.xlu0 1
        %2636 = vperm.xlu0 %2635, %v2405
        %v2637 = vpop.permute.xlu0 %2636
        %2639 = vset.pattern.permute.xlu0 1
        %2640 = vperm.xlu0 %2639, %v2406
        %v2641 = vpop.permute.xlu0 %2640
        %2643 = vset.pattern.permute.xlu0 1
        %2644 = vperm.xlu0 %2643, %v2407
        %v2645 = vpop.permute.xlu0 %2644
        %2647 = vset.pattern.permute.xlu0 1
        %2648 = vperm.xlu0 %2647, %v2408
        %v2649 = vpop.permute.xlu0 %2648
        %2651 = vset.pattern.permute.xlu0 1
        %2652 = vperm.xlu0 %2651, %v2409
        %v2653 = vpop.permute.xlu0 %2652
        %2655 = vset.pattern.permute.xlu0 1
        %2656 = vperm.xlu0 %2655, %v2410
        %v2657 = vpop.permute.xlu0 %2656
        %2659 = vset.pattern.permute.xlu0 1
        %2660 = vperm.xlu0 %2659, %v2411
        %v2661 = vpop.permute.xlu0 %2660
        %2663 = vset.pattern.permute.xlu0 1
        %2664 = vperm.xlu0 %2663, %v2412
        %v2665 = vpop.permute.xlu0 %2664
        %2667 = vset.pattern.permute.xlu0 1
        %2668 = vperm.xlu0 %2667, %v2413
        %v2669 = vpop.permute.xlu0 %2668
        %2671 = vset.pattern.permute.xlu0 1
        %2672 = vperm.xlu0 %2671, %v2414
        %v2673 = vpop.permute.xlu0 %2672
        %2675 = vset.pattern.permute.xlu0 1
        %2676 = vperm.xlu0 %2675, %v2415
        %v2677 = vpop.permute.xlu0 %2676
        %2679 = vset.pattern.permute.xlu0 1
        %2680 = vperm.xlu0 %2679, %v2416
        %v2681 = vpop.permute.xlu0 %2680
        %2683 = vset.pattern.permute.xlu0 1
        %2684 = vperm.xlu0 %2683, %v2417
        %v2685 = vpop.permute.xlu0 %2684
        %2687 = vset.pattern.permute.xlu0 1
        %2688 = vperm.xlu0 %2687, %v2418
        %v2689 = vpop.permute.xlu0 %2688
        %2691 = vset.pattern.permute.xlu0 1
        %2692 = vperm.xlu0 %2691, %v2419
        %v2693 = vpop.permute.xlu0 %2692
        %2695 = vset.pattern.permute.xlu0 1
        %2696 = vperm.xlu0 %2695, %v2420
        %v2697 = vpop.permute.xlu0 %2696
        %2699 = vset.pattern.permute.xlu0 1
        %2700 = vperm.xlu0 %2699, %v2421
        %v2701 = vpop.permute.xlu0 %2700
        %2703 = vset.pattern.permute.xlu0 1
        %2704 = vperm.xlu0 %2703, %v2422
        %v2705 = vpop.permute.xlu0 %2704
        %2707 = vset.pattern.permute.xlu0 1
        %2708 = vperm.xlu0 %2707, %v2423
        %v2709 = vpop.permute.xlu0 %2708
        %v2711 = vlaneseq
        %v2712 = vshrl.u32 %v2711, 7
        %v2713 = vsub.s32 0, %v2712
        %v2714 = vrot.slane %v2610, %v2713
        %v2715 = vmul.f32 %v2613, %v2714
        %v2716 = vmul.f32 %v2617, %v2714
        %v2717 = vmul.f32 %v2621, %v2714
        %v2718 = vmul.f32 %v2625, %v2714
        %v2719 = vmul.f32 %v2629, %v2714
        %v2720 = vmul.f32 %v2633, %v2714
        %v2721 = vmul.f32 %v2637, %v2714
        %v2722 = vmul.f32 %v2641, %v2714
        %v2723 = vmul.f32 %v2645, %v2714
        %v2724 = vmul.f32 %v2649, %v2714
        %v2725 = vmul.f32 %v2653, %v2714
        %v2726 = vmul.f32 %v2657, %v2714
        %v2727 = vmul.f32 %v2661, %v2714
        %v2728 = vmul.f32 %v2665, %v2714
        %v2729 = vmul.f32 %v2669, %v2714
        %v2730 = vmul.f32 %v2673, %v2714
        %v2731 = vmul.f32 %v2677, %v2714
        %v2732 = vmul.f32 %v2681, %v2714
        %v2733 = vmul.f32 %v2685, %v2714
        %v2734 = vmul.f32 %v2689, %v2714
        %v2735 = vmul.f32 %v2693, %v2714
        %v2736 = vmul.f32 %v2697, %v2714
        %v2737 = vmul.f32 %v2701, %v2714
        %v2738 = vmul.f32 %v2705, %v2714
        %v2739 = vmul.f32 %v2709, %v2714
        %v2740 = vadd.f32 %v2585, %v2715
        %v2741 = vadd.f32 %v2586, %v2716
        %v2742 = vadd.f32 %v2587, %v2717
        %v2743 = vadd.f32 %v2588, %v2718
        %v2744 = vadd.f32 %v2589, %v2719
        %v2745 = vadd.f32 %v2590, %v2720
        %v2746 = vadd.f32 %v2591, %v2721
        %v2747 = vadd.f32 %v2592, %v2722
        %v2748 = vadd.f32 %v2593, %v2723
        %v2749 = vadd.f32 %v2594, %v2724
        %v2750 = vadd.f32 %v2595, %v2725
        %v2751 = vadd.f32 %v2596, %v2726
        %v2752 = vadd.f32 %v2597, %v2727
        %v2753 = vadd.f32 %v2598, %v2728
        %v2754 = vadd.f32 %v2599, %v2729
        %v2755 = vadd.f32 %v2600, %v2730
        %v2756 = vadd.f32 %v2601, %v2731
        %v2757 = vadd.f32 %v2602, %v2732
        %v2758 = vadd.f32 %v2603, %v2733
        %v2759 = vadd.f32 %v2604, %v2734
        %v2760 = vadd.f32 %v2605, %v2735
        %v2761 = vadd.f32 %v2606, %v2736
        %v2762 = vadd.f32 %v2607, %v2737
        %v2763 = vadd.f32 %v2608, %v2738
        %v2764 = vadd.f32 %v2609, %v2739
        %v2765 = vld [vmem:[%s1 + $0x2] sm:$0x1]
        %2766 = vset.pattern.permute.xlu0 2
        %2767 = vperm.xlu0 %2766, %v2399
        %v2768 = vpop.permute.xlu0 %2767
        %2770 = vset.pattern.permute.xlu0 2
        %2771 = vperm.xlu0 %2770, %v2400
        %v2772 = vpop.permute.xlu0 %2771
        %2774 = vset.pattern.permute.xlu0 2
        %2775 = vperm.xlu0 %2774, %v2401
        %v2776 = vpop.permute.xlu0 %2775
        %2778 = vset.pattern.permute.xlu0 2
        %2779 = vperm.xlu0 %2778, %v2402
        %v2780 = vpop.permute.xlu0 %2779
        %2782 = vset.pattern.permute.xlu0 2
        %2783 = vperm.xlu0 %2782, %v2403
        %v2784 = vpop.permute.xlu0 %2783
        %2786 = vset.pattern.permute.xlu0 2
        %2787 = vperm.xlu0 %2786, %v2404
        %v2788 = vpop.permute.xlu0 %2787
        %2790 = vset.pattern.permute.xlu0 2
        %2791 = vperm.xlu0 %2790, %v2405
        %v2792 = vpop.permute.xlu0 %2791
        %2794 = vset.pattern.permute.xlu0 2
        %2795 = vperm.xlu0 %2794, %v2406
        %v2796 = vpop.permute.xlu0 %2795
        %2798 = vset.pattern.permute.xlu0 2
        %2799 = vperm.xlu0 %2798, %v2407
        %v2800 = vpop.permute.xlu0 %2799
        %2802 = vset.pattern.permute.xlu0 2
        %2803 = vperm.xlu0 %2802, %v2408
        %v2804 = vpop.permute.xlu0 %2803
        %2806 = vset.pattern.permute.xlu0 2
        %2807 = vperm.xlu0 %2806, %v2409
        %v2808 = vpop.permute.xlu0 %2807
        %2810 = vset.pattern.permute.xlu0 2
        %2811 = vperm.xlu0 %2810, %v2410
        %v2812 = vpop.permute.xlu0 %2811
        %2814 = vset.pattern.permute.xlu0 2
        %2815 = vperm.xlu0 %2814, %v2411
        %v2816 = vpop.permute.xlu0 %2815
        %2818 = vset.pattern.permute.xlu0 2
        %2819 = vperm.xlu0 %2818, %v2412
        %v2820 = vpop.permute.xlu0 %2819
        %2822 = vset.pattern.permute.xlu0 2
        %2823 = vperm.xlu0 %2822, %v2413
        %v2824 = vpop.permute.xlu0 %2823
        %2826 = vset.pattern.permute.xlu0 2
        %2827 = vperm.xlu0 %2826, %v2414
        %v2828 = vpop.permute.xlu0 %2827
        %2830 = vset.pattern.permute.xlu0 2
        %2831 = vperm.xlu0 %2830, %v2415
        %v2832 = vpop.permute.xlu0 %2831
        %2834 = vset.pattern.permute.xlu0 2
        %2835 = vperm.xlu0 %2834, %v2416
        %v2836 = vpop.permute.xlu0 %2835
        %2838 = vset.pattern.permute.xlu0 2
        %2839 = vperm.xlu0 %2838, %v2417
        %v2840 = vpop.permute.xlu0 %2839
        %2842 = vset.pattern.permute.xlu0 2
        %2843 = vperm.xlu0 %2842, %v2418
        %v2844 = vpop.permute.xlu0 %2843
        %2846 = vset.pattern.permute.xlu0 2
        %2847 = vperm.xlu0 %2846, %v2419
        %v2848 = vpop.permute.xlu0 %2847
        %2850 = vset.pattern.permute.xlu0 2
        %2851 = vperm.xlu0 %2850, %v2420
        %v2852 = vpop.permute.xlu0 %2851
        %2854 = vset.pattern.permute.xlu0 2
        %2855 = vperm.xlu0 %2854, %v2421
        %v2856 = vpop.permute.xlu0 %2855
        %2858 = vset.pattern.permute.xlu0 2
        %2859 = vperm.xlu0 %2858, %v2422
        %v2860 = vpop.permute.xlu0 %2859
        %2862 = vset.pattern.permute.xlu0 2
        %2863 = vperm.xlu0 %2862, %v2423
        %v2864 = vpop.permute.xlu0 %2863
        %v2866 = vlaneseq
        %v2867 = vshrl.u32 %v2866, 7
        %v2868 = vsub.s32 0, %v2867
        %v2869 = vrot.slane %v2765, %v2868
        %v2870 = vmul.f32 %v2768, %v2869
        %v2871 = vmul.f32 %v2772, %v2869
        %v2872 = vmul.f32 %v2776, %v2869
        %v2873 = vmul.f32 %v2780, %v2869
        %v2874 = vmul.f32 %v2784, %v2869
        %v2875 = vmul.f32 %v2788, %v2869
        %v2876 = vmul.f32 %v2792, %v2869
        %v2877 = vmul.f32 %v2796, %v2869
        %v2878 = vmul.f32 %v2800, %v2869
        %v2879 = vmul.f32 %v2804, %v2869
        %v2880 = vmul.f32 %v2808, %v2869
        %v2881 = vmul.f32 %v2812, %v2869
        %v2882 = vmul.f32 %v2816, %v2869
        %v2883 = vmul.f32 %v2820, %v2869
        %v2884 = vmul.f32 %v2824, %v2869
        %v2885 = vmul.f32 %v2828, %v2869
        %v2886 = vmul.f32 %v2832, %v2869
        %v2887 = vmul.f32 %v2836, %v2869
        %v2888 = vmul.f32 %v2840, %v2869
        %v2889 = vmul.f32 %v2844, %v2869
        %v2890 = vmul.f32 %v2848, %v2869
        %v2891 = vmul.f32 %v2852, %v2869
        %v2892 = vmul.f32 %v2856, %v2869
        %v2893 = vmul.f32 %v2860, %v2869
        %v2894 = vmul.f32 %v2864, %v2869
        %v2895 = vadd.f32 %v2740, %v2870
        %v2896 = vadd.f32 %v2741, %v2871
        %v2897 = vadd.f32 %v2742, %v2872
        %v2898 = vadd.f32 %v2743, %v2873
        %v2899 = vadd.f32 %v2744, %v2874
        %v2900 = vadd.f32 %v2745, %v2875
        %v2901 = vadd.f32 %v2746, %v2876
        %v2902 = vadd.f32 %v2747, %v2877
        %v2903 = vadd.f32 %v2748, %v2878
        %v2904 = vadd.f32 %v2749, %v2879
        %v2905 = vadd.f32 %v2750, %v2880
        %v2906 = vadd.f32 %v2751, %v2881
        %v2907 = vadd.f32 %v2752, %v2882
        %v2908 = vadd.f32 %v2753, %v2883
        %v2909 = vadd.f32 %v2754, %v2884
        %v2910 = vadd.f32 %v2755, %v2885
        %v2911 = vadd.f32 %v2756, %v2886
        %v2912 = vadd.f32 %v2757, %v2887
        %v2913 = vadd.f32 %v2758, %v2888
        %v2914 = vadd.f32 %v2759, %v2889
        %v2915 = vadd.f32 %v2760, %v2890
        %v2916 = vadd.f32 %v2761, %v2891
        %v2917 = vadd.f32 %v2762, %v2892
        %v2918 = vadd.f32 %v2763, %v2893
        %v2919 = vadd.f32 %v2764, %v2894
        %v2920 = vld [vmem:[%s1 + $0x3] sm:$0x1]
        %2921 = vset.pattern.permute.xlu0 3
        %2922 = vperm.xlu0 %2921, %v2399
        %v2923 = vpop.permute.xlu0 %2922
        %2925 = vset.pattern.permute.xlu0 3
        %2926 = vperm.xlu0 %2925, %v2400
        %v2927 = vpop.permute.xlu0 %2926
        %2929 = vset.pattern.permute.xlu0 3
        %2930 = vperm.xlu0 %2929, %v2401
        %v2931 = vpop.permute.xlu0 %2930
        %2933 = vset.pattern.permute.xlu0 3
        %2934 = vperm.xlu0 %2933, %v2402
        %v2935 = vpop.permute.xlu0 %2934
        %2937 = vset.pattern.permute.xlu0 3
        %2938 = vperm.xlu0 %2937, %v2403
        %v2939 = vpop.permute.xlu0 %2938
        %2941 = vset.pattern.permute.xlu0 3
        %2942 = vperm.xlu0 %2941, %v2404
        %v2943 = vpop.permute.xlu0 %2942
        %2945 = vset.pattern.permute.xlu0 3
        %2946 = vperm.xlu0 %2945, %v2405
        %v2947 = vpop.permute.xlu0 %2946
        %2949 = vset.pattern.permute.xlu0 3
        %2950 = vperm.xlu0 %2949, %v2406
        %v2951 = vpop.permute.xlu0 %2950
        %2953 = vset.pattern.permute.xlu0 3
        %2954 = vperm.xlu0 %2953, %v2407
        %v2955 = vpop.permute.xlu0 %2954
        %2957 = vset.pattern.permute.xlu0 3
        %2958 = vperm.xlu0 %2957, %v2408
        %v2959 = vpop.permute.xlu0 %2958
        %2961 = vset.pattern.permute.xlu0 3
        %2962 = vperm.xlu0 %2961, %v2409
        %v2963 = vpop.permute.xlu0 %2962
        %2965 = vset.pattern.permute.xlu0 3
        %2966 = vperm.xlu0 %2965, %v2410
        %v2967 = vpop.permute.xlu0 %2966
        %2969 = vset.pattern.permute.xlu0 3
        %2970 = vperm.xlu0 %2969, %v2411
        %v2971 = vpop.permute.xlu0 %2970
        %2973 = vset.pattern.permute.xlu0 3
        %2974 = vperm.xlu0 %2973, %v2412
        %v2975 = vpop.permute.xlu0 %2974
        %2977 = vset.pattern.permute.xlu0 3
        %2978 = vperm.xlu0 %2977, %v2413
        %v2979 = vpop.permute.xlu0 %2978
        %2981 = vset.pattern.permute.xlu0 3
        %2982 = vperm.xlu0 %2981, %v2414
        %v2983 = vpop.permute.xlu0 %2982
        %2985 = vset.pattern.permute.xlu0 3
        %2986 = vperm.xlu0 %2985, %v2415
        %v2987 = vpop.permute.xlu0 %2986
        %2989 = vset.pattern.permute.xlu0 3
        %2990 = vperm.xlu0 %2989, %v2416
        %v2991 = vpop.permute.xlu0 %2990
        %2993 = vset.pattern.permute.xlu0 3
        %2994 = vperm.xlu0 %2993, %v2417
        %v2995 = vpop.permute.xlu0 %2994
        %2997 = vset.pattern.permute.xlu0 3
        %2998 = vperm.xlu0 %2997, %v2418
        %v2999 = vpop.permute.xlu0 %2998
        %3001 = vset.pattern.permute.xlu0 3
        %3002 = vperm.xlu0 %3001, %v2419
        %v3003 = vpop.permute.xlu0 %3002
        %3005 = vset.pattern.permute.xlu0 3
        %3006 = vperm.xlu0 %3005, %v2420
        %v3007 = vpop.permute.xlu0 %3006
        %3009 = vset.pattern.permute.xlu0 3
        %3010 = vperm.xlu0 %3009, %v2421
        %v3011 = vpop.permute.xlu0 %3010
        %3013 = vset.pattern.permute.xlu0 3
        %3014 = vperm.xlu0 %3013, %v2422
        %v3015 = vpop.permute.xlu0 %3014
        %3017 = vset.pattern.permute.xlu0 3
        %3018 = vperm.xlu0 %3017, %v2423
        %v3019 = vpop.permute.xlu0 %3018
        %v3021 = vlaneseq
        %v3022 = vshrl.u32 %v3021, 7
        %v3023 = vsub.s32 0, %v3022
        %v3024 = vrot.slane %v2920, %v3023
        %v3025 = vmul.f32 %v2923, %v3024
        %v3026 = vmul.f32 %v2927, %v3024
        %v3027 = vmul.f32 %v2931, %v3024
        %v3028 = vmul.f32 %v2935, %v3024
        %v3029 = vmul.f32 %v2939, %v3024
        %v3030 = vmul.f32 %v2943, %v3024
        %v3031 = vmul.f32 %v2947, %v3024
        %v3032 = vmul.f32 %v2951, %v3024
        %v3033 = vmul.f32 %v2955, %v3024
        %v3034 = vmul.f32 %v2959, %v3024
        %v3035 = vmul.f32 %v2963, %v3024
        %v3036 = vmul.f32 %v2967, %v3024
        %v3037 = vmul.f32 %v2971, %v3024
        %v3038 = vmul.f32 %v2975, %v3024
        %v3039 = vmul.f32 %v2979, %v3024
        %v3040 = vmul.f32 %v2983, %v3024
        %v3041 = vmul.f32 %v2987, %v3024
        %v3042 = vmul.f32 %v2991, %v3024
        %v3043 = vmul.f32 %v2995, %v3024
        %v3044 = vmul.f32 %v2999, %v3024
        %v3045 = vmul.f32 %v3003, %v3024
        %v3046 = vmul.f32 %v3007, %v3024
        %v3047 = vmul.f32 %v3011, %v3024
        %v3048 = vmul.f32 %v3015, %v3024
        %v3049 = vmul.f32 %v3019, %v3024
        %v3050 = vadd.f32 %v2895, %v3025
        %v3051 = vadd.f32 %v2896, %v3026
        %v3052 = vadd.f32 %v2897, %v3027
        %v3053 = vadd.f32 %v2898, %v3028
        %v3054 = vadd.f32 %v2899, %v3029
        %v3055 = vadd.f32 %v2900, %v3030
        %v3056 = vadd.f32 %v2901, %v3031
        %v3057 = vadd.f32 %v2902, %v3032
        %v3058 = vadd.f32 %v2903, %v3033
        %v3059 = vadd.f32 %v2904, %v3034
        %v3060 = vadd.f32 %v2905, %v3035
        %v3061 = vadd.f32 %v2906, %v3036
        %v3062 = vadd.f32 %v2907, %v3037
        %v3063 = vadd.f32 %v2908, %v3038
        %v3064 = vadd.f32 %v2909, %v3039
        %v3065 = vadd.f32 %v2910, %v3040
        %v3066 = vadd.f32 %v2911, %v3041
        %v3067 = vadd.f32 %v2912, %v3042
        %v3068 = vadd.f32 %v2913, %v3043
        %v3069 = vadd.f32 %v2914, %v3044
        %v3070 = vadd.f32 %v2915, %v3045
        %v3071 = vadd.f32 %v2916, %v3046
        %v3072 = vadd.f32 %v2917, %v3047
        %v3073 = vadd.f32 %v2918, %v3048
        %v3074 = vadd.f32 %v2919, %v3049
        %v3075 = vld [vmem:[%s1 + $0x4] sm:$0x1]
        %3076 = vset.pattern.permute.xlu0 4
        %3077 = vperm.xlu0 %3076, %v2399
        %v3078 = vpop.permute.xlu0 %3077
        %3080 = vset.pattern.permute.xlu0 4
        %3081 = vperm.xlu0 %3080, %v2400
        %v3082 = vpop.permute.xlu0 %3081
        %3084 = vset.pattern.permute.xlu0 4
        %3085 = vperm.xlu0 %3084, %v2401
        %v3086 = vpop.permute.xlu0 %3085
        %3088 = vset.pattern.permute.xlu0 4
        %3089 = vperm.xlu0 %3088, %v2402
        %v3090 = vpop.permute.xlu0 %3089
        %3092 = vset.pattern.permute.xlu0 4
        %3093 = vperm.xlu0 %3092, %v2403
        %v3094 = vpop.permute.xlu0 %3093
        %3096 = vset.pattern.permute.xlu0 4
        %3097 = vperm.xlu0 %3096, %v2404
        %v3098 = vpop.permute.xlu0 %3097
        %3100 = vset.pattern.permute.xlu0 4
        %3101 = vperm.xlu0 %3100, %v2405
        %v3102 = vpop.permute.xlu0 %3101
        %3104 = vset.pattern.permute.xlu0 4
        %3105 = vperm.xlu0 %3104, %v2406
        %v3106 = vpop.permute.xlu0 %3105
        %3108 = vset.pattern.permute.xlu0 4
        %3109 = vperm.xlu0 %3108, %v2407
        %v3110 = vpop.permute.xlu0 %3109
        %3112 = vset.pattern.permute.xlu0 4
        %3113 = vperm.xlu0 %3112, %v2408
        %v3114 = vpop.permute.xlu0 %3113
        %3116 = vset.pattern.permute.xlu0 4
        %3117 = vperm.xlu0 %3116, %v2409
        %v3118 = vpop.permute.xlu0 %3117
        %3120 = vset.pattern.permute.xlu0 4
        %3121 = vperm.xlu0 %3120, %v2410
        %v3122 = vpop.permute.xlu0 %3121
        %3124 = vset.pattern.permute.xlu0 4
        %3125 = vperm.xlu0 %3124, %v2411
        %v3126 = vpop.permute.xlu0 %3125
        %3128 = vset.pattern.permute.xlu0 4
        %3129 = vperm.xlu0 %3128, %v2412
        %v3130 = vpop.permute.xlu0 %3129
        %3132 = vset.pattern.permute.xlu0 4
        %3133 = vperm.xlu0 %3132, %v2413
        %v3134 = vpop.permute.xlu0 %3133
        %3136 = vset.pattern.permute.xlu0 4
        %3137 = vperm.xlu0 %3136, %v2414
        %v3138 = vpop.permute.xlu0 %3137
        %3140 = vset.pattern.permute.xlu0 4
        %3141 = vperm.xlu0 %3140, %v2415
        %v3142 = vpop.permute.xlu0 %3141
        %3144 = vset.pattern.permute.xlu0 4
        %3145 = vperm.xlu0 %3144, %v2416
        %v3146 = vpop.permute.xlu0 %3145
        %3148 = vset.pattern.permute.xlu0 4
        %3149 = vperm.xlu0 %3148, %v2417
        %v3150 = vpop.permute.xlu0 %3149
        %3152 = vset.pattern.permute.xlu0 4
        %3153 = vperm.xlu0 %3152, %v2418
        %v3154 = vpop.permute.xlu0 %3153
        %3156 = vset.pattern.permute.xlu0 4
        %3157 = vperm.xlu0 %3156, %v2419
        %v3158 = vpop.permute.xlu0 %3157
        %3160 = vset.pattern.permute.xlu0 4
        %3161 = vperm.xlu0 %3160, %v2420
        %v3162 = vpop.permute.xlu0 %3161
        %3164 = vset.pattern.permute.xlu0 4
        %3165 = vperm.xlu0 %3164, %v2421
        %v3166 = vpop.permute.xlu0 %3165
        %3168 = vset.pattern.permute.xlu0 4
        %3169 = vperm.xlu0 %3168, %v2422
        %v3170 = vpop.permute.xlu0 %3169
        %3172 = vset.pattern.permute.xlu0 4
        %3173 = vperm.xlu0 %3172, %v2423
        %v3174 = vpop.permute.xlu0 %3173
        %v3176 = vlaneseq
        %v3177 = vshrl.u32 %v3176, 7
        %v3178 = vsub.s32 0, %v3177
        %v3179 = vrot.slane %v3075, %v3178
        %v3180 = vmul.f32 %v3078, %v3179
        %v3181 = vmul.f32 %v3082, %v3179
        %v3182 = vmul.f32 %v3086, %v3179
        %v3183 = vmul.f32 %v3090, %v3179
        %v3184 = vmul.f32 %v3094, %v3179
        %v3185 = vmul.f32 %v3098, %v3179
        %v3186 = vmul.f32 %v3102, %v3179
        %v3187 = vmul.f32 %v3106, %v3179
        %v3188 = vmul.f32 %v3110, %v3179
        %v3189 = vmul.f32 %v3114, %v3179
        %v3190 = vmul.f32 %v3118, %v3179
        %v3191 = vmul.f32 %v3122, %v3179
        %v3192 = vmul.f32 %v3126, %v3179
        %v3193 = vmul.f32 %v3130, %v3179
        %v3194 = vmul.f32 %v3134, %v3179
        %v3195 = vmul.f32 %v3138, %v3179
        %v3196 = vmul.f32 %v3142, %v3179
        %v3197 = vmul.f32 %v3146, %v3179
        %v3198 = vmul.f32 %v3150, %v3179
        %v3199 = vmul.f32 %v3154, %v3179
        %v3200 = vmul.f32 %v3158, %v3179
        %v3201 = vmul.f32 %v3162, %v3179
        %v3202 = vmul.f32 %v3166, %v3179
        %v3203 = vmul.f32 %v3170, %v3179
        %v3204 = vmul.f32 %v3174, %v3179
        %v3205 = vadd.f32 %v3050, %v3180
        %v3206 = vadd.f32 %v3051, %v3181
        %v3207 = vadd.f32 %v3052, %v3182
        %v3208 = vadd.f32 %v3053, %v3183
        %v3209 = vadd.f32 %v3054, %v3184
        %v3210 = vadd.f32 %v3055, %v3185
        %v3211 = vadd.f32 %v3056, %v3186
        %v3212 = vadd.f32 %v3057, %v3187
        %v3213 = vadd.f32 %v3058, %v3188
        %v3214 = vadd.f32 %v3059, %v3189
        %v3215 = vadd.f32 %v3060, %v3190
        %v3216 = vadd.f32 %v3061, %v3191
        %v3217 = vadd.f32 %v3062, %v3192
        %v3218 = vadd.f32 %v3063, %v3193
        %v3219 = vadd.f32 %v3064, %v3194
        %v3220 = vadd.f32 %v3065, %v3195
        %v3221 = vadd.f32 %v3066, %v3196
        %v3222 = vadd.f32 %v3067, %v3197
        %v3223 = vadd.f32 %v3068, %v3198
        %v3224 = vadd.f32 %v3069, %v3199
        %v3225 = vadd.f32 %v3070, %v3200
        %v3226 = vadd.f32 %v3071, %v3201
        %v3227 = vadd.f32 %v3072, %v3202
        %v3228 = vadd.f32 %v3073, %v3203
        %v3229 = vadd.f32 %v3074, %v3204
        %v3230 = vld [vmem:[%s1 + $0x5] sm:$0x1]
        %3231 = vset.pattern.permute.xlu0 5
        %3232 = vperm.xlu0 %3231, %v2399
        %v3233 = vpop.permute.xlu0 %3232
        %3235 = vset.pattern.permute.xlu0 5
        %3236 = vperm.xlu0 %3235, %v2400
        %v3237 = vpop.permute.xlu0 %3236
        %3239 = vset.pattern.permute.xlu0 5
        %3240 = vperm.xlu0 %3239, %v2401
        %v3241 = vpop.permute.xlu0 %3240
        %3243 = vset.pattern.permute.xlu0 5
        %3244 = vperm.xlu0 %3243, %v2402
        %v3245 = vpop.permute.xlu0 %3244
        %3247 = vset.pattern.permute.xlu0 5
        %3248 = vperm.xlu0 %3247, %v2403
        %v3249 = vpop.permute.xlu0 %3248
        %3251 = vset.pattern.permute.xlu0 5
        %3252 = vperm.xlu0 %3251, %v2404
        %v3253 = vpop.permute.xlu0 %3252
        %3255 = vset.pattern.permute.xlu0 5
        %3256 = vperm.xlu0 %3255, %v2405
        %v3257 = vpop.permute.xlu0 %3256
        %3259 = vset.pattern.permute.xlu0 5
        %3260 = vperm.xlu0 %3259, %v2406
        %v3261 = vpop.permute.xlu0 %3260
        %3263 = vset.pattern.permute.xlu0 5
        %3264 = vperm.xlu0 %3263, %v2407
        %v3265 = vpop.permute.xlu0 %3264
        %3267 = vset.pattern.permute.xlu0 5
        %3268 = vperm.xlu0 %3267, %v2408
        %v3269 = vpop.permute.xlu0 %3268
        %3271 = vset.pattern.permute.xlu0 5
        %3272 = vperm.xlu0 %3271, %v2409
        %v3273 = vpop.permute.xlu0 %3272
        %3275 = vset.pattern.permute.xlu0 5
        %3276 = vperm.xlu0 %3275, %v2410
        %v3277 = vpop.permute.xlu0 %3276
        %3279 = vset.pattern.permute.xlu0 5
        %3280 = vperm.xlu0 %3279, %v2411
        %v3281 = vpop.permute.xlu0 %3280
        %3283 = vset.pattern.permute.xlu0 5
        %3284 = vperm.xlu0 %3283, %v2412
        %v3285 = vpop.permute.xlu0 %3284
        %3287 = vset.pattern.permute.xlu0 5
        %3288 = vperm.xlu0 %3287, %v2413
        %v3289 = vpop.permute.xlu0 %3288
        %3291 = vset.pattern.permute.xlu0 5
        %3292 = vperm.xlu0 %3291, %v2414
        %v3293 = vpop.permute.xlu0 %3292
        %3295 = vset.pattern.permute.xlu0 5
        %3296 = vperm.xlu0 %3295, %v2415
        %v3297 = vpop.permute.xlu0 %3296
        %3299 = vset.pattern.permute.xlu0 5
        %3300 = vperm.xlu0 %3299, %v2416
        %v3301 = vpop.permute.xlu0 %3300
        %3303 = vset.pattern.permute.xlu0 5
        %3304 = vperm.xlu0 %3303, %v2417
        %v3305 = vpop.permute.xlu0 %3304
        %3307 = vset.pattern.permute.xlu0 5
        %3308 = vperm.xlu0 %3307, %v2418
        %v3309 = vpop.permute.xlu0 %3308
        %3311 = vset.pattern.permute.xlu0 5
        %3312 = vperm.xlu0 %3311, %v2419
        %v3313 = vpop.permute.xlu0 %3312
        %3315 = vset.pattern.permute.xlu0 5
        %3316 = vperm.xlu0 %3315, %v2420
        %v3317 = vpop.permute.xlu0 %3316
        %3319 = vset.pattern.permute.xlu0 5
        %3320 = vperm.xlu0 %3319, %v2421
        %v3321 = vpop.permute.xlu0 %3320
        %3323 = vset.pattern.permute.xlu0 5
        %3324 = vperm.xlu0 %3323, %v2422
        %v3325 = vpop.permute.xlu0 %3324
        %3327 = vset.pattern.permute.xlu0 5
        %3328 = vperm.xlu0 %3327, %v2423
        %v3329 = vpop.permute.xlu0 %3328
        %v3331 = vlaneseq
        %v3332 = vshrl.u32 %v3331, 7
        %v3333 = vsub.s32 0, %v3332
        %v3334 = vrot.slane %v3230, %v3333
        %v3335 = vmul.f32 %v3233, %v3334
        %v3336 = vmul.f32 %v3237, %v3334
        %v3337 = vmul.f32 %v3241, %v3334
        %v3338 = vmul.f32 %v3245, %v3334
        %v3339 = vmul.f32 %v3249, %v3334
        %v3340 = vmul.f32 %v3253, %v3334
        %v3341 = vmul.f32 %v3257, %v3334
        %v3342 = vmul.f32 %v3261, %v3334
        %v3343 = vmul.f32 %v3265, %v3334
        %v3344 = vmul.f32 %v3269, %v3334
        %v3345 = vmul.f32 %v3273, %v3334
        %v3346 = vmul.f32 %v3277, %v3334
        %v3347 = vmul.f32 %v3281, %v3334
        %v3348 = vmul.f32 %v3285, %v3334
        %v3349 = vmul.f32 %v3289, %v3334
        %v3350 = vmul.f32 %v3293, %v3334
        %v3351 = vmul.f32 %v3297, %v3334
        %v3352 = vmul.f32 %v3301, %v3334
        %v3353 = vmul.f32 %v3305, %v3334
        %v3354 = vmul.f32 %v3309, %v3334
        %v3355 = vmul.f32 %v3313, %v3334
        %v3356 = vmul.f32 %v3317, %v3334
        %v3357 = vmul.f32 %v3321, %v3334
        %v3358 = vmul.f32 %v3325, %v3334
        %v3359 = vmul.f32 %v3329, %v3334
        %v3360 = vadd.f32 %v3205, %v3335
        %v3361 = vadd.f32 %v3206, %v3336
        %v3362 = vadd.f32 %v3207, %v3337
        %v3363 = vadd.f32 %v3208, %v3338
        %v3364 = vadd.f32 %v3209, %v3339
        %v3365 = vadd.f32 %v3210, %v3340
        %v3366 = vadd.f32 %v3211, %v3341
        %v3367 = vadd.f32 %v3212, %v3342
        %v3368 = vadd.f32 %v3213, %v3343
        %v3369 = vadd.f32 %v3214, %v3344
        %v3370 = vadd.f32 %v3215, %v3345
        %v3371 = vadd.f32 %v3216, %v3346
        %v3372 = vadd.f32 %v3217, %v3347
        %v3373 = vadd.f32 %v3218, %v3348
        %v3374 = vadd.f32 %v3219, %v3349
        %v3375 = vadd.f32 %v3220, %v3350
        %v3376 = vadd.f32 %v3221, %v3351
        %v3377 = vadd.f32 %v3222, %v3352
        %v3378 = vadd.f32 %v3223, %v3353
        %v3379 = vadd.f32 %v3224, %v3354
        %v3380 = vadd.f32 %v3225, %v3355
        %v3381 = vadd.f32 %v3226, %v3356
        %v3382 = vadd.f32 %v3227, %v3357
        %v3383 = vadd.f32 %v3228, %v3358
        %v3384 = vadd.f32 %v3229, %v3359
        %v3385 = vld [vmem:[%s1 + $0x6] sm:$0x1]
        %3386 = vset.pattern.permute.xlu0 6
        %3387 = vperm.xlu0 %3386, %v2399
        %v3388 = vpop.permute.xlu0 %3387
        %3390 = vset.pattern.permute.xlu0 6
        %3391 = vperm.xlu0 %3390, %v2400
        %v3392 = vpop.permute.xlu0 %3391
        %3394 = vset.pattern.permute.xlu0 6
        %3395 = vperm.xlu0 %3394, %v2401
        %v3396 = vpop.permute.xlu0 %3395
        %3398 = vset.pattern.permute.xlu0 6
        %3399 = vperm.xlu0 %3398, %v2402
        %v3400 = vpop.permute.xlu0 %3399
        %3402 = vset.pattern.permute.xlu0 6
        %3403 = vperm.xlu0 %3402, %v2403
        %v3404 = vpop.permute.xlu0 %3403
        %3406 = vset.pattern.permute.xlu0 6
        %3407 = vperm.xlu0 %3406, %v2404
        %v3408 = vpop.permute.xlu0 %3407
        %3410 = vset.pattern.permute.xlu0 6
        %3411 = vperm.xlu0 %3410, %v2405
        %v3412 = vpop.permute.xlu0 %3411
        %3414 = vset.pattern.permute.xlu0 6
        %3415 = vperm.xlu0 %3414, %v2406
        %v3416 = vpop.permute.xlu0 %3415
        %3418 = vset.pattern.permute.xlu0 6
        %3419 = vperm.xlu0 %3418, %v2407
        %v3420 = vpop.permute.xlu0 %3419
        %3422 = vset.pattern.permute.xlu0 6
        %3423 = vperm.xlu0 %3422, %v2408
        %v3424 = vpop.permute.xlu0 %3423
        %3426 = vset.pattern.permute.xlu0 6
        %3427 = vperm.xlu0 %3426, %v2409
        %v3428 = vpop.permute.xlu0 %3427
        %3430 = vset.pattern.permute.xlu0 6
        %3431 = vperm.xlu0 %3430, %v2410
        %v3432 = vpop.permute.xlu0 %3431
        %3434 = vset.pattern.permute.xlu0 6
        %3435 = vperm.xlu0 %3434, %v2411
        %v3436 = vpop.permute.xlu0 %3435
        %3438 = vset.pattern.permute.xlu0 6
        %3439 = vperm.xlu0 %3438, %v2412
        %v3440 = vpop.permute.xlu0 %3439
        %3442 = vset.pattern.permute.xlu0 6
        %3443 = vperm.xlu0 %3442, %v2413
        %v3444 = vpop.permute.xlu0 %3443
        %3446 = vset.pattern.permute.xlu0 6
        %3447 = vperm.xlu0 %3446, %v2414
        %v3448 = vpop.permute.xlu0 %3447
        %3450 = vset.pattern.permute.xlu0 6
        %3451 = vperm.xlu0 %3450, %v2415
        %v3452 = vpop.permute.xlu0 %3451
        %3454 = vset.pattern.permute.xlu0 6
        %3455 = vperm.xlu0 %3454, %v2416
        %v3456 = vpop.permute.xlu0 %3455
        %3458 = vset.pattern.permute.xlu0 6
        %3459 = vperm.xlu0 %3458, %v2417
        %v3460 = vpop.permute.xlu0 %3459
        %3462 = vset.pattern.permute.xlu0 6
        %3463 = vperm.xlu0 %3462, %v2418
        %v3464 = vpop.permute.xlu0 %3463
        %3466 = vset.pattern.permute.xlu0 6
        %3467 = vperm.xlu0 %3466, %v2419
        %v3468 = vpop.permute.xlu0 %3467
        %3470 = vset.pattern.permute.xlu0 6
        %3471 = vperm.xlu0 %3470, %v2420
        %v3472 = vpop.permute.xlu0 %3471
        %3474 = vset.pattern.permute.xlu0 6
        %3475 = vperm.xlu0 %3474, %v2421
        %v3476 = vpop.permute.xlu0 %3475
        %3478 = vset.pattern.permute.xlu0 6
        %3479 = vperm.xlu0 %3478, %v2422
        %v3480 = vpop.permute.xlu0 %3479
        %3482 = vset.pattern.permute.xlu0 6
        %3483 = vperm.xlu0 %3482, %v2423
        %v3484 = vpop.permute.xlu0 %3483
        %v3486 = vlaneseq
        %v3487 = vshrl.u32 %v3486, 7
        %v3488 = vsub.s32 0, %v3487
        %v3489 = vrot.slane %v3385, %v3488
        %v3490 = vmul.f32 %v3388, %v3489
        %v3491 = vmul.f32 %v3392, %v3489
        %v3492 = vmul.f32 %v3396, %v3489
        %v3493 = vmul.f32 %v3400, %v3489
        %v3494 = vmul.f32 %v3404, %v3489
        %v3495 = vmul.f32 %v3408, %v3489
        %v3496 = vmul.f32 %v3412, %v3489
        %v3497 = vmul.f32 %v3416, %v3489
        %v3498 = vmul.f32 %v3420, %v3489
        %v3499 = vmul.f32 %v3424, %v3489
        %v3500 = vmul.f32 %v3428, %v3489
        %v3501 = vmul.f32 %v3432, %v3489
        %v3502 = vmul.f32 %v3436, %v3489
        %v3503 = vmul.f32 %v3440, %v3489
        %v3504 = vmul.f32 %v3444, %v3489
        %v3505 = vmul.f32 %v3448, %v3489
        %v3506 = vmul.f32 %v3452, %v3489
        %v3507 = vmul.f32 %v3456, %v3489
        %v3508 = vmul.f32 %v3460, %v3489
        %v3509 = vmul.f32 %v3464, %v3489
        %v3510 = vmul.f32 %v3468, %v3489
        %v3511 = vmul.f32 %v3472, %v3489
        %v3512 = vmul.f32 %v3476, %v3489
        %v3513 = vmul.f32 %v3480, %v3489
        %v3514 = vmul.f32 %v3484, %v3489
        %v3515 = vadd.f32 %v3360, %v3490
        %v3516 = vadd.f32 %v3361, %v3491
        %v3517 = vadd.f32 %v3362, %v3492
        %v3518 = vadd.f32 %v3363, %v3493
        %v3519 = vadd.f32 %v3364, %v3494
        %v3520 = vadd.f32 %v3365, %v3495
        %v3521 = vadd.f32 %v3366, %v3496
        %v3522 = vadd.f32 %v3367, %v3497
        %v3523 = vadd.f32 %v3368, %v3498
        %v3524 = vadd.f32 %v3369, %v3499
        %v3525 = vadd.f32 %v3370, %v3500
        %v3526 = vadd.f32 %v3371, %v3501
        %v3527 = vadd.f32 %v3372, %v3502
        %v3528 = vadd.f32 %v3373, %v3503
        %v3529 = vadd.f32 %v3374, %v3504
        %v3530 = vadd.f32 %v3375, %v3505
        %v3531 = vadd.f32 %v3376, %v3506
        %v3532 = vadd.f32 %v3377, %v3507
        %v3533 = vadd.f32 %v3378, %v3508
        %v3534 = vadd.f32 %v3379, %v3509
        %v3535 = vadd.f32 %v3380, %v3510
        %v3536 = vadd.f32 %v3381, %v3511
        %v3537 = vadd.f32 %v3382, %v3512
        %v3538 = vadd.f32 %v3383, %v3513
        %v3539 = vadd.f32 %v3384, %v3514
        %v3540 = vld [vmem:[%s1 + $0x7] sm:$0x1]
        %3541 = vset.pattern.permute.xlu0 7
        %3542 = vperm.xlu0 %3541, %v2399
        %v3543 = vpop.permute.xlu0 %3542
        %3545 = vset.pattern.permute.xlu0 7
        %3546 = vperm.xlu0 %3545, %v2400
        %v3547 = vpop.permute.xlu0 %3546
        %3549 = vset.pattern.permute.xlu0 7
        %3550 = vperm.xlu0 %3549, %v2401
        %v3551 = vpop.permute.xlu0 %3550
        %3553 = vset.pattern.permute.xlu0 7
        %3554 = vperm.xlu0 %3553, %v2402
        %v3555 = vpop.permute.xlu0 %3554
        %3557 = vset.pattern.permute.xlu0 7
        %3558 = vperm.xlu0 %3557, %v2403
        %v3559 = vpop.permute.xlu0 %3558
        %3561 = vset.pattern.permute.xlu0 7
        %3562 = vperm.xlu0 %3561, %v2404
        %v3563 = vpop.permute.xlu0 %3562
        %3565 = vset.pattern.permute.xlu0 7
        %3566 = vperm.xlu0 %3565, %v2405
        %v3567 = vpop.permute.xlu0 %3566
        %3569 = vset.pattern.permute.xlu0 7
        %3570 = vperm.xlu0 %3569, %v2406
        %v3571 = vpop.permute.xlu0 %3570
        %3573 = vset.pattern.permute.xlu0 7
        %3574 = vperm.xlu0 %3573, %v2407
        %v3575 = vpop.permute.xlu0 %3574
        %3577 = vset.pattern.permute.xlu0 7
        %3578 = vperm.xlu0 %3577, %v2408
        %v3579 = vpop.permute.xlu0 %3578
        %3581 = vset.pattern.permute.xlu0 7
        %3582 = vperm.xlu0 %3581, %v2409
        %v3583 = vpop.permute.xlu0 %3582
        %3585 = vset.pattern.permute.xlu0 7
        %3586 = vperm.xlu0 %3585, %v2410
        %v3587 = vpop.permute.xlu0 %3586
        %3589 = vset.pattern.permute.xlu0 7
        %3590 = vperm.xlu0 %3589, %v2411
        %v3591 = vpop.permute.xlu0 %3590
        %3593 = vset.pattern.permute.xlu0 7
        %3594 = vperm.xlu0 %3593, %v2412
        %v3595 = vpop.permute.xlu0 %3594
        %3597 = vset.pattern.permute.xlu0 7
        %3598 = vperm.xlu0 %3597, %v2413
        %v3599 = vpop.permute.xlu0 %3598
        %3601 = vset.pattern.permute.xlu0 7
        %3602 = vperm.xlu0 %3601, %v2414
        %v3603 = vpop.permute.xlu0 %3602
        %3605 = vset.pattern.permute.xlu0 7
        %3606 = vperm.xlu0 %3605, %v2415
        %v3607 = vpop.permute.xlu0 %3606
        %3609 = vset.pattern.permute.xlu0 7
        %3610 = vperm.xlu0 %3609, %v2416
        %v3611 = vpop.permute.xlu0 %3610
        %3613 = vset.pattern.permute.xlu0 7
        %3614 = vperm.xlu0 %3613, %v2417
        %v3615 = vpop.permute.xlu0 %3614
        %3617 = vset.pattern.permute.xlu0 7
        %3618 = vperm.xlu0 %3617, %v2418
        %v3619 = vpop.permute.xlu0 %3618
        %3621 = vset.pattern.permute.xlu0 7
        %3622 = vperm.xlu0 %3621, %v2419
        %v3623 = vpop.permute.xlu0 %3622
        %3625 = vset.pattern.permute.xlu0 7
        %3626 = vperm.xlu0 %3625, %v2420
        %v3627 = vpop.permute.xlu0 %3626
        %3629 = vset.pattern.permute.xlu0 7
        %3630 = vperm.xlu0 %3629, %v2421
        %v3631 = vpop.permute.xlu0 %3630
        %3633 = vset.pattern.permute.xlu0 7
        %3634 = vperm.xlu0 %3633, %v2422
        %v3635 = vpop.permute.xlu0 %3634
        %3637 = vset.pattern.permute.xlu0 7
        %3638 = vperm.xlu0 %3637, %v2423
        %v3639 = vpop.permute.xlu0 %3638
        %v3641 = vlaneseq
        %v3642 = vshrl.u32 %v3641, 7
        %v3643 = vsub.s32 0, %v3642
        %v3644 = vrot.slane %v3540, %v3643
        %v3645 = vmul.f32 %v3543, %v3644
        %v3646 = vmul.f32 %v3547, %v3644
        %v3647 = vmul.f32 %v3551, %v3644
        %v3648 = vmul.f32 %v3555, %v3644
        %v3649 = vmul.f32 %v3559, %v3644
        %v3650 = vmul.f32 %v3563, %v3644
        %v3651 = vmul.f32 %v3567, %v3644
        %v3652 = vmul.f32 %v3571, %v3644
        %v3653 = vmul.f32 %v3575, %v3644
        %v3654 = vmul.f32 %v3579, %v3644
        %v3655 = vmul.f32 %v3583, %v3644
        %v3656 = vmul.f32 %v3587, %v3644
        %v3657 = vmul.f32 %v3591, %v3644
        %v3658 = vmul.f32 %v3595, %v3644
        %v3659 = vmul.f32 %v3599, %v3644
        %v3660 = vmul.f32 %v3603, %v3644
        %v3661 = vmul.f32 %v3607, %v3644
        %v3662 = vmul.f32 %v3611, %v3644
        %v3663 = vmul.f32 %v3615, %v3644
        %v3664 = vmul.f32 %v3619, %v3644
        %v3665 = vmul.f32 %v3623, %v3644
        %v3666 = vmul.f32 %v3627, %v3644
        %v3667 = vmul.f32 %v3631, %v3644
        %v3668 = vmul.f32 %v3635, %v3644
        %v3669 = vmul.f32 %v3639, %v3644
        %v3670 = vadd.f32 %v3515, %v3645
        %v3671 = vadd.f32 %v3516, %v3646
        %v3672 = vadd.f32 %v3517, %v3647
        %v3673 = vadd.f32 %v3518, %v3648
        %v3674 = vadd.f32 %v3519, %v3649
        %v3675 = vadd.f32 %v3520, %v3650
        %v3676 = vadd.f32 %v3521, %v3651
        %v3677 = vadd.f32 %v3522, %v3652
        %v3678 = vadd.f32 %v3523, %v3653
        %v3679 = vadd.f32 %v3524, %v3654
        %v3680 = vadd.f32 %v3525, %v3655
        %v3681 = vadd.f32 %v3526, %v3656
        %v3682 = vadd.f32 %v3527, %v3657
        %v3683 = vadd.f32 %v3528, %v3658
        %v3684 = vadd.f32 %v3529, %v3659
        %v3685 = vadd.f32 %v3530, %v3660
        %v3686 = vadd.f32 %v3531, %v3661
        %v3687 = vadd.f32 %v3532, %v3662
        %v3688 = vadd.f32 %v3533, %v3663
        %v3689 = vadd.f32 %v3534, %v3664
        %v3690 = vadd.f32 %v3535, %v3665
        %v3691 = vadd.f32 %v3536, %v3666
        %v3692 = vadd.f32 %v3537, %v3667
        %v3693 = vadd.f32 %v3538, %v3668
        %v3694 = vadd.f32 %v3539, %v3669
        %v3695 = vld [vmem:[%s1 + $0x8] sm:$0x1]
        %3696 = vset.pattern.permute.xlu0 8
        %3697 = vperm.xlu0 %3696, %v2399
        %v3698 = vpop.permute.xlu0 %3697
        %3700 = vset.pattern.permute.xlu0 8
        %3701 = vperm.xlu0 %3700, %v2400
        %v3702 = vpop.permute.xlu0 %3701
        %3704 = vset.pattern.permute.xlu0 8
        %3705 = vperm.xlu0 %3704, %v2401
        %v3706 = vpop.permute.xlu0 %3705
        %3708 = vset.pattern.permute.xlu0 8
        %3709 = vperm.xlu0 %3708, %v2402
        %v3710 = vpop.permute.xlu0 %3709
        %3712 = vset.pattern.permute.xlu0 8
        %3713 = vperm.xlu0 %3712, %v2403
        %v3714 = vpop.permute.xlu0 %3713
        %3716 = vset.pattern.permute.xlu0 8
        %3717 = vperm.xlu0 %3716, %v2404
        %v3718 = vpop.permute.xlu0 %3717
        %3720 = vset.pattern.permute.xlu0 8
        %3721 = vperm.xlu0 %3720, %v2405
        %v3722 = vpop.permute.xlu0 %3721
        %3724 = vset.pattern.permute.xlu0 8
        %3725 = vperm.xlu0 %3724, %v2406
        %v3726 = vpop.permute.xlu0 %3725
        %3728 = vset.pattern.permute.xlu0 8
        %3729 = vperm.xlu0 %3728, %v2407
        %v3730 = vpop.permute.xlu0 %3729
        %3732 = vset.pattern.permute.xlu0 8
        %3733 = vperm.xlu0 %3732, %v2408
        %v3734 = vpop.permute.xlu0 %3733
        %3736 = vset.pattern.permute.xlu0 8
        %3737 = vperm.xlu0 %3736, %v2409
        %v3738 = vpop.permute.xlu0 %3737
        %3740 = vset.pattern.permute.xlu0 8
        %3741 = vperm.xlu0 %3740, %v2410
        %v3742 = vpop.permute.xlu0 %3741
        %3744 = vset.pattern.permute.xlu0 8
        %3745 = vperm.xlu0 %3744, %v2411
        %v3746 = vpop.permute.xlu0 %3745
        %3748 = vset.pattern.permute.xlu0 8
        %3749 = vperm.xlu0 %3748, %v2412
        %v3750 = vpop.permute.xlu0 %3749
        %3752 = vset.pattern.permute.xlu0 8
        %3753 = vperm.xlu0 %3752, %v2413
        %v3754 = vpop.permute.xlu0 %3753
        %3756 = vset.pattern.permute.xlu0 8
        %3757 = vperm.xlu0 %3756, %v2414
        %v3758 = vpop.permute.xlu0 %3757
        %3760 = vset.pattern.permute.xlu0 8
        %3761 = vperm.xlu0 %3760, %v2415
        %v3762 = vpop.permute.xlu0 %3761
        %3764 = vset.pattern.permute.xlu0 8
        %3765 = vperm.xlu0 %3764, %v2416
        %v3766 = vpop.permute.xlu0 %3765
        %3768 = vset.pattern.permute.xlu0 8
        %3769 = vperm.xlu0 %3768, %v2417
        %v3770 = vpop.permute.xlu0 %3769
        %3772 = vset.pattern.permute.xlu0 8
        %3773 = vperm.xlu0 %3772, %v2418
        %v3774 = vpop.permute.xlu0 %3773
        %3776 = vset.pattern.permute.xlu0 8
        %3777 = vperm.xlu0 %3776, %v2419
        %v3778 = vpop.permute.xlu0 %3777
        %3780 = vset.pattern.permute.xlu0 8
        %3781 = vperm.xlu0 %3780, %v2420
        %v3782 = vpop.permute.xlu0 %3781
        %3784 = vset.pattern.permute.xlu0 8
        %3785 = vperm.xlu0 %3784, %v2421
        %v3786 = vpop.permute.xlu0 %3785
        %3788 = vset.pattern.permute.xlu0 8
        %3789 = vperm.xlu0 %3788, %v2422
        %v3790 = vpop.permute.xlu0 %3789
        %3792 = vset.pattern.permute.xlu0 8
        %3793 = vperm.xlu0 %3792, %v2423
        %v3794 = vpop.permute.xlu0 %3793
        %v3796 = vlaneseq
        %v3797 = vshrl.u32 %v3796, 7
        %v3798 = vsub.s32 0, %v3797
        %v3799 = vrot.slane %v3695, %v3798
        %v3800 = vmul.f32 %v3698, %v3799
        %v3801 = vmul.f32 %v3702, %v3799
        %v3802 = vmul.f32 %v3706, %v3799
        %v3803 = vmul.f32 %v3710, %v3799
        %v3804 = vmul.f32 %v3714, %v3799
        %v3805 = vmul.f32 %v3718, %v3799
        %v3806 = vmul.f32 %v3722, %v3799
        %v3807 = vmul.f32 %v3726, %v3799
        %v3808 = vmul.f32 %v3730, %v3799
        %v3809 = vmul.f32 %v3734, %v3799
        %v3810 = vmul.f32 %v3738, %v3799
        %v3811 = vmul.f32 %v3742, %v3799
        %v3812 = vmul.f32 %v3746, %v3799
        %v3813 = vmul.f32 %v3750, %v3799
        %v3814 = vmul.f32 %v3754, %v3799
        %v3815 = vmul.f32 %v3758, %v3799
        %v3816 = vmul.f32 %v3762, %v3799
        %v3817 = vmul.f32 %v3766, %v3799
        %v3818 = vmul.f32 %v3770, %v3799
        %v3819 = vmul.f32 %v3774, %v3799
        %v3820 = vmul.f32 %v3778, %v3799
        %v3821 = vmul.f32 %v3782, %v3799
        %v3822 = vmul.f32 %v3786, %v3799
        %v3823 = vmul.f32 %v3790, %v3799
        %v3824 = vmul.f32 %v3794, %v3799
        %v3825 = vadd.f32 %v3670, %v3800
        %v3826 = vadd.f32 %v3671, %v3801
        %v3827 = vadd.f32 %v3672, %v3802
        %v3828 = vadd.f32 %v3673, %v3803
        %v3829 = vadd.f32 %v3674, %v3804
        %v3830 = vadd.f32 %v3675, %v3805
        %v3831 = vadd.f32 %v3676, %v3806
        %v3832 = vadd.f32 %v3677, %v3807
        %v3833 = vadd.f32 %v3678, %v3808
        %v3834 = vadd.f32 %v3679, %v3809
        %v3835 = vadd.f32 %v3680, %v3810
        %v3836 = vadd.f32 %v3681, %v3811
        %v3837 = vadd.f32 %v3682, %v3812
        %v3838 = vadd.f32 %v3683, %v3813
        %v3839 = vadd.f32 %v3684, %v3814
        %v3840 = vadd.f32 %v3685, %v3815
        %v3841 = vadd.f32 %v3686, %v3816
        %v3842 = vadd.f32 %v3687, %v3817
        %v3843 = vadd.f32 %v3688, %v3818
        %v3844 = vadd.f32 %v3689, %v3819
        %v3845 = vadd.f32 %v3690, %v3820
        %v3846 = vadd.f32 %v3691, %v3821
        %v3847 = vadd.f32 %v3692, %v3822
        %v3848 = vadd.f32 %v3693, %v3823
        %v3849 = vadd.f32 %v3694, %v3824
        %v3850 = vmax.f32 %v3825, 0.0
        %v3851 = vmax.f32 %v3826, 0.0
        %v3852 = vmax.f32 %v3827, 0.0
        %v3853 = vmax.f32 %v3828, 0.0
        %v3854 = vmax.f32 %v3829, 0.0
        %v3855 = vmax.f32 %v3830, 0.0
        %v3856 = vmax.f32 %v3831, 0.0
        %v3857 = vmax.f32 %v3832, 0.0
        %v3858 = vmax.f32 %v3833, 0.0
        %v3859 = vmax.f32 %v3834, 0.0
        %v3860 = vmax.f32 %v3835, 0.0
        %v3861 = vmax.f32 %v3836, 0.0
        %v3862 = vmax.f32 %v3837, 0.0
        %v3863 = vmax.f32 %v3838, 0.0
        %v3864 = vmax.f32 %v3839, 0.0
        %v3865 = vmax.f32 %v3840, 0.0
        %v3866 = vmax.f32 %v3841, 0.0
        %v3867 = vmax.f32 %v3842, 0.0
        %v3868 = vmax.f32 %v3843, 0.0
        %v3869 = vmax.f32 %v3844, 0.0
        %v3870 = vmax.f32 %v3845, 0.0
        %v3871 = vmax.f32 %v3846, 0.0
        %v3872 = vmax.f32 %v3847, 0.0
        %v3873 = vmax.f32 %v3848, 0.0
        %v3874 = vmax.f32 %v3849, 0.0
        %vm3875 = vcmask 64512
        %3876 = vst.msk [vmem:[#allocation3] sm:$0xff] %vm3875, %v3850
        %3877 = vst.msk [vmem:[#allocation3 + $0x8] sm:$0xff] %vm3875, %v3851
        %3878 = vst.msk [vmem:[#allocation3 + $0x10] sm:$0xff] %vm3875, %v3852
        %3879 = vst.msk [vmem:[#allocation3 + $0x18] sm:$0xff] %vm3875, %v3853
        %3880 = vst.msk [vmem:[#allocation3 + $0x20] sm:$0xff] %vm3875, %v3854
        %3881 = vst.msk [vmem:[#allocation3 + $0x28] sm:$0xff] %vm3875, %v3855
        %3882 = vst.msk [vmem:[#allocation3 + $0x30] sm:$0xff] %vm3875, %v3856
        %3883 = vst.msk [vmem:[#allocation3 + $0x38] sm:$0xff] %vm3875, %v3857
        %3884 = vst.msk [vmem:[#allocation3 + $0x40] sm:$0xff] %vm3875, %v3858
        %3885 = vst.msk [vmem:[#allocation3 + $0x48] sm:$0xff] %vm3875, %v3859
        %3886 = vst.msk [vmem:[#allocation3 + $0x50] sm:$0xff] %vm3875, %v3860
        %3887 = vst.msk [vmem:[#allocation3 + $0x58] sm:$0xff] %vm3875, %v3861
        %3888 = vst.msk [vmem:[#allocation3 + $0x60] sm:$0xff] %vm3875, %v3862
        %3889 = vst.msk [vmem:[#allocation3 + $0x68] sm:$0xff] %vm3875, %v3863
        %3890 = vst.msk [vmem:[#allocation3 + $0x70] sm:$0xff] %vm3875, %v3864
        %3891 = vst.msk [vmem:[#allocation3 + $0x78] sm:$0xff] %vm3875, %v3865
        %3892 = vst.msk [vmem:[#allocation3 + $0x80] sm:$0xff] %vm3875, %v3866
        %3893 = vst.msk [vmem:[#allocation3 + $0x88] sm:$0xff] %vm3875, %v3867
        %3894 = vst.msk [vmem:[#allocation3 + $0x90] sm:$0xff] %vm3875, %v3868
        %3895 = vst.msk [vmem:[#allocation3 + $0x98] sm:$0xff] %vm3875, %v3869
        %3896 = vst.msk [vmem:[#allocation3 + $0xa0] sm:$0xff] %vm3875, %v3870
        %3897 = vst.msk [vmem:[#allocation3 + $0xa8] sm:$0xff] %vm3875, %v3871
        %3898 = vst.msk [vmem:[#allocation3 + $0xb0] sm:$0xff] %vm3875, %v3872
        %3899 = vst.msk [vmem:[#allocation3 + $0xb8] sm:$0xff] %vm3875, %v3873
        %vm3900 = vcmask 60416
        %3901 = vst.msk [vmem:[#allocation3 + $0xc0] sm:$0xf] %vm3900, %v3874
        %v3902 = vld [vmem:[#allocation3] sm:$0xff]
        %v3903 = vld [vmem:[#allocation3 + $0x8] sm:$0xf]
        %3904 = vst.msk [vmem:[#allocation2] sm:$0xff] %vm3875, %v3902
        %3905 = vst.msk [vmem:[#allocation2 + $0x10] sm:$0xf] %vm3900, %v3903
        %v3906 = vld [vmem:[#allocation3 + $0x1] sm:$0xff]
        %v3907 = vld [vmem:[#allocation3 + $0x9] sm:$0xf]
        %3910 = vrot.lane.b32.xlu0 %v3906, 8
        %v3911 = vpop.permute.xlu0 %3910
        %3912 = vrot.lane.b32.xlu0 %v3907, 8
        %v3913 = vpop.permute.xlu0 %3912
        %vm3916 = vcmask 130112
        %3917 = vst.msk [vmem:[#allocation2] sm:$0xff] %vm3916, %v3911
        %vm3918 = vcmask 126016
        %3919 = vst.msk [vmem:[#allocation2 + $0x10] sm:$0xf] %vm3918, %v3913
        %v3920 = vld [vmem:[#allocation3 + $0x2] sm:$0xff]
        %v3921 = vld [vmem:[#allocation3 + $0xa] sm:$0xf]
        %3924 = vrot.lane.b32.xlu0 %v3920, 16
        %v3925 = vpop.permute.xlu0 %3924
        %3926 = vrot.lane.b32.xlu0 %v3921, 16
        %v3927 = vpop.permute.xlu0 %3926
        %vm3930 = vcmask 195712
        %3931 = vst.msk [vmem:[#allocation2] sm:$0xff] %vm3930, %v3925
        %vm3932 = vcmask 191616
        %3933 = vst.msk [vmem:[#allocation2 + $0x10] sm:$0xf] %vm3932, %v3927
        %v3934 = vld [vmem:[#allocation3 + $0xe] sm:$0xff]
        %v3935 = vld [vmem:[#allocation3 + $0x16] sm:$0xf]
        %3938 = vrot.lane.b32.xlu0 %v3934, 24
        %v3939 = vpop.permute.xlu0 %3938
        %3940 = vrot.lane.b32.xlu0 %v3935, 24
        %v3941 = vpop.permute.xlu0 %3940
        %vm3944 = vcmask 261312
        %3945 = vst.msk [vmem:[#allocation2] sm:$0xff] %vm3944, %v3939
        %vm3946 = vcmask 257216
        %3947 = vst.msk [vmem:[#allocation2 + $0x10] sm:$0xf] %vm3946, %v3941
        %v3948 = vld [vmem:[#allocation3 + $0xf] sm:$0xff]
        %v3949 = vld [vmem:[#allocation3 + $0x17] sm:$0xf]
        %3952 = vrot.lane.b32.xlu0 %v3948, 32
        %v3953 = vpop.permute.xlu0 %3952
        %3954 = vrot.lane.b32.xlu0 %v3949, 32
        %v3955 = vpop.permute.xlu0 %3954
        %vm3958 = vcmask 326912
        %3959 = vst.msk [vmem:[#allocation2] sm:$0xff] %vm3958, %v3953
        %vm3960 = vcmask 322816
        %3961 = vst.msk [vmem:[#allocation2 + $0x10] sm:$0xf] %vm3960, %v3955
        %v3962 = vld [vmem:[#allocation3 + $0x10] sm:$0xff]
        %v3963 = vld [vmem:[#allocation3 + $0x18] sm:$0xf]
        %3966 = vrot.lane.b32.xlu0 %v3962, 40
        %v3967 = vpop.permute.xlu0 %3966
        %3968 = vrot.lane.b32.xlu0 %v3963, 40
        %v3969 = vpop.permute.xlu0 %3968
        %vm3972 = vcmask 392512
        %3973 = vst.msk [vmem:[#allocation2] sm:$0xff] %vm3972, %v3967
        %vm3974 = vcmask 388416
        %3975 = vst.msk [vmem:[#allocation2 + $0x10] sm:$0xf] %vm3974, %v3969
        %v3976 = vld [vmem:[#allocation3 + $0x1c] sm:$0xff]
        %v3977 = vld [vmem:[#allocation3 + $0x24] sm:$0xf]
        %3980 = vrot.lane.b32.xlu0 %v3976, 48
        %v3981 = vpop.permute.xlu0 %3980
        %3982 = vrot.lane.b32.xlu0 %v3977, 48
        %v3983 = vpop.permute.xlu0 %3982
        %vm3986 = vcmask 458112
        %3987 = vst.msk [vmem:[#allocation2] sm:$0xff] %vm3986, %v3981
        %vm3988 = vcmask 454016
        %3989 = vst.msk [vmem:[#allocation2 + $0x10] sm:$0xf] %vm3988, %v3983
        %v3990 = vld [vmem:[#allocation3 + $0x1d] sm:$0xff]
        %v3991 = vld [vmem:[#allocation3 + $0x25] sm:$0xf]
        %3994 = vrot.lane.b32.xlu0 %v3990, 56
        %v3995 = vpop.permute.xlu0 %3994
        %3996 = vrot.lane.b32.xlu0 %v3991, 56
        %v3997 = vpop.permute.xlu0 %3996
        %vm4000 = vcmask 523712
        %4001 = vst.msk [vmem:[#allocation2] sm:$0xff] %vm4000, %v3995
        %vm4002 = vcmask 519616
        %4003 = vst.msk [vmem:[#allocation2 + $0x10] sm:$0xf] %vm4002, %v3997
        %v4004 = vld [vmem:[#allocation3 + $0x1e] sm:$0xff]
        %v4005 = vld [vmem:[#allocation3 + $0x26] sm:$0xf]
        %4008 = vrot.lane.b32.xlu0 %v4004, 64
        %v4009 = vpop.permute.xlu0 %4008
        %4010 = vrot.lane.b32.xlu0 %v4005, 64
        %v4011 = vpop.permute.xlu0 %4010
        %vm4014 = vcmask 589312
        %4015 = vst.msk [vmem:[#allocation2] sm:$0xff] %vm4014, %v4009
        %vm4016 = vcmask 585216
        %4017 = vst.msk [vmem:[#allocation2 + $0x10] sm:$0xf] %vm4016, %v4011
        %v4018 = vld [vmem:[#allocation3 + $0xe] sm:$0xff]
        %v4019 = vld [vmem:[#allocation3 + $0x16] sm:$0xf]
        %v4022 = vrot.slane %v4018, 4
        %v4023 = vrot.slane %v4019, 4
        %v4024 = vsel %vm690, %v4022, %v4023
        %vm4027 = vcmask 64516
        %4028 = vst.msk [vmem:[#allocation2 + $0x10] sm:$0xf0] %vm4027, %v4022
        %4029 = vst.msk [vmem:[#allocation2 + $0x20] sm:$0xff] %vm3875, %v4024
        %v4030 = vld [vmem:[#allocation3 + $0xf] sm:$0xff]
        %v4031 = vld [vmem:[#allocation3 + $0x17] sm:$0xf]
        %v4034 = vrot.slane %v4030, 4
        %v4035 = vrot.slane %v4031, 4
        %v4036 = vsel %vm690, %v4034, %v4035
        %4037 = vrot.lane.b32.xlu0 %v4034, 8
        %v4038 = vpop.permute.xlu0 %4037
        %4039 = vrot.lane.b32.xlu0 %v4036, 8
        %v4040 = vpop.permute.xlu0 %4039
        %vm4043 = vcmask 130116
        %4044 = vst.msk [vmem:[#allocation2 + $0x10] sm:$0xf0] %vm4043, %v4038
        %4045 = vst.msk [vmem:[#allocation2 + $0x20] sm:$0xff] %vm3916, %v4040
        %v4046 = vld [vmem:[#allocation3 + $0x10] sm:$0xff]
        %v4047 = vld [vmem:[#allocation3 + $0x18] sm:$0xf]
        %v4050 = vrot.slane %v4046, 4
        %v4051 = vrot.slane %v4047, 4
        %v4052 = vsel %vm690, %v4050, %v4051
        %4053 = vrot.lane.b32.xlu0 %v4050, 16
        %v4054 = vpop.permute.xlu0 %4053
        %4055 = vrot.lane.b32.xlu0 %v4052, 16
        %v4056 = vpop.permute.xlu0 %4055
        %vm4059 = vcmask 195716
        %4060 = vst.msk [vmem:[#allocation2 + $0x10] sm:$0xf0] %vm4059, %v4054
        %4061 = vst.msk [vmem:[#allocation2 + $0x20] sm:$0xff] %vm3930, %v4056
        %v4062 = vld [vmem:[#allocation3 + $0x1c] sm:$0xff]
        %v4063 = vld [vmem:[#allocation3 + $0x24] sm:$0xf]
        %v4066 = vrot.slane %v4062, 4
        %v4067 = vrot.slane %v4063, 4
        %v4068 = vsel %vm690, %v4066, %v4067
        %4069 = vrot.lane.b32.xlu0 %v4066, 24
        %v4070 = vpop.permute.xlu0 %4069
        %4071 = vrot.lane.b32.xlu0 %v4068, 24
        %v4072 = vpop.permute.xlu0 %4071
        %vm4075 = vcmask 261316
        %4076 = vst.msk [vmem:[#allocation2 + $0x10] sm:$0xf0] %vm4075, %v4070
        %4077 = vst.msk [vmem:[#allocation2 + $0x20] sm:$0xff] %vm3944, %v4072
        %v4078 = vld [vmem:[#allocation3 + $0x1d] sm:$0xff]
        %v4079 = vld [vmem:[#allocation3 + $0x25] sm:$0xf]
        %v4082 = vrot.slane %v4078, 4
        %v4083 = vrot.slane %v4079, 4
        %v4084 = vsel %vm690, %v4082, %v4083
        %4085 = vrot.lane.b32.xlu0 %v4082, 32
        %v4086 = vpop.permute.xlu0 %4085
        %4087 = vrot.lane.b32.xlu0 %v4084, 32
        %v4088 = vpop.permute.xlu0 %4087
        %vm4091 = vcmask 326916
        %4092 = vst.msk [vmem:[#allocation2 + $0x10] sm:$0xf0] %vm4091, %v4086
        %4093 = vst.msk [vmem:[#allocation2 + $0x20] sm:$0xff] %vm3958, %v4088
        %v4094 = vld [vmem:[#allocation3 + $0x1e] sm:$0xff]
        %v4095 = vld [vmem:[#allocation3 + $0x26] sm:$0xf]
        %v4098 = vrot.slane %v4094, 4
        %v4099 = vrot.slane %v4095, 4
        %v4100 = vsel %vm690, %v4098, %v4099
        %4101 = vrot.lane.b32.xlu0 %v4098, 40
        %v4102 = vpop.permute.xlu0 %4101
        %4103 = vrot.lane.b32.xlu0 %v4100, 40
        %v4104 = vpop.permute.xlu0 %4103
        %vm4107 = vcmask 392516
        %4108 = vst.msk [vmem:[#allocation2 + $0x10] sm:$0xf0] %vm4107, %v4102
        %4109 = vst.msk [vmem:[#allocation2 + $0x20] sm:$0xff] %vm3972, %v4104
        %v4110 = vld [vmem:[#allocation3 + $0x2a] sm:$0xff]
        %v4111 = vld [vmem:[#allocation3 + $0x32] sm:$0xf]
        %v4114 = vrot.slane %v4110, 4
        %v4115 = vrot.slane %v4111, 4
        %v4116 = vsel %vm690, %v4114, %v4115
        %4117 = vrot.lane.b32.xlu0 %v4114, 48
        %v4118 = vpop.permute.xlu0 %4117
        %4119 = vrot.lane.b32.xlu0 %v4116, 48
        %v4120 = vpop.permute.xlu0 %4119
        %vm4123 = vcmask 458116
        %4124 = vst.msk [vmem:[#allocation2 + $0x10] sm:$0xf0] %vm4123, %v4118
        %4125 = vst.msk [vmem:[#allocation2 + $0x20] sm:$0xff] %vm3986, %v4120
        %v4126 = vld [vmem:[#allocation3 + $0x2b] sm:$0xff]
        %v4127 = vld [vmem:[#allocation3 + $0x33] sm:$0xf]
        %v4130 = vrot.slane %v4126, 4
        %v4131 = vrot.slane %v4127, 4
        %v4132 = vsel %vm690, %v4130, %v4131
        %4133 = vrot.lane.b32.xlu0 %v4130, 56
        %v4134 = vpop.permute.xlu0 %4133
        %4135 = vrot.lane.b32.xlu0 %v4132, 56
        %v4136 = vpop.permute.xlu0 %4135
        %vm4139 = vcmask 523716
        %4140 = vst.msk [vmem:[#allocation2 + $0x10] sm:$0xf0] %vm4139, %v4134
        %4141 = vst.msk [vmem:[#allocation2 + $0x20] sm:$0xff] %vm4000, %v4136
        %v4142 = vld [vmem:[#allocation3 + $0x2c] sm:$0xff]
        %v4143 = vld [vmem:[#allocation3 + $0x34] sm:$0xf]
        %v4146 = vrot.slane %v4142, 4
        %v4147 = vrot.slane %v4143, 4
        %v4148 = vsel %vm690, %v4146, %v4147
        %4149 = vrot.lane.b32.xlu0 %v4146, 64
        %v4150 = vpop.permute.xlu0 %4149
        %4151 = vrot.lane.b32.xlu0 %v4148, 64
        %v4152 = vpop.permute.xlu0 %4151
        %vm4155 = vcmask 589316
        %4156 = vst.msk [vmem:[#allocation2 + $0x10] sm:$0xf0] %vm4155, %v4150
        %4157 = vst.msk [vmem:[#allocation2 + $0x20] sm:$0xff] %vm4014, %v4152
        %v4158 = vld [vmem:[#allocation3 + $0x1c] sm:$0xff]
        %v4159 = vld [vmem:[#allocation3 + $0x24] sm:$0xf]
        %4160 = vst.msk [vmem:[#allocation2 + $0x30] sm:$0xff] %vm3875, %v4158
        %4161 = vst.msk [vmem:[#allocation2 + $0x40] sm:$0xf] %vm3900, %v4159
        %v4162 = vld [vmem:[#allocation3 + $0x1d] sm:$0xff]
        %v4163 = vld [vmem:[#allocation3 + $0x25] sm:$0xf]
        %4166 = vrot.lane.b32.xlu0 %v4162, 8
        %v4167 = vpop.permute.xlu0 %4166
        %4168 = vrot.lane.b32.xlu0 %v4163, 8
        %v4169 = vpop.permute.xlu0 %4168
        %4172 = vst.msk [vmem:[#allocation2 + $0x30] sm:$0xff] %vm3916, %v4167
        %4173 = vst.msk [vmem:[#allocation2 + $0x40] sm:$0xf] %vm3918, %v4169
        %v4174 = vld [vmem:[#allocation3 + $0x1e] sm:$0xff]
        %v4175 = vld [vmem:[#allocation3 + $0x26] sm:$0xf]
        %4178 = vrot.lane.b32.xlu0 %v4174, 16
        %v4179 = vpop.permute.xlu0 %4178
        %4180 = vrot.lane.b32.xlu0 %v4175, 16
        %v4181 = vpop.permute.xlu0 %4180
        %4184 = vst.msk [vmem:[#allocation2 + $0x30] sm:$0xff] %vm3930, %v4179
        %4185 = vst.msk [vmem:[#allocation2 + $0x40] sm:$0xf] %vm3932, %v4181
        %v4186 = vld [vmem:[#allocation3 + $0x2a] sm:$0xff]
        %v4187 = vld [vmem:[#allocation3 + $0x32] sm:$0xf]
        %4190 = vrot.lane.b32.xlu0 %v4186, 24
        %v4191 = vpop.permute.xlu0 %4190
        %4192 = vrot.lane.b32.xlu0 %v4187, 24
        %v4193 = vpop.permute.xlu0 %4192
        %4196 = vst.msk [vmem:[#allocation2 + $0x30] sm:$0xff] %vm3944, %v4191
        %4197 = vst.msk [vmem:[#allocation2 + $0x40] sm:$0xf] %vm3946, %v4193
        %v4198 = vld [vmem:[#allocation3 + $0x2b] sm:$0xff]
        %v4199 = vld [vmem:[#allocation3 + $0x33] sm:$0xf]
        %4202 = vrot.lane.b32.xlu0 %v4198, 32
        %v4203 = vpop.permute.xlu0 %4202
        %4204 = vrot.lane.b32.xlu0 %v4199, 32
        %v4205 = vpop.permute.xlu0 %4204
        %4208 = vst.msk [vmem:[#allocation2 + $0x30] sm:$0xff] %vm3958, %v4203
        %4209 = vst.msk [vmem:[#allocation2 + $0x40] sm:$0xf] %vm3960, %v4205
        %v4210 = vld [vmem:[#allocation3 + $0x2c] sm:$0xff]
        %v4211 = vld [vmem:[#allocation3 + $0x34] sm:$0xf]
        %4214 = vrot.lane.b32.xlu0 %v4210, 40
        %v4215 = vpop.permute.xlu0 %4214
        %4216 = vrot.lane.b32.xlu0 %v4211, 40
        %v4217 = vpop.permute.xlu0 %4216
        %4220 = vst.msk [vmem:[#allocation2 + $0x30] sm:$0xff] %vm3972, %v4215
        %4221 = vst.msk [vmem:[#allocation2 + $0x40] sm:$0xf] %vm3974, %v4217
        %v4222 = vld [vmem:[#allocation3 + $0x38] sm:$0xff]
        %v4223 = vld [vmem:[#allocation3 + $0x40] sm:$0xf]
        %4226 = vrot.lane.b32.xlu0 %v4222, 48
        %v4227 = vpop.permute.xlu0 %4226
        %4228 = vrot.lane.b32.xlu0 %v4223, 48
        %v4229 = vpop.permute.xlu0 %4228
        %4232 = vst.msk [vmem:[#allocation2 + $0x30] sm:$0xff] %vm3986, %v4227
        %4233 = vst.msk [vmem:[#allocation2 + $0x40] sm:$0xf] %vm3988, %v4229
        %v4234 = vld [vmem:[#allocation3 + $0x39] sm:$0xff]
        %v4235 = vld [vmem:[#allocation3 + $0x41] sm:$0xf]
        %4238 = vrot.lane.b32.xlu0 %v4234, 56
        %v4239 = vpop.permute.xlu0 %4238
        %4240 = vrot.lane.b32.xlu0 %v4235, 56
        %v4241 = vpop.permute.xlu0 %4240
        %4244 = vst.msk [vmem:[#allocation2 + $0x30] sm:$0xff] %vm4000, %v4239
        %4245 = vst.msk [vmem:[#allocation2 + $0x40] sm:$0xf] %vm4002, %v4241
        %v4246 = vld [vmem:[#allocation3 + $0x3a] sm:$0xff]
        %v4247 = vld [vmem:[#allocation3 + $0x42] sm:$0xf]
        %4250 = vrot.lane.b32.xlu0 %v4246, 64
        %v4251 = vpop.permute.xlu0 %4250
        %4252 = vrot.lane.b32.xlu0 %v4247, 64
        %v4253 = vpop.permute.xlu0 %4252
        %4256 = vst.msk [vmem:[#allocation2 + $0x30] sm:$0xff] %vm4014, %v4251
        %4257 = vst.msk [vmem:[#allocation2 + $0x40] sm:$0xf] %vm4016, %v4253
        %v4258 = vld [vmem:[#allocation3 + $0x2a] sm:$0xff]
        %v4259 = vld [vmem:[#allocation3 + $0x32] sm:$0xf]
        %v4262 = vrot.slane %v4258, 4
        %v4263 = vrot.slane %v4259, 4
        %v4264 = vsel %vm690, %v4262, %v4263
        %4267 = vst.msk [vmem:[#allocation2 + $0x40] sm:$0xf0] %vm4027, %v4262
        %4268 = vst.msk [vmem:[#allocation2 + $0x50] sm:$0xff] %vm3875, %v4264
        %v4269 = vld [vmem:[#allocation3 + $0x2b] sm:$0xff]
        %v4270 = vld [vmem:[#allocation3 + $0x33] sm:$0xf]
        %v4273 = vrot.slane %v4269, 4
        %v4274 = vrot.slane %v4270, 4
        %v4275 = vsel %vm690, %v4273, %v4274
        %4276 = vrot.lane.b32.xlu0 %v4273, 8
        %v4277 = vpop.permute.xlu0 %4276
        %4278 = vrot.lane.b32.xlu0 %v4275, 8
        %v4279 = vpop.permute.xlu0 %4278
        %4282 = vst.msk [vmem:[#allocation2 + $0x40] sm:$0xf0] %vm4043, %v4277
        %4283 = vst.msk [vmem:[#allocation2 + $0x50] sm:$0xff] %vm3916, %v4279
        %v4284 = vld [vmem:[#allocation3 + $0x2c] sm:$0xff]
        %v4285 = vld [vmem:[#allocation3 + $0x34] sm:$0xf]
        %v4288 = vrot.slane %v4284, 4
        %v4289 = vrot.slane %v4285, 4
        %v4290 = vsel %vm690, %v4288, %v4289
        %4291 = vrot.lane.b32.xlu0 %v4288, 16
        %v4292 = vpop.permute.xlu0 %4291
        %4293 = vrot.lane.b32.xlu0 %v4290, 16
        %v4294 = vpop.permute.xlu0 %4293
        %4297 = vst.msk [vmem:[#allocation2 + $0x40] sm:$0xf0] %vm4059, %v4292
        %4298 = vst.msk [vmem:[#allocation2 + $0x50] sm:$0xff] %vm3930, %v4294
        %v4299 = vld [vmem:[#allocation3 + $0x38] sm:$0xff]
        %v4300 = vld [vmem:[#allocation3 + $0x40] sm:$0xf]
        %v4303 = vrot.slane %v4299, 4
        %v4304 = vrot.slane %v4300, 4
        %v4305 = vsel %vm690, %v4303, %v4304
        %4306 = vrot.lane.b32.xlu0 %v4303, 24
        %v4307 = vpop.permute.xlu0 %4306
        %4308 = vrot.lane.b32.xlu0 %v4305, 24
        %v4309 = vpop.permute.xlu0 %4308
        %4312 = vst.msk [vmem:[#allocation2 + $0x40] sm:$0xf0] %vm4075, %v4307
        %4313 = vst.msk [vmem:[#allocation2 + $0x50] sm:$0xff] %vm3944, %v4309
        %v4314 = vld [vmem:[#allocation3 + $0x39] sm:$0xff]
        %v4315 = vld [vmem:[#allocation3 + $0x41] sm:$0xf]
        %v4318 = vrot.slane %v4314, 4
        %v4319 = vrot.slane %v4315, 4
        %v4320 = vsel %vm690, %v4318, %v4319
        %4321 = vrot.lane.b32.xlu0 %v4318, 32
        %v4322 = vpop.permute.xlu0 %4321
        %4323 = vrot.lane.b32.xlu0 %v4320, 32
        %v4324 = vpop.permute.xlu0 %4323
        %4327 = vst.msk [vmem:[#allocation2 + $0x40] sm:$0xf0] %vm4091, %v4322
        %4328 = vst.msk [vmem:[#allocation2 + $0x50] sm:$0xff] %vm3958, %v4324
        %v4329 = vld [vmem:[#allocation3 + $0x3a] sm:$0xff]
        %v4330 = vld [vmem:[#allocation3 + $0x42] sm:$0xf]
        %v4333 = vrot.slane %v4329, 4
        %v4334 = vrot.slane %v4330, 4
        %v4335 = vsel %vm690, %v4333, %v4334
        %4336 = vrot.lane.b32.xlu0 %v4333, 40
        %v4337 = vpop.permute.xlu0 %4336
        %4338 = vrot.lane.b32.xlu0 %v4335, 40
        %v4339 = vpop.permute.xlu0 %4338
        %4342 = vst.msk [vmem:[#allocation2 + $0x40] sm:$0xf0] %vm4107, %v4337
        %4343 = vst.msk [vmem:[#allocation2 + $0x50] sm:$0xff] %vm3972, %v4339
        %v4344 = vld [vmem:[#allocation3 + $0x46] sm:$0xff]
        %v4345 = vld [vmem:[#allocation3 + $0x4e] sm:$0xf]
        %v4348 = vrot.slane %v4344, 4
        %v4349 = vrot.slane %v4345, 4
        %v4350 = vsel %vm690, %v4348, %v4349
        %4351 = vrot.lane.b32.xlu0 %v4348, 48
        %v4352 = vpop.permute.xlu0 %4351
        %4353 = vrot.lane.b32.xlu0 %v4350, 48
        %v4354 = vpop.permute.xlu0 %4353
        %4357 = vst.msk [vmem:[#allocation2 + $0x40] sm:$0xf0] %vm4123, %v4352
        %4358 = vst.msk [vmem:[#allocation2 + $0x50] sm:$0xff] %vm3986, %v4354
        %v4359 = vld [vmem:[#allocation3 + $0x47] sm:$0xff]
        %v4360 = vld [vmem:[#allocation3 + $0x4f] sm:$0xf]
        %v4363 = vrot.slane %v4359, 4
        %v4364 = vrot.slane %v4360, 4
        %v4365 = vsel %vm690, %v4363, %v4364
        %4366 = vrot.lane.b32.xlu0 %v4363, 56
        %v4367 = vpop.permute.xlu0 %4366
        %4368 = vrot.lane.b32.xlu0 %v4365, 56
        %v4369 = vpop.permute.xlu0 %4368
        %4372 = vst.msk [vmem:[#allocation2 + $0x40] sm:$0xf0] %vm4139, %v4367
        %4373 = vst.msk [vmem:[#allocation2 + $0x50] sm:$0xff] %vm4000, %v4369
        %v4374 = vld [vmem:[#allocation3 + $0x48] sm:$0xff]
        %v4375 = vld [vmem:[#allocation3 + $0x50] sm:$0xf]
        %v4378 = vrot.slane %v4374, 4
        %v4379 = vrot.slane %v4375, 4
        %v4380 = vsel %vm690, %v4378, %v4379
        %4381 = vrot.lane.b32.xlu0 %v4378, 64
        %v4382 = vpop.permute.xlu0 %4381
        %4383 = vrot.lane.b32.xlu0 %v4380, 64
        %v4384 = vpop.permute.xlu0 %4383
        %4387 = vst.msk [vmem:[#allocation2 + $0x40] sm:$0xf0] %vm4155, %v4382
        %4388 = vst.msk [vmem:[#allocation2 + $0x50] sm:$0xff] %vm4014, %v4384
        %v4389 = vld [vmem:[#allocation3 + $0x38] sm:$0xff]
        %v4390 = vld [vmem:[#allocation3 + $0x40] sm:$0xf]
        %4391 = vst.msk [vmem:[#allocation2 + $0x60] sm:$0xff] %vm3875, %v4389
        %4392 = vst.msk [vmem:[#allocation2 + $0x70] sm:$0xf] %vm3900, %v4390
        %v4393 = vld [vmem:[#allocation3 + $0x39] sm:$0xff]
        %v4394 = vld [vmem:[#allocation3 + $0x41] sm:$0xf]
        %4397 = vrot.lane.b32.xlu0 %v4393, 8
        %v4398 = vpop.permute.xlu0 %4397
        %4399 = vrot.lane.b32.xlu0 %v4394, 8
        %v4400 = vpop.permute.xlu0 %4399
        %4403 = vst.msk [vmem:[#allocation2 + $0x60] sm:$0xff] %vm3916, %v4398
        %4404 = vst.msk [vmem:[#allocation2 + $0x70] sm:$0xf] %vm3918, %v4400
        %v4405 = vld [vmem:[#allocation3 + $0x3a] sm:$0xff]
        %v4406 = vld [vmem:[#allocation3 + $0x42] sm:$0xf]
        %4409 = vrot.lane.b32.xlu0 %v4405, 16
        %v4410 = vpop.permute.xlu0 %4409
        %4411 = vrot.lane.b32.xlu0 %v4406, 16
        %v4412 = vpop.permute.xlu0 %4411
        %4415 = vst.msk [vmem:[#allocation2 + $0x60] sm:$0xff] %vm3930, %v4410
        %4416 = vst.msk [vmem:[#allocation2 + $0x70] sm:$0xf] %vm3932, %v4412
        %v4417 = vld [vmem:[#allocation3 + $0x46] sm:$0xff]
        %v4418 = vld [vmem:[#allocation3 + $0x4e] sm:$0xf]
        %4421 = vrot.lane.b32.xlu0 %v4417, 24
        %v4422 = vpop.permute.xlu0 %4421
        %4423 = vrot.lane.b32.xlu0 %v4418, 24
        %v4424 = vpop.permute.xlu0 %4423
        %4427 = vst.msk [vmem:[#allocation2 + $0x60] sm:$0xff] %vm3944, %v4422
        %4428 = vst.msk [vmem:[#allocation2 + $0x70] sm:$0xf] %vm3946, %v4424
        %v4429 = vld [vmem:[#allocation3 + $0x47] sm:$0xff]
        %v4430 = vld [vmem:[#allocation3 + $0x4f] sm:$0xf]
        %4433 = vrot.lane.b32.xlu0 %v4429, 32
        %v4434 = vpop.permute.xlu0 %4433
        %4435 = vrot.lane.b32.xlu0 %v4430, 32
        %v4436 = vpop.permute.xlu0 %4435
        %4439 = vst.msk [vmem:[#allocation2 + $0x60] sm:$0xff] %vm3958, %v4434
        %4440 = vst.msk [vmem:[#allocation2 + $0x70] sm:$0xf] %vm3960, %v4436
        %v4441 = vld [vmem:[#allocation3 + $0x48] sm:$0xff]
        %v4442 = vld [vmem:[#allocation3 + $0x50] sm:$0xf]
        %4445 = vrot.lane.b32.xlu0 %v4441, 40
        %v4446 = vpop.permute.xlu0 %4445
        %4447 = vrot.lane.b32.xlu0 %v4442, 40
        %v4448 = vpop.permute.xlu0 %4447
        %4451 = vst.msk [vmem:[#allocation2 + $0x60] sm:$0xff] %vm3972, %v4446
        %4452 = vst.msk [vmem:[#allocation2 + $0x70] sm:$0xf] %vm3974, %v4448
        %v4453 = vld [vmem:[#allocation3 + $0x54] sm:$0xff]
        %v4454 = vld [vmem:[#allocation3 + $0x5c] sm:$0xf]
        %4457 = vrot.lane.b32.xlu0 %v4453, 48
        %v4458 = vpop.permute.xlu0 %4457
        %4459 = vrot.lane.b32.xlu0 %v4454, 48
        %v4460 = vpop.permute.xlu0 %4459
        %4463 = vst.msk [vmem:[#allocation2 + $0x60] sm:$0xff] %vm3986, %v4458
        %4464 = vst.msk [vmem:[#allocation2 + $0x70] sm:$0xf] %vm3988, %v4460
        %v4465 = vld [vmem:[#allocation3 + $0x55] sm:$0xff]
        %v4466 = vld [vmem:[#allocation3 + $0x5d] sm:$0xf]
        %4469 = vrot.lane.b32.xlu0 %v4465, 56
        %v4470 = vpop.permute.xlu0 %4469
        %4471 = vrot.lane.b32.xlu0 %v4466, 56
        %v4472 = vpop.permute.xlu0 %4471
        %4475 = vst.msk [vmem:[#allocation2 + $0x60] sm:$0xff] %vm4000, %v4470
        %4476 = vst.msk [vmem:[#allocation2 + $0x70] sm:$0xf] %vm4002, %v4472
        %v4477 = vld [vmem:[#allocation3 + $0x56] sm:$0xff]
        %v4478 = vld [vmem:[#allocation3 + $0x5e] sm:$0xf]
        %4481 = vrot.lane.b32.xlu0 %v4477, 64
        %v4482 = vpop.permute.xlu0 %4481
        %4483 = vrot.lane.b32.xlu0 %v4478, 64
        %v4484 = vpop.permute.xlu0 %4483
        %4487 = vst.msk [vmem:[#allocation2 + $0x60] sm:$0xff] %vm4014, %v4482
        %4488 = vst.msk [vmem:[#allocation2 + $0x70] sm:$0xf] %vm4016, %v4484
        %v4489 = vld [vmem:[#allocation3 + $0x46] sm:$0xff]
        %v4490 = vld [vmem:[#allocation3 + $0x4e] sm:$0xf]
        %v4493 = vrot.slane %v4489, 4
        %v4494 = vrot.slane %v4490, 4
        %v4495 = vsel %vm690, %v4493, %v4494
        %4498 = vst.msk [vmem:[#allocation2 + $0x70] sm:$0xf0] %vm4027, %v4493
        %4499 = vst.msk [vmem:[#allocation2 + $0x80] sm:$0xff] %vm3875, %v4495
        %v4500 = vld [vmem:[#allocation3 + $0x47] sm:$0xff]
        %v4501 = vld [vmem:[#allocation3 + $0x4f] sm:$0xf]
        %v4504 = vrot.slane %v4500, 4
        %v4505 = vrot.slane %v4501, 4
        %v4506 = vsel %vm690, %v4504, %v4505
        %4507 = vrot.lane.b32.xlu0 %v4504, 8
        %v4508 = vpop.permute.xlu0 %4507
        %4509 = vrot.lane.b32.xlu0 %v4506, 8
        %v4510 = vpop.permute.xlu0 %4509
        %4513 = vst.msk [vmem:[#allocation2 + $0x70] sm:$0xf0] %vm4043, %v4508
        %4514 = vst.msk [vmem:[#allocation2 + $0x80] sm:$0xff] %vm3916, %v4510
        %v4515 = vld [vmem:[#allocation3 + $0x48] sm:$0xff]
        %v4516 = vld [vmem:[#allocation3 + $0x50] sm:$0xf]
        %v4519 = vrot.slane %v4515, 4
        %v4520 = vrot.slane %v4516, 4
        %v4521 = vsel %vm690, %v4519, %v4520
        %4522 = vrot.lane.b32.xlu0 %v4519, 16
        %v4523 = vpop.permute.xlu0 %4522
        %4524 = vrot.lane.b32.xlu0 %v4521, 16
        %v4525 = vpop.permute.xlu0 %4524
        %4528 = vst.msk [vmem:[#allocation2 + $0x70] sm:$0xf0] %vm4059, %v4523
        %4529 = vst.msk [vmem:[#allocation2 + $0x80] sm:$0xff] %vm3930, %v4525
        %v4530 = vld [vmem:[#allocation3 + $0x54] sm:$0xff]
        %v4531 = vld [vmem:[#allocation3 + $0x5c] sm:$0xf]
        %v4534 = vrot.slane %v4530, 4
        %v4535 = vrot.slane %v4531, 4
        %v4536 = vsel %vm690, %v4534, %v4535
        %4537 = vrot.lane.b32.xlu0 %v4534, 24
        %v4538 = vpop.permute.xlu0 %4537
        %4539 = vrot.lane.b32.xlu0 %v4536, 24
        %v4540 = vpop.permute.xlu0 %4539
        %4543 = vst.msk [vmem:[#allocation2 + $0x70] sm:$0xf0] %vm4075, %v4538
        %4544 = vst.msk [vmem:[#allocation2 + $0x80] sm:$0xff] %vm3944, %v4540
        %v4545 = vld [vmem:[#allocation3 + $0x55] sm:$0xff]
        %v4546 = vld [vmem:[#allocation3 + $0x5d] sm:$0xf]
        %v4549 = vrot.slane %v4545, 4
        %v4550 = vrot.slane %v4546, 4
        %v4551 = vsel %vm690, %v4549, %v4550
        %4552 = vrot.lane.b32.xlu0 %v4549, 32
        %v4553 = vpop.permute.xlu0 %4552
        %4554 = vrot.lane.b32.xlu0 %v4551, 32
        %v4555 = vpop.permute.xlu0 %4554
        %4558 = vst.msk [vmem:[#allocation2 + $0x70] sm:$0xf0] %vm4091, %v4553
        %4559 = vst.msk [vmem:[#allocation2 + $0x80] sm:$0xff] %vm3958, %v4555
        %v4560 = vld [vmem:[#allocation3 + $0x56] sm:$0xff]
        %v4561 = vld [vmem:[#allocation3 + $0x5e] sm:$0xf]
        %v4564 = vrot.slane %v4560, 4
        %v4565 = vrot.slane %v4561, 4
        %v4566 = vsel %vm690, %v4564, %v4565
        %4567 = vrot.lane.b32.xlu0 %v4564, 40
        %v4568 = vpop.permute.xlu0 %4567
        %4569 = vrot.lane.b32.xlu0 %v4566, 40
        %v4570 = vpop.permute.xlu0 %4569
        %4573 = vst.msk [vmem:[#allocation2 + $0x70] sm:$0xf0] %vm4107, %v4568
        %4574 = vst.msk [vmem:[#allocation2 + $0x80] sm:$0xff] %vm3972, %v4570
        %v4575 = vld [vmem:[#allocation3 + $0x62] sm:$0xff]
        %v4576 = vld [vmem:[#allocation3 + $0x6a] sm:$0xf]
        %v4579 = vrot.slane %v4575, 4
        %v4580 = vrot.slane %v4576, 4
        %v4581 = vsel %vm690, %v4579, %v4580
        %4582 = vrot.lane.b32.xlu0 %v4579, 48
        %v4583 = vpop.permute.xlu0 %4582
        %4584 = vrot.lane.b32.xlu0 %v4581, 48
        %v4585 = vpop.permute.xlu0 %4584
        %4588 = vst.msk [vmem:[#allocation2 + $0x70] sm:$0xf0] %vm4123, %v4583
        %4589 = vst.msk [vmem:[#allocation2 + $0x80] sm:$0xff] %vm3986, %v4585
        %v4590 = vld [vmem:[#allocation3 + $0x63] sm:$0xff]
        %v4591 = vld [vmem:[#allocation3 + $0x6b] sm:$0xf]
        %v4594 = vrot.slane %v4590, 4
        %v4595 = vrot.slane %v4591, 4
        %v4596 = vsel %vm690, %v4594, %v4595
        %4597 = vrot.lane.b32.xlu0 %v4594, 56
        %v4598 = vpop.permute.xlu0 %4597
        %4599 = vrot.lane.b32.xlu0 %v4596, 56
        %v4600 = vpop.permute.xlu0 %4599
        %4603 = vst.msk [vmem:[#allocation2 + $0x70] sm:$0xf0] %vm4139, %v4598
        %4604 = vst.msk [vmem:[#allocation2 + $0x80] sm:$0xff] %vm4000, %v4600
        %v4605 = vld [vmem:[#allocation3 + $0x64] sm:$0xff]
        %v4606 = vld [vmem:[#allocation3 + $0x6c] sm:$0xf]
        %v4609 = vrot.slane %v4605, 4
        %v4610 = vrot.slane %v4606, 4
        %v4611 = vsel %vm690, %v4609, %v4610
        %4612 = vrot.lane.b32.xlu0 %v4609, 64
        %v4613 = vpop.permute.xlu0 %4612
        %4614 = vrot.lane.b32.xlu0 %v4611, 64
        %v4615 = vpop.permute.xlu0 %4614
        %4618 = vst.msk [vmem:[#allocation2 + $0x70] sm:$0xf0] %vm4155, %v4613
        %4619 = vst.msk [vmem:[#allocation2 + $0x80] sm:$0xff] %vm4014, %v4615
        %v4620 = vld [vmem:[#allocation3 + $0x54] sm:$0xff]
        %v4621 = vld [vmem:[#allocation3 + $0x5c] sm:$0xf]
        %4622 = vst.msk [vmem:[#allocation2 + $0x90] sm:$0xff] %vm3875, %v4620
        %4623 = vst.msk [vmem:[#allocation2 + $0xa0] sm:$0xf] %vm3900, %v4621
        %v4624 = vld [vmem:[#allocation3 + $0x55] sm:$0xff]
        %v4625 = vld [vmem:[#allocation3 + $0x5d] sm:$0xf]
        %4628 = vrot.lane.b32.xlu0 %v4624, 8
        %v4629 = vpop.permute.xlu0 %4628
        %4630 = vrot.lane.b32.xlu0 %v4625, 8
        %v4631 = vpop.permute.xlu0 %4630
        %4634 = vst.msk [vmem:[#allocation2 + $0x90] sm:$0xff] %vm3916, %v4629
        %4635 = vst.msk [vmem:[#allocation2 + $0xa0] sm:$0xf] %vm3918, %v4631
        %v4636 = vld [vmem:[#allocation3 + $0x56] sm:$0xff]
        %v4637 = vld [vmem:[#allocation3 + $0x5e] sm:$0xf]
        %4640 = vrot.lane.b32.xlu0 %v4636, 16
        %v4641 = vpop.permute.xlu0 %4640
        %4642 = vrot.lane.b32.xlu0 %v4637, 16
        %v4643 = vpop.permute.xlu0 %4642
        %4646 = vst.msk [vmem:[#allocation2 + $0x90] sm:$0xff] %vm3930, %v4641
        %4647 = vst.msk [vmem:[#allocation2 + $0xa0] sm:$0xf] %vm3932, %v4643
        %v4648 = vld [vmem:[#allocation3 + $0x62] sm:$0xff]
        %v4649 = vld [vmem:[#allocation3 + $0x6a] sm:$0xf]
        %4652 = vrot.lane.b32.xlu0 %v4648, 24
        %v4653 = vpop.permute.xlu0 %4652
        %4654 = vrot.lane.b32.xlu0 %v4649, 24
        %v4655 = vpop.permute.xlu0 %4654
        %4658 = vst.msk [vmem:[#allocation2 + $0x90] sm:$0xff] %vm3944, %v4653
        %4659 = vst.msk [vmem:[#allocation2 + $0xa0] sm:$0xf] %vm3946, %v4655
        %v4660 = vld [vmem:[#allocation3 + $0x63] sm:$0xff]
        %v4661 = vld [vmem:[#allocation3 + $0x6b] sm:$0xf]
        %4664 = vrot.lane.b32.xlu0 %v4660, 32
        %v4665 = vpop.permute.xlu0 %4664
        %4666 = vrot.lane.b32.xlu0 %v4661, 32
        %v4667 = vpop.permute.xlu0 %4666
        %4670 = vst.msk [vmem:[#allocation2 + $0x90] sm:$0xff] %vm3958, %v4665
        %4671 = vst.msk [vmem:[#allocation2 + $0xa0] sm:$0xf] %vm3960, %v4667
        %v4672 = vld [vmem:[#allocation3 + $0x64] sm:$0xff]
        %v4673 = vld [vmem:[#allocation3 + $0x6c] sm:$0xf]
        %4676 = vrot.lane.b32.xlu0 %v4672, 40
        %v4677 = vpop.permute.xlu0 %4676
        %4678 = vrot.lane.b32.xlu0 %v4673, 40
        %v4679 = vpop.permute.xlu0 %4678
        %4682 = vst.msk [vmem:[#allocation2 + $0x90] sm:$0xff] %vm3972, %v4677
        %4683 = vst.msk [vmem:[#allocation2 + $0xa0] sm:$0xf] %vm3974, %v4679
        %v4684 = vld [vmem:[#allocation3 + $0x70] sm:$0xff]
        %v4685 = vld [vmem:[#allocation3 + $0x78] sm:$0xf]
        %4688 = vrot.lane.b32.xlu0 %v4684, 48
        %v4689 = vpop.permute.xlu0 %4688
        %4690 = vrot.lane.b32.xlu0 %v4685, 48
        %v4691 = vpop.permute.xlu0 %4690
        %4694 = vst.msk [vmem:[#allocation2 + $0x90] sm:$0xff] %vm3986, %v4689
        %4695 = vst.msk [vmem:[#allocation2 + $0xa0] sm:$0xf] %vm3988, %v4691
        %v4696 = vld [vmem:[#allocation3 + $0x71] sm:$0xff]
        %v4697 = vld [vmem:[#allocation3 + $0x79] sm:$0xf]
        %4700 = vrot.lane.b32.xlu0 %v4696, 56
        %v4701 = vpop.permute.xlu0 %4700
        %4702 = vrot.lane.b32.xlu0 %v4697, 56
        %v4703 = vpop.permute.xlu0 %4702
        %4706 = vst.msk [vmem:[#allocation2 + $0x90] sm:$0xff] %vm4000, %v4701
        %4707 = vst.msk [vmem:[#allocation2 + $0xa0] sm:$0xf] %vm4002, %v4703
        %v4708 = vld [vmem:[#allocation3 + $0x72] sm:$0xff]
        %v4709 = vld [vmem:[#allocation3 + $0x7a] sm:$0xf]
        %4712 = vrot.lane.b32.xlu0 %v4708, 64
        %v4713 = vpop.permute.xlu0 %4712
        %4714 = vrot.lane.b32.xlu0 %v4709, 64
        %v4715 = vpop.permute.xlu0 %4714
        %4718 = vst.msk [vmem:[#allocation2 + $0x90] sm:$0xff] %vm4014, %v4713
        %4719 = vst.msk [vmem:[#allocation2 + $0xa0] sm:$0xf] %vm4016, %v4715
        %v4720 = vld [vmem:[#allocation3 + $0x62] sm:$0xff]
        %v4721 = vld [vmem:[#allocation3 + $0x6a] sm:$0xf]
        %v4724 = vrot.slane %v4720, 4
        %v4725 = vrot.slane %v4721, 4
        %v4726 = vsel %vm690, %v4724, %v4725
        %4729 = vst.msk [vmem:[#allocation2 + $0xa0] sm:$0xf0] %vm4027, %v4724
        %4730 = vst.msk [vmem:[#allocation2 + $0xb0] sm:$0xff] %vm3875, %v4726
        %v4731 = vld [vmem:[#allocation3 + $0x63] sm:$0xff]
        %v4732 = vld [vmem:[#allocation3 + $0x6b] sm:$0xf]
        %v4735 = vrot.slane %v4731, 4
        %v4736 = vrot.slane %v4732, 4
        %v4737 = vsel %vm690, %v4735, %v4736
        %4738 = vrot.lane.b32.xlu0 %v4735, 8
        %v4739 = vpop.permute.xlu0 %4738
        %4740 = vrot.lane.b32.xlu0 %v4737, 8
        %v4741 = vpop.permute.xlu0 %4740
        %4744 = vst.msk [vmem:[#allocation2 + $0xa0] sm:$0xf0] %vm4043, %v4739
        %4745 = vst.msk [vmem:[#allocation2 + $0xb0] sm:$0xff] %vm3916, %v4741
        %v4746 = vld [vmem:[#allocation3 + $0x64] sm:$0xff]
        %v4747 = vld [vmem:[#allocation3 + $0x6c] sm:$0xf]
        %v4750 = vrot.slane %v4746, 4
        %v4751 = vrot.slane %v4747, 4
        %v4752 = vsel %vm690, %v4750, %v4751
        %4753 = vrot.lane.b32.xlu0 %v4750, 16
        %v4754 = vpop.permute.xlu0 %4753
        %4755 = vrot.lane.b32.xlu0 %v4752, 16
        %v4756 = vpop.permute.xlu0 %4755
        %4759 = vst.msk [vmem:[#allocation2 + $0xa0] sm:$0xf0] %vm4059, %v4754
        %4760 = vst.msk [vmem:[#allocation2 + $0xb0] sm:$0xff] %vm3930, %v4756
        %v4761 = vld [vmem:[#allocation3 + $0x70] sm:$0xff]
        %v4762 = vld [vmem:[#allocation3 + $0x78] sm:$0xf]
        %v4765 = vrot.slane %v4761, 4
        %v4766 = vrot.slane %v4762, 4
        %v4767 = vsel %vm690, %v4765, %v4766
        %4768 = vrot.lane.b32.xlu0 %v4765, 24
        %v4769 = vpop.permute.xlu0 %4768
        %4770 = vrot.lane.b32.xlu0 %v4767, 24
        %v4771 = vpop.permute.xlu0 %4770
        %4774 = vst.msk [vmem:[#allocation2 + $0xa0] sm:$0xf0] %vm4075, %v4769
        %4775 = vst.msk [vmem:[#allocation2 + $0xb0] sm:$0xff] %vm3944, %v4771
        %v4776 = vld [vmem:[#allocation3 + $0x71] sm:$0xff]
        %v4777 = vld [vmem:[#allocation3 + $0x79] sm:$0xf]
        %v4780 = vrot.slane %v4776, 4
        %v4781 = vrot.slane %v4777, 4
        %v4782 = vsel %vm690, %v4780, %v4781
        %4783 = vrot.lane.b32.xlu0 %v4780, 32
        %v4784 = vpop.permute.xlu0 %4783
        %4785 = vrot.lane.b32.xlu0 %v4782, 32
        %v4786 = vpop.permute.xlu0 %4785
        %4789 = vst.msk [vmem:[#allocation2 + $0xa0] sm:$0xf0] %vm4091, %v4784
        %4790 = vst.msk [vmem:[#allocation2 + $0xb0] sm:$0xff] %vm3958, %v4786
        %v4791 = vld [vmem:[#allocation3 + $0x72] sm:$0xff]
        %v4792 = vld [vmem:[#allocation3 + $0x7a] sm:$0xf]
        %v4795 = vrot.slane %v4791, 4
        %v4796 = vrot.slane %v4792, 4
        %v4797 = vsel %vm690, %v4795, %v4796
        %4798 = vrot.lane.b32.xlu0 %v4795, 40
        %v4799 = vpop.permute.xlu0 %4798
        %4800 = vrot.lane.b32.xlu0 %v4797, 40
        %v4801 = vpop.permute.xlu0 %4800
        %4804 = vst.msk [vmem:[#allocation2 + $0xa0] sm:$0xf0] %vm4107, %v4799
        %4805 = vst.msk [vmem:[#allocation2 + $0xb0] sm:$0xff] %vm3972, %v4801
        %v4806 = vld [vmem:[#allocation3 + $0x7e] sm:$0xff]
        %v4807 = vld [vmem:[#allocation3 + $0x86] sm:$0xf]
        %v4810 = vrot.slane %v4806, 4
        %v4811 = vrot.slane %v4807, 4
        %v4812 = vsel %vm690, %v4810, %v4811
        %4813 = vrot.lane.b32.xlu0 %v4810, 48
        %v4814 = vpop.permute.xlu0 %4813
        %4815 = vrot.lane.b32.xlu0 %v4812, 48
        %v4816 = vpop.permute.xlu0 %4815
        %4819 = vst.msk [vmem:[#allocation2 + $0xa0] sm:$0xf0] %vm4123, %v4814
        %4820 = vst.msk [vmem:[#allocation2 + $0xb0] sm:$0xff] %vm3986, %v4816
        %v4821 = vld [vmem:[#allocation3 + $0x7f] sm:$0xff]
        %v4822 = vld [vmem:[#allocation3 + $0x87] sm:$0xf]
        %v4825 = vrot.slane %v4821, 4
        %v4826 = vrot.slane %v4822, 4
        %v4827 = vsel %vm690, %v4825, %v4826
        %4828 = vrot.lane.b32.xlu0 %v4825, 56
        %v4829 = vpop.permute.xlu0 %4828
        %4830 = vrot.lane.b32.xlu0 %v4827, 56
        %v4831 = vpop.permute.xlu0 %4830
        %4834 = vst.msk [vmem:[#allocation2 + $0xa0] sm:$0xf0] %vm4139, %v4829
        %4835 = vst.msk [vmem:[#allocation2 + $0xb0] sm:$0xff] %vm4000, %v4831
        %v4836 = vld [vmem:[#allocation3 + $0x80] sm:$0xff]
        %v4837 = vld [vmem:[#allocation3 + $0x88] sm:$0xf]
        %v4840 = vrot.slane %v4836, 4
        %v4841 = vrot.slane %v4837, 4
        %v4842 = vsel %vm690, %v4840, %v4841
        %4843 = vrot.lane.b32.xlu0 %v4840, 64
        %v4844 = vpop.permute.xlu0 %4843
        %4845 = vrot.lane.b32.xlu0 %v4842, 64
        %v4846 = vpop.permute.xlu0 %4845
        %4849 = vst.msk [vmem:[#allocation2 + $0xa0] sm:$0xf0] %vm4155, %v4844
        %4850 = vst.msk [vmem:[#allocation2 + $0xb0] sm:$0xff] %vm4014, %v4846
        %v4851 = vld [vmem:[#allocation3 + $0x70] sm:$0xff]
        %v4852 = vld [vmem:[#allocation3 + $0x78] sm:$0xf]
        %4853 = vst.msk [vmem:[#allocation2 + $0xc0] sm:$0xff] %vm3875, %v4851
        %4854 = vst.msk [vmem:[#allocation2 + $0xd0] sm:$0xf] %vm3900, %v4852
        %v4855 = vld [vmem:[#allocation3 + $0x71] sm:$0xff]
        %v4856 = vld [vmem:[#allocation3 + $0x79] sm:$0xf]
        %4859 = vrot.lane.b32.xlu0 %v4855, 8
        %v4860 = vpop.permute.xlu0 %4859
        %4861 = vrot.lane.b32.xlu0 %v4856, 8
        %v4862 = vpop.permute.xlu0 %4861
        %4865 = vst.msk [vmem:[#allocation2 + $0xc0] sm:$0xff] %vm3916, %v4860
        %4866 = vst.msk [vmem:[#allocation2 + $0xd0] sm:$0xf] %vm3918, %v4862
        %v4867 = vld [vmem:[#allocation3 + $0x72] sm:$0xff]
        %v4868 = vld [vmem:[#allocation3 + $0x7a] sm:$0xf]
        %4871 = vrot.lane.b32.xlu0 %v4867, 16
        %v4872 = vpop.permute.xlu0 %4871
        %4873 = vrot.lane.b32.xlu0 %v4868, 16
        %v4874 = vpop.permute.xlu0 %4873
        %4877 = vst.msk [vmem:[#allocation2 + $0xc0] sm:$0xff] %vm3930, %v4872
        %4878 = vst.msk [vmem:[#allocation2 + $0xd0] sm:$0xf] %vm3932, %v4874
        %v4879 = vld [vmem:[#allocation3 + $0x7e] sm:$0xff]
        %v4880 = vld [vmem:[#allocation3 + $0x86] sm:$0xf]
        %4883 = vrot.lane.b32.xlu0 %v4879, 24
        %v4884 = vpop.permute.xlu0 %4883
        %4885 = vrot.lane.b32.xlu0 %v4880, 24
        %v4886 = vpop.permute.xlu0 %4885
        %4889 = vst.msk [vmem:[#allocation2 + $0xc0] sm:$0xff] %vm3944, %v4884
        %4890 = vst.msk [vmem:[#allocation2 + $0xd0] sm:$0xf] %vm3946, %v4886
        %v4891 = vld [vmem:[#allocation3 + $0x7f] sm:$0xff]
        %v4892 = vld [vmem:[#allocation3 + $0x87] sm:$0xf]
        %4895 = vrot.lane.b32.xlu0 %v4891, 32
        %v4896 = vpop.permute.xlu0 %4895
        %4897 = vrot.lane.b32.xlu0 %v4892, 32
        %v4898 = vpop.permute.xlu0 %4897
        %4901 = vst.msk [vmem:[#allocation2 + $0xc0] sm:$0xff] %vm3958, %v4896
        %4902 = vst.msk [vmem:[#allocation2 + $0xd0] sm:$0xf] %vm3960, %v4898
        %v4903 = vld [vmem:[#allocation3 + $0x80] sm:$0xff]
        %v4904 = vld [vmem:[#allocation3 + $0x88] sm:$0xf]
        %4907 = vrot.lane.b32.xlu0 %v4903, 40
        %v4908 = vpop.permute.xlu0 %4907
        %4909 = vrot.lane.b32.xlu0 %v4904, 40
        %v4910 = vpop.permute.xlu0 %4909
        %4913 = vst.msk [vmem:[#allocation2 + $0xc0] sm:$0xff] %vm3972, %v4908
        %4914 = vst.msk [vmem:[#allocation2 + $0xd0] sm:$0xf] %vm3974, %v4910
        %v4915 = vld [vmem:[#allocation3 + $0x8c] sm:$0xff]
        %v4916 = vld [vmem:[#allocation3 + $0x94] sm:$0xf]
        %4919 = vrot.lane.b32.xlu0 %v4915, 48
        %v4920 = vpop.permute.xlu0 %4919
        %4921 = vrot.lane.b32.xlu0 %v4916, 48
        %v4922 = vpop.permute.xlu0 %4921
        %4925 = vst.msk [vmem:[#allocation2 + $0xc0] sm:$0xff] %vm3986, %v4920
        %4926 = vst.msk [vmem:[#allocation2 + $0xd0] sm:$0xf] %vm3988, %v4922
        %v4927 = vld [vmem:[#allocation3 + $0x8d] sm:$0xff]
        %v4928 = vld [vmem:[#allocation3 + $0x95] sm:$0xf]
        %4931 = vrot.lane.b32.xlu0 %v4927, 56
        %v4932 = vpop.permute.xlu0 %4931
        %4933 = vrot.lane.b32.xlu0 %v4928, 56
        %v4934 = vpop.permute.xlu0 %4933
        %4937 = vst.msk [vmem:[#allocation2 + $0xc0] sm:$0xff] %vm4000, %v4932
        %4938 = vst.msk [vmem:[#allocation2 + $0xd0] sm:$0xf] %vm4002, %v4934
        %v4939 = vld [vmem:[#allocation3 + $0x8e] sm:$0xff]
        %v4940 = vld [vmem:[#allocation3 + $0x96] sm:$0xf]
        %4943 = vrot.lane.b32.xlu0 %v4939, 64
        %v4944 = vpop.permute.xlu0 %4943
        %4945 = vrot.lane.b32.xlu0 %v4940, 64
        %v4946 = vpop.permute.xlu0 %4945
        %4949 = vst.msk [vmem:[#allocation2 + $0xc0] sm:$0xff] %vm4014, %v4944
        %4950 = vst.msk [vmem:[#allocation2 + $0xd0] sm:$0xf] %vm4016, %v4946
        %v4951 = vld [vmem:[#allocation3 + $0x7e] sm:$0xff]
        %v4952 = vld [vmem:[#allocation3 + $0x86] sm:$0xf]
        %v4955 = vrot.slane %v4951, 4
        %v4956 = vrot.slane %v4952, 4
        %v4957 = vsel %vm690, %v4955, %v4956
        %4960 = vst.msk [vmem:[#allocation2 + $0xd0] sm:$0xf0] %vm4027, %v4955
        %4961 = vst.msk [vmem:[#allocation2 + $0xe0] sm:$0xff] %vm3875, %v4957
        %v4962 = vld [vmem:[#allocation3 + $0x7f] sm:$0xff]
        %v4963 = vld [vmem:[#allocation3 + $0x87] sm:$0xf]
        %v4966 = vrot.slane %v4962, 4
        %v4967 = vrot.slane %v4963, 4
        %v4968 = vsel %vm690, %v4966, %v4967
        %4969 = vrot.lane.b32.xlu0 %v4966, 8
        %v4970 = vpop.permute.xlu0 %4969
        %4971 = vrot.lane.b32.xlu0 %v4968, 8
        %v4972 = vpop.permute.xlu0 %4971
        %4975 = vst.msk [vmem:[#allocation2 + $0xd0] sm:$0xf0] %vm4043, %v4970
        %4976 = vst.msk [vmem:[#allocation2 + $0xe0] sm:$0xff] %vm3916, %v4972
        %v4977 = vld [vmem:[#allocation3 + $0x80] sm:$0xff]
        %v4978 = vld [vmem:[#allocation3 + $0x88] sm:$0xf]
        %v4981 = vrot.slane %v4977, 4
        %v4982 = vrot.slane %v4978, 4
        %v4983 = vsel %vm690, %v4981, %v4982
        %4984 = vrot.lane.b32.xlu0 %v4981, 16
        %v4985 = vpop.permute.xlu0 %4984
        %4986 = vrot.lane.b32.xlu0 %v4983, 16
        %v4987 = vpop.permute.xlu0 %4986
        %4990 = vst.msk [vmem:[#allocation2 + $0xd0] sm:$0xf0] %vm4059, %v4985
        %4991 = vst.msk [vmem:[#allocation2 + $0xe0] sm:$0xff] %vm3930, %v4987
        %v4992 = vld [vmem:[#allocation3 + $0x8c] sm:$0xff]
        %v4993 = vld [vmem:[#allocation3 + $0x94] sm:$0xf]
        %v4996 = vrot.slane %v4992, 4
        %v4997 = vrot.slane %v4993, 4
        %v4998 = vsel %vm690, %v4996, %v4997
        %4999 = vrot.lane.b32.xlu0 %v4996, 24
        %v5000 = vpop.permute.xlu0 %4999
        %5001 = vrot.lane.b32.xlu0 %v4998, 24
        %v5002 = vpop.permute.xlu0 %5001
        %5005 = vst.msk [vmem:[#allocation2 + $0xd0] sm:$0xf0] %vm4075, %v5000
        %5006 = vst.msk [vmem:[#allocation2 + $0xe0] sm:$0xff] %vm3944, %v5002
        %v5007 = vld [vmem:[#allocation3 + $0x8d] sm:$0xff]
        %v5008 = vld [vmem:[#allocation3 + $0x95] sm:$0xf]
        %v5011 = vrot.slane %v5007, 4
        %v5012 = vrot.slane %v5008, 4
        %v5013 = vsel %vm690, %v5011, %v5012
        %5014 = vrot.lane.b32.xlu0 %v5011, 32
        %v5015 = vpop.permute.xlu0 %5014
        %5016 = vrot.lane.b32.xlu0 %v5013, 32
        %v5017 = vpop.permute.xlu0 %5016
        %5020 = vst.msk [vmem:[#allocation2 + $0xd0] sm:$0xf0] %vm4091, %v5015
        %5021 = vst.msk [vmem:[#allocation2 + $0xe0] sm:$0xff] %vm3958, %v5017
        %v5022 = vld [vmem:[#allocation3 + $0x8e] sm:$0xff]
        %v5023 = vld [vmem:[#allocation3 + $0x96] sm:$0xf]
        %v5026 = vrot.slane %v5022, 4
        %v5027 = vrot.slane %v5023, 4
        %v5028 = vsel %vm690, %v5026, %v5027
        %5029 = vrot.lane.b32.xlu0 %v5026, 40
        %v5030 = vpop.permute.xlu0 %5029
        %5031 = vrot.lane.b32.xlu0 %v5028, 40
        %v5032 = vpop.permute.xlu0 %5031
        %5035 = vst.msk [vmem:[#allocation2 + $0xd0] sm:$0xf0] %vm4107, %v5030
        %5036 = vst.msk [vmem:[#allocation2 + $0xe0] sm:$0xff] %vm3972, %v5032
        %v5037 = vld [vmem:[#allocation3 + $0x9a] sm:$0xff]
        %v5038 = vld [vmem:[#allocation3 + $0xa2] sm:$0xf]
        %v5041 = vrot.slane %v5037, 4
        %v5042 = vrot.slane %v5038, 4
        %v5043 = vsel %vm690, %v5041, %v5042
        %5044 = vrot.lane.b32.xlu0 %v5041, 48
        %v5045 = vpop.permute.xlu0 %5044
        %5046 = vrot.lane.b32.xlu0 %v5043, 48
        %v5047 = vpop.permute.xlu0 %5046
        %5050 = vst.msk [vmem:[#allocation2 + $0xd0] sm:$0xf0] %vm4123, %v5045
        %5051 = vst.msk [vmem:[#allocation2 + $0xe0] sm:$0xff] %vm3986, %v5047
        %v5052 = vld [vmem:[#allocation3 + $0x9b] sm:$0xff]
        %v5053 = vld [vmem:[#allocation3 + $0xa3] sm:$0xf]
        %v5056 = vrot.slane %v5052, 4
        %v5057 = vrot.slane %v5053, 4
        %v5058 = vsel %vm690, %v5056, %v5057
        %5059 = vrot.lane.b32.xlu0 %v5056, 56
        %v5060 = vpop.permute.xlu0 %5059
        %5061 = vrot.lane.b32.xlu0 %v5058, 56
        %v5062 = vpop.permute.xlu0 %5061
        %5065 = vst.msk [vmem:[#allocation2 + $0xd0] sm:$0xf0] %vm4139, %v5060
        %5066 = vst.msk [vmem:[#allocation2 + $0xe0] sm:$0xff] %vm4000, %v5062
        %v5067 = vld [vmem:[#allocation3 + $0x9c] sm:$0xff]
        %v5068 = vld [vmem:[#allocation3 + $0xa4] sm:$0xf]
        %v5071 = vrot.slane %v5067, 4
        %v5072 = vrot.slane %v5068, 4
        %v5073 = vsel %vm690, %v5071, %v5072
        %5074 = vrot.lane.b32.xlu0 %v5071, 64
        %v5075 = vpop.permute.xlu0 %5074
        %5076 = vrot.lane.b32.xlu0 %v5073, 64
        %v5077 = vpop.permute.xlu0 %5076
        %5080 = vst.msk [vmem:[#allocation2 + $0xd0] sm:$0xf0] %vm4155, %v5075
        %5081 = vst.msk [vmem:[#allocation2 + $0xe0] sm:$0xff] %vm4014, %v5077
        %v5082 = vld [vmem:[#allocation3 + $0x8c] sm:$0xff]
        %v5083 = vld [vmem:[#allocation3 + $0x94] sm:$0xf]
        %5084 = vst.msk [vmem:[#allocation2 + $0xf0] sm:$0xff] %vm3875, %v5082
        %5085 = vst.msk [vmem:[#allocation2 + $0x100] sm:$0xf] %vm3900, %v5083
        %v5086 = vld [vmem:[#allocation3 + $0x8d] sm:$0xff]
        %v5087 = vld [vmem:[#allocation3 + $0x95] sm:$0xf]
        %5090 = vrot.lane.b32.xlu0 %v5086, 8
        %v5091 = vpop.permute.xlu0 %5090
        %5092 = vrot.lane.b32.xlu0 %v5087, 8
        %v5093 = vpop.permute.xlu0 %5092
        %5096 = vst.msk [vmem:[#allocation2 + $0xf0] sm:$0xff] %vm3916, %v5091
        %5097 = vst.msk [vmem:[#allocation2 + $0x100] sm:$0xf] %vm3918, %v5093
        %v5098 = vld [vmem:[#allocation3 + $0x8e] sm:$0xff]
        %v5099 = vld [vmem:[#allocation3 + $0x96] sm:$0xf]
        %5102 = vrot.lane.b32.xlu0 %v5098, 16
        %v5103 = vpop.permute.xlu0 %5102
        %5104 = vrot.lane.b32.xlu0 %v5099, 16
        %v5105 = vpop.permute.xlu0 %5104
        %5108 = vst.msk [vmem:[#allocation2 + $0xf0] sm:$0xff] %vm3930, %v5103
        %5109 = vst.msk [vmem:[#allocation2 + $0x100] sm:$0xf] %vm3932, %v5105
        %v5110 = vld [vmem:[#allocation3 + $0x9a] sm:$0xff]
        %v5111 = vld [vmem:[#allocation3 + $0xa2] sm:$0xf]
        %5114 = vrot.lane.b32.xlu0 %v5110, 24
        %v5115 = vpop.permute.xlu0 %5114
        %5116 = vrot.lane.b32.xlu0 %v5111, 24
        %v5117 = vpop.permute.xlu0 %5116
        %5120 = vst.msk [vmem:[#allocation2 + $0xf0] sm:$0xff] %vm3944, %v5115
        %5121 = vst.msk [vmem:[#allocation2 + $0x100] sm:$0xf] %vm3946, %v5117
        %v5122 = vld [vmem:[#allocation3 + $0x9b] sm:$0xff]
        %v5123 = vld [vmem:[#allocation3 + $0xa3] sm:$0xf]
        %5126 = vrot.lane.b32.xlu0 %v5122, 32
        %v5127 = vpop.permute.xlu0 %5126
        %5128 = vrot.lane.b32.xlu0 %v5123, 32
        %v5129 = vpop.permute.xlu0 %5128
        %5132 = vst.msk [vmem:[#allocation2 + $0xf0] sm:$0xff] %vm3958, %v5127
        %5133 = vst.msk [vmem:[#allocation2 + $0x100] sm:$0xf] %vm3960, %v5129
        %v5134 = vld [vmem:[#allocation3 + $0x9c] sm:$0xff]
        %v5135 = vld [vmem:[#allocation3 + $0xa4] sm:$0xf]
        %5138 = vrot.lane.b32.xlu0 %v5134, 40
        %v5139 = vpop.permute.xlu0 %5138
        %5140 = vrot.lane.b32.xlu0 %v5135, 40
        %v5141 = vpop.permute.xlu0 %5140
        %5144 = vst.msk [vmem:[#allocation2 + $0xf0] sm:$0xff] %vm3972, %v5139
        %5145 = vst.msk [vmem:[#allocation2 + $0x100] sm:$0xf] %vm3974, %v5141
        %v5146 = vld [vmem:[#allocation3 + $0xa8] sm:$0xff]
        %v5147 = vld [vmem:[#allocation3 + $0xb0] sm:$0xf]
        %5150 = vrot.lane.b32.xlu0 %v5146, 48
        %v5151 = vpop.permute.xlu0 %5150
        %5152 = vrot.lane.b32.xlu0 %v5147, 48
        %v5153 = vpop.permute.xlu0 %5152
        %5156 = vst.msk [vmem:[#allocation2 + $0xf0] sm:$0xff] %vm3986, %v5151
        %5157 = vst.msk [vmem:[#allocation2 + $0x100] sm:$0xf] %vm3988, %v5153
        %v5158 = vld [vmem:[#allocation3 + $0xa9] sm:$0xff]
        %v5159 = vld [vmem:[#allocation3 + $0xb1] sm:$0xf]
        %5162 = vrot.lane.b32.xlu0 %v5158, 56
        %v5163 = vpop.permute.xlu0 %5162
        %5164 = vrot.lane.b32.xlu0 %v5159, 56
        %v5165 = vpop.permute.xlu0 %5164
        %5168 = vst.msk [vmem:[#allocation2 + $0xf0] sm:$0xff] %vm4000, %v5163
        %5169 = vst.msk [vmem:[#allocation2 + $0x100] sm:$0xf] %vm4002, %v5165
        %v5170 = vld [vmem:[#allocation3 + $0xaa] sm:$0xff]
        %v5171 = vld [vmem:[#allocation3 + $0xb2] sm:$0xf]
        %5174 = vrot.lane.b32.xlu0 %v5170, 64
        %v5175 = vpop.permute.xlu0 %5174
        %5176 = vrot.lane.b32.xlu0 %v5171, 64
        %v5177 = vpop.permute.xlu0 %5176
        %5180 = vst.msk [vmem:[#allocation2 + $0xf0] sm:$0xff] %vm4014, %v5175
        %5181 = vst.msk [vmem:[#allocation2 + $0x100] sm:$0xf] %vm4016, %v5177
        %v5182 = vld [vmem:[#allocation3 + $0x9a] sm:$0xff]
        %v5183 = vld [vmem:[#allocation3 + $0xa2] sm:$0xf]
        %v5186 = vrot.slane %v5182, 4
        %v5187 = vrot.slane %v5183, 4
        %v5188 = vsel %vm690, %v5186, %v5187
        %5191 = vst.msk [vmem:[#allocation2 + $0x100] sm:$0xf0] %vm4027, %v5186
        %5192 = vst.msk [vmem:[#allocation2 + $0x110] sm:$0xff] %vm3875, %v5188
        %v5193 = vld [vmem:[#allocation3 + $0x9b] sm:$0xff]
        %v5194 = vld [vmem:[#allocation3 + $0xa3] sm:$0xf]
        %v5197 = vrot.slane %v5193, 4
        %v5198 = vrot.slane %v5194, 4
        %v5199 = vsel %vm690, %v5197, %v5198
        %5200 = vrot.lane.b32.xlu0 %v5197, 8
        %v5201 = vpop.permute.xlu0 %5200
        %5202 = vrot.lane.b32.xlu0 %v5199, 8
        %v5203 = vpop.permute.xlu0 %5202
        %5206 = vst.msk [vmem:[#allocation2 + $0x100] sm:$0xf0] %vm4043, %v5201
        %5207 = vst.msk [vmem:[#allocation2 + $0x110] sm:$0xff] %vm3916, %v5203
        %v5208 = vld [vmem:[#allocation3 + $0x9c] sm:$0xff]
        %v5209 = vld [vmem:[#allocation3 + $0xa4] sm:$0xf]
        %v5212 = vrot.slane %v5208, 4
        %v5213 = vrot.slane %v5209, 4
        %v5214 = vsel %vm690, %v5212, %v5213
        %5215 = vrot.lane.b32.xlu0 %v5212, 16
        %v5216 = vpop.permute.xlu0 %5215
        %5217 = vrot.lane.b32.xlu0 %v5214, 16
        %v5218 = vpop.permute.xlu0 %5217
        %5221 = vst.msk [vmem:[#allocation2 + $0x100] sm:$0xf0] %vm4059, %v5216
        %5222 = vst.msk [vmem:[#allocation2 + $0x110] sm:$0xff] %vm3930, %v5218
        %v5223 = vld [vmem:[#allocation3 + $0xa8] sm:$0xff]
        %v5224 = vld [vmem:[#allocation3 + $0xb0] sm:$0xf]
        %v5227 = vrot.slane %v5223, 4
        %v5228 = vrot.slane %v5224, 4
        %v5229 = vsel %vm690, %v5227, %v5228
        %5230 = vrot.lane.b32.xlu0 %v5227, 24
        %v5231 = vpop.permute.xlu0 %5230
        %5232 = vrot.lane.b32.xlu0 %v5229, 24
        %v5233 = vpop.permute.xlu0 %5232
        %5236 = vst.msk [vmem:[#allocation2 + $0x100] sm:$0xf0] %vm4075, %v5231
        %5237 = vst.msk [vmem:[#allocation2 + $0x110] sm:$0xff] %vm3944, %v5233
        %v5238 = vld [vmem:[#allocation3 + $0xa9] sm:$0xff]
        %v5239 = vld [vmem:[#allocation3 + $0xb1] sm:$0xf]
        %v5242 = vrot.slane %v5238, 4
        %v5243 = vrot.slane %v5239, 4
        %v5244 = vsel %vm690, %v5242, %v5243
        %5245 = vrot.lane.b32.xlu0 %v5242, 32
        %v5246 = vpop.permute.xlu0 %5245
        %5247 = vrot.lane.b32.xlu0 %v5244, 32
        %v5248 = vpop.permute.xlu0 %5247
        %5251 = vst.msk [vmem:[#allocation2 + $0x100] sm:$0xf0] %vm4091, %v5246
        %5252 = vst.msk [vmem:[#allocation2 + $0x110] sm:$0xff] %vm3958, %v5248
        %v5253 = vld [vmem:[#allocation3 + $0xaa] sm:$0xff]
        %v5254 = vld [vmem:[#allocation3 + $0xb2] sm:$0xf]
        %v5257 = vrot.slane %v5253, 4
        %v5258 = vrot.slane %v5254, 4
        %v5259 = vsel %vm690, %v5257, %v5258
        %5260 = vrot.lane.b32.xlu0 %v5257, 40
        %v5261 = vpop.permute.xlu0 %5260
        %5262 = vrot.lane.b32.xlu0 %v5259, 40
        %v5263 = vpop.permute.xlu0 %5262
        %5266 = vst.msk [vmem:[#allocation2 + $0x100] sm:$0xf0] %vm4107, %v5261
        %5267 = vst.msk [vmem:[#allocation2 + $0x110] sm:$0xff] %vm3972, %v5263
        %v5268 = vld [vmem:[#allocation3 + $0xb6] sm:$0xff]
        %v5269 = vld [vmem:[#allocation3 + $0xbe] sm:$0xf]
        %v5272 = vrot.slane %v5268, 4
        %v5273 = vrot.slane %v5269, 4
        %v5274 = vsel %vm690, %v5272, %v5273
        %5275 = vrot.lane.b32.xlu0 %v5272, 48
        %v5276 = vpop.permute.xlu0 %5275
        %5277 = vrot.lane.b32.xlu0 %v5274, 48
        %v5278 = vpop.permute.xlu0 %5277
        %5281 = vst.msk [vmem:[#allocation2 + $0x100] sm:$0xf0] %vm4123, %v5276
        %5282 = vst.msk [vmem:[#allocation2 + $0x110] sm:$0xff] %vm3986, %v5278
        %v5283 = vld [vmem:[#allocation3 + $0xb7] sm:$0xff]
        %v5284 = vld [vmem:[#allocation3 + $0xbf] sm:$0xf]
        %v5287 = vrot.slane %v5283, 4
        %v5288 = vrot.slane %v5284, 4
        %v5289 = vsel %vm690, %v5287, %v5288
        %5290 = vrot.lane.b32.xlu0 %v5287, 56
        %v5291 = vpop.permute.xlu0 %5290
        %5292 = vrot.lane.b32.xlu0 %v5289, 56
        %v5293 = vpop.permute.xlu0 %5292
        %5296 = vst.msk [vmem:[#allocation2 + $0x100] sm:$0xf0] %vm4139, %v5291
        %5297 = vst.msk [vmem:[#allocation2 + $0x110] sm:$0xff] %vm4000, %v5293
        %v5298 = vld [vmem:[#allocation3 + $0xb8] sm:$0xff]
        %v5299 = vld [vmem:[#allocation3 + $0xc0] sm:$0xf]
        %v5302 = vrot.slane %v5298, 4
        %v5303 = vrot.slane %v5299, 4
        %v5304 = vsel %vm690, %v5302, %v5303
        %5305 = vrot.lane.b32.xlu0 %v5302, 64
        %v5306 = vpop.permute.xlu0 %5305
        %5307 = vrot.lane.b32.xlu0 %v5304, 64
        %v5308 = vpop.permute.xlu0 %5307
        %5311 = vst.msk [vmem:[#allocation2 + $0x100] sm:$0xf0] %vm4155, %v5306
        %5312 = vst.msk [vmem:[#allocation2 + $0x110] sm:$0xff] %vm4014, %v5308
        %v5313 = vld [vmem:[#allocation2] sm:$0xff]
        %v5314 = vld [vmem:[#allocation2 + $0x10] sm:$0xff]
        %v5315 = vld [vmem:[#allocation2 + $0x20] sm:$0xff]
        %v5316 = vld [vmem:[#allocation2 + $0x30] sm:$0xff]
        %v5317 = vld [vmem:[#allocation2 + $0x40] sm:$0xff]
        %v5318 = vld [vmem:[#allocation2 + $0x50] sm:$0xff]
        %v5319 = vld [vmem:[#allocation2 + $0x60] sm:$0xff]
        %v5320 = vld [vmem:[#allocation2 + $0x70] sm:$0xff]
        %v5321 = vld [vmem:[#allocation2 + $0x80] sm:$0xff]
        %v5322 = vld [vmem:[#allocation2 + $0x90] sm:$0xff]
        %v5323 = vld [vmem:[#allocation2 + $0xa0] sm:$0xff]
        %v5324 = vld [vmem:[#allocation2 + $0xb0] sm:$0xff]
        %v5325 = vld [vmem:[#allocation2 + $0xc0] sm:$0xff]
        %v5326 = vld [vmem:[#allocation2 + $0xd0] sm:$0xff]
        %v5327 = vld [vmem:[#allocation2 + $0xe0] sm:$0xff]
        %v5328 = vld [vmem:[#allocation2 + $0xf0] sm:$0xff]
        %v5329 = vld [vmem:[#allocation2 + $0x100] sm:$0xff]
        %v5330 = vld [vmem:[#allocation2 + $0x110] sm:$0xff]
        %v5331 = vld [vmem:[%s3] sm:$0xff]
        %v5332 = vld [vmem:[%s3 + $0x8] sm:$0xff]
        %v5333 = vld [vmem:[%s3 + $0x10] sm:$0xff]
        %v5334 = vld [vmem:[%s3 + $0x18] sm:$0xff]
        %v5335 = vld [vmem:[%s3 + $0x20] sm:$0xff]
        %v5336 = vld [vmem:[%s3 + $0x28] sm:$0xff]
        %v5337 = vld [vmem:[%s3 + $0x30] sm:$0xff]
        %v5338 = vld [vmem:[%s3 + $0x38] sm:$0xff]
        %v5339 = vld [vmem:[%s3 + $0x40] sm:$0xff]
        %v5340 = vld [vmem:[%s4] sm:$0x1]
        %v5342 = vlaneseq
        %v5343 = vshrl.u32 %v5342, 7
        %v5344 = vsub.s32 0, %v5343
        %v5345 = vrot.slane %v5340, %v5344
        %vm5347 = vcmask 588800
        %v5349 = vsel %vm5347, %v5313, 0
        %v5352 = vsel %vm5347, %v5314, 0
        %v5355 = vsel %vm5347, %v5315, 0
        %v5358 = vsel %vm5347, %v5316, 0
        %v5361 = vsel %vm5347, %v5317, 0
        %v5364 = vsel %vm5347, %v5318, 0
        %v5367 = vsel %vm5347, %v5319, 0
        %v5370 = vsel %vm5347, %v5320, 0
        %v5373 = vsel %vm5347, %v5321, 0
        %v5376 = vsel %vm5347, %v5322, 0
        %v5379 = vsel %vm5347, %v5323, 0
        %v5382 = vsel %vm5347, %v5324, 0
        %v5385 = vsel %vm5347, %v5325, 0
        %v5388 = vsel %vm5347, %v5326, 0
        %v5391 = vsel %vm5347, %v5327, 0
        %v5394 = vsel %vm5347, %v5328, 0
        %v5397 = vsel %vm5347, %v5329, 0
        %v5400 = vsel %vm5347, %v5330, 0
        %5402 = vmatprep.subr.mxu0 0.0
        %5403 = vmatpush1.msra.mxu0 %v5331
        %5404 = vmatprep.subr.mxu0 0.0
        %5405 = vmatpush1.msra.mxu0 %v5332
        %5406 = vmatprep.subr.mxu0 0.0
        %5407 = vmatpush1.msra.mxu0 %v5333
        %5408 = vmatprep.subr.mxu0 0.0
        %5409 = vmatpush1.msra.mxu0 %v5334
        %5410 = vmatprep.subr.mxu0 0.0
        %5411 = vmatpush1.msra.mxu0 %v5335
        %5412 = vmatprep.subr.mxu0 0.0
        %5413 = vmatpush1.msra.mxu0 %v5336
        %5414 = vmatprep.subr.mxu0 0.0
        %5415 = vmatpush1.msra.mxu0 %v5337
        %5416 = vmatprep.subr.mxu0 0.0
        %5417 = vmatpush1.msra.mxu0 %v5338
        %5418 = vmatprep.subr.mxu0 0.0
        %5419 = vmatpush1.msra.mxu0 %v5339
        %5420 = vmatprep.subr.mxu0 0.0
        %5421 = vmatpush1.msra.mxu0 0.0
        %5422 = vmatprep.subr.mxu0 0.0
        %5423 = vmatpush1.msra.mxu0 0.0
        %5424 = vmatprep.subr.mxu0 0.0
        %5425 = vmatpush1.msra.mxu0 0.0
        %5426 = vmatprep.subr.mxu0 0.0
        %5427 = vmatpush1.msra.mxu0 0.0
        %5428 = vmatprep.subr.mxu0 0.0
        %5429 = vmatpush1.msra.mxu0 0.0
        %5430 = vmatprep.subr.mxu0 0.0
        %5431 = vmatpush1.msra.mxu0 0.0
        %5432 = vmatprep.subr.mxu0 0.0
        %5433 = vmatpush1.msra.mxu0 0.0
        %5434 = vmatprep.subr.mxu0 0.0
        %5435 = vmatpush1.msra.mxu0 0.0
        %5436 = vmatprep.subr.mxu0 0.0
        %5437 = vmatpush1.msra.mxu0 0.0
        %5438 = vmatprep.subr.mxu0 0.0
        %5439 = vmatpush1.msra.mxu0 0.0
        %5440 = vmatprep.subr.mxu0 0.0
        %5441 = vmatpush1.msra.mxu0 0.0
        %5442 = vmatprep.subr.mxu0 0.0
        %5443 = vmatpush1.msra.mxu0 0.0
        %5444 = vmatprep.subr.mxu0 0.0
        %5445 = vmatpush1.msra.mxu0 0.0
        %5446 = vmatprep.subr.mxu0 0.0
        %5447 = vmatpush1.msra.mxu0 0.0
        %5448 = vmatprep.subr.mxu0 0.0
        %5449 = vmatpush1.msra.mxu0 0.0
        %5450 = vmatprep.subr.mxu0 0.0
        %5451 = vmatpush1.msra.mxu0 0.0
        %5452 = vmatprep.subr.mxu0 0.0
        %5453 = vmatpush1.msra.mxu0 0.0
        %5454 = vmatprep.subr.mxu0 0.0
        %5455 = vmatpush1.msra.mxu0 0.0
        %5456 = vmatprep.subr.mxu0 0.0
        %5457 = vmatpush1.msra.mxu0 0.0
        %5458 = vmatprep.subr.mxu0 0.0
        %5459 = vmatpush1.msra.mxu0 0.0
        %5460 = vmatprep.subr.mxu0 0.0
        %5461 = vmatpush1.msra.mxu0 0.0
        %5462 = vmatprep.subr.mxu0 0.0
        %5463 = vmatpush1.msra.mxu0 0.0
        %5464 = vmatprep.subr.mxu0 0.0
        %5465 = vmatpush1.msra.mxu0 0.0
        %5466 = vmatprep.mubr.f32.mxu0 0.0
        %5467 = vmatmul.mubr.f32.gmra.mrb[0].mxu0 %v5349
        %v5468 = vpop.f32.mrb[0].mxu0
        %v5469 = vadd.f32 %v5345, %v5468
        %v5470 = vpop.f32.mrb[0].mxu0
        %5471 = vmatprep.mubr.f32.mxu0 0.0
        %5472 = vmatmul.mubr.f32.gmra.mrb[0].mxu0 %v5352
        %v5473 = vpop.f32.mrb[0].mxu0
        %v5474 = vadd.f32 %v5345, %v5473
        %v5475 = vpop.f32.mrb[0].mxu0
        %5476 = vmatprep.mubr.f32.mxu0 0.0
        %5477 = vmatmul.mubr.f32.gmra.mrb[0].mxu0 %v5355
        %v5478 = vpop.f32.mrb[0].mxu0
        %v5479 = vadd.f32 %v5345, %v5478
        %v5480 = vpop.f32.mrb[0].mxu0
        %5481 = vmatprep.mubr.f32.mxu0 0.0
        %5482 = vmatmul.mubr.f32.gmra.mrb[0].mxu0 %v5358
        %v5483 = vpop.f32.mrb[0].mxu0
        %v5484 = vadd.f32 %v5345, %v5483
        %v5485 = vpop.f32.mrb[0].mxu0
        %5486 = vmatprep.mubr.f32.mxu0 0.0
        %5487 = vmatmul.mubr.f32.gmra.mrb[0].mxu0 %v5361
        %v5488 = vpop.f32.mrb[0].mxu0
        %v5489 = vadd.f32 %v5345, %v5488
        %v5490 = vpop.f32.mrb[0].mxu0
        %5491 = vmatprep.mubr.f32.mxu0 0.0
        %5492 = vmatmul.mubr.f32.gmra.mrb[0].mxu0 %v5364
        %v5493 = vpop.f32.mrb[0].mxu0
        %v5494 = vadd.f32 %v5345, %v5493
        %v5495 = vpop.f32.mrb[0].mxu0
        %5496 = vmatprep.mubr.f32.mxu0 0.0
        %5497 = vmatmul.mubr.f32.gmra.mrb[0].mxu0 %v5367
        %v5498 = vpop.f32.mrb[0].mxu0
        %v5499 = vadd.f32 %v5345, %v5498
        %v5500 = vpop.f32.mrb[0].mxu0
        %5501 = vmatprep.mubr.f32.mxu0 0.0
        %5502 = vmatmul.mubr.f32.gmra.mrb[0].mxu0 %v5370
        %v5503 = vpop.f32.mrb[0].mxu0
        %v5504 = vadd.f32 %v5345, %v5503
        %v5505 = vpop.f32.mrb[0].mxu0
        %5506 = vmatprep.mubr.f32.mxu0 0.0
        %5507 = vmatmul.mubr.f32.gmra.mrb[0].mxu0 %v5373
        %v5508 = vpop.f32.mrb[0].mxu0
        %v5509 = vadd.f32 %v5345, %v5508
        %v5510 = vpop.f32.mrb[0].mxu0
        %5511 = vmatprep.mubr.f32.mxu0 0.0
        %5512 = vmatmul.mubr.f32.gmra.mrb[0].mxu0 %v5376
        %v5513 = vpop.f32.mrb[0].mxu0
        %v5514 = vadd.f32 %v5345, %v5513
        %v5515 = vpop.f32.mrb[0].mxu0
        %5516 = vmatprep.mubr.f32.mxu0 0.0
        %5517 = vmatmul.mubr.f32.gmra.mrb[0].mxu0 %v5379
        %v5518 = vpop.f32.mrb[0].mxu0
        %v5519 = vadd.f32 %v5345, %v5518
        %v5520 = vpop.f32.mrb[0].mxu0
        %5521 = vmatprep.mubr.f32.mxu0 0.0
        %5522 = vmatmul.mubr.f32.gmra.mrb[0].mxu0 %v5382
        %v5523 = vpop.f32.mrb[0].mxu0
        %v5524 = vadd.f32 %v5345, %v5523
        %v5525 = vpop.f32.mrb[0].mxu0
        %5526 = vmatprep.mubr.f32.mxu0 0.0
        %5527 = vmatmul.mubr.f32.gmra.mrb[0].mxu0 %v5385
        %v5528 = vpop.f32.mrb[0].mxu0
        %v5529 = vadd.f32 %v5345, %v5528
        %v5530 = vpop.f32.mrb[0].mxu0
        %5531 = vmatprep.mubr.f32.mxu0 0.0
        %5532 = vmatmul.mubr.f32.gmra.mrb[0].mxu0 %v5388
        %v5533 = vpop.f32.mrb[0].mxu0
        %v5534 = vadd.f32 %v5345, %v5533
        %v5535 = vpop.f32.mrb[0].mxu0
        %5536 = vmatprep.mubr.f32.mxu0 0.0
        %5537 = vmatmul.mubr.f32.gmra.mrb[0].mxu0 %v5391
        %v5538 = vpop.f32.mrb[0].mxu0
        %v5539 = vadd.f32 %v5345, %v5538
        %v5540 = vpop.f32.mrb[0].mxu0
        %5541 = vmatprep.mubr.f32.mxu0 0.0
        %5542 = vmatmul.mubr.f32.gmra.mrb[0].mxu0 %v5394
        %v5543 = vpop.f32.mrb[0].mxu0
        %v5544 = vadd.f32 %v5345, %v5543
        %v5545 = vpop.f32.mrb[0].mxu0
        %5546 = vmatprep.mubr.f32.mxu0 0.0
        %5547 = vmatmul.mubr.f32.gmra.mrb[0].mxu0 %v5397
        %v5548 = vpop.f32.mrb[0].mxu0
        %v5549 = vadd.f32 %v5345, %v5548
        %v5550 = vpop.f32.mrb[0].mxu0
        %5551 = vmatprep.mubr.f32.mxu0 0.0
        %5552 = vmatmul.mubr.f32.gmra.mrb[0].mxu0 %v5400
        %v5553 = vpop.f32.mrb[0].mxu0
        %v5554 = vadd.f32 %v5345, %v5553
        %v5555 = vpop.f32.mrb[0].mxu0
        %5556 = vdwg.mxu0
        %v5557 = vmax.f32 %v5469, 0.0
        %v5558 = vmax.f32 %v5474, 0.0
        %v5559 = vmax.f32 %v5479, 0.0
        %v5560 = vmax.f32 %v5484, 0.0
        %v5561 = vmax.f32 %v5489, 0.0
        %v5562 = vmax.f32 %v5494, 0.0
        %v5563 = vmax.f32 %v5499, 0.0
        %v5564 = vmax.f32 %v5504, 0.0
        %v5565 = vmax.f32 %v5509, 0.0
        %v5566 = vmax.f32 %v5514, 0.0
        %v5567 = vmax.f32 %v5519, 0.0
        %v5568 = vmax.f32 %v5524, 0.0
        %v5569 = vmax.f32 %v5529, 0.0
        %v5570 = vmax.f32 %v5534, 0.0
        %v5571 = vmax.f32 %v5539, 0.0
        %v5572 = vmax.f32 %v5544, 0.0
        %v5573 = vmax.f32 %v5549, 0.0
        %v5574 = vmax.f32 %v5554, 0.0
        %5575 = vst.msk [vmem:[#allocation4] sm:$0xff] %vm3875, %v5557
        %5576 = vst.msk [vmem:[#allocation4 + $0x8] sm:$0xff] %vm3875, %v5558
        %5577 = vst.msk [vmem:[#allocation4 + $0x10] sm:$0xff] %vm3875, %v5559
        %5578 = vst.msk [vmem:[#allocation4 + $0x18] sm:$0xff] %vm3875, %v5560
        %5579 = vst.msk [vmem:[#allocation4 + $0x20] sm:$0xff] %vm3875, %v5561
        %5580 = vst.msk [vmem:[#allocation4 + $0x28] sm:$0xff] %vm3875, %v5562
        %5581 = vst.msk [vmem:[#allocation4 + $0x30] sm:$0xff] %vm3875, %v5563
        %5582 = vst.msk [vmem:[#allocation4 + $0x38] sm:$0xff] %vm3875, %v5564
        %5583 = vst.msk [vmem:[#allocation4 + $0x40] sm:$0xff] %vm3875, %v5565
        %5584 = vst.msk [vmem:[#allocation4 + $0x48] sm:$0xff] %vm3875, %v5566
        %5585 = vst.msk [vmem:[#allocation4 + $0x50] sm:$0xff] %vm3875, %v5567
        %5586 = vst.msk [vmem:[#allocation4 + $0x58] sm:$0xff] %vm3875, %v5568
        %5587 = vst.msk [vmem:[#allocation4 + $0x60] sm:$0xff] %vm3875, %v5569
        %5588 = vst.msk [vmem:[#allocation4 + $0x68] sm:$0xff] %vm3875, %v5570
        %5589 = vst.msk [vmem:[#allocation4 + $0x70] sm:$0xff] %vm3875, %v5571
        %5590 = vst.msk [vmem:[#allocation4 + $0x78] sm:$0xff] %vm3875, %v5572
        %5591 = vst.msk [vmem:[#allocation4 + $0x80] sm:$0xff] %vm3875, %v5573
        %5592 = vst.msk [vmem:[#allocation4 + $0x88] sm:$0xff] %vm3875, %v5574
        %v5593 = vld [vmem:[#allocation4] sm:$0x3]
        %v5594 = vld [vmem:[#allocation4 + $0xc] sm:$0x3]
        %v5595 = vmax.f32 %v5593, %v5594
        %vm5596 = vcmask 58368
        %v5597 = vsel %vm5596, %v5595, -inf
        %v5598 = vrot.slane %v5597, 4
        %v5599 = vmax.f32 %v5597, %v5598
        %v5600 = vrot.slane %v5599, 2
        %v5601 = vmax.f32 %v5599, %v5600
        %v5602 = vrot.slane %v5601, 1
        %v5603 = vmax.f32 %v5601, %v5602
        %vm5604 = vcmask 57344
        %5605 = vst.msk [vmem:[#allocation5] sm:$0x1] %vm5604, %v5603
        %v5606 = vld [vmem:[#allocation4 + $0x2] sm:$0x3]
        %v5607 = vld [vmem:[#allocation4 + $0xe] sm:$0x3]
        %v5608 = vmax.f32 %v5606, %v5607
        %v5609 = vsel %vm5596, %v5608, -inf
        %v5610 = vrot.slane %v5609, 4
        %v5611 = vmax.f32 %v5609, %v5610
        %v5612 = vrot.slane %v5611, 2
        %v5613 = vmax.f32 %v5611, %v5612
        %v5614 = vrot.slane %v5613, 1
        %v5615 = vmax.f32 %v5613, %v5614
        %5616 = vst.msk [vmem:[#allocation5 + $0x1] sm:$0x1] %vm5604, %v5615
        %v5617 = vld [vmem:[#allocation4 + $0x4] sm:$0x3]
        %v5618 = vld [vmem:[#allocation4 + $0x10] sm:$0x3]
        %v5619 = vmax.f32 %v5617, %v5618
        %v5620 = vsel %vm5596, %v5619, -inf
        %v5621 = vrot.slane %v5620, 4
        %v5622 = vmax.f32 %v5620, %v5621
        %v5623 = vrot.slane %v5622, 2
        %v5624 = vmax.f32 %v5622, %v5623
        %v5625 = vrot.slane %v5624, 1
        %v5626 = vmax.f32 %v5624, %v5625
        %5627 = vst.msk [vmem:[#allocation5 + $0x2] sm:$0x1] %vm5604, %v5626
        %v5628 = vld [vmem:[#allocation4 + $0x6] sm:$0x3]
        %v5629 = vld [vmem:[#allocation4 + $0x12] sm:$0x3]
        %v5630 = vmax.f32 %v5628, %v5629
        %v5631 = vsel %vm5596, %v5630, -inf
        %v5632 = vrot.slane %v5631, 4
        %v5633 = vmax.f32 %v5631, %v5632
        %v5634 = vrot.slane %v5633, 2
        %v5635 = vmax.f32 %v5633, %v5634
        %v5636 = vrot.slane %v5635, 1
        %v5637 = vmax.f32 %v5635, %v5636
        %5638 = vst.msk [vmem:[#allocation5 + $0x3] sm:$0x1] %vm5604, %v5637
        %v5639 = vld [vmem:[#allocation4 + $0x8] sm:$0x3]
        %v5640 = vld [vmem:[#allocation4 + $0x14] sm:$0x3]
        %v5641 = vmax.f32 %v5639, %v5640
        %v5642 = vsel %vm5596, %v5641, -inf
        %v5643 = vrot.slane %v5642, 4
        %v5644 = vmax.f32 %v5642, %v5643
        %v5645 = vrot.slane %v5644, 2
        %v5646 = vmax.f32 %v5644, %v5645
        %v5647 = vrot.slane %v5646, 1
        %v5648 = vmax.f32 %v5646, %v5647
        %5649 = vst.msk [vmem:[#allocation5 + $0x4] sm:$0x1] %vm5604, %v5648
        %v5650 = vld [vmem:[#allocation4 + $0xa] sm:$0x3]
        %v5651 = vld [vmem:[#allocation4 + $0x16] sm:$0x3]
        %v5652 = vmax.f32 %v5650, %v5651
        %v5653 = vsel %vm5596, %v5652, -inf
        %v5654 = vrot.slane %v5653, 4
        %v5655 = vmax.f32 %v5653, %v5654
        %v5656 = vrot.slane %v5655, 2
        %v5657 = vmax.f32 %v5655, %v5656
        %v5658 = vrot.slane %v5657, 1
        %v5659 = vmax.f32 %v5657, %v5658
        %5660 = vst.msk [vmem:[#allocation5 + $0x5] sm:$0x1] %vm5604, %v5659
        %v5661 = vld [vmem:[#allocation4 + $0x18] sm:$0x3]
        %v5662 = vld [vmem:[#allocation4 + $0x24] sm:$0x3]
        %v5663 = vmax.f32 %v5661, %v5662
        %v5664 = vsel %vm5596, %v5663, -inf
        %v5665 = vrot.slane %v5664, 4
        %v5666 = vmax.f32 %v5664, %v5665
        %v5667 = vrot.slane %v5666, 2
        %v5668 = vmax.f32 %v5666, %v5667
        %v5669 = vrot.slane %v5668, 1
        %v5670 = vmax.f32 %v5668, %v5669
        %5671 = vst.msk [vmem:[#allocation5 + $0x6] sm:$0x1] %vm5604, %v5670
        %v5672 = vld [vmem:[#allocation4 + $0x1a] sm:$0x3]
        %v5673 = vld [vmem:[#allocation4 + $0x26] sm:$0x3]
        %v5674 = vmax.f32 %v5672, %v5673
        %v5675 = vsel %vm5596, %v5674, -inf
        %v5676 = vrot.slane %v5675, 4
        %v5677 = vmax.f32 %v5675, %v5676
        %v5678 = vrot.slane %v5677, 2
        %v5679 = vmax.f32 %v5677, %v5678
        %v5680 = vrot.slane %v5679, 1
        %v5681 = vmax.f32 %v5679, %v5680
        %5682 = vst.msk [vmem:[#allocation5 + $0x7] sm:$0x1] %vm5604, %v5681
        %v5683 = vld [vmem:[#allocation4 + $0x1c] sm:$0x3]
        %v5684 = vld [vmem:[#allocation4 + $0x28] sm:$0x3]
        %v5685 = vmax.f32 %v5683, %v5684
        %v5686 = vsel %vm5596, %v5685, -inf
        %v5687 = vrot.slane %v5686, 4
        %v5688 = vmax.f32 %v5686, %v5687
        %v5689 = vrot.slane %v5688, 2
        %v5690 = vmax.f32 %v5688, %v5689
        %v5691 = vrot.slane %v5690, 1
        %v5692 = vmax.f32 %v5690, %v5691
        %5693 = vst.msk [vmem:[#allocation5 + $0x8] sm:$0x1] %vm5604, %v5692
        %v5694 = vld [vmem:[#allocation4 + $0x1e] sm:$0x3]
        %v5695 = vld [vmem:[#allocation4 + $0x2a] sm:$0x3]
        %v5696 = vmax.f32 %v5694, %v5695
        %v5697 = vsel %vm5596, %v5696, -inf
        %v5698 = vrot.slane %v5697, 4
        %v5699 = vmax.f32 %v5697, %v5698
        %v5700 = vrot.slane %v5699, 2
        %v5701 = vmax.f32 %v5699, %v5700
        %v5702 = vrot.slane %v5701, 1
        %v5703 = vmax.f32 %v5701, %v5702
        %5704 = vst.msk [vmem:[#allocation5 + $0x9] sm:$0x1] %vm5604, %v5703
        %v5705 = vld [vmem:[#allocation4 + $0x20] sm:$0x3]
        %v5706 = vld [vmem:[#allocation4 + $0x2c] sm:$0x3]
        %v5707 = vmax.f32 %v5705, %v5706
        %v5708 = vsel %vm5596, %v5707, -inf
        %v5709 = vrot.slane %v5708, 4
        %v5710 = vmax.f32 %v5708, %v5709
        %v5711 = vrot.slane %v5710, 2
        %v5712 = vmax.f32 %v5710, %v5711
        %v5713 = vrot.slane %v5712, 1
        %v5714 = vmax.f32 %v5712, %v5713
        %5715 = vst.msk [vmem:[#allocation5 + $0xa] sm:$0x1] %vm5604, %v5714
        %v5716 = vld [vmem:[#allocation4 + $0x22] sm:$0x3]
        %v5717 = vld [vmem:[#allocation4 + $0x2e] sm:$0x3]
        %v5718 = vmax.f32 %v5716, %v5717
        %v5719 = vsel %vm5596, %v5718, -inf
        %v5720 = vrot.slane %v5719, 4
        %v5721 = vmax.f32 %v5719, %v5720
        %v5722 = vrot.slane %v5721, 2
        %v5723 = vmax.f32 %v5721, %v5722
        %v5724 = vrot.slane %v5723, 1
        %v5725 = vmax.f32 %v5723, %v5724
        %5726 = vst.msk [vmem:[#allocation5 + $0xb] sm:$0x1] %vm5604, %v5725
        %v5727 = vld [vmem:[#allocation4 + $0x30] sm:$0x3]
        %v5728 = vld [vmem:[#allocation4 + $0x3c] sm:$0x3]
        %v5729 = vmax.f32 %v5727, %v5728
        %v5730 = vsel %vm5596, %v5729, -inf
        %v5731 = vrot.slane %v5730, 4
        %v5732 = vmax.f32 %v5730, %v5731
        %v5733 = vrot.slane %v5732, 2
        %v5734 = vmax.f32 %v5732, %v5733
        %v5735 = vrot.slane %v5734, 1
        %v5736 = vmax.f32 %v5734, %v5735
        %5737 = vst.msk [vmem:[#allocation5 + $0xc] sm:$0x1] %vm5604, %v5736
        %v5738 = vld [vmem:[#allocation4 + $0x32] sm:$0x3]
        %v5739 = vld [vmem:[#allocation4 + $0x3e] sm:$0x3]
        %v5740 = vmax.f32 %v5738, %v5739
        %v5741 = vsel %vm5596, %v5740, -inf
        %v5742 = vrot.slane %v5741, 4
        %v5743 = vmax.f32 %v5741, %v5742
        %v5744 = vrot.slane %v5743, 2
        %v5745 = vmax.f32 %v5743, %v5744
        %v5746 = vrot.slane %v5745, 1
        %v5747 = vmax.f32 %v5745, %v5746
        %5748 = vst.msk [vmem:[#allocation5 + $0xd] sm:$0x1] %vm5604, %v5747
        %v5749 = vld [vmem:[#allocation4 + $0x34] sm:$0x3]
        %v5750 = vld [vmem:[#allocation4 + $0x40] sm:$0x3]
        %v5751 = vmax.f32 %v5749, %v5750
        %v5752 = vsel %vm5596, %v5751, -inf
        %v5753 = vrot.slane %v5752, 4
        %v5754 = vmax.f32 %v5752, %v5753
        %v5755 = vrot.slane %v5754, 2
        %v5756 = vmax.f32 %v5754, %v5755
        %v5757 = vrot.slane %v5756, 1
        %v5758 = vmax.f32 %v5756, %v5757
        %5759 = vst.msk [vmem:[#allocation5 + $0xe] sm:$0x1] %vm5604, %v5758
        %v5760 = vld [vmem:[#allocation4 + $0x36] sm:$0x3]
        %v5761 = vld [vmem:[#allocation4 + $0x42] sm:$0x3]
        %v5762 = vmax.f32 %v5760, %v5761
        %v5763 = vsel %vm5596, %v5762, -inf
        %v5764 = vrot.slane %v5763, 4
        %v5765 = vmax.f32 %v5763, %v5764
        %v5766 = vrot.slane %v5765, 2
        %v5767 = vmax.f32 %v5765, %v5766
        %v5768 = vrot.slane %v5767, 1
        %v5769 = vmax.f32 %v5767, %v5768
        %5770 = vst.msk [vmem:[#allocation5 + $0xf] sm:$0x1] %vm5604, %v5769
        %v5771 = vld [vmem:[#allocation4 + $0x38] sm:$0x3]
        %v5772 = vld [vmem:[#allocation4 + $0x44] sm:$0x3]
        %v5773 = vmax.f32 %v5771, %v5772
        %v5774 = vsel %vm5596, %v5773, -inf
        %v5775 = vrot.slane %v5774, 4
        %v5776 = vmax.f32 %v5774, %v5775
        %v5777 = vrot.slane %v5776, 2
        %v5778 = vmax.f32 %v5776, %v5777
        %v5779 = vrot.slane %v5778, 1
        %v5780 = vmax.f32 %v5778, %v5779
        %5781 = vst.msk [vmem:[#allocation5 + $0x10] sm:$0x1] %vm5604, %v5780
        %v5782 = vld [vmem:[#allocation4 + $0x3a] sm:$0x3]
        %v5783 = vld [vmem:[#allocation4 + $0x46] sm:$0x3]
        %v5784 = vmax.f32 %v5782, %v5783
        %v5785 = vsel %vm5596, %v5784, -inf
        %v5786 = vrot.slane %v5785, 4
        %v5787 = vmax.f32 %v5785, %v5786
        %v5788 = vrot.slane %v5787, 2
        %v5789 = vmax.f32 %v5787, %v5788
        %v5790 = vrot.slane %v5789, 1
        %v5791 = vmax.f32 %v5789, %v5790
        %5792 = vst.msk [vmem:[#allocation5 + $0x11] sm:$0x1] %vm5604, %v5791
        %v5793 = vld [vmem:[#allocation4 + $0x48] sm:$0x3]
        %v5794 = vld [vmem:[#allocation4 + $0x54] sm:$0x3]
        %v5795 = vmax.f32 %v5793, %v5794
        %v5796 = vsel %vm5596, %v5795, -inf
        %v5797 = vrot.slane %v5796, 4
        %v5798 = vmax.f32 %v5796, %v5797
        %v5799 = vrot.slane %v5798, 2
        %v5800 = vmax.f32 %v5798, %v5799
        %v5801 = vrot.slane %v5800, 1
        %v5802 = vmax.f32 %v5800, %v5801
        %5803 = vst.msk [vmem:[#allocation5 + $0x12] sm:$0x1] %vm5604, %v5802
        %v5804 = vld [vmem:[#allocation4 + $0x4a] sm:$0x3]
        %v5805 = vld [vmem:[#allocation4 + $0x56] sm:$0x3]
        %v5806 = vmax.f32 %v5804, %v5805
        %v5807 = vsel %vm5596, %v5806, -inf
        %v5808 = vrot.slane %v5807, 4
        %v5809 = vmax.f32 %v5807, %v5808
        %v5810 = vrot.slane %v5809, 2
        %v5811 = vmax.f32 %v5809, %v5810
        %v5812 = vrot.slane %v5811, 1
        %v5813 = vmax.f32 %v5811, %v5812
        %5814 = vst.msk [vmem:[#allocation5 + $0x13] sm:$0x1] %vm5604, %v5813
        %v5815 = vld [vmem:[#allocation4 + $0x4c] sm:$0x3]
        %v5816 = vld [vmem:[#allocation4 + $0x58] sm:$0x3]
        %v5817 = vmax.f32 %v5815, %v5816
        %v5818 = vsel %vm5596, %v5817, -inf
        %v5819 = vrot.slane %v5818, 4
        %v5820 = vmax.f32 %v5818, %v5819
        %v5821 = vrot.slane %v5820, 2
        %v5822 = vmax.f32 %v5820, %v5821
        %v5823 = vrot.slane %v5822, 1
        %v5824 = vmax.f32 %v5822, %v5823
        %5825 = vst.msk [vmem:[#allocation5 + $0x14] sm:$0x1] %vm5604, %v5824
        %v5826 = vld [vmem:[#allocation4 + $0x4e] sm:$0x3]
        %v5827 = vld [vmem:[#allocation4 + $0x5a] sm:$0x3]
        %v5828 = vmax.f32 %v5826, %v5827
        %v5829 = vsel %vm5596, %v5828, -inf
        %v5830 = vrot.slane %v5829, 4
        %v5831 = vmax.f32 %v5829, %v5830
        %v5832 = vrot.slane %v5831, 2
        %v5833 = vmax.f32 %v5831, %v5832
        %v5834 = vrot.slane %v5833, 1
        %v5835 = vmax.f32 %v5833, %v5834
        %5836 = vst.msk [vmem:[#allocation5 + $0x15] sm:$0x1] %vm5604, %v5835
        %v5837 = vld [vmem:[#allocation4 + $0x50] sm:$0x3]
        %v5838 = vld [vmem:[#allocation4 + $0x5c] sm:$0x3]
        %v5839 = vmax.f32 %v5837, %v5838
        %v5840 = vsel %vm5596, %v5839, -inf
        %v5841 = vrot.slane %v5840, 4
        %v5842 = vmax.f32 %v5840, %v5841
        %v5843 = vrot.slane %v5842, 2
        %v5844 = vmax.f32 %v5842, %v5843
        %v5845 = vrot.slane %v5844, 1
        %v5846 = vmax.f32 %v5844, %v5845
        %5847 = vst.msk [vmem:[#allocation5 + $0x16] sm:$0x1] %vm5604, %v5846
        %v5848 = vld [vmem:[#allocation4 + $0x52] sm:$0x3]
        %v5849 = vld [vmem:[#allocation4 + $0x5e] sm:$0x3]
        %v5850 = vmax.f32 %v5848, %v5849
        %v5851 = vsel %vm5596, %v5850, -inf
        %v5852 = vrot.slane %v5851, 4
        %v5853 = vmax.f32 %v5851, %v5852
        %v5854 = vrot.slane %v5853, 2
        %v5855 = vmax.f32 %v5853, %v5854
        %v5856 = vrot.slane %v5855, 1
        %v5857 = vmax.f32 %v5855, %v5856
        %5858 = vst.msk [vmem:[#allocation5 + $0x17] sm:$0x1] %vm5604, %v5857
        %v5859 = vld [vmem:[#allocation4 + $0x60] sm:$0x3]
        %v5860 = vld [vmem:[#allocation4 + $0x6c] sm:$0x3]
        %v5861 = vmax.f32 %v5859, %v5860
        %v5862 = vsel %vm5596, %v5861, -inf
        %v5863 = vrot.slane %v5862, 4
        %v5864 = vmax.f32 %v5862, %v5863
        %v5865 = vrot.slane %v5864, 2
        %v5866 = vmax.f32 %v5864, %v5865
        %v5867 = vrot.slane %v5866, 1
        %v5868 = vmax.f32 %v5866, %v5867
        %5869 = vst.msk [vmem:[#allocation5 + $0x18] sm:$0x1] %vm5604, %v5868
        %v5870 = vld [vmem:[#allocation4 + $0x62] sm:$0x3]
        %v5871 = vld [vmem:[#allocation4 + $0x6e] sm:$0x3]
        %v5872 = vmax.f32 %v5870, %v5871
        %v5873 = vsel %vm5596, %v5872, -inf
        %v5874 = vrot.slane %v5873, 4
        %v5875 = vmax.f32 %v5873, %v5874
        %v5876 = vrot.slane %v5875, 2
        %v5877 = vmax.f32 %v5875, %v5876
        %v5878 = vrot.slane %v5877, 1
        %v5879 = vmax.f32 %v5877, %v5878
        %5880 = vst.msk [vmem:[#allocation5 + $0x19] sm:$0x1] %vm5604, %v5879
        %v5881 = vld [vmem:[#allocation4 + $0x64] sm:$0x3]
        %v5882 = vld [vmem:[#allocation4 + $0x70] sm:$0x3]
        %v5883 = vmax.f32 %v5881, %v5882
        %v5884 = vsel %vm5596, %v5883, -inf
        %v5885 = vrot.slane %v5884, 4
        %v5886 = vmax.f32 %v5884, %v5885
        %v5887 = vrot.slane %v5886, 2
        %v5888 = vmax.f32 %v5886, %v5887
        %v5889 = vrot.slane %v5888, 1
        %v5890 = vmax.f32 %v5888, %v5889
        %5891 = vst.msk [vmem:[#allocation5 + $0x1a] sm:$0x1] %vm5604, %v5890
        %v5892 = vld [vmem:[#allocation4 + $0x66] sm:$0x3]
        %v5893 = vld [vmem:[#allocation4 + $0x72] sm:$0x3]
        %v5894 = vmax.f32 %v5892, %v5893
        %v5895 = vsel %vm5596, %v5894, -inf
        %v5896 = vrot.slane %v5895, 4
        %v5897 = vmax.f32 %v5895, %v5896
        %v5898 = vrot.slane %v5897, 2
        %v5899 = vmax.f32 %v5897, %v5898
        %v5900 = vrot.slane %v5899, 1
        %v5901 = vmax.f32 %v5899, %v5900
        %5902 = vst.msk [vmem:[#allocation5 + $0x1b] sm:$0x1] %vm5604, %v5901
        %v5903 = vld [vmem:[#allocation4 + $0x68] sm:$0x3]
        %v5904 = vld [vmem:[#allocation4 + $0x74] sm:$0x3]
        %v5905 = vmax.f32 %v5903, %v5904
        %v5906 = vsel %vm5596, %v5905, -inf
        %v5907 = vrot.slane %v5906, 4
        %v5908 = vmax.f32 %v5906, %v5907
        %v5909 = vrot.slane %v5908, 2
        %v5910 = vmax.f32 %v5908, %v5909
        %v5911 = vrot.slane %v5910, 1
        %v5912 = vmax.f32 %v5910, %v5911
        %5913 = vst.msk [vmem:[#allocation5 + $0x1c] sm:$0x1] %vm5604, %v5912
        %v5914 = vld [vmem:[#allocation4 + $0x6a] sm:$0x3]
        %v5915 = vld [vmem:[#allocation4 + $0x76] sm:$0x3]
        %v5916 = vmax.f32 %v5914, %v5915
        %v5917 = vsel %vm5596, %v5916, -inf
        %v5918 = vrot.slane %v5917, 4
        %v5919 = vmax.f32 %v5917, %v5918
        %v5920 = vrot.slane %v5919, 2
        %v5921 = vmax.f32 %v5919, %v5920
        %v5922 = vrot.slane %v5921, 1
        %v5923 = vmax.f32 %v5921, %v5922
        %5924 = vst.msk [vmem:[#allocation5 + $0x1d] sm:$0x1] %vm5604, %v5923
        %v5925 = vld [vmem:[#allocation4 + $0x78] sm:$0x3]
        %v5926 = vld [vmem:[#allocation4 + $0x84] sm:$0x3]
        %v5927 = vmax.f32 %v5925, %v5926
        %v5928 = vsel %vm5596, %v5927, -inf
        %v5929 = vrot.slane %v5928, 4
        %v5930 = vmax.f32 %v5928, %v5929
        %v5931 = vrot.slane %v5930, 2
        %v5932 = vmax.f32 %v5930, %v5931
        %v5933 = vrot.slane %v5932, 1
        %v5934 = vmax.f32 %v5932, %v5933
        %5935 = vst.msk [vmem:[#allocation5 + $0x1e] sm:$0x1] %vm5604, %v5934
        %v5936 = vld [vmem:[#allocation4 + $0x7a] sm:$0x3]
        %v5937 = vld [vmem:[#allocation4 + $0x86] sm:$0x3]
        %v5938 = vmax.f32 %v5936, %v5937
        %v5939 = vsel %vm5596, %v5938, -inf
        %v5940 = vrot.slane %v5939, 4
        %v5941 = vmax.f32 %v5939, %v5940
        %v5942 = vrot.slane %v5941, 2
        %v5943 = vmax.f32 %v5941, %v5942
        %v5944 = vrot.slane %v5943, 1
        %v5945 = vmax.f32 %v5943, %v5944
        %5946 = vst.msk [vmem:[#allocation5 + $0x1f] sm:$0x1] %vm5604, %v5945
        %v5947 = vld [vmem:[#allocation4 + $0x7c] sm:$0x3]
        %v5948 = vld [vmem:[#allocation4 + $0x88] sm:$0x3]
        %v5949 = vmax.f32 %v5947, %v5948
        %v5950 = vsel %vm5596, %v5949, -inf
        %v5951 = vrot.slane %v5950, 4
        %v5952 = vmax.f32 %v5950, %v5951
        %v5953 = vrot.slane %v5952, 2
        %v5954 = vmax.f32 %v5952, %v5953
        %v5955 = vrot.slane %v5954, 1
        %v5956 = vmax.f32 %v5954, %v5955
        %5957 = vst.msk [vmem:[#allocation5 + $0x20] sm:$0x1] %vm5604, %v5956
        %v5958 = vld [vmem:[#allocation4 + $0x7e] sm:$0x3]
        %v5959 = vld [vmem:[#allocation4 + $0x8a] sm:$0x3]
        %v5960 = vmax.f32 %v5958, %v5959
        %v5961 = vsel %vm5596, %v5960, -inf
        %v5962 = vrot.slane %v5961, 4
        %v5963 = vmax.f32 %v5961, %v5962
        %v5964 = vrot.slane %v5963, 2
        %v5965 = vmax.f32 %v5963, %v5964
        %v5966 = vrot.slane %v5965, 1
        %v5967 = vmax.f32 %v5965, %v5966
        %5968 = vst.msk [vmem:[#allocation5 + $0x21] sm:$0x1] %vm5604, %v5967
        %v5969 = vld [vmem:[#allocation4 + $0x80] sm:$0x3]
        %v5970 = vld [vmem:[#allocation4 + $0x8c] sm:$0x3]
        %v5971 = vmax.f32 %v5969, %v5970
        %v5972 = vsel %vm5596, %v5971, -inf
        %v5973 = vrot.slane %v5972, 4
        %v5974 = vmax.f32 %v5972, %v5973
        %v5975 = vrot.slane %v5974, 2
        %v5976 = vmax.f32 %v5974, %v5975
        %v5977 = vrot.slane %v5976, 1
        %v5978 = vmax.f32 %v5976, %v5977
        %5979 = vst.msk [vmem:[#allocation5 + $0x22] sm:$0x1] %vm5604, %v5978
        %v5980 = vld [vmem:[#allocation4 + $0x82] sm:$0x3]
        %v5981 = vld [vmem:[#allocation4 + $0x8e] sm:$0x3]
        %v5982 = vmax.f32 %v5980, %v5981
        %v5983 = vsel %vm5596, %v5982, -inf
        %v5984 = vrot.slane %v5983, 4
        %v5985 = vmax.f32 %v5983, %v5984
        %v5986 = vrot.slane %v5985, 2
        %v5987 = vmax.f32 %v5985, %v5986
        %v5988 = vrot.slane %v5987, 1
        %v5989 = vmax.f32 %v5987, %v5988
        %5990 = vst.msk [vmem:[#allocation5 + $0x23] sm:$0x1] %vm5604, %v5989
        %v5991 = vld [vmem:[#allocation5] sm:$0xf]
        %5992 = vst.msk [vmem:[#allocation2] sm:$0xf] %vm3900, %v5991
        %v5993 = vld [vmem:[#allocation5 + $0x1] sm:$0xf]
        %5995 = vrot.lane.b32.xlu0 %v5993, 8
        %v5996 = vpop.permute.xlu0 %5995
        %5998 = vst.msk [vmem:[#allocation2] sm:$0xf] %vm3918, %v5996
        %v5999 = vld [vmem:[#allocation5 + $0x2] sm:$0xf]
        %6001 = vrot.lane.b32.xlu0 %v5999, 16
        %v6002 = vpop.permute.xlu0 %6001
        %6004 = vst.msk [vmem:[#allocation2] sm:$0xf] %vm3932, %v6002
        %v6005 = vld [vmem:[#allocation5 + $0x6] sm:$0xf]
        %6007 = vrot.lane.b32.xlu0 %v6005, 24
        %v6008 = vpop.permute.xlu0 %6007
        %6010 = vst.msk [vmem:[#allocation2] sm:$0xf] %vm3946, %v6008
        %v6011 = vld [vmem:[#allocation5 + $0x7] sm:$0xf]
        %6013 = vrot.lane.b32.xlu0 %v6011, 32
        %v6014 = vpop.permute.xlu0 %6013
        %6016 = vst.msk [vmem:[#allocation2] sm:$0xf] %vm3960, %v6014
        %v6017 = vld [vmem:[#allocation5 + $0x8] sm:$0xf]
        %6019 = vrot.lane.b32.xlu0 %v6017, 40
        %v6020 = vpop.permute.xlu0 %6019
        %6022 = vst.msk [vmem:[#allocation2] sm:$0xf] %vm3974, %v6020
        %v6023 = vld [vmem:[#allocation5 + $0xc] sm:$0xf]
        %6025 = vrot.lane.b32.xlu0 %v6023, 48
        %v6026 = vpop.permute.xlu0 %6025
        %6028 = vst.msk [vmem:[#allocation2] sm:$0xf] %vm3988, %v6026
        %v6029 = vld [vmem:[#allocation5 + $0xd] sm:$0xf]
        %6031 = vrot.lane.b32.xlu0 %v6029, 56
        %v6032 = vpop.permute.xlu0 %6031
        %6034 = vst.msk [vmem:[#allocation2] sm:$0xf] %vm4002, %v6032
        %v6035 = vld [vmem:[#allocation5 + $0xe] sm:$0xf]
        %6037 = vrot.lane.b32.xlu0 %v6035, 64
        %v6038 = vpop.permute.xlu0 %6037
        %6040 = vst.msk [vmem:[#allocation2] sm:$0xf] %vm4016, %v6038
        %v6041 = vld [vmem:[#allocation5 + $0x6] sm:$0xf]
        %v6043 = vrot.slane %v6041, 4
        %6045 = vst.msk [vmem:[#allocation2] sm:$0xf0] %vm4027, %v6043
        %v6046 = vld [vmem:[#allocation5 + $0x7] sm:$0xf]
        %v6048 = vrot.slane %v6046, 4
        %6049 = vrot.lane.b32.xlu0 %v6048, 8
        %v6050 = vpop.permute.xlu0 %6049
        %6052 = vst.msk [vmem:[#allocation2] sm:$0xf0] %vm4043, %v6050
        %v6053 = vld [vmem:[#allocation5 + $0x8] sm:$0xf]
        %v6055 = vrot.slane %v6053, 4
        %6056 = vrot.lane.b32.xlu0 %v6055, 16
        %v6057 = vpop.permute.xlu0 %6056
        %6059 = vst.msk [vmem:[#allocation2] sm:$0xf0] %vm4059, %v6057
        %v6060 = vld [vmem:[#allocation5 + $0xc] sm:$0xf]
        %v6062 = vrot.slane %v6060, 4
        %6063 = vrot.lane.b32.xlu0 %v6062, 24
        %v6064 = vpop.permute.xlu0 %6063
        %6066 = vst.msk [vmem:[#allocation2] sm:$0xf0] %vm4075, %v6064
        %v6067 = vld [vmem:[#allocation5 + $0xd] sm:$0xf]
        %v6069 = vrot.slane %v6067, 4
        %6070 = vrot.lane.b32.xlu0 %v6069, 32
        %v6071 = vpop.permute.xlu0 %6070
        %6073 = vst.msk [vmem:[#allocation2] sm:$0xf0] %vm4091, %v6071
        %v6074 = vld [vmem:[#allocation5 + $0xe] sm:$0xf]
        %v6076 = vrot.slane %v6074, 4
        %6077 = vrot.lane.b32.xlu0 %v6076, 40
        %v6078 = vpop.permute.xlu0 %6077
        %6080 = vst.msk [vmem:[#allocation2] sm:$0xf0] %vm4107, %v6078
        %v6081 = vld [vmem:[#allocation5 + $0x12] sm:$0xf]
        %v6083 = vrot.slane %v6081, 4
        %6084 = vrot.lane.b32.xlu0 %v6083, 48
        %v6085 = vpop.permute.xlu0 %6084
        %6087 = vst.msk [vmem:[#allocation2] sm:$0xf0] %vm4123, %v6085
        %v6088 = vld [vmem:[#allocation5 + $0x13] sm:$0xf]
        %v6090 = vrot.slane %v6088, 4
        %6091 = vrot.lane.b32.xlu0 %v6090, 56
        %v6092 = vpop.permute.xlu0 %6091
        %6094 = vst.msk [vmem:[#allocation2] sm:$0xf0] %vm4139, %v6092
        %v6095 = vld [vmem:[#allocation5 + $0x14] sm:$0xf]
        %v6097 = vrot.slane %v6095, 4
        %6098 = vrot.lane.b32.xlu0 %v6097, 64
        %v6099 = vpop.permute.xlu0 %6098
        %6101 = vst.msk [vmem:[#allocation2] sm:$0xf0] %vm4155, %v6099
        %v6102 = vld [vmem:[#allocation5 + $0xc] sm:$0xf]
        %6103 = vst.msk [vmem:[#allocation2 + $0x10] sm:$0xf] %vm3900, %v6102
        %v6104 = vld [vmem:[#allocation5 + $0xd] sm:$0xf]
        %6106 = vrot.lane.b32.xlu0 %v6104, 8
        %v6107 = vpop.permute.xlu0 %6106
        %6109 = vst.msk [vmem:[#allocation2 + $0x10] sm:$0xf] %vm3918, %v6107
        %v6110 = vld [vmem:[#allocation5 + $0xe] sm:$0xf]
        %6112 = vrot.lane.b32.xlu0 %v6110, 16
        %v6113 = vpop.permute.xlu0 %6112
        %6115 = vst.msk [vmem:[#allocation2 + $0x10] sm:$0xf] %vm3932, %v6113
        %v6116 = vld [vmem:[#allocation5 + $0x12] sm:$0xf]
        %6118 = vrot.lane.b32.xlu0 %v6116, 24
        %v6119 = vpop.permute.xlu0 %6118
        %6121 = vst.msk [vmem:[#allocation2 + $0x10] sm:$0xf] %vm3946, %v6119
        %v6122 = vld [vmem:[#allocation5 + $0x13] sm:$0xf]
        %6124 = vrot.lane.b32.xlu0 %v6122, 32
        %v6125 = vpop.permute.xlu0 %6124
        %6127 = vst.msk [vmem:[#allocation2 + $0x10] sm:$0xf] %vm3960, %v6125
        %v6128 = vld [vmem:[#allocation5 + $0x14] sm:$0xf]
        %6130 = vrot.lane.b32.xlu0 %v6128, 40
        %v6131 = vpop.permute.xlu0 %6130
        %6133 = vst.msk [vmem:[#allocation2 + $0x10] sm:$0xf] %vm3974, %v6131
        %v6134 = vld [vmem:[#allocation5 + $0x18] sm:$0xf]
        %6136 = vrot.lane.b32.xlu0 %v6134, 48
        %v6137 = vpop.permute.xlu0 %6136
        %6139 = vst.msk [vmem:[#allocation2 + $0x10] sm:$0xf] %vm3988, %v6137
        %v6140 = vld [vmem:[#allocation5 + $0x19] sm:$0xf]
        %6142 = vrot.lane.b32.xlu0 %v6140, 56
        %v6143 = vpop.permute.xlu0 %6142
        %6145 = vst.msk [vmem:[#allocation2 + $0x10] sm:$0xf] %vm4002, %v6143
        %v6146 = vld [vmem:[#allocation5 + $0x1a] sm:$0xf]
        %6148 = vrot.lane.b32.xlu0 %v6146, 64
        %v6149 = vpop.permute.xlu0 %6148
        %6151 = vst.msk [vmem:[#allocation2 + $0x10] sm:$0xf] %vm4016, %v6149
        %v6152 = vld [vmem:[#allocation5 + $0x12] sm:$0xf]
        %v6154 = vrot.slane %v6152, 4
        %6156 = vst.msk [vmem:[#allocation2 + $0x10] sm:$0xf0] %vm4027, %v6154
        %v6157 = vld [vmem:[#allocation5 + $0x13] sm:$0xf]
        %v6159 = vrot.slane %v6157, 4
        %6160 = vrot.lane.b32.xlu0 %v6159, 8
        %v6161 = vpop.permute.xlu0 %6160
        %6163 = vst.msk [vmem:[#allocation2 + $0x10] sm:$0xf0] %vm4043, %v6161
        %v6164 = vld [vmem:[#allocation5 + $0x14] sm:$0xf]
        %v6166 = vrot.slane %v6164, 4
        %6167 = vrot.lane.b32.xlu0 %v6166, 16
        %v6168 = vpop.permute.xlu0 %6167
        %6170 = vst.msk [vmem:[#allocation2 + $0x10] sm:$0xf0] %vm4059, %v6168
        %v6171 = vld [vmem:[#allocation5 + $0x18] sm:$0xf]
        %v6173 = vrot.slane %v6171, 4
        %6174 = vrot.lane.b32.xlu0 %v6173, 24
        %v6175 = vpop.permute.xlu0 %6174
        %6177 = vst.msk [vmem:[#allocation2 + $0x10] sm:$0xf0] %vm4075, %v6175
        %v6178 = vld [vmem:[#allocation5 + $0x19] sm:$0xf]
        %v6180 = vrot.slane %v6178, 4
        %6181 = vrot.lane.b32.xlu0 %v6180, 32
        %v6182 = vpop.permute.xlu0 %6181
        %6184 = vst.msk [vmem:[#allocation2 + $0x10] sm:$0xf0] %vm4091, %v6182
        %v6185 = vld [vmem:[#allocation5 + $0x1a] sm:$0xf]
        %v6187 = vrot.slane %v6185, 4
        %6188 = vrot.lane.b32.xlu0 %v6187, 40
        %v6189 = vpop.permute.xlu0 %6188
        %6191 = vst.msk [vmem:[#allocation2 + $0x10] sm:$0xf0] %vm4107, %v6189
        %v6192 = vld [vmem:[#allocation5 + $0x1e] sm:$0xf]
        %v6194 = vrot.slane %v6192, 4
        %6195 = vrot.lane.b32.xlu0 %v6194, 48
        %v6196 = vpop.permute.xlu0 %6195
        %6198 = vst.msk [vmem:[#allocation2 + $0x10] sm:$0xf0] %vm4123, %v6196
        %v6199 = vld [vmem:[#allocation5 + $0x1f] sm:$0xf]
        %v6201 = vrot.slane %v6199, 4
        %6202 = vrot.lane.b32.xlu0 %v6201, 56
        %v6203 = vpop.permute.xlu0 %6202
        %6205 = vst.msk [vmem:[#allocation2 + $0x10] sm:$0xf0] %vm4139, %v6203
        %v6206 = vld [vmem:[#allocation5 + $0x20] sm:$0xf]
        %v6208 = vrot.slane %v6206, 4
        %6209 = vrot.lane.b32.xlu0 %v6208, 64
        %v6210 = vpop.permute.xlu0 %6209
        %6212 = vst.msk [vmem:[#allocation2 + $0x10] sm:$0xf0] %vm4155, %v6210
        %v6213 = vld [vmem:[#allocation2] sm:$0xff]
        %v6214 = vld [vmem:[#allocation2 + $0x10] sm:$0xff]
        %v6215 = vld [vmem:[%s5] sm:$0xff]
        %v6216 = vld [vmem:[%s5 + $0x8] sm:$0xff]
        %v6217 = vld [vmem:[%s5 + $0x10] sm:$0xff]
        %v6218 = vld [vmem:[%s5 + $0x18] sm:$0xff]
        %v6219 = vld [vmem:[%s5 + $0x20] sm:$0xff]
        %v6220 = vld [vmem:[%s5 + $0x28] sm:$0xff]
        %v6221 = vld [vmem:[%s5 + $0x30] sm:$0xff]
        %v6222 = vld [vmem:[%s5 + $0x38] sm:$0xff]
        %v6223 = vld [vmem:[%s5 + $0x40] sm:$0xff]
        %v6224 = vld [vmem:[%s6] sm:$0x1]
        %v6226 = vlaneseq
        %v6227 = vshrl.u32 %v6226, 7
        %v6228 = vsub.s32 0, %v6227
        %v6229 = vrot.slane %v6224, %v6228
        %v6232 = vsel %vm5347, %v6213, 0
        %v6235 = vsel %vm5347, %v6214, 0
        %6237 = vmatprep.subr.mxu0 0.0
        %6238 = vmatpush1.msra.mxu0 %v6215
        %6239 = vmatprep.subr.mxu0 0.0
        %6240 = vmatpush1.msra.mxu0 %v6216
        %6241 = vmatprep.subr.mxu0 0.0
        %6242 = vmatpush1.msra.mxu0 %v6217
        %6243 = vmatprep.subr.mxu0 0.0
        %6244 = vmatpush1.msra.mxu0 %v6218
        %6245 = vmatprep.subr.mxu0 0.0
        %6246 = vmatpush1.msra.mxu0 %v6219
        %6247 = vmatprep.subr.mxu0 0.0
        %6248 = vmatpush1.msra.mxu0 %v6220
        %6249 = vmatprep.subr.mxu0 0.0
        %6250 = vmatpush1.msra.mxu0 %v6221
        %6251 = vmatprep.subr.mxu0 0.0
        %6252 = vmatpush1.msra.mxu0 %v6222
        %6253 = vmatprep.subr.mxu0 0.0
        %6254 = vmatpush1.msra.mxu0 %v6223
        %6255 = vmatprep.subr.mxu0 0.0
        %6256 = vmatpush1.msra.mxu0 0.0
        %6257 = vmatprep.subr.mxu0 0.0
        %6258 = vmatpush1.msra.mxu0 0.0
        %6259 = vmatprep.subr.mxu0 0.0
        %6260 = vmatpush1.msra.mxu0 0.0
        %6261 = vmatprep.subr.mxu0 0.0
        %6262 = vmatpush1.msra.mxu0 0.0
        %6263 = vmatprep.subr.mxu0 0.0
        %6264 = vmatpush1.msra.mxu0 0.0
        %6265 = vmatprep.subr.mxu0 0.0
        %6266 = vmatpush1.msra.mxu0 0.0
        %6267 = vmatprep.subr.mxu0 0.0
        %6268 = vmatpush1.msra.mxu0 0.0
        %6269 = vmatprep.subr.mxu0 0.0
        %6270 = vmatpush1.msra.mxu0 0.0
        %6271 = vmatprep.subr.mxu0 0.0
        %6272 = vmatpush1.msra.mxu0 0.0
        %6273 = vmatprep.subr.mxu0 0.0
        %6274 = vmatpush1.msra.mxu0 0.0
        %6275 = vmatprep.subr.mxu0 0.0
        %6276 = vmatpush1.msra.mxu0 0.0
        %6277 = vmatprep.subr.mxu0 0.0
        %6278 = vmatpush1.msra.mxu0 0.0
        %6279 = vmatprep.subr.mxu0 0.0
        %6280 = vmatpush1.msra.mxu0 0.0
        %6281 = vmatprep.subr.mxu0 0.0
        %6282 = vmatpush1.msra.mxu0 0.0
        %6283 = vmatprep.subr.mxu0 0.0
        %6284 = vmatpush1.msra.mxu0 0.0
        %6285 = vmatprep.subr.mxu0 0.0
        %6286 = vmatpush1.msra.mxu0 0.0
        %6287 = vmatprep.subr.mxu0 0.0
        %6288 = vmatpush1.msra.mxu0 0.0
        %6289 = vmatprep.subr.mxu0 0.0
        %6290 = vmatpush1.msra.mxu0 0.0
        %6291 = vmatprep.subr.mxu0 0.0
        %6292 = vmatpush1.msra.mxu0 0.0
        %6293 = vmatprep.subr.mxu0 0.0
        %6294 = vmatpush1.msra.mxu0 0.0
        %6295 = vmatprep.subr.mxu0 0.0
        %6296 = vmatpush1.msra.mxu0 0.0
        %6297 = vmatprep.subr.mxu0 0.0
        %6298 = vmatpush1.msra.mxu0 0.0
        %6299 = vmatprep.subr.mxu0 0.0
        %6300 = vmatpush1.msra.mxu0 0.0
        %6301 = vmatprep.mubr.f32.mxu0 0.0
        %6302 = vmatmul.mubr.f32.gmra.mrb[0].mxu0 %v6232
        %v6303 = vpop.f32.mrb[0].mxu0
        %v6304 = vadd.f32 %v6229, %v6303
        %v6305 = vpop.f32.mrb[0].mxu0
        %6306 = vmatprep.mubr.f32.mxu0 0.0
        %6307 = vmatmul.mubr.f32.gmra.mrb[0].mxu0 %v6235
        %v6308 = vpop.f32.mrb[0].mxu0
        %v6309 = vadd.f32 %v6229, %v6308
        %v6310 = vpop.f32.mrb[0].mxu0
        %6311 = vdwg.mxu0
        %v6312 = vmax.f32 %v6304, 0.0
        %v6313 = vmax.f32 %v6309, 0.0
        %vm6314 = vcmask 130048
        %6315 = vst.msk [vmem:[#allocation6] sm:$0xff] %vm6314, %v6312
        %6316 = vst.msk [vmem:[#allocation6 + $0x8] sm:$0xff] %vm6314, %v6313
        %v6317 = vld [vmem:[#allocation6] sm:$0x3]
        %vm6318 = vcmask 123904
        %6319 = vst.msk [vmem:[#allocation2] sm:$0x3] %vm6318, %v6317
        %v6320 = vld [vmem:[#allocation6 + $0x1] sm:$0x3]
        %6322 = vrot.lane.b32.xlu0 %v6320, 16
        %v6323 = vpop.permute.xlu0 %6322
        %vm6325 = vcmask 255104
        %6326 = vst.msk [vmem:[#allocation2] sm:$0x3] %vm6325, %v6323
        %v6327 = vld [vmem:[#allocation6 + $0x2] sm:$0x3]
        %6329 = vrot.lane.b32.xlu0 %v6327, 32
        %v6330 = vpop.permute.xlu0 %6329
        %vm6332 = vcmask 386304
        %6333 = vst.msk [vmem:[#allocation2] sm:$0x3] %vm6332, %v6330
        %v6334 = vld [vmem:[#allocation6 + $0x4] sm:$0x3]
        %6336 = vrot.lane.b32.xlu0 %v6334, 48
        %v6337 = vpop.permute.xlu0 %6336
        %vm6339 = vcmask 517504
        %6340 = vst.msk [vmem:[#allocation2] sm:$0x3] %vm6339, %v6337
        %v6341 = vld [vmem:[#allocation6 + $0x5] sm:$0x3]
        %6343 = vrot.lane.b32.xlu0 %v6341, 64
        %v6344 = vpop.permute.xlu0 %6343
        %vm6346 = vcmask 648704
        %6347 = vst.msk [vmem:[#allocation2] sm:$0x3] %vm6346, %v6344
        %v6348 = vld [vmem:[#allocation6 + $0x6] sm:$0x3]
        %6350 = vrot.lane.b32.xlu0 %v6348, 80
        %v6351 = vpop.permute.xlu0 %6350
        %vm6353 = vcmask 779904
        %6354 = vst.msk [vmem:[#allocation2] sm:$0x3] %vm6353, %v6351
        %v6355 = vld [vmem:[#allocation6 + $0x8] sm:$0x3]
        %6357 = vrot.lane.b32.xlu0 %v6355, 96
        %v6358 = vpop.permute.xlu0 %6357
        %vm6360 = vcmask 911104
        %6361 = vst.msk [vmem:[#allocation2] sm:$0x3] %vm6360, %v6358
        %v6362 = vld [vmem:[#allocation6 + $0x9] sm:$0x3]
        %6364 = vrot.lane.b32.xlu0 %v6362, 112
        %v6365 = vpop.permute.xlu0 %6364
        %vm6367 = vcmask 1042304
        %6368 = vst.msk [vmem:[#allocation2] sm:$0x3] %vm6367, %v6365
        %v6369 = vld [vmem:[#allocation6 + $0xa] sm:$0x3]
        %6370 = vst.msk [vmem:[#allocation2 + $0x8] sm:$0x3] %vm6318, %v6369
        %v6371 = vld [vmem:[#allocation6 + $0x4] sm:$0x3]
        %v6373 = vrot.slane %v6371, 6
        %vm6375 = vcmask 125954
        %6376 = vst.msk [vmem:[#allocation2] sm:$0xc] %vm6375, %v6373
        %v6377 = vld [vmem:[#allocation6 + $0x5] sm:$0x3]
        %v6379 = vrot.slane %v6377, 6
        %6380 = vrot.lane.b32.xlu0 %v6379, 16
        %v6381 = vpop.permute.xlu0 %6380
        %vm6383 = vcmask 257154
        %6384 = vst.msk [vmem:[#allocation2] sm:$0xc] %vm6383, %v6381
        %v6385 = vld [vmem:[#allocation6 + $0x6] sm:$0x3]
        %v6387 = vrot.slane %v6385, 6
        %6388 = vrot.lane.b32.xlu0 %v6387, 32
        %v6389 = vpop.permute.xlu0 %6388
        %vm6391 = vcmask 388354
        %6392 = vst.msk [vmem:[#allocation2] sm:$0xc] %vm6391, %v6389
        %v6393 = vld [vmem:[#allocation6 + $0x8] sm:$0x3]
        %v6395 = vrot.slane %v6393, 6
        %6396 = vrot.lane.b32.xlu0 %v6395, 48
        %v6397 = vpop.permute.xlu0 %6396
        %vm6399 = vcmask 519554
        %6400 = vst.msk [vmem:[#allocation2] sm:$0xc] %vm6399, %v6397
        %v6401 = vld [vmem:[#allocation6 + $0x9] sm:$0x3]
        %v6403 = vrot.slane %v6401, 6
        %6404 = vrot.lane.b32.xlu0 %v6403, 64
        %v6405 = vpop.permute.xlu0 %6404
        %vm6407 = vcmask 650754
        %6408 = vst.msk [vmem:[#allocation2] sm:$0xc] %vm6407, %v6405
        %v6409 = vld [vmem:[#allocation6 + $0xa] sm:$0x3]
        %v6411 = vrot.slane %v6409, 6
        %6412 = vrot.lane.b32.xlu0 %v6411, 80
        %v6413 = vpop.permute.xlu0 %6412
        %vm6415 = vcmask 781954
        %6416 = vst.msk [vmem:[#allocation2] sm:$0xc] %vm6415, %v6413
        %v6417 = vld [vmem:[#allocation6 + $0xc] sm:$0x3]
        %v6419 = vrot.slane %v6417, 6
        %6420 = vrot.lane.b32.xlu0 %v6419, 96
        %v6421 = vpop.permute.xlu0 %6420
        %vm6423 = vcmask 913154
        %6424 = vst.msk [vmem:[#allocation2] sm:$0xc] %vm6423, %v6421
        %v6425 = vld [vmem:[#allocation6 + $0xd] sm:$0x3]
        %v6427 = vrot.slane %v6425, 6
        %6428 = vrot.lane.b32.xlu0 %v6427, 112
        %v6429 = vpop.permute.xlu0 %6428
        %vm6431 = vcmask 1044354
        %6432 = vst.msk [vmem:[#allocation2] sm:$0xc] %vm6431, %v6429
        %v6433 = vld [vmem:[#allocation6 + $0xe] sm:$0x3]
        %v6435 = vrot.slane %v6433, 6
        %6437 = vst.msk [vmem:[#allocation2 + $0x8] sm:$0xc] %vm6375, %v6435
        %v6438 = vld [vmem:[#allocation2] sm:$0xf]
        %v6439 = vld [vmem:[#allocation2 + $0x8] sm:$0xf]
        %v6440 = vld [vmem:[%s7] sm:$0xff]
        %v6441 = vld [vmem:[%s7 + $0x8] sm:$0xff]
        %v6442 = vld [vmem:[%s7 + $0x10] sm:$0xff]
        %v6443 = vld [vmem:[%s7 + $0x18] sm:$0xff]
        %v6444 = vld [vmem:[%s7 + $0x20] sm:$0xff]
        %v6445 = vld [vmem:[%s7 + $0x28] sm:$0xff]
        %v6446 = vld [vmem:[%s7 + $0x30] sm:$0xff]
        %v6447 = vld [vmem:[%s7 + $0x38] sm:$0xff]
        %v6448 = vld [vmem:[%s7 + $0x40] sm:$0xff]
        %v6449 = vld [vmem:[%s7 + $0x48] sm:$0xff]
        %v6450 = vld [vmem:[%s7 + $0x50] sm:$0xff]
        %v6451 = vld [vmem:[%s7 + $0x58] sm:$0xff]
        %v6452 = vld [vmem:[%s7 + $0x60] sm:$0xff]
        %v6453 = vld [vmem:[%s7 + $0x68] sm:$0xff]
        %v6454 = vld [vmem:[%s7 + $0x70] sm:$0xff]
        %v6455 = vld [vmem:[%s7 + $0x78] sm:$0xff]
        %v6456 = vld [vmem:[%s7 + $0x80] sm:$0xff]
        %v6457 = vld [vmem:[%s7 + $0x88] sm:$0xff]
        %v6458 = vld [vmem:[%s8] sm:$0x1]
        %v6460 = vlaneseq
        %v6461 = vshrl.u32 %v6460, 7
        %v6462 = vsub.s32 0, %v6461
        %v6463 = vrot.slane %v6458, %v6462
        %v6466 = vsel %vm6314, %v6439, 0
        %6468 = vmatprep.subr.mxu0 0.0
        %6469 = vmatpush1.msra.mxu0 %v6440
        %6470 = vmatprep.subr.mxu0 0.0
        %6471 = vmatpush1.msra.mxu0 %v6441
        %6472 = vmatprep.subr.mxu0 0.0
        %6473 = vmatpush1.msra.mxu0 %v6442
        %6474 = vmatprep.subr.mxu0 0.0
        %6475 = vmatpush1.msra.mxu0 %v6443
        %6476 = vmatprep.subr.mxu0 0.0
        %6477 = vmatpush1.msra.mxu0 %v6444
        %6478 = vmatprep.subr.mxu0 0.0
        %6479 = vmatpush1.msra.mxu0 %v6445
        %6480 = vmatprep.subr.mxu0 0.0
        %6481 = vmatpush1.msra.mxu0 %v6446
        %6482 = vmatprep.subr.mxu0 0.0
        %6483 = vmatpush1.msra.mxu0 %v6447
        %6484 = vmatprep.subr.mxu0 0.0
        %6485 = vmatpush1.msra.mxu0 %v6448
        %6486 = vmatprep.subr.mxu0 0.0
        %6487 = vmatpush1.msra.mxu0 %v6449
        %6488 = vmatprep.subr.mxu0 0.0
        %6489 = vmatpush1.msra.mxu0 %v6450
        %6490 = vmatprep.subr.mxu0 0.0
        %6491 = vmatpush1.msra.mxu0 %v6451
        %6492 = vmatprep.subr.mxu0 0.0
        %6493 = vmatpush1.msra.mxu0 %v6452
        %6494 = vmatprep.subr.mxu0 0.0
        %6495 = vmatpush1.msra.mxu0 %v6453
        %6496 = vmatprep.subr.mxu0 0.0
        %6497 = vmatpush1.msra.mxu0 %v6454
        %6498 = vmatprep.subr.mxu0 0.0
        %6499 = vmatpush1.msra.mxu0 %v6455
        %6500 = vmatprep.subr.mxu0 0.0
        %6501 = vmatpush1.msra.mxu0 %v6456
        %6502 = vmatprep.subr.mxu0 0.0
        %6503 = vmatpush1.msra.mxu0 %v6457
        %6504 = vmatprep.subr.mxu0 0.0
        %6505 = vmatpush1.msra.mxu0 0.0
        %6506 = vmatprep.subr.mxu0 0.0
        %6507 = vmatpush1.msra.mxu0 0.0
        %6508 = vmatprep.subr.mxu0 0.0
        %6509 = vmatpush1.msra.mxu0 0.0
        %6510 = vmatprep.subr.mxu0 0.0
        %6511 = vmatpush1.msra.mxu0 0.0
        %6512 = vmatprep.subr.mxu0 0.0
        %6513 = vmatpush1.msra.mxu0 0.0
        %6514 = vmatprep.subr.mxu0 0.0
        %6515 = vmatpush1.msra.mxu0 0.0
        %6516 = vmatprep.subr.mxu0 0.0
        %6517 = vmatpush1.msra.mxu0 0.0
        %6518 = vmatprep.subr.mxu0 0.0
        %6519 = vmatpush1.msra.mxu0 0.0
        %6520 = vmatprep.subr.mxu0 0.0
        %6521 = vmatpush1.msra.mxu0 0.0
        %6522 = vmatprep.subr.mxu0 0.0
        %6523 = vmatpush1.msra.mxu0 0.0
        %6524 = vmatprep.subr.mxu0 0.0
        %6525 = vmatpush1.msra.mxu0 0.0
        %6526 = vmatprep.subr.mxu0 0.0
        %6527 = vmatpush1.msra.mxu0 0.0
        %6528 = vmatprep.subr.mxu0 0.0
        %6529 = vmatpush1.msra.mxu0 0.0
        %6530 = vmatprep.subr.mxu0 0.0
        %6531 = vmatpush1.msra.mxu0 0.0
        %6532 = vmatprep.mubr.f32.mxu0 %v6466
        %6533 = vmatmul.mubr.f32.gmra.mrb[0].mxu0 %v6438
        %v6534 = vpop.f32.mrb[0].mxu0
        %v6535 = vadd.f32 %v6463, %v6534
        %v6536 = vpop.f32.mrb[0].mxu0
        %6537 = vdwg.mxu0
        %v6538 = vmax.f32 %v6535, 0.0
        %vm6539 = vcmask 125952
        %6540 = vst.msk [vmem:[#allocation7] sm:$0xf] %vm6539, %v6538
        %v6541 = vld [vmem:[#allocation7] sm:$0xf]
        %v6542 = vsel %vm6539, %v6541, 0.0
        %v6543 = vrot.slane %v6542, 4
        %v6544 = vadd.f32 %v6542, %v6543
        %v6545 = vrot.slane %v6544, 2
        %v6546 = vadd.f32 %v6544, %v6545
        %v6547 = vrot.slane %v6546, 1
        %v6548 = vadd.f32 %v6546, %v6547
        %v6549 = vmul.f32 %v6548, 0.25
        %v6550 = vld [vmem:[%s9] sm:$0xff]
        %v6551 = vld [vmem:[%s9 + $0x8] sm:$0xff]
        %v6552 = vld [vmem:[%s10] sm:$0x1]
        %v6554 = vsel %vm6314, %v6549, 0
        %6556 = vmatprep.subr.mxu0 0.0
        %6557 = vmatpush1.msra.mxu0 %v6550
        %6558 = vmatprep.subr.mxu0 0.0
        %6559 = vmatpush1.msra.mxu0 %v6551
        %6560 = vmatprep.subr.mxu0 0.0
        %6561 = vmatpush1.msra.mxu0 0.0
        %6562 = vmatprep.subr.mxu0 0.0
        %6563 = vmatpush1.msra.mxu0 0.0
        %6564 = vmatprep.subr.mxu0 0.0
        %6565 = vmatpush1.msra.mxu0 0.0
        %6566 = vmatprep.subr.mxu0 0.0
        %6567 = vmatpush1.msra.mxu0 0.0
        %6568 = vmatprep.subr.mxu0 0.0
        %6569 = vmatpush1.msra.mxu0 0.0
        %6570 = vmatprep.subr.mxu0 0.0
        %6571 = vmatpush1.msra.mxu0 0.0
        %6572 = vmatprep.subr.mxu0 0.0
        %6573 = vmatpush1.msra.mxu0 0.0
        %6574 = vmatprep.subr.mxu0 0.0
        %6575 = vmatpush1.msra.mxu0 0.0
        %6576 = vmatprep.subr.mxu0 0.0
        %6577 = vmatpush1.msra.mxu0 0.0
        %6578 = vmatprep.subr.mxu0 0.0
        %6579 = vmatpush1.msra.mxu0 0.0
        %6580 = vmatprep.subr.mxu0 0.0
        %6581 = vmatpush1.msra.mxu0 0.0
        %6582 = vmatprep.subr.mxu0 0.0
        %6583 = vmatpush1.msra.mxu0 0.0
        %6584 = vmatprep.subr.mxu0 0.0
        %6585 = vmatpush1.msra.mxu0 0.0
        %6586 = vmatprep.subr.mxu0 0.0
        %6587 = vmatpush1.msra.mxu0 0.0
        %6588 = vmatprep.subr.mxu0 0.0
        %6589 = vmatpush1.msra.mxu0 0.0
        %6590 = vmatprep.subr.mxu0 0.0
        %6591 = vmatpush1.msra.mxu0 0.0
        %6592 = vmatprep.subr.mxu0 0.0
        %6593 = vmatpush1.msra.mxu0 0.0
        %6594 = vmatprep.subr.mxu0 0.0
        %6595 = vmatpush1.msra.mxu0 0.0
        %6596 = vmatprep.subr.mxu0 0.0
        %6597 = vmatpush1.msra.mxu0 0.0
        %6598 = vmatprep.subr.mxu0 0.0
        %6599 = vmatpush1.msra.mxu0 0.0
        %6600 = vmatprep.subr.mxu0 0.0
        %6601 = vmatpush1.msra.mxu0 0.0
        %6602 = vmatprep.subr.mxu0 0.0
        %6603 = vmatpush1.msra.mxu0 0.0
        %6604 = vmatprep.subr.mxu0 0.0
        %6605 = vmatpush1.msra.mxu0 0.0
        %6606 = vmatprep.subr.mxu0 0.0
        %6607 = vmatpush1.msra.mxu0 0.0
        %6608 = vmatprep.subr.mxu0 0.0
        %6609 = vmatpush1.msra.mxu0 0.0
        %6610 = vmatprep.subr.mxu0 0.0
        %6611 = vmatpush1.msra.mxu0 0.0
        %6612 = vmatprep.subr.mxu0 0.0
        %6613 = vmatpush1.msra.mxu0 0.0
        %6614 = vmatprep.subr.mxu0 0.0
        %6615 = vmatpush1.msra.mxu0 0.0
        %6616 = vmatprep.subr.mxu0 0.0
        %6617 = vmatpush1.msra.mxu0 0.0
        %6618 = vmatprep.subr.mxu0 0.0
        %6619 = vmatpush1.msra.mxu0 0.0
        %6620 = vmatprep.mubr.f32.mxu0 0.0
        %6621 = vmatmul.mubr.f32.gmra.mrb[0].mxu0 %v6554
        %v6622 = vpop.f32.mrb[0].mxu0
        %v6623 = vadd.f32 %v6552, %v6622
        %v6624 = vpop.f32.mrb[0].mxu0
        %6625 = vdwg.mxu0
        %vm6626 = vcmask 8192
        %6627 = vst.msk [vmem:[%s378] sm:$0x1] %vm6626, %v6623
        %s6628 = sand.u32 %s269, 1
        %s6629 = scalar_lea.sflag [#allocation9], %s6628
        %s6630 = sand.u32 %s269, 1
        %s6631 = scalar_lea.vmem [#allocation8], %s6630
        // Predicated region
        $region65: #{forward.1} parent=63 // pred_check
          %p6632 = pneg %p279
        $region66: #{forward.1} parent=63 // pred_check_branch
          %6634 = sbr.rel (%p6632) target = $region68
        $region67: #{forward.1} parent=63 // pred_region
          %s6636 = ssub.s32 16, 16
          %6637 = vsyncadd %s6629, %s6636
          %s6638 = smul.addr %s25, 16
          %s6639 = scalar_lea.hbm %s11, %s6638
          %s6641 = sshll.u32 %s6631, 4
          %s6642 = int_to_ptr.vmem [resolvable:$true] %s6641
          %6644 = dma.vmem_to_hbm [thread:$0]  %s6642, 16, %s6639, %s6629
        $region68: #{forward.1} parent=63 // pred_fallthru
          _
      $region64: #{forward.1} parent=5 // pred_fallthru
        _
      %p6645 = scmp.le.s32.totalorder 2, %s20
      // Predicated region
      $region69: #{forward.1} parent=5 // pred_check
        %p6646 = pneg %p6645
      $region70: #{forward.1} parent=5 // pred_check_branch
        %6648 = sbr.rel (%p6646) target = $region72
      $region71: #{forward.1} parent=5 // pred_region
        %s6649 = ssub.s32 %s20, 2
        // Predicated region
        $region73: #{forward.1} parent=71 // pred_check
          %p6650 = pneg %p285
        $region74: #{forward.1} parent=71 // pred_check_branch
          %6652 = sbr.rel (%p6650) target = $region76
        $region75: #{forward.1} parent=71 // pred_region
          %s6653 = sand.u32 %s270, 1
          %s6654 = scalar_lea.sflag [#allocation9], %s6653
          %s6655 = sand.u32 %s270, 1
          %s6656 = scalar_lea.vmem [#allocation8], %s6655
          %6657 = dma.done %s6654, 16
        $region76: #{forward.1} parent=71 // pred_fallthru
          _
      $region72: #{forward.1} parent=5 // pred_fallthru
        _
    $region6: #{forward.1} parent=1 // loop_footer
      %s24 = sadd.s32 1, %s20
    $region7: #{forward.1} parent=1 // loop_footer_branch
      %19 = sbr.rel target = $region3
    $region8: #{forward.1} parent=1 // loop_exit
      _
    %6658 = vsyncpa [#allocation9], 1
    %s6659 = scalar_lea.sflag [#allocation9], 1
    %6660 = vsyncpa %s6659, 1

</llo_original>
